<compile_context>
chip_gen: v7x
topology: tpu7x:2x2x1
jax: 0.10.0
libtpu: 0.0.40
codegen_flags: <defaults>
</compile_context>

<pallas_src>
import functools

import jax
import jax.numpy as jnp
from jax.experimental import pallas as pl
from jax.experimental.pallas import tpu as pltpu


# ---------------------------------------------------------------------------
# In-kernel helpers
# ---------------------------------------------------------------------------
def _layernorm(x, g, b, eps=1e-5):
    mu = jnp.mean(x, axis=-1, keepdims=True)
    var = jnp.mean((x - mu) ** 2, axis=-1, keepdims=True)
    return (x - mu) * jax.lax.rsqrt(var + eps) * g + b


# ---------------------------------------------------------------------------
# Pallas kernel: one grid step == one batch element
# ---------------------------------------------------------------------------
def decoder_block_kernel(num_heads, embed, t_len, s_len, mm_dtype, approx_recip,
                         x_ref, v_ref, k_ref,
                         # decoder self-attention params
                         wq1, bq1, wk1, bk1, wv1, bv1, wo1h, bo1, gn0, bn0,
                         # cross-attention params
                         wq2, bq2, wk2, bk2, wv2, bv2, wo2h, bo2, gn1, bn1,
                         # feed-forward + final norm
                         wf1, bf1, wf2, bf2, gn2, bn2,
                         out_ref):
    H, E = num_heads, embed
    Dh = E // H
    # NOTE: 1/sqrt(embedding_size), NOT 1/sqrt(head_dim) -- matches PyTorch ref.
    inv_scale = jnp.float32(1.0 / (float(E) ** 0.5))

    x2d = x_ref[...].reshape(t_len, E)      # target tokens          (T, E)
    enc_v = v_ref[...].reshape(s_len, E)    # encoder output values  (S, E)
    enc_k = k_ref[...].reshape(s_len, E)    # encoder output keys    (S, E)

    def split_heads(m):
        # (L, E) -> (H, L, Dh) via static lane slices + leading-dim stack.
        # No data duplication and no sublane<->major transpose.
        return jnp.stack([m[:, h * Dh:(h + 1) * Dh] for h in range(H)], axis=0)

    def mha(q_tok, key_tok, val_tok, wq, bq, wk, bk, wv, bv, wo_h, bo):
        # Dense E x E projections (full MXU contraction depth), f32 accumulate.
        q = jnp.dot(q_tok.astype(mm_dtype), wq[...],
                    preferred_element_type=jnp.float32) + bq[...]
        k = jnp.dot(key_tok.astype(mm_dtype), wk[...],
                    preferred_element_type=jnp.float32) + bk[...]
        v = jnp.dot(val_tok.astype(mm_dtype), wv[...],
                    preferred_element_type=jnp.float32) + bv[...]
        q = q * inv_scale                    # fold 1/sqrt(E) into Q once

        qh = split_heads(q.astype(mm_dtype))     # (H, lq, Dh)
        kh = split_heads(k.astype(mm_dtype))     # (H, lk, Dh)
        vh = split_heads(v.astype(mm_dtype))     # (H, lk, Dh)

        # head-batched QK^T, contraction on last dims (no explicit transpose)
        s = jnp.einsum('hqd,hkd->hqk', qh, kh,
                       preferred_element_type=jnp.float32)
        s = s - jnp.max(s, axis=-1, keepdims=True)
        p = jnp.exp(s)
        p = p * pl.reciprocal(jnp.sum(p, axis=-1, keepdims=True),
                              approx=approx_recip)
        p = p.astype(mm_dtype)               # cast once, reused for PV matmul

        ctx = jnp.einsum('hqk,hkd->hqd', p, vh,
                         preferred_element_type=jnp.float32)   # (H, lq, Dh)

        # output projection: ONE head-batched matmul + head-axis reduction.
        proj = jnp.einsum('hqd,hde->hqe', ctx.astype(mm_dtype), wo_h[...],
                          preferred_element_type=jnp.float32)  # (H, lq, E)
        return jnp.sum(proj, axis=0) + bo[...]

    # --- decoder self-attention: SelfAttention(values=x, keys=x, query=x) ---
    att1 = mha(x2d, x2d, x2d, wq1, bq1, wk1, bk1, wv1, bv1, wo1h, bo1)
    query = _layernorm(att1 + x2d, gn0[...], bn0[...])     # dropout == identity

    # --- TransformerBlock cross-attn: values=enc_value, keys=enc_key ---
    att2 = mha(query, enc_k, enc_v, wq2, bq2, wk2, bk2, wv2, bv2, wo2h, bo2)
    x2 = _layernorm(att2 + query, gn1[...], bn1[...])

    # feed-forward: Linear -> ReLU -> Linear (dense E-contraction matmuls)
    h1 = jnp.dot(x2.astype(mm_dtype), wf1[...],
                 preferred_element_type=jnp.float32) + bf1[...]
    h1 = jnp.maximum(h1, 0.0)
    ff = jnp.dot(h1.astype(mm_dtype), wf2[...],
                 preferred_element_type=jnp.float32) + bf2[...]

    out = _layernorm(ff + x2, gn2[...], bn2[...])
    out_ref[...] = out.reshape(1, t_len, E).astype(out_ref.dtype)


# ---------------------------------------------------------------------------
# Wrapper: parameter packing + pallas_call
# ---------------------------------------------------------------------------
def _pack_params(params, num_heads, embed, mm_dtype):
    """Cast matmul weights to mm_dtype; pack only fc_out per head (H, Dh, E)."""
    H, E = num_heads, embed
    Dh = E // H
    f32 = jnp.float32
    p = params

    def mm(a):
        return a.astype(mm_dtype)

    def f(a):
        return a.astype(f32)

    return [
        mm(p["wq1"]), f(p["bq1"]), mm(p["wk1"]), f(p["bk1"]),
        mm(p["wv1"]), f(p["bv1"]),
        mm(p["wo1"].reshape(H, Dh, E)), f(p["bo1"]),
        f(p["gn0"]), f(p["bn0"]),
        mm(p["wq2"]), f(p["bq2"]), mm(p["wk2"]), f(p["bk2"]),
        mm(p["wv2"]), f(p["bv2"]),
        mm(p["wo2"].reshape(H, Dh, E)), f(p["bo2"]),
        f(p["gn1"]), f(p["bn1"]),
        mm(p["wf1"]), f(p["bf1"]), mm(p["wf2"]), f(p["bf2"]),
        f(p["gn2"]), f(p["bn2"]),
    ]


def _vmem_capacity_bytes():
    try:
        cap = getattr(pltpu.get_tpu_info(), "vmem_capacity_bytes", None)
        if cap:
            return int(cap)
    except Exception:
        pass
    return 64 << 20          # conservative default: v7x physical VMEM per TC


def decoder_block(x, enc_value, enc_key, params, num_heads,
                  matmul_dtype=jnp.float32, approx_reciprocal=True):
    N, T, E = x.shape
    S = enc_value.shape[1]
    weights = _pack_params(params, num_heads, E, matmul_dtype)
    kernel = functools.partial(decoder_block_kernel, num_heads, E, T, S,
                               matmul_dtype, approx_reciprocal)

    def _run(single_buffer_weights):
        def weight_spec(arr):
            nd = arr.ndim                              # bind ndim now
            idx = lambda b, _nd=nd: (0,) * _nd
            if single_buffer_weights:
                # constant index_map -> one VMEM copy suffices (default is 2)
                return pl.BlockSpec(arr.shape, idx, pipeline_mode=pl.Buffered(1))
            return pl.BlockSpec(arr.shape, idx)

        in_specs = [
            pl.BlockSpec((1, T, E), lambda b: (b, 0, 0)),   # target tokens
            pl.BlockSpec((1, S, E), lambda b: (b, 0, 0)),   # encoder value
            pl.BlockSpec((1, S, E), lambda b: (b, 0, 0)),   # encoder key
        ] + [weight_spec(w) for w in weights]
        out_spec = pl.BlockSpec((1, T, E), lambda b: (b, 0, 0))

        param_bytes = sum(int(w.size) * w.dtype.itemsize for w in weights)
        act_bytes = 4 * (2 * T * E + 2 * S * E)            # per-step blocks (f32)
        copies = 1 if single_buffer_weights else 2
        needed = copies * param_bytes + 2 * act_bytes + (8 << 20)
        # Never claim the full physical VMEM (leave compiler scratch headroom).
        vmem_limit = int(min(max(needed, 16 << 20),
                             int(0.85 * _vmem_capacity_bytes())))

        return pl.pallas_call(
            kernel,
            out_shape=jax.ShapeDtypeStruct((N, T, E), jnp.float32),
            grid_spec=pltpu.PrefetchScalarGridSpec(
                num_scalar_prefetch=0,
                grid=(N,),
                in_specs=in_specs,
                out_specs=out_spec,
            ),
            compiler_params=pltpu.CompilerParams(
                dimension_semantics=("parallel",),
                vmem_limit_bytes=vmem_limit,
            ),
        )(x, enc_value, enc_key, *weights)

    try:
        return _run(True)
    except Exception:
        # pl.Buffered(1) single-buffering not supported on this jax version ->
        # fall back to default double-buffered weight specs.
        return _run(False)


# ---------------------------------------------------------------------------
# Pure-JAX reference (mirrors the PyTorch module) for verification
# ---------------------------------------------------------------------------
def reference_decoder_block(x, enc_value, enc_key, p, num_heads):
    E = x.shape[-1]
    H = num_heads
    Dh = E // H

    def mha(values, keys, query, wq, bq, wk, bk, wv, bv, wo, bo):
        N, Lq, _ = query.shape
        Lk = keys.shape[1]
        Q = query @ wq + bq
        K = keys @ wk + bk
        V = values @ wv + bv
        Qh = Q.reshape(N, Lq, H, Dh)
        Kh = K.reshape(N, Lk, H, Dh)
        Vh = V.reshape(N, Lk, H, Dh)
        energy = jnp.einsum("nqhd,nkhd->nhqk", Qh, Kh)
        att = jax.nn.softmax(energy / (E ** 0.5), axis=-1)
        out = jnp.einsum("nhqk,nkhd->nqhd", att, Vh).reshape(N, Lq, E)
        return out @ wo + bo

    def ln(y, g, b, eps=1e-5):
        mu = y.mean(-1, keepdims=True)
        var = ((y - mu) ** 2).mean(-1, keepdims=True)
        return (y - mu) / jnp.sqrt(var + eps) * g + b

    att = mha(x, x, x, p["wq1"], p["bq1"], p["wk1"], p["bk1"],
              p["wv1"], p["bv1"], p["wo1"], p["bo1"])
    query = ln(att + x, p["gn0"], p["bn0"])

    att2 = mha(enc_value, enc_key, query, p["wq2"], p["bq2"], p["wk2"],
               p["bk2"], p["wv2"], p["bv2"], p["wo2"], p["bo2"])
    x2 = ln(att2 + query, p["gn1"], p["bn1"])

    h = jnp.maximum(x2 @ p["wf1"] + p["bf1"], 0.0)
    ff = h @ p["wf2"] + p["bf2"]
    return ln(ff + x2, p["gn2"], p["bn2"])


# ---------------------------------------------------------------------------
# Deterministic parameter init + test
# ---------------------------------------------------------------------------
def init_params(key, embed, hidden):
    ks = jax.random.split(key, 20)

    def lin(kw, kb, fan_in, fan_out):
        w = jax.random.normal(kw, (fan_in, fan_out), jnp.float32) * 0.08
        b = jax.random.normal(kb, (1, fan_out), jnp.float32) * 0.02
        return w, b

    p = {}
    p["wq1"], p["bq1"] = lin(ks[0], ks[1], embed, embed)
    p["wk1"], p["bk1"] = lin(ks[2], ks[3], embed, embed)
    p["wv1"], p["bv1"] = lin(ks[4], ks[5], embed, embed)
    p["wo1"], p["bo1"] = lin(ks[6], ks[7], embed, embed)
    p["gn0"] = jnp.ones((1, embed), jnp.float32)
    p["bn0"] = jnp.zeros((1, embed), jnp.float32)
    p["wq2"], p["bq2"] = lin(ks[8], ks[9], embed, embed)
    p["wk2"], p["bk2"] = lin(ks[10], ks[11], embed, embed)
    p["wv2"], p["bv2"] = lin(ks[12], ks[13], embed, embed)
    p["wo2"], p["bo2"] = lin(ks[14], ks[15], embed, embed)
    p["gn1"] = jnp.ones((1, embed), jnp.float32)
    p["bn1"] = jnp.zeros((1, embed), jnp.float32)
    p["wf1"], p["bf1"] = lin(ks[16], ks[17], embed, hidden)
    p["wf2"], p["bf2"] = lin(ks[18], ks[19], hidden, embed)
    p["gn2"] = jnp.ones((1, embed), jnp.float32)
    p["bn2"] = jnp.zeros((1, embed), jnp.float32)
    return p


if __name__ == "__main__":
    batch = 2
    trg_len = 8
    src_len = 8
    embed = 32
    num_heads = 4
    forward_expansion = 4
    hidden = forward_expansion * embed

    key = jax.random.PRNGKey(0)
    k1, k2, k3, kp = jax.random.split(key, 4)
    x = jax.random.normal(k1, (batch, trg_len, embed), jnp.float32)
    enc_value = jax.random.normal(k2, (batch, src_len, embed), jnp.float32)
    enc_key = jax.random.normal(k3, (batch, src_len, embed), jnp.float32)
    params = init_params(kp, embed, hidden)

    ref = reference_decoder_block(x, enc_value, enc_key, params, num_heads)

    # Strict path: f32 matmul operands, exact reciprocal -> tight check.
    out = decoder_block(x, enc_value, enc_key, params, num_heads,
                        matmul_dtype=jnp.float32, approx_reciprocal=False)
    out = jax.block_until_ready(out)
    assert out.shape == (batch, trg_len, embed)
    assert jnp.allclose(out, ref, atol=1e-4, rtol=1e-4), "f32 kernel mismatch"

    # Fast path: bf16 matmul operands (all TPU generations take bf16 on the
    # MXU) + approx EUP reciprocal; f32 accumulation / elementwise math.
    out_fast = decoder_block(x, enc_value, enc_key, params, num_heads,
                             matmul_dtype=jnp.bfloat16, approx_reciprocal=True)
    out_fast = jax.block_until_ready(out_fast)
    assert jnp.max(jnp.abs(out_fast - ref)) < 0.15, "bf16 kernel mismatch"

    print("KERNEL_OK")
</pallas_src>

<mosaic_0001>
module attributes {stable_mosaic.version = 11 : i64} {
  func.func @decoder_block_kernel(%arg0: i32, %arg1: memref<1x8x32xf32, #tpu.memory_space<vmem>>, %arg2: memref<1x8x32xf32, #tpu.memory_space<vmem>>, %arg3: memref<1x8x32xf32, #tpu.memory_space<vmem>>, %arg4: memref<32x32xf32, #tpu.memory_space<vmem>>, %arg5: memref<1x32xf32, #tpu.memory_space<vmem>>, %arg6: memref<32x32xf32, #tpu.memory_space<vmem>>, %arg7: memref<1x32xf32, #tpu.memory_space<vmem>>, %arg8: memref<32x32xf32, #tpu.memory_space<vmem>>, %arg9: memref<1x32xf32, #tpu.memory_space<vmem>>, %arg10: memref<4x8x32xf32, #tpu.memory_space<vmem>>, %arg11: memref<1x32xf32, #tpu.memory_space<vmem>>, %arg12: memref<1x32xf32, #tpu.memory_space<vmem>>, %arg13: memref<1x32xf32, #tpu.memory_space<vmem>>, %arg14: memref<32x32xf32, #tpu.memory_space<vmem>>, %arg15: memref<1x32xf32, #tpu.memory_space<vmem>>, %arg16: memref<32x32xf32, #tpu.memory_space<vmem>>, %arg17: memref<1x32xf32, #tpu.memory_space<vmem>>, %arg18: memref<32x32xf32, #tpu.memory_space<vmem>>, %arg19: memref<1x32xf32, #tpu.memory_space<vmem>>, %arg20: memref<4x8x32xf32, #tpu.memory_space<vmem>>, %arg21: memref<1x32xf32, #tpu.memory_space<vmem>>, %arg22: memref<1x32xf32, #tpu.memory_space<vmem>>, %arg23: memref<1x32xf32, #tpu.memory_space<vmem>>, %arg24: memref<32x128xf32, #tpu.memory_space<vmem>>, %arg25: memref<1x128xf32, #tpu.memory_space<vmem>>, %arg26: memref<128x32xf32, #tpu.memory_space<vmem>>, %arg27: memref<1x32xf32, #tpu.memory_space<vmem>>, %arg28: memref<1x32xf32, #tpu.memory_space<vmem>>, %arg29: memref<1x32xf32, #tpu.memory_space<vmem>>, %arg30: memref<1x8x32xf32, #tpu.memory_space<vmem>>) attributes {dimension_semantics = [#tpu.dimension_semantics<parallel>], iteration_bounds = array<i64: 2>, scalar_prefetch = 0 : i64, scratch_operands = 0 : i64, tpu.core_type = #tpu.core_type<tc>, window_params = [{transform_indices = @transform_0, window_bounds = array<i64: 1, 8, 32>}, {transform_indices = @transform_1, window_bounds = array<i64: 1, 8, 32>}, {transform_indices = @transform_2, window_bounds = array<i64: 1, 8, 32>}, {pipeline_mode = #tpu.pipeline_mode<synchronous>, transform_indices = @transform_3, window_bounds = array<i64: 32, 32>}, {pipeline_mode = #tpu.pipeline_mode<synchronous>, transform_indices = @transform_4, window_bounds = array<i64: 1, 32>}, {pipeline_mode = #tpu.pipeline_mode<synchronous>, transform_indices = @transform_5, window_bounds = array<i64: 32, 32>}, {pipeline_mode = #tpu.pipeline_mode<synchronous>, transform_indices = @transform_6, window_bounds = array<i64: 1, 32>}, {pipeline_mode = #tpu.pipeline_mode<synchronous>, transform_indices = @transform_7, window_bounds = array<i64: 32, 32>}, {pipeline_mode = #tpu.pipeline_mode<synchronous>, transform_indices = @transform_8, window_bounds = array<i64: 1, 32>}, {pipeline_mode = #tpu.pipeline_mode<synchronous>, transform_indices = @transform_9, window_bounds = array<i64: 4, 8, 32>}, {pipeline_mode = #tpu.pipeline_mode<synchronous>, transform_indices = @transform_10, window_bounds = array<i64: 1, 32>}, {pipeline_mode = #tpu.pipeline_mode<synchronous>, transform_indices = @transform_11, window_bounds = array<i64: 1, 32>}, {pipeline_mode = #tpu.pipeline_mode<synchronous>, transform_indices = @transform_12, window_bounds = array<i64: 1, 32>}, {pipeline_mode = #tpu.pipeline_mode<synchronous>, transform_indices = @transform_13, window_bounds = array<i64: 32, 32>}, {pipeline_mode = #tpu.pipeline_mode<synchronous>, transform_indices = @transform_14, window_bounds = array<i64: 1, 32>}, {pipeline_mode = #tpu.pipeline_mode<synchronous>, transform_indices = @transform_15, window_bounds = array<i64: 32, 32>}, {pipeline_mode = #tpu.pipeline_mode<synchronous>, transform_indices = @transform_16, window_bounds = array<i64: 1, 32>}, {pipeline_mode = #tpu.pipeline_mode<synchronous>, transform_indices = @transform_17, window_bounds = array<i64: 32, 32>}, {pipeline_mode = #tpu.pipeline_mode<synchronous>, transform_indices = @transform_18, window_bounds = array<i64: 1, 32>}, {pipeline_mode = #tpu.pipeline_mode<synchronous>, transform_indices = @transform_19, window_bounds = array<i64: 4, 8, 32>}, {pipeline_mode = #tpu.pipeline_mode<synchronous>, transform_indices = @transform_20, window_bounds = array<i64: 1, 32>}, {pipeline_mode = #tpu.pipeline_mode<synchronous>, transform_indices = @transform_21, window_bounds = array<i64: 1, 32>}, {pipeline_mode = #tpu.pipeline_mode<synchronous>, transform_indices = @transform_22, window_bounds = array<i64: 1, 32>}, {pipeline_mode = #tpu.pipeline_mode<synchronous>, transform_indices = @transform_23, window_bounds = array<i64: 32, 128>}, {pipeline_mode = #tpu.pipeline_mode<synchronous>, transform_indices = @transform_24, window_bounds = array<i64: 1, 128>}, {pipeline_mode = #tpu.pipeline_mode<synchronous>, transform_indices = @transform_25, window_bounds = array<i64: 128, 32>}, {pipeline_mode = #tpu.pipeline_mode<synchronous>, transform_indices = @transform_26, window_bounds = array<i64: 1, 32>}, {pipeline_mode = #tpu.pipeline_mode<synchronous>, transform_indices = @transform_27, window_bounds = array<i64: 1, 32>}, {pipeline_mode = #tpu.pipeline_mode<synchronous>, transform_indices = @transform_28, window_bounds = array<i64: 1, 32>}, {transform_indices = @transform_29, window_bounds = array<i64: 1, 8, 32>}]} {
    %c0 = arith.constant 0 : index
    %c0_0 = arith.constant 0 : index
    %c0_1 = arith.constant 0 : index
    %0 = vector.load %arg1[%c0, %c0_0, %c0_1] : memref<1x8x32xf32, #tpu.memory_space<vmem>>, vector<1x8x32xf32>
    %1 = vector.shape_cast %0 : vector<1x8x32xf32> to vector<8x32xf32>
    %c0_2 = arith.constant 0 : index
    %c0_3 = arith.constant 0 : index
    %c0_4 = arith.constant 0 : index
    %2 = vector.load %arg2[%c0_2, %c0_3, %c0_4] : memref<1x8x32xf32, #tpu.memory_space<vmem>>, vector<1x8x32xf32>
    %3 = vector.shape_cast %2 : vector<1x8x32xf32> to vector<8x32xf32>
    %c0_5 = arith.constant 0 : index
    %c0_6 = arith.constant 0 : index
    %c0_7 = arith.constant 0 : index
    %4 = vector.load %arg3[%c0_5, %c0_6, %c0_7] : memref<1x8x32xf32, #tpu.memory_space<vmem>>, vector<1x8x32xf32>
    %5 = vector.shape_cast %4 : vector<1x8x32xf32> to vector<8x32xf32>
    %c0_8 = arith.constant 0 : index
    %c0_9 = arith.constant 0 : index
    %6 = vector.load %arg4[%c0_8, %c0_9] : memref<32x32xf32, #tpu.memory_space<vmem>>, vector<32x32xf32>
    %cst = arith.constant dense<0.000000e+00> : vector<8x32xf32>
    %7 = tpu.matmul %1, %6, %cst {dimension_numbers = #tpu.dot_dimension_numbers<[1], [0], [0], [1], [0, 0, 1, 1], [], []>} : vector<8x32xf32>, vector<32x32xf32>, vector<8x32xf32> -> vector<8x32xf32>
    %c0_10 = arith.constant 0 : index
    %c0_11 = arith.constant 0 : index
    %8 = vector.load %arg5[%c0_10, %c0_11] : memref<1x32xf32, #tpu.memory_space<vmem>>, vector<1x32xf32>
    %9 = vector.broadcast %8 : vector<1x32xf32> to vector<8x32xf32>
    %10 = arith.addf %7, %9 : vector<8x32xf32>
    %c0_12 = arith.constant 0 : index
    %c0_13 = arith.constant 0 : index
    %11 = vector.load %arg6[%c0_12, %c0_13] : memref<32x32xf32, #tpu.memory_space<vmem>>, vector<32x32xf32>
    %cst_14 = arith.constant dense<0.000000e+00> : vector<8x32xf32>
    %12 = tpu.matmul %1, %11, %cst_14 {dimension_numbers = #tpu.dot_dimension_numbers<[1], [0], [0], [1], [0, 0, 1, 1], [], []>} : vector<8x32xf32>, vector<32x32xf32>, vector<8x32xf32> -> vector<8x32xf32>
    %c0_15 = arith.constant 0 : index
    %c0_16 = arith.constant 0 : index
    %13 = vector.load %arg7[%c0_15, %c0_16] : memref<1x32xf32, #tpu.memory_space<vmem>>, vector<1x32xf32>
    %14 = vector.broadcast %13 : vector<1x32xf32> to vector<8x32xf32>
    %15 = arith.addf %12, %14 : vector<8x32xf32>
    %c0_17 = arith.constant 0 : index
    %c0_18 = arith.constant 0 : index
    %16 = vector.load %arg8[%c0_17, %c0_18] : memref<32x32xf32, #tpu.memory_space<vmem>>, vector<32x32xf32>
    %cst_19 = arith.constant dense<0.000000e+00> : vector<8x32xf32>
    %17 = tpu.matmul %1, %16, %cst_19 {dimension_numbers = #tpu.dot_dimension_numbers<[1], [0], [0], [1], [0, 0, 1, 1], [], []>} : vector<8x32xf32>, vector<32x32xf32>, vector<8x32xf32> -> vector<8x32xf32>
    %c0_20 = arith.constant 0 : index
    %c0_21 = arith.constant 0 : index
    %18 = vector.load %arg9[%c0_20, %c0_21] : memref<1x32xf32, #tpu.memory_space<vmem>>, vector<1x32xf32>
    %19 = vector.broadcast %18 : vector<1x32xf32> to vector<8x32xf32>
    %20 = arith.addf %17, %19 : vector<8x32xf32>
    %cst_22 = arith.constant 0.176776692 : f32
    %21 = vector.broadcast %cst_22 : f32 to vector<8x32xf32>
    %22 = arith.mulf %10, %21 : vector<8x32xf32>
    %23 = vector.extract_strided_slice %22 {offsets = [0, 0], sizes = [8, 8], strides = [1, 1]} : vector<8x32xf32> to vector<8x8xf32>
    %24 = vector.extract_strided_slice %22 {offsets = [0, 8], sizes = [8, 8], strides = [1, 1]} : vector<8x32xf32> to vector<8x8xf32>
    %25 = vector.extract_strided_slice %22 {offsets = [0, 16], sizes = [8, 8], strides = [1, 1]} : vector<8x32xf32> to vector<8x8xf32>
    %26 = vector.extract_strided_slice %22 {offsets = [0, 24], sizes = [8, 8], strides = [1, 1]} : vector<8x32xf32> to vector<8x8xf32>
    %27 = vector.shape_cast %23 : vector<8x8xf32> to vector<1x8x8xf32>
    %28 = vector.shape_cast %24 : vector<8x8xf32> to vector<1x8x8xf32>
    %29 = vector.shape_cast %25 : vector<8x8xf32> to vector<1x8x8xf32>
    %30 = vector.shape_cast %26 : vector<8x8xf32> to vector<1x8x8xf32>
    %31 = tpu.concatenate %27, %28, %29, %30 in 0 : vector<1x8x8xf32>, vector<1x8x8xf32>, vector<1x8x8xf32>, vector<1x8x8xf32> -> vector<4x8x8xf32>
    %32 = vector.extract_strided_slice %15 {offsets = [0, 0], sizes = [8, 8], strides = [1, 1]} : vector<8x32xf32> to vector<8x8xf32>
    %33 = vector.extract_strided_slice %15 {offsets = [0, 8], sizes = [8, 8], strides = [1, 1]} : vector<8x32xf32> to vector<8x8xf32>
    %34 = vector.extract_strided_slice %15 {offsets = [0, 16], sizes = [8, 8], strides = [1, 1]} : vector<8x32xf32> to vector<8x8xf32>
    %35 = vector.extract_strided_slice %15 {offsets = [0, 24], sizes = [8, 8], strides = [1, 1]} : vector<8x32xf32> to vector<8x8xf32>
    %36 = vector.shape_cast %32 : vector<8x8xf32> to vector<1x8x8xf32>
    %37 = vector.shape_cast %33 : vector<8x8xf32> to vector<1x8x8xf32>
    %38 = vector.shape_cast %34 : vector<8x8xf32> to vector<1x8x8xf32>
    %39 = vector.shape_cast %35 : vector<8x8xf32> to vector<1x8x8xf32>
    %40 = tpu.concatenate %36, %37, %38, %39 in 0 : vector<1x8x8xf32>, vector<1x8x8xf32>, vector<1x8x8xf32>, vector<1x8x8xf32> -> vector<4x8x8xf32>
    %41 = vector.extract_strided_slice %20 {offsets = [0, 0], sizes = [8, 8], strides = [1, 1]} : vector<8x32xf32> to vector<8x8xf32>
    %42 = vector.extract_strided_slice %20 {offsets = [0, 8], sizes = [8, 8], strides = [1, 1]} : vector<8x32xf32> to vector<8x8xf32>
    %43 = vector.extract_strided_slice %20 {offsets = [0, 16], sizes = [8, 8], strides = [1, 1]} : vector<8x32xf32> to vector<8x8xf32>
    %44 = vector.extract_strided_slice %20 {offsets = [0, 24], sizes = [8, 8], strides = [1, 1]} : vector<8x32xf32> to vector<8x8xf32>
    %45 = vector.shape_cast %41 : vector<8x8xf32> to vector<1x8x8xf32>
    %46 = vector.shape_cast %42 : vector<8x8xf32> to vector<1x8x8xf32>
    %47 = vector.shape_cast %43 : vector<8x8xf32> to vector<1x8x8xf32>
    %48 = vector.shape_cast %44 : vector<8x8xf32> to vector<1x8x8xf32>
    %49 = tpu.concatenate %45, %46, %47, %48 in 0 : vector<1x8x8xf32>, vector<1x8x8xf32>, vector<1x8x8xf32>, vector<1x8x8xf32> -> vector<4x8x8xf32>
    "tpu.trace_start"() <{level = 10 : i32, message = "hqd,hkd->hqk"}> : () -> ()
    %cst_23 = arith.constant dense<0.000000e+00> : vector<4x8x8xf32>
    %50 = tpu.matmul %31, %40, %cst_23 {dimension_numbers = #tpu.dot_dimension_numbers<[2], [2], [1], [1], [0, 0, 0, 1, 1, 1], [0], [0]>} : vector<4x8x8xf32>, vector<4x8x8xf32>, vector<4x8x8xf32> -> vector<4x8x8xf32>
    "tpu.trace_stop"() : () -> ()
    %cst_24 = arith.constant dense<0xFF800000> : vector<4x8xf32>
    %51 = vector.multi_reduction <maximumf>, %50, %cst_24 [2] : vector<4x8x8xf32> to vector<4x8xf32>
    %52 = vector.shape_cast %51 : vector<4x8xf32> to vector<4x8x1xf32>
    %53 = vector.broadcast %52 : vector<4x8x1xf32> to vector<4x8x8xf32>
    %54 = arith.subf %50, %53 : vector<4x8x8xf32>
    %55 = math.exp %54 : vector<4x8x8xf32>
    %cst_25 = arith.constant dense<0.000000e+00> : vector<4x8xf32>
    %56 = vector.multi_reduction <add>, %55, %cst_25 [2] : vector<4x8x8xf32> to vector<4x8xf32>
    %57 = vector.shape_cast %56 : vector<4x8xf32> to vector<4x8x1xf32>
    %58 = tpu.reciprocal %57 : vector<4x8x1xf32> -> vector<4x8x1xf32>
    %59 = vector.broadcast %58 : vector<4x8x1xf32> to vector<4x8x8xf32>
    %60 = arith.mulf %55, %59 : vector<4x8x8xf32>
    "tpu.trace_start"() <{level = 10 : i32, message = "hqk,hkd->hqd"}> : () -> ()
    %cst_26 = arith.constant dense<0.000000e+00> : vector<4x8x8xf32>
    %61 = tpu.matmul %60, %49, %cst_26 {dimension_numbers = #tpu.dot_dimension_numbers<[2], [1], [1], [2], [0, 0, 0, 1, 1, 2], [0], [0]>} : vector<4x8x8xf32>, vector<4x8x8xf32>, vector<4x8x8xf32> -> vector<4x8x8xf32>
    "tpu.trace_stop"() : () -> ()
    %c0_27 = arith.constant 0 : index
    %c0_28 = arith.constant 0 : index
    %c0_29 = arith.constant 0 : index
    %62 = vector.load %arg10[%c0_27, %c0_28, %c0_29] : memref<4x8x32xf32, #tpu.memory_space<vmem>>, vector<4x8x32xf32>
    "tpu.trace_start"() <{level = 10 : i32, message = "hqd,hde->hqe"}> : () -> ()
    %cst_30 = arith.constant dense<0.000000e+00> : vector<4x8x32xf32>
    %63 = tpu.matmul %61, %62, %cst_30 {dimension_numbers = #tpu.dot_dimension_numbers<[2], [1], [1], [2], [0, 0, 0, 1, 1, 2], [0], [0]>} : vector<4x8x8xf32>, vector<4x8x32xf32>, vector<4x8x32xf32> -> vector<4x8x32xf32>
    "tpu.trace_stop"() : () -> ()
    %cst_31 = arith.constant dense<0.000000e+00> : vector<8x32xf32>
    %64 = vector.multi_reduction <add>, %63, %cst_31 [0] : vector<4x8x32xf32> to vector<8x32xf32>
    %c0_32 = arith.constant 0 : index
    %c0_33 = arith.constant 0 : index
    %65 = vector.load %arg11[%c0_32, %c0_33] : memref<1x32xf32, #tpu.memory_space<vmem>>, vector<1x32xf32>
    %66 = vector.broadcast %65 : vector<1x32xf32> to vector<8x32xf32>
    %67 = arith.addf %64, %66 : vector<8x32xf32>
    %68 = arith.addf %67, %1 : vector<8x32xf32>
    %c0_34 = arith.constant 0 : index
    %c0_35 = arith.constant 0 : index
    %69 = vector.load %arg12[%c0_34, %c0_35] : memref<1x32xf32, #tpu.memory_space<vmem>>, vector<1x32xf32>
    %c0_36 = arith.constant 0 : index
    %c0_37 = arith.constant 0 : index
    %70 = vector.load %arg13[%c0_36, %c0_37] : memref<1x32xf32, #tpu.memory_space<vmem>>, vector<1x32xf32>
    %cst_38 = arith.constant dense<0.000000e+00> : vector<8xf32>
    %71 = vector.multi_reduction <add>, %68, %cst_38 [1] : vector<8x32xf32> to vector<8xf32>
    %72 = vector.shape_cast %71 : vector<8xf32> to vector<8x1xf32>
    %cst_39 = arith.constant 3.200000e+01 : f32
    %73 = vector.broadcast %cst_39 : f32 to vector<8x1xf32>
    %74 = arith.divf %72, %73 : vector<8x1xf32>
    %75 = vector.broadcast %74 : vector<8x1xf32> to vector<8x32xf32>
    %76 = arith.subf %68, %75 : vector<8x32xf32>
    %77 = arith.mulf %76, %76 : vector<8x32xf32>
    %cst_40 = arith.constant dense<0.000000e+00> : vector<8xf32>
    %78 = vector.multi_reduction <add>, %77, %cst_40 [1] : vector<8x32xf32> to vector<8xf32>
    %79 = vector.shape_cast %78 : vector<8xf32> to vector<8x1xf32>
    %cst_41 = arith.constant 3.200000e+01 : f32
    %80 = vector.broadcast %cst_41 : f32 to vector<8x1xf32>
    %81 = arith.divf %79, %80 : vector<8x1xf32>
    %82 = vector.broadcast %74 : vector<8x1xf32> to vector<8x32xf32>
    %83 = arith.subf %68, %82 : vector<8x32xf32>
    %cst_42 = arith.constant 9.99999974E-6 : f32
    %84 = vector.broadcast %cst_42 : f32 to vector<8x1xf32>
    %85 = arith.addf %81, %84 : vector<8x1xf32>
    %86 = math.rsqrt %85 : vector<8x1xf32>
    %87 = vector.broadcast %86 : vector<8x1xf32> to vector<8x32xf32>
    %88 = arith.mulf %83, %87 : vector<8x32xf32>
    %89 = vector.broadcast %69 : vector<1x32xf32> to vector<8x32xf32>
    %90 = arith.mulf %88, %89 : vector<8x32xf32>
    %91 = vector.broadcast %70 : vector<1x32xf32> to vector<8x32xf32>
    %92 = arith.addf %90, %91 : vector<8x32xf32>
    %c0_43 = arith.constant 0 : index
    %c0_44 = arith.constant 0 : index
    %93 = vector.load %arg14[%c0_43, %c0_44] : memref<32x32xf32, #tpu.memory_space<vmem>>, vector<32x32xf32>
    %cst_45 = arith.constant dense<0.000000e+00> : vector<8x32xf32>
    %94 = tpu.matmul %92, %93, %cst_45 {dimension_numbers = #tpu.dot_dimension_numbers<[1], [0], [0], [1], [0, 0, 1, 1], [], []>} : vector<8x32xf32>, vector<32x32xf32>, vector<8x32xf32> -> vector<8x32xf32>
    %c0_46 = arith.constant 0 : index
    %c0_47 = arith.constant 0 : index
    %95 = vector.load %arg15[%c0_46, %c0_47] : memref<1x32xf32, #tpu.memory_space<vmem>>, vector<1x32xf32>
    %96 = vector.broadcast %95 : vector<1x32xf32> to vector<8x32xf32>
    %97 = arith.addf %94, %96 : vector<8x32xf32>
    %c0_48 = arith.constant 0 : index
    %c0_49 = arith.constant 0 : index
    %98 = vector.load %arg16[%c0_48, %c0_49] : memref<32x32xf32, #tpu.memory_space<vmem>>, vector<32x32xf32>
    %cst_50 = arith.constant dense<0.000000e+00> : vector<8x32xf32>
    %99 = tpu.matmul %5, %98, %cst_50 {dimension_numbers = #tpu.dot_dimension_numbers<[1], [0], [0], [1], [0, 0, 1, 1], [], []>} : vector<8x32xf32>, vector<32x32xf32>, vector<8x32xf32> -> vector<8x32xf32>
    %c0_51 = arith.constant 0 : index
    %c0_52 = arith.constant 0 : index
    %100 = vector.load %arg17[%c0_51, %c0_52] : memref<1x32xf32, #tpu.memory_space<vmem>>, vector<1x32xf32>
    %101 = vector.broadcast %100 : vector<1x32xf32> to vector<8x32xf32>
    %102 = arith.addf %99, %101 : vector<8x32xf32>
    %c0_53 = arith.constant 0 : index
    %c0_54 = arith.constant 0 : index
    %103 = vector.load %arg18[%c0_53, %c0_54] : memref<32x32xf32, #tpu.memory_space<vmem>>, vector<32x32xf32>
    %cst_55 = arith.constant dense<0.000000e+00> : vector<8x32xf32>
    %104 = tpu.matmul %3, %103, %cst_55 {dimension_numbers = #tpu.dot_dimension_numbers<[1], [0], [0], [1], [0, 0, 1, 1], [], []>} : vector<8x32xf32>, vector<32x32xf32>, vector<8x32xf32> -> vector<8x32xf32>
    %c0_56 = arith.constant 0 : index
    %c0_57 = arith.constant 0 : index
    %105 = vector.load %arg19[%c0_56, %c0_57] : memref<1x32xf32, #tpu.memory_space<vmem>>, vector<1x32xf32>
    %106 = vector.broadcast %105 : vector<1x32xf32> to vector<8x32xf32>
    %107 = arith.addf %104, %106 : vector<8x32xf32>
    %cst_58 = arith.constant 0.176776692 : f32
    %108 = vector.broadcast %cst_58 : f32 to vector<8x32xf32>
    %109 = arith.mulf %97, %108 : vector<8x32xf32>
    %110 = vector.extract_strided_slice %109 {offsets = [0, 0], sizes = [8, 8], strides = [1, 1]} : vector<8x32xf32> to vector<8x8xf32>
    %111 = vector.extract_strided_slice %109 {offsets = [0, 8], sizes = [8, 8], strides = [1, 1]} : vector<8x32xf32> to vector<8x8xf32>
    %112 = vector.extract_strided_slice %109 {offsets = [0, 16], sizes = [8, 8], strides = [1, 1]} : vector<8x32xf32> to vector<8x8xf32>
    %113 = vector.extract_strided_slice %109 {offsets = [0, 24], sizes = [8, 8], strides = [1, 1]} : vector<8x32xf32> to vector<8x8xf32>
    %114 = vector.shape_cast %110 : vector<8x8xf32> to vector<1x8x8xf32>
    %115 = vector.shape_cast %111 : vector<8x8xf32> to vector<1x8x8xf32>
    %116 = vector.shape_cast %112 : vector<8x8xf32> to vector<1x8x8xf32>
    %117 = vector.shape_cast %113 : vector<8x8xf32> to vector<1x8x8xf32>
    %118 = tpu.concatenate %114, %115, %116, %117 in 0 : vector<1x8x8xf32>, vector<1x8x8xf32>, vector<1x8x8xf32>, vector<1x8x8xf32> -> vector<4x8x8xf32>
    %119 = vector.extract_strided_slice %102 {offsets = [0, 0], sizes = [8, 8], strides = [1, 1]} : vector<8x32xf32> to vector<8x8xf32>
    %120 = vector.extract_strided_slice %102 {offsets = [0, 8], sizes = [8, 8], strides = [1, 1]} : vector<8x32xf32> to vector<8x8xf32>
    %121 = vector.extract_strided_slice %102 {offsets = [0, 16], sizes = [8, 8], strides = [1, 1]} : vector<8x32xf32> to vector<8x8xf32>
    %122 = vector.extract_strided_slice %102 {offsets = [0, 24], sizes = [8, 8], strides = [1, 1]} : vector<8x32xf32> to vector<8x8xf32>
    %123 = vector.shape_cast %119 : vector<8x8xf32> to vector<1x8x8xf32>
    %124 = vector.shape_cast %120 : vector<8x8xf32> to vector<1x8x8xf32>
    %125 = vector.shape_cast %121 : vector<8x8xf32> to vector<1x8x8xf32>
    %126 = vector.shape_cast %122 : vector<8x8xf32> to vector<1x8x8xf32>
    %127 = tpu.concatenate %123, %124, %125, %126 in 0 : vector<1x8x8xf32>, vector<1x8x8xf32>, vector<1x8x8xf32>, vector<1x8x8xf32> -> vector<4x8x8xf32>
    %128 = vector.extract_strided_slice %107 {offsets = [0, 0], sizes = [8, 8], strides = [1, 1]} : vector<8x32xf32> to vector<8x8xf32>
    %129 = vector.extract_strided_slice %107 {offsets = [0, 8], sizes = [8, 8], strides = [1, 1]} : vector<8x32xf32> to vector<8x8xf32>
    %130 = vector.extract_strided_slice %107 {offsets = [0, 16], sizes = [8, 8], strides = [1, 1]} : vector<8x32xf32> to vector<8x8xf32>
    %131 = vector.extract_strided_slice %107 {offsets = [0, 24], sizes = [8, 8], strides = [1, 1]} : vector<8x32xf32> to vector<8x8xf32>
    %132 = vector.shape_cast %128 : vector<8x8xf32> to vector<1x8x8xf32>
    %133 = vector.shape_cast %129 : vector<8x8xf32> to vector<1x8x8xf32>
    %134 = vector.shape_cast %130 : vector<8x8xf32> to vector<1x8x8xf32>
    %135 = vector.shape_cast %131 : vector<8x8xf32> to vector<1x8x8xf32>
    %136 = tpu.concatenate %132, %133, %134, %135 in 0 : vector<1x8x8xf32>, vector<1x8x8xf32>, vector<1x8x8xf32>, vector<1x8x8xf32> -> vector<4x8x8xf32>
    "tpu.trace_start"() <{level = 10 : i32, message = "hqd,hkd->hqk"}> : () -> ()
    %cst_59 = arith.constant dense<0.000000e+00> : vector<4x8x8xf32>
    %137 = tpu.matmul %118, %127, %cst_59 {dimension_numbers = #tpu.dot_dimension_numbers<[2], [2], [1], [1], [0, 0, 0, 1, 1, 1], [0], [0]>} : vector<4x8x8xf32>, vector<4x8x8xf32>, vector<4x8x8xf32> -> vector<4x8x8xf32>
    "tpu.trace_stop"() : () -> ()
    %cst_60 = arith.constant dense<0xFF800000> : vector<4x8xf32>
    %138 = vector.multi_reduction <maximumf>, %137, %cst_60 [2] : vector<4x8x8xf32> to vector<4x8xf32>
    %139 = vector.shape_cast %138 : vector<4x8xf32> to vector<4x8x1xf32>
    %140 = vector.broadcast %139 : vector<4x8x1xf32> to vector<4x8x8xf32>
    %141 = arith.subf %137, %140 : vector<4x8x8xf32>
    %142 = math.exp %141 : vector<4x8x8xf32>
    %cst_61 = arith.constant dense<0.000000e+00> : vector<4x8xf32>
    %143 = vector.multi_reduction <add>, %142, %cst_61 [2] : vector<4x8x8xf32> to vector<4x8xf32>
    %144 = vector.shape_cast %143 : vector<4x8xf32> to vector<4x8x1xf32>
    %145 = tpu.reciprocal %144 : vector<4x8x1xf32> -> vector<4x8x1xf32>
    %146 = vector.broadcast %145 : vector<4x8x1xf32> to vector<4x8x8xf32>
    %147 = arith.mulf %142, %146 : vector<4x8x8xf32>
    "tpu.trace_start"() <{level = 10 : i32, message = "hqk,hkd->hqd"}> : () -> ()
    %cst_62 = arith.constant dense<0.000000e+00> : vector<4x8x8xf32>
    %148 = tpu.matmul %147, %136, %cst_62 {dimension_numbers = #tpu.dot_dimension_numbers<[2], [1], [1], [2], [0, 0, 0, 1, 1, 2], [0], [0]>} : vector<4x8x8xf32>, vector<4x8x8xf32>, vector<4x8x8xf32> -> vector<4x8x8xf32>
    "tpu.trace_stop"() : () -> ()
    %c0_63 = arith.constant 0 : index
    %c0_64 = arith.constant 0 : index
    %c0_65 = arith.constant 0 : index
    %149 = vector.load %arg20[%c0_63, %c0_64, %c0_65] : memref<4x8x32xf32, #tpu.memory_space<vmem>>, vector<4x8x32xf32>
    "tpu.trace_start"() <{level = 10 : i32, message = "hqd,hde->hqe"}> : () -> ()
    %cst_66 = arith.constant dense<0.000000e+00> : vector<4x8x32xf32>
    %150 = tpu.matmul %148, %149, %cst_66 {dimension_numbers = #tpu.dot_dimension_numbers<[2], [1], [1], [2], [0, 0, 0, 1, 1, 2], [0], [0]>} : vector<4x8x8xf32>, vector<4x8x32xf32>, vector<4x8x32xf32> -> vector<4x8x32xf32>
    "tpu.trace_stop"() : () -> ()
    %cst_67 = arith.constant dense<0.000000e+00> : vector<8x32xf32>
    %151 = vector.multi_reduction <add>, %150, %cst_67 [0] : vector<4x8x32xf32> to vector<8x32xf32>
    %c0_68 = arith.constant 0 : index
    %c0_69 = arith.constant 0 : index
    %152 = vector.load %arg21[%c0_68, %c0_69] : memref<1x32xf32, #tpu.memory_space<vmem>>, vector<1x32xf32>
    %153 = vector.broadcast %152 : vector<1x32xf32> to vector<8x32xf32>
    %154 = arith.addf %151, %153 : vector<8x32xf32>
    %155 = arith.addf %154, %92 : vector<8x32xf32>
    %c0_70 = arith.constant 0 : index
    %c0_71 = arith.constant 0 : index
    %156 = vector.load %arg22[%c0_70, %c0_71] : memref<1x32xf32, #tpu.memory_space<vmem>>, vector<1x32xf32>
    %c0_72 = arith.constant 0 : index
    %c0_73 = arith.constant 0 : index
    %157 = vector.load %arg23[%c0_72, %c0_73] : memref<1x32xf32, #tpu.memory_space<vmem>>, vector<1x32xf32>
    %cst_74 = arith.constant dense<0.000000e+00> : vector<8xf32>
    %158 = vector.multi_reduction <add>, %155, %cst_74 [1] : vector<8x32xf32> to vector<8xf32>
    %159 = vector.shape_cast %158 : vector<8xf32> to vector<8x1xf32>
    %cst_75 = arith.constant 3.200000e+01 : f32
    %160 = vector.broadcast %cst_75 : f32 to vector<8x1xf32>
    %161 = arith.divf %159, %160 : vector<8x1xf32>
    %162 = vector.broadcast %161 : vector<8x1xf32> to vector<8x32xf32>
    %163 = arith.subf %155, %162 : vector<8x32xf32>
    %164 = arith.mulf %163, %163 : vector<8x32xf32>
    %cst_76 = arith.constant dense<0.000000e+00> : vector<8xf32>
    %165 = vector.multi_reduction <add>, %164, %cst_76 [1] : vector<8x32xf32> to vector<8xf32>
    %166 = vector.shape_cast %165 : vector<8xf32> to vector<8x1xf32>
    %cst_77 = arith.constant 3.200000e+01 : f32
    %167 = vector.broadcast %cst_77 : f32 to vector<8x1xf32>
    %168 = arith.divf %166, %167 : vector<8x1xf32>
    %169 = vector.broadcast %161 : vector<8x1xf32> to vector<8x32xf32>
    %170 = arith.subf %155, %169 : vector<8x32xf32>
    %cst_78 = arith.constant 9.99999974E-6 : f32
    %171 = vector.broadcast %cst_78 : f32 to vector<8x1xf32>
    %172 = arith.addf %168, %171 : vector<8x1xf32>
    %173 = math.rsqrt %172 : vector<8x1xf32>
    %174 = vector.broadcast %173 : vector<8x1xf32> to vector<8x32xf32>
    %175 = arith.mulf %170, %174 : vector<8x32xf32>
    %176 = vector.broadcast %156 : vector<1x32xf32> to vector<8x32xf32>
    %177 = arith.mulf %175, %176 : vector<8x32xf32>
    %178 = vector.broadcast %157 : vector<1x32xf32> to vector<8x32xf32>
    %179 = arith.addf %177, %178 : vector<8x32xf32>
    %c0_79 = arith.constant 0 : index
    %c0_80 = arith.constant 0 : index
    %180 = vector.load %arg24[%c0_79, %c0_80] : memref<32x128xf32, #tpu.memory_space<vmem>>, vector<32x128xf32>
    %cst_81 = arith.constant dense<0.000000e+00> : vector<8x128xf32>
    %181 = tpu.matmul %179, %180, %cst_81 {dimension_numbers = #tpu.dot_dimension_numbers<[1], [0], [0], [1], [0, 0, 1, 1], [], []>} : vector<8x32xf32>, vector<32x128xf32>, vector<8x128xf32> -> vector<8x128xf32>
    %c0_82 = arith.constant 0 : index
    %c0_83 = arith.constant 0 : index
    %182 = vector.load %arg25[%c0_82, %c0_83] : memref<1x128xf32, #tpu.memory_space<vmem>>, vector<1x128xf32>
    %183 = vector.broadcast %182 : vector<1x128xf32> to vector<8x128xf32>
    %184 = arith.addf %181, %183 : vector<8x128xf32>
    %cst_84 = arith.constant 0.000000e+00 : f32
    %185 = vector.broadcast %cst_84 : f32 to vector<8x128xf32>
    %186 = arith.maximumf %184, %185 : vector<8x128xf32>
    %c0_85 = arith.constant 0 : index
    %c0_86 = arith.constant 0 : index
    %187 = vector.load %arg26[%c0_85, %c0_86] : memref<128x32xf32, #tpu.memory_space<vmem>>, vector<128x32xf32>
    %cst_87 = arith.constant dense<0.000000e+00> : vector<8x32xf32>
    %188 = tpu.matmul %186, %187, %cst_87 {dimension_numbers = #tpu.dot_dimension_numbers<[1], [0], [0], [1], [0, 0, 1, 1], [], []>} : vector<8x128xf32>, vector<128x32xf32>, vector<8x32xf32> -> vector<8x32xf32>
    %c0_88 = arith.constant 0 : index
    %c0_89 = arith.constant 0 : index
    %189 = vector.load %arg27[%c0_88, %c0_89] : memref<1x32xf32, #tpu.memory_space<vmem>>, vector<1x32xf32>
    %190 = vector.broadcast %189 : vector<1x32xf32> to vector<8x32xf32>
    %191 = arith.addf %188, %190 : vector<8x32xf32>
    %192 = arith.addf %191, %179 : vector<8x32xf32>
    %c0_90 = arith.constant 0 : index
    %c0_91 = arith.constant 0 : index
    %193 = vector.load %arg28[%c0_90, %c0_91] : memref<1x32xf32, #tpu.memory_space<vmem>>, vector<1x32xf32>
    %c0_92 = arith.constant 0 : index
    %c0_93 = arith.constant 0 : index
    %194 = vector.load %arg29[%c0_92, %c0_93] : memref<1x32xf32, #tpu.memory_space<vmem>>, vector<1x32xf32>
    %cst_94 = arith.constant dense<0.000000e+00> : vector<8xf32>
    %195 = vector.multi_reduction <add>, %192, %cst_94 [1] : vector<8x32xf32> to vector<8xf32>
    %196 = vector.shape_cast %195 : vector<8xf32> to vector<8x1xf32>
    %cst_95 = arith.constant 3.200000e+01 : f32
    %197 = vector.broadcast %cst_95 : f32 to vector<8x1xf32>
    %198 = arith.divf %196, %197 : vector<8x1xf32>
    %199 = vector.broadcast %198 : vector<8x1xf32> to vector<8x32xf32>
    %200 = arith.subf %192, %199 : vector<8x32xf32>
    %201 = arith.mulf %200, %200 : vector<8x32xf32>
    %cst_96 = arith.constant dense<0.000000e+00> : vector<8xf32>
    %202 = vector.multi_reduction <add>, %201, %cst_96 [1] : vector<8x32xf32> to vector<8xf32>
    %203 = vector.shape_cast %202 : vector<8xf32> to vector<8x1xf32>
    %cst_97 = arith.constant 3.200000e+01 : f32
    %204 = vector.broadcast %cst_97 : f32 to vector<8x1xf32>
    %205 = arith.divf %203, %204 : vector<8x1xf32>
    %206 = vector.broadcast %198 : vector<8x1xf32> to vector<8x32xf32>
    %207 = arith.subf %192, %206 : vector<8x32xf32>
    %cst_98 = arith.constant 9.99999974E-6 : f32
    %208 = vector.broadcast %cst_98 : f32 to vector<8x1xf32>
    %209 = arith.addf %205, %208 : vector<8x1xf32>
    %210 = math.rsqrt %209 : vector<8x1xf32>
    %211 = vector.broadcast %210 : vector<8x1xf32> to vector<8x32xf32>
    %212 = arith.mulf %207, %211 : vector<8x32xf32>
    %213 = vector.broadcast %193 : vector<1x32xf32> to vector<8x32xf32>
    %214 = arith.mulf %212, %213 : vector<8x32xf32>
    %215 = vector.broadcast %194 : vector<1x32xf32> to vector<8x32xf32>
    %216 = arith.addf %214, %215 : vector<8x32xf32>
    %217 = vector.shape_cast %216 : vector<8x32xf32> to vector<1x8x32xf32>
    %c0_99 = arith.constant 0 : index
    %c0_100 = arith.constant 0 : index
    %c0_101 = arith.constant 0 : index
    %218 = vector.load %arg30[%c0_99, %c0_100, %c0_101] : memref<1x8x32xf32, #tpu.memory_space<vmem>>, vector<1x8x32xf32>
    tpu.vector_store %arg30[%c0_99, %c0_100, %c0_101], %217 {strides = array<i32>} : memref<1x8x32xf32, #tpu.memory_space<vmem>>, vector<1x8x32xf32>,
    return
  }
  func.func @transform_0(%arg0: i32) -> (i32, i32, i32) {
    %c0_i32 = arith.constant 0 : i32
    %c0_i32_0 = arith.constant 0 : i32
    %c0_i32_1 = arith.constant 0 : i32
    return %arg0, %c0_i32, %c0_i32_0 : i32, i32, i32
  }
  func.func @transform_1(%arg0: i32) -> (i32, i32, i32) {
    %c0_i32 = arith.constant 0 : i32
    %c0_i32_0 = arith.constant 0 : i32
    %c0_i32_1 = arith.constant 0 : i32
    return %arg0, %c0_i32, %c0_i32_0 : i32, i32, i32
  }
  func.func @transform_2(%arg0: i32) -> (i32, i32, i32) {
    %c0_i32 = arith.constant 0 : i32
    %c0_i32_0 = arith.constant 0 : i32
    %c0_i32_1 = arith.constant 0 : i32
    return %arg0, %c0_i32, %c0_i32_0 : i32, i32, i32
  }
  func.func @transform_3(%arg0: i32) -> (i32, i32) {
    %c0_i32 = arith.constant 0 : i32
    %c0_i32_0 = arith.constant 0 : i32
    %c0_i32_1 = arith.constant 0 : i32
    return %c0_i32, %c0_i32_0 : i32, i32
  }
  func.func @transform_4(%arg0: i32) -> (i32, i32) {
    %c0_i32 = arith.constant 0 : i32
    %c0_i32_0 = arith.constant 0 : i32
    %c0_i32_1 = arith.constant 0 : i32
    return %c0_i32, %c0_i32_0 : i32, i32
  }
  func.func @transform_5(%arg0: i32) -> (i32, i32) {
    %c0_i32 = arith.constant 0 : i32
    %c0_i32_0 = arith.constant 0 : i32
    %c0_i32_1 = arith.constant 0 : i32
    return %c0_i32, %c0_i32_0 : i32, i32
  }
  func.func @transform_6(%arg0: i32) -> (i32, i32) {
    %c0_i32 = arith.constant 0 : i32
    %c0_i32_0 = arith.constant 0 : i32
    %c0_i32_1 = arith.constant 0 : i32
    return %c0_i32, %c0_i32_0 : i32, i32
  }
  func.func @transform_7(%arg0: i32) -> (i32, i32) {
    %c0_i32 = arith.constant 0 : i32
    %c0_i32_0 = arith.constant 0 : i32
    %c0_i32_1 = arith.constant 0 : i32
    return %c0_i32, %c0_i32_0 : i32, i32
  }
  func.func @transform_8(%arg0: i32) -> (i32, i32) {
    %c0_i32 = arith.constant 0 : i32
    %c0_i32_0 = arith.constant 0 : i32
    %c0_i32_1 = arith.constant 0 : i32
    return %c0_i32, %c0_i32_0 : i32, i32
  }
  func.func @transform_9(%arg0: i32) -> (i32, i32, i32) {
    %c0_i32 = arith.constant 0 : i32
    %c0_i32_0 = arith.constant 0 : i32
    %c0_i32_1 = arith.constant 0 : i32
    %c0_i32_2 = arith.constant 0 : i32
    return %c0_i32, %c0_i32_0, %c0_i32_1 : i32, i32, i32
  }
  func.func @transform_10(%arg0: i32) -> (i32, i32) {
    %c0_i32 = arith.constant 0 : i32
    %c0_i32_0 = arith.constant 0 : i32
    %c0_i32_1 = arith.constant 0 : i32
    return %c0_i32, %c0_i32_0 : i32, i32
  }
  func.func @transform_11(%arg0: i32) -> (i32, i32) {
    %c0_i32 = arith.constant 0 : i32
    %c0_i32_0 = arith.constant 0 : i32
    %c0_i32_1 = arith.constant 0 : i32
    return %c0_i32, %c0_i32_0 : i32, i32
  }
  func.func @transform_12(%arg0: i32) -> (i32, i32) {
    %c0_i32 = arith.constant 0 : i32
    %c0_i32_0 = arith.constant 0 : i32
    %c0_i32_1 = arith.constant 0 : i32
    return %c0_i32, %c0_i32_0 : i32, i32
  }
  func.func @transform_13(%arg0: i32) -> (i32, i32) {
    %c0_i32 = arith.constant 0 : i32
    %c0_i32_0 = arith.constant 0 : i32
    %c0_i32_1 = arith.constant 0 : i32
    return %c0_i32, %c0_i32_0 : i32, i32
  }
  func.func @transform_14(%arg0: i32) -> (i32, i32) {
    %c0_i32 = arith.constant 0 : i32
    %c0_i32_0 = arith.constant 0 : i32
    %c0_i32_1 = arith.constant 0 : i32
    return %c0_i32, %c0_i32_0 : i32, i32
  }
  func.func @transform_15(%arg0: i32) -> (i32, i32) {
    %c0_i32 = arith.constant 0 : i32
    %c0_i32_0 = arith.constant 0 : i32
    %c0_i32_1 = arith.constant 0 : i32
    return %c0_i32, %c0_i32_0 : i32, i32
  }
  func.func @transform_16(%arg0: i32) -> (i32, i32) {
    %c0_i32 = arith.constant 0 : i32
    %c0_i32_0 = arith.constant 0 : i32
    %c0_i32_1 = arith.constant 0 : i32
    return %c0_i32, %c0_i32_0 : i32, i32
  }
  func.func @transform_17(%arg0: i32) -> (i32, i32) {
    %c0_i32 = arith.constant 0 : i32
    %c0_i32_0 = arith.constant 0 : i32
    %c0_i32_1 = arith.constant 0 : i32
    return %c0_i32, %c0_i32_0 : i32, i32
  }
  func.func @transform_18(%arg0: i32) -> (i32, i32) {
    %c0_i32 = arith.constant 0 : i32
    %c0_i32_0 = arith.constant 0 : i32
    %c0_i32_1 = arith.constant 0 : i32
    return %c0_i32, %c0_i32_0 : i32, i32
  }
  func.func @transform_19(%arg0: i32) -> (i32, i32, i32) {
    %c0_i32 = arith.constant 0 : i32
    %c0_i32_0 = arith.constant 0 : i32
    %c0_i32_1 = arith.constant 0 : i32
    %c0_i32_2 = arith.constant 0 : i32
    return %c0_i32, %c0_i32_0, %c0_i32_1 : i32, i32, i32
  }
  func.func @transform_20(%arg0: i32) -> (i32, i32) {
    %c0_i32 = arith.constant 0 : i32
    %c0_i32_0 = arith.constant 0 : i32
    %c0_i32_1 = arith.constant 0 : i32
    return %c0_i32, %c0_i32_0 : i32, i32
  }
  func.func @transform_21(%arg0: i32) -> (i32, i32) {
    %c0_i32 = arith.constant 0 : i32
    %c0_i32_0 = arith.constant 0 : i32
    %c0_i32_1 = arith.constant 0 : i32
    return %c0_i32, %c0_i32_0 : i32, i32
  }
  func.func @transform_22(%arg0: i32) -> (i32, i32) {
    %c0_i32 = arith.constant 0 : i32
    %c0_i32_0 = arith.constant 0 : i32
    %c0_i32_1 = arith.constant 0 : i32
    return %c0_i32, %c0_i32_0 : i32, i32
  }
  func.func @transform_23(%arg0: i32) -> (i32, i32) {
    %c0_i32 = arith.constant 0 : i32
    %c0_i32_0 = arith.constant 0 : i32
    %c0_i32_1 = arith.constant 0 : i32
    return %c0_i32, %c0_i32_0 : i32, i32
  }
  func.func @transform_24(%arg0: i32) -> (i32, i32) {
    %c0_i32 = arith.constant 0 : i32
    %c0_i32_0 = arith.constant 0 : i32
    %c0_i32_1 = arith.constant 0 : i32
    return %c0_i32, %c0_i32_0 : i32, i32
  }
  func.func @transform_25(%arg0: i32) -> (i32, i32) {
    %c0_i32 = arith.constant 0 : i32
    %c0_i32_0 = arith.constant 0 : i32
    %c0_i32_1 = arith.constant 0 : i32
    return %c0_i32, %c0_i32_0 : i32, i32
  }
  func.func @transform_26(%arg0: i32) -> (i32, i32) {
    %c0_i32 = arith.constant 0 : i32
    %c0_i32_0 = arith.constant 0 : i32
    %c0_i32_1 = arith.constant 0 : i32
    return %c0_i32, %c0_i32_0 : i32, i32
  }
  func.func @transform_27(%arg0: i32) -> (i32, i32) {
    %c0_i32 = arith.constant 0 : i32
    %c0_i32_0 = arith.constant 0 : i32
    %c0_i32_1 = arith.constant 0 : i32
    return %c0_i32, %c0_i32_0 : i32, i32
  }
  func.func @transform_28(%arg0: i32) -> (i32, i32) {
    %c0_i32 = arith.constant 0 : i32
    %c0_i32_0 = arith.constant 0 : i32
    %c0_i32_1 = arith.constant 0 : i32
    return %c0_i32, %c0_i32_0 : i32, i32
  }
  func.func @transform_29(%arg0: i32) -> (i32, i32, i32) {
    %c0_i32 = arith.constant 0 : i32
    %c0_i32_0 = arith.constant 0 : i32
    %c0_i32_1 = arith.constant 0 : i32
    return %arg0, %c0_i32, %c0_i32_0 : i32, i32, i32
  }
}

module attributes {stable_mosaic.version = 11 : i64} {
  func.func @decoder_block_kernel(%arg0: i32, %arg1: memref<1x8x32xf32, #tpu.memory_space<vmem>>, %arg2: memref<1x8x32xf32, #tpu.memory_space<vmem>>, %arg3: memref<1x8x32xf32, #tpu.memory_space<vmem>>, %arg4: memref<32x32xf32, #tpu.memory_space<vmem>>, %arg5: memref<1x32xf32, #tpu.memory_space<vmem>>, %arg6: memref<32x32xf32, #tpu.memory_space<vmem>>, %arg7: memref<1x32xf32, #tpu.memory_space<vmem>>, %arg8: memref<32x32xf32, #tpu.memory_space<vmem>>, %arg9: memref<1x32xf32, #tpu.memory_space<vmem>>, %arg10: memref<4x8x32xf32, #tpu.memory_space<vmem>>, %arg11: memref<1x32xf32, #tpu.memory_space<vmem>>, %arg12: memref<1x32xf32, #tpu.memory_space<vmem>>, %arg13: memref<1x32xf32, #tpu.memory_space<vmem>>, %arg14: memref<32x32xf32, #tpu.memory_space<vmem>>, %arg15: memref<1x32xf32, #tpu.memory_space<vmem>>, %arg16: memref<32x32xf32, #tpu.memory_space<vmem>>, %arg17: memref<1x32xf32, #tpu.memory_space<vmem>>, %arg18: memref<32x32xf32, #tpu.memory_space<vmem>>, %arg19: memref<1x32xf32, #tpu.memory_space<vmem>>, %arg20: memref<4x8x32xf32, #tpu.memory_space<vmem>>, %arg21: memref<1x32xf32, #tpu.memory_space<vmem>>, %arg22: memref<1x32xf32, #tpu.memory_space<vmem>>, %arg23: memref<1x32xf32, #tpu.memory_space<vmem>>, %arg24: memref<32x128xf32, #tpu.memory_space<vmem>>, %arg25: memref<1x128xf32, #tpu.memory_space<vmem>>, %arg26: memref<128x32xf32, #tpu.memory_space<vmem>>, %arg27: memref<1x32xf32, #tpu.memory_space<vmem>>, %arg28: memref<1x32xf32, #tpu.memory_space<vmem>>, %arg29: memref<1x32xf32, #tpu.memory_space<vmem>>, %arg30: memref<1x8x32xf32, #tpu.memory_space<vmem>>) attributes {dimension_semantics = [#tpu.dimension_semantics<parallel>], iteration_bounds = array<i64: 2>, scalar_prefetch = 0 : i64, scratch_operands = 0 : i64, tpu.core_type = #tpu.core_type<tc>, window_params = [{transform_indices = @transform_0, window_bounds = array<i64: 1, 8, 32>}, {transform_indices = @transform_1, window_bounds = array<i64: 1, 8, 32>}, {transform_indices = @transform_2, window_bounds = array<i64: 1, 8, 32>}, {pipeline_mode = #tpu.pipeline_mode<synchronous>, transform_indices = @transform_3, window_bounds = array<i64: 32, 32>}, {pipeline_mode = #tpu.pipeline_mode<synchronous>, transform_indices = @transform_4, window_bounds = array<i64: 1, 32>}, {pipeline_mode = #tpu.pipeline_mode<synchronous>, transform_indices = @transform_5, window_bounds = array<i64: 32, 32>}, {pipeline_mode = #tpu.pipeline_mode<synchronous>, transform_indices = @transform_6, window_bounds = array<i64: 1, 32>}, {pipeline_mode = #tpu.pipeline_mode<synchronous>, transform_indices = @transform_7, window_bounds = array<i64: 32, 32>}, {pipeline_mode = #tpu.pipeline_mode<synchronous>, transform_indices = @transform_8, window_bounds = array<i64: 1, 32>}, {pipeline_mode = #tpu.pipeline_mode<synchronous>, transform_indices = @transform_9, window_bounds = array<i64: 4, 8, 32>}, {pipeline_mode = #tpu.pipeline_mode<synchronous>, transform_indices = @transform_10, window_bounds = array<i64: 1, 32>}, {pipeline_mode = #tpu.pipeline_mode<synchronous>, transform_indices = @transform_11, window_bounds = array<i64: 1, 32>}, {pipeline_mode = #tpu.pipeline_mode<synchronous>, transform_indices = @transform_12, window_bounds = array<i64: 1, 32>}, {pipeline_mode = #tpu.pipeline_mode<synchronous>, transform_indices = @transform_13, window_bounds = array<i64: 32, 32>}, {pipeline_mode = #tpu.pipeline_mode<synchronous>, transform_indices = @transform_14, window_bounds = array<i64: 1, 32>}, {pipeline_mode = #tpu.pipeline_mode<synchronous>, transform_indices = @transform_15, window_bounds = array<i64: 32, 32>}, {pipeline_mode = #tpu.pipeline_mode<synchronous>, transform_indices = @transform_16, window_bounds = array<i64: 1, 32>}, {pipeline_mode = #tpu.pipeline_mode<synchronous>, transform_indices = @transform_17, window_bounds = array<i64: 32, 32>}, {pipeline_mode = #tpu.pipeline_mode<synchronous>, transform_indices = @transform_18, window_bounds = array<i64: 1, 32>}, {pipeline_mode = #tpu.pipeline_mode<synchronous>, transform_indices = @transform_19, window_bounds = array<i64: 4, 8, 32>}, {pipeline_mode = #tpu.pipeline_mode<synchronous>, transform_indices = @transform_20, window_bounds = array<i64: 1, 32>}, {pipeline_mode = #tpu.pipeline_mode<synchronous>, transform_indices = @transform_21, window_bounds = array<i64: 1, 32>}, {pipeline_mode = #tpu.pipeline_mode<synchronous>, transform_indices = @transform_22, window_bounds = array<i64: 1, 32>}, {pipeline_mode = #tpu.pipeline_mode<synchronous>, transform_indices = @transform_23, window_bounds = array<i64: 32, 128>}, {pipeline_mode = #tpu.pipeline_mode<synchronous>, transform_indices = @transform_24, window_bounds = array<i64: 1, 128>}, {pipeline_mode = #tpu.pipeline_mode<synchronous>, transform_indices = @transform_25, window_bounds = array<i64: 128, 32>}, {pipeline_mode = #tpu.pipeline_mode<synchronous>, transform_indices = @transform_26, window_bounds = array<i64: 1, 32>}, {pipeline_mode = #tpu.pipeline_mode<synchronous>, transform_indices = @transform_27, window_bounds = array<i64: 1, 32>}, {pipeline_mode = #tpu.pipeline_mode<synchronous>, transform_indices = @transform_28, window_bounds = array<i64: 1, 32>}, {transform_indices = @transform_29, window_bounds = array<i64: 1, 8, 32>}]} {
    %c0 = arith.constant 0 : index
    %c0_0 = arith.constant 0 : index
    %c0_1 = arith.constant 0 : index
    %0 = vector.load %arg1[%c0, %c0_0, %c0_1] : memref<1x8x32xf32, #tpu.memory_space<vmem>>, vector<1x8x32xf32>
    %1 = vector.shape_cast %0 : vector<1x8x32xf32> to vector<8x32xf32>
    %c0_2 = arith.constant 0 : index
    %c0_3 = arith.constant 0 : index
    %c0_4 = arith.constant 0 : index
    %2 = vector.load %arg2[%c0_2, %c0_3, %c0_4] : memref<1x8x32xf32, #tpu.memory_space<vmem>>, vector<1x8x32xf32>
    %3 = vector.shape_cast %2 : vector<1x8x32xf32> to vector<8x32xf32>
    %c0_5 = arith.constant 0 : index
    %c0_6 = arith.constant 0 : index
    %c0_7 = arith.constant 0 : index
    %4 = vector.load %arg3[%c0_5, %c0_6, %c0_7] : memref<1x8x32xf32, #tpu.memory_space<vmem>>, vector<1x8x32xf32>
    %5 = vector.shape_cast %4 : vector<1x8x32xf32> to vector<8x32xf32>
    %c0_8 = arith.constant 0 : index
    %c0_9 = arith.constant 0 : index
    %6 = vector.load %arg4[%c0_8, %c0_9] : memref<32x32xf32, #tpu.memory_space<vmem>>, vector<32x32xf32>
    %cst = arith.constant dense<0.000000e+00> : vector<8x32xf32>
    %7 = tpu.matmul %1, %6, %cst {dimension_numbers = #tpu.dot_dimension_numbers<[1], [0], [0], [1], [0, 0, 1, 1], [], []>} : vector<8x32xf32>, vector<32x32xf32>, vector<8x32xf32> -> vector<8x32xf32>
    %c0_10 = arith.constant 0 : index
    %c0_11 = arith.constant 0 : index
    %8 = vector.load %arg5[%c0_10, %c0_11] : memref<1x32xf32, #tpu.memory_space<vmem>>, vector<1x32xf32>
    %9 = vector.broadcast %8 : vector<1x32xf32> to vector<8x32xf32>
    %10 = arith.addf %7, %9 : vector<8x32xf32>
    %c0_12 = arith.constant 0 : index
    %c0_13 = arith.constant 0 : index
    %11 = vector.load %arg6[%c0_12, %c0_13] : memref<32x32xf32, #tpu.memory_space<vmem>>, vector<32x32xf32>
    %cst_14 = arith.constant dense<0.000000e+00> : vector<8x32xf32>
    %12 = tpu.matmul %1, %11, %cst_14 {dimension_numbers = #tpu.dot_dimension_numbers<[1], [0], [0], [1], [0, 0, 1, 1], [], []>} : vector<8x32xf32>, vector<32x32xf32>, vector<8x32xf32> -> vector<8x32xf32>
    %c0_15 = arith.constant 0 : index
    %c0_16 = arith.constant 0 : index
    %13 = vector.load %arg7[%c0_15, %c0_16] : memref<1x32xf32, #tpu.memory_space<vmem>>, vector<1x32xf32>
    %14 = vector.broadcast %13 : vector<1x32xf32> to vector<8x32xf32>
    %15 = arith.addf %12, %14 : vector<8x32xf32>
    %c0_17 = arith.constant 0 : index
    %c0_18 = arith.constant 0 : index
    %16 = vector.load %arg8[%c0_17, %c0_18] : memref<32x32xf32, #tpu.memory_space<vmem>>, vector<32x32xf32>
    %cst_19 = arith.constant dense<0.000000e+00> : vector<8x32xf32>
    %17 = tpu.matmul %1, %16, %cst_19 {dimension_numbers = #tpu.dot_dimension_numbers<[1], [0], [0], [1], [0, 0, 1, 1], [], []>} : vector<8x32xf32>, vector<32x32xf32>, vector<8x32xf32> -> vector<8x32xf32>
    %c0_20 = arith.constant 0 : index
    %c0_21 = arith.constant 0 : index
    %18 = vector.load %arg9[%c0_20, %c0_21] : memref<1x32xf32, #tpu.memory_space<vmem>>, vector<1x32xf32>
    %19 = vector.broadcast %18 : vector<1x32xf32> to vector<8x32xf32>
    %20 = arith.addf %17, %19 : vector<8x32xf32>
    %cst_22 = arith.constant 0.176776692 : f32
    %21 = vector.broadcast %cst_22 : f32 to vector<8x32xf32>
    %22 = arith.mulf %10, %21 : vector<8x32xf32>
    %23 = vector.extract_strided_slice %22 {offsets = [0, 0], sizes = [8, 8], strides = [1, 1]} : vector<8x32xf32> to vector<8x8xf32>
    %24 = vector.extract_strided_slice %22 {offsets = [0, 8], sizes = [8, 8], strides = [1, 1]} : vector<8x32xf32> to vector<8x8xf32>
    %25 = vector.extract_strided_slice %22 {offsets = [0, 16], sizes = [8, 8], strides = [1, 1]} : vector<8x32xf32> to vector<8x8xf32>
    %26 = vector.extract_strided_slice %22 {offsets = [0, 24], sizes = [8, 8], strides = [1, 1]} : vector<8x32xf32> to vector<8x8xf32>
    %27 = vector.shape_cast %23 : vector<8x8xf32> to vector<1x8x8xf32>
    %28 = vector.shape_cast %24 : vector<8x8xf32> to vector<1x8x8xf32>
    %29 = vector.shape_cast %25 : vector<8x8xf32> to vector<1x8x8xf32>
    %30 = vector.shape_cast %26 : vector<8x8xf32> to vector<1x8x8xf32>
    %31 = tpu.concatenate %27, %28, %29, %30 in 0 : vector<1x8x8xf32>, vector<1x8x8xf32>, vector<1x8x8xf32>, vector<1x8x8xf32> -> vector<4x8x8xf32>
    %32 = vector.extract_strided_slice %15 {offsets = [0, 0], sizes = [8, 8], strides = [1, 1]} : vector<8x32xf32> to vector<8x8xf32>
    %33 = vector.extract_strided_slice %15 {offsets = [0, 8], sizes = [8, 8], strides = [1, 1]} : vector<8x32xf32> to vector<8x8xf32>
    %34 = vector.extract_strided_slice %15 {offsets = [0, 16], sizes = [8, 8], strides = [1, 1]} : vector<8x32xf32> to vector<8x8xf32>
    %35 = vector.extract_strided_slice %15 {offsets = [0, 24], sizes = [8, 8], strides = [1, 1]} : vector<8x32xf32> to vector<8x8xf32>
    %36 = vector.shape_cast %32 : vector<8x8xf32> to vector<1x8x8xf32>
    %37 = vector.shape_cast %33 : vector<8x8xf32> to vector<1x8x8xf32>
    %38 = vector.shape_cast %34 : vector<8x8xf32> to vector<1x8x8xf32>
    %39 = vector.shape_cast %35 : vector<8x8xf32> to vector<1x8x8xf32>
    %40 = tpu.concatenate %36, %37, %38, %39 in 0 : vector<1x8x8xf32>, vector<1x8x8xf32>, vector<1x8x8xf32>, vector<1x8x8xf32> -> vector<4x8x8xf32>
    %41 = vector.extract_strided_slice %20 {offsets = [0, 0], sizes = [8, 8], strides = [1, 1]} : vector<8x32xf32> to vector<8x8xf32>
    %42 = vector.extract_strided_slice %20 {offsets = [0, 8], sizes = [8, 8], strides = [1, 1]} : vector<8x32xf32> to vector<8x8xf32>
    %43 = vector.extract_strided_slice %20 {offsets = [0, 16], sizes = [8, 8], strides = [1, 1]} : vector<8x32xf32> to vector<8x8xf32>
    %44 = vector.extract_strided_slice %20 {offsets = [0, 24], sizes = [8, 8], strides = [1, 1]} : vector<8x32xf32> to vector<8x8xf32>
    %45 = vector.shape_cast %41 : vector<8x8xf32> to vector<1x8x8xf32>
    %46 = vector.shape_cast %42 : vector<8x8xf32> to vector<1x8x8xf32>
    %47 = vector.shape_cast %43 : vector<8x8xf32> to vector<1x8x8xf32>
    %48 = vector.shape_cast %44 : vector<8x8xf32> to vector<1x8x8xf32>
    %49 = tpu.concatenate %45, %46, %47, %48 in 0 : vector<1x8x8xf32>, vector<1x8x8xf32>, vector<1x8x8xf32>, vector<1x8x8xf32> -> vector<4x8x8xf32>
    "tpu.trace_start"() <{level = 10 : i32, message = "hqd,hkd->hqk"}> : () -> ()
    %cst_23 = arith.constant dense<0.000000e+00> : vector<4x8x8xf32>
    %50 = tpu.matmul %31, %40, %cst_23 {dimension_numbers = #tpu.dot_dimension_numbers<[2], [2], [1], [1], [0, 0, 0, 1, 1, 1], [0], [0]>} : vector<4x8x8xf32>, vector<4x8x8xf32>, vector<4x8x8xf32> -> vector<4x8x8xf32>
    "tpu.trace_stop"() : () -> ()
    %cst_24 = arith.constant dense<0xFF800000> : vector<4x8xf32>
    %51 = vector.multi_reduction <maximumf>, %50, %cst_24 [2] : vector<4x8x8xf32> to vector<4x8xf32>
    %52 = vector.shape_cast %51 : vector<4x8xf32> to vector<4x8x1xf32>
    %53 = vector.broadcast %52 : vector<4x8x1xf32> to vector<4x8x8xf32>
    %54 = arith.subf %50, %53 : vector<4x8x8xf32>
    %55 = math.exp %54 : vector<4x8x8xf32>
    %cst_25 = arith.constant dense<0.000000e+00> : vector<4x8xf32>
    %56 = vector.multi_reduction <add>, %55, %cst_25 [2] : vector<4x8x8xf32> to vector<4x8xf32>
    %57 = vector.shape_cast %56 : vector<4x8xf32> to vector<4x8x1xf32>
    %58 = tpu.reciprocal %57 : vector<4x8x1xf32> -> vector<4x8x1xf32>
    %59 = vector.broadcast %58 : vector<4x8x1xf32> to vector<4x8x8xf32>
    %60 = arith.mulf %55, %59 : vector<4x8x8xf32>
    "tpu.trace_start"() <{level = 10 : i32, message = "hqk,hkd->hqd"}> : () -> ()
    %cst_26 = arith.constant dense<0.000000e+00> : vector<4x8x8xf32>
    %61 = tpu.matmul %60, %49, %cst_26 {dimension_numbers = #tpu.dot_dimension_numbers<[2], [1], [1], [2], [0, 0, 0, 1, 1, 2], [0], [0]>} : vector<4x8x8xf32>, vector<4x8x8xf32>, vector<4x8x8xf32> -> vector<4x8x8xf32>
    "tpu.trace_stop"() : () -> ()
    %c0_27 = arith.constant 0 : index
    %c0_28 = arith.constant 0 : index
    %c0_29 = arith.constant 0 : index
    %62 = vector.load %arg10[%c0_27, %c0_28, %c0_29] : memref<4x8x32xf32, #tpu.memory_space<vmem>>, vector<4x8x32xf32>
    "tpu.trace_start"() <{level = 10 : i32, message = "hqd,hde->hqe"}> : () -> ()
    %cst_30 = arith.constant dense<0.000000e+00> : vector<4x8x32xf32>
    %63 = tpu.matmul %61, %62, %cst_30 {dimension_numbers = #tpu.dot_dimension_numbers<[2], [1], [1], [2], [0, 0, 0, 1, 1, 2], [0], [0]>} : vector<4x8x8xf32>, vector<4x8x32xf32>, vector<4x8x32xf32> -> vector<4x8x32xf32>
    "tpu.trace_stop"() : () -> ()
    %cst_31 = arith.constant dense<0.000000e+00> : vector<8x32xf32>
    %64 = vector.multi_reduction <add>, %63, %cst_31 [0] : vector<4x8x32xf32> to vector<8x32xf32>
    %c0_32 = arith.constant 0 : index
    %c0_33 = arith.constant 0 : index
    %65 = vector.load %arg11[%c0_32, %c0_33] : memref<1x32xf32, #tpu.memory_space<vmem>>, vector<1x32xf32>
    %66 = vector.broadcast %65 : vector<1x32xf32> to vector<8x32xf32>
    %67 = arith.addf %64, %66 : vector<8x32xf32>
    %68 = arith.addf %67, %1 : vector<8x32xf32>
    %c0_34 = arith.constant 0 : index
    %c0_35 = arith.constant 0 : index
    %69 = vector.load %arg12[%c0_34, %c0_35] : memref<1x32xf32, #tpu.memory_space<vmem>>, vector<1x32xf32>
    %c0_36 = arith.constant 0 : index
    %c0_37 = arith.constant 0 : index
    %70 = vector.load %arg13[%c0_36, %c0_37] : memref<1x32xf32, #tpu.memory_space<vmem>>, vector<1x32xf32>
    %cst_38 = arith.constant dense<0.000000e+00> : vector<8xf32>
    %71 = vector.multi_reduction <add>, %68, %cst_38 [1] : vector<8x32xf32> to vector<8xf32>
    %72 = vector.shape_cast %71 : vector<8xf32> to vector<8x1xf32>
    %cst_39 = arith.constant 3.200000e+01 : f32
    %73 = vector.broadcast %cst_39 : f32 to vector<8x1xf32>
    %74 = arith.divf %72, %73 : vector<8x1xf32>
    %75 = vector.broadcast %74 : vector<8x1xf32> to vector<8x32xf32>
    %76 = arith.subf %68, %75 : vector<8x32xf32>
    %77 = arith.mulf %76, %76 : vector<8x32xf32>
    %cst_40 = arith.constant dense<0.000000e+00> : vector<8xf32>
    %78 = vector.multi_reduction <add>, %77, %cst_40 [1] : vector<8x32xf32> to vector<8xf32>
    %79 = vector.shape_cast %78 : vector<8xf32> to vector<8x1xf32>
    %cst_41 = arith.constant 3.200000e+01 : f32
    %80 = vector.broadcast %cst_41 : f32 to vector<8x1xf32>
    %81 = arith.divf %79, %80 : vector<8x1xf32>
    %82 = vector.broadcast %74 : vector<8x1xf32> to vector<8x32xf32>
    %83 = arith.subf %68, %82 : vector<8x32xf32>
    %cst_42 = arith.constant 9.99999974E-6 : f32
    %84 = vector.broadcast %cst_42 : f32 to vector<8x1xf32>
    %85 = arith.addf %81, %84 : vector<8x1xf32>
    %86 = math.rsqrt %85 : vector<8x1xf32>
    %87 = vector.broadcast %86 : vector<8x1xf32> to vector<8x32xf32>
    %88 = arith.mulf %83, %87 : vector<8x32xf32>
    %89 = vector.broadcast %69 : vector<1x32xf32> to vector<8x32xf32>
    %90 = arith.mulf %88, %89 : vector<8x32xf32>
    %91 = vector.broadcast %70 : vector<1x32xf32> to vector<8x32xf32>
    %92 = arith.addf %90, %91 : vector<8x32xf32>
    %c0_43 = arith.constant 0 : index
    %c0_44 = arith.constant 0 : index
    %93 = vector.load %arg14[%c0_43, %c0_44] : memref<32x32xf32, #tpu.memory_space<vmem>>, vector<32x32xf32>
    %cst_45 = arith.constant dense<0.000000e+00> : vector<8x32xf32>
    %94 = tpu.matmul %92, %93, %cst_45 {dimension_numbers = #tpu.dot_dimension_numbers<[1], [0], [0], [1], [0, 0, 1, 1], [], []>} : vector<8x32xf32>, vector<32x32xf32>, vector<8x32xf32> -> vector<8x32xf32>
    %c0_46 = arith.constant 0 : index
    %c0_47 = arith.constant 0 : index
    %95 = vector.load %arg15[%c0_46, %c0_47] : memref<1x32xf32, #tpu.memory_space<vmem>>, vector<1x32xf32>
    %96 = vector.broadcast %95 : vector<1x32xf32> to vector<8x32xf32>
    %97 = arith.addf %94, %96 : vector<8x32xf32>
    %c0_48 = arith.constant 0 : index
    %c0_49 = arith.constant 0 : index
    %98 = vector.load %arg16[%c0_48, %c0_49] : memref<32x32xf32, #tpu.memory_space<vmem>>, vector<32x32xf32>
    %cst_50 = arith.constant dense<0.000000e+00> : vector<8x32xf32>
    %99 = tpu.matmul %5, %98, %cst_50 {dimension_numbers = #tpu.dot_dimension_numbers<[1], [0], [0], [1], [0, 0, 1, 1], [], []>} : vector<8x32xf32>, vector<32x32xf32>, vector<8x32xf32> -> vector<8x32xf32>
    %c0_51 = arith.constant 0 : index
    %c0_52 = arith.constant 0 : index
    %100 = vector.load %arg17[%c0_51, %c0_52] : memref<1x32xf32, #tpu.memory_space<vmem>>, vector<1x32xf32>
    %101 = vector.broadcast %100 : vector<1x32xf32> to vector<8x32xf32>
    %102 = arith.addf %99, %101 : vector<8x32xf32>
    %c0_53 = arith.constant 0 : index
    %c0_54 = arith.constant 0 : index
    %103 = vector.load %arg18[%c0_53, %c0_54] : memref<32x32xf32, #tpu.memory_space<vmem>>, vector<32x32xf32>
    %cst_55 = arith.constant dense<0.000000e+00> : vector<8x32xf32>
    %104 = tpu.matmul %3, %103, %cst_55 {dimension_numbers = #tpu.dot_dimension_numbers<[1], [0], [0], [1], [0, 0, 1, 1], [], []>} : vector<8x32xf32>, vector<32x32xf32>, vector<8x32xf32> -> vector<8x32xf32>
    %c0_56 = arith.constant 0 : index
    %c0_57 = arith.constant 0 : index
    %105 = vector.load %arg19[%c0_56, %c0_57] : memref<1x32xf32, #tpu.memory_space<vmem>>, vector<1x32xf32>
    %106 = vector.broadcast %105 : vector<1x32xf32> to vector<8x32xf32>
    %107 = arith.addf %104, %106 : vector<8x32xf32>
    %cst_58 = arith.constant 0.176776692 : f32
    %108 = vector.broadcast %cst_58 : f32 to vector<8x32xf32>
    %109 = arith.mulf %97, %108 : vector<8x32xf32>
    %110 = vector.extract_strided_slice %109 {offsets = [0, 0], sizes = [8, 8], strides = [1, 1]} : vector<8x32xf32> to vector<8x8xf32>
    %111 = vector.extract_strided_slice %109 {offsets = [0, 8], sizes = [8, 8], strides = [1, 1]} : vector<8x32xf32> to vector<8x8xf32>
    %112 = vector.extract_strided_slice %109 {offsets = [0, 16], sizes = [8, 8], strides = [1, 1]} : vector<8x32xf32> to vector<8x8xf32>
    %113 = vector.extract_strided_slice %109 {offsets = [0, 24], sizes = [8, 8], strides = [1, 1]} : vector<8x32xf32> to vector<8x8xf32>
    %114 = vector.shape_cast %110 : vector<8x8xf32> to vector<1x8x8xf32>
    %115 = vector.shape_cast %111 : vector<8x8xf32> to vector<1x8x8xf32>
    %116 = vector.shape_cast %112 : vector<8x8xf32> to vector<1x8x8xf32>
    %117 = vector.shape_cast %113 : vector<8x8xf32> to vector<1x8x8xf32>
    %118 = tpu.concatenate %114, %115, %116, %117 in 0 : vector<1x8x8xf32>, vector<1x8x8xf32>, vector<1x8x8xf32>, vector<1x8x8xf32> -> vector<4x8x8xf32>
    %119 = vector.extract_strided_slice %102 {offsets = [0, 0], sizes = [8, 8], strides = [1, 1]} : vector<8x32xf32> to vector<8x8xf32>
    %120 = vector.extract_strided_slice %102 {offsets = [0, 8], sizes = [8, 8], strides = [1, 1]} : vector<8x32xf32> to vector<8x8xf32>
    %121 = vector.extract_strided_slice %102 {offsets = [0, 16], sizes = [8, 8], strides = [1, 1]} : vector<8x32xf32> to vector<8x8xf32>
    %122 = vector.extract_strided_slice %102 {offsets = [0, 24], sizes = [8, 8], strides = [1, 1]} : vector<8x32xf32> to vector<8x8xf32>
    %123 = vector.shape_cast %119 : vector<8x8xf32> to vector<1x8x8xf32>
    %124 = vector.shape_cast %120 : vector<8x8xf32> to vector<1x8x8xf32>
    %125 = vector.shape_cast %121 : vector<8x8xf32> to vector<1x8x8xf32>
    %126 = vector.shape_cast %122 : vector<8x8xf32> to vector<1x8x8xf32>
    %127 = tpu.concatenate %123, %124, %125, %126 in 0 : vector<1x8x8xf32>, vector<1x8x8xf32>, vector<1x8x8xf32>, vector<1x8x8xf32> -> vector<4x8x8xf32>
    %128 = vector.extract_strided_slice %107 {offsets = [0, 0], sizes = [8, 8], strides = [1, 1]} : vector<8x32xf32> to vector<8x8xf32>
    %129 = vector.extract_strided_slice %107 {offsets = [0, 8], sizes = [8, 8], strides = [1, 1]} : vector<8x32xf32> to vector<8x8xf32>
    %130 = vector.extract_strided_slice %107 {offsets = [0, 16], sizes = [8, 8], strides = [1, 1]} : vector<8x32xf32> to vector<8x8xf32>
    %131 = vector.extract_strided_slice %107 {offsets = [0, 24], sizes = [8, 8], strides = [1, 1]} : vector<8x32xf32> to vector<8x8xf32>
    %132 = vector.shape_cast %128 : vector<8x8xf32> to vector<1x8x8xf32>
    %133 = vector.shape_cast %129 : vector<8x8xf32> to vector<1x8x8xf32>
    %134 = vector.shape_cast %130 : vector<8x8xf32> to vector<1x8x8xf32>
    %135 = vector.shape_cast %131 : vector<8x8xf32> to vector<1x8x8xf32>
    %136 = tpu.concatenate %132, %133, %134, %135 in 0 : vector<1x8x8xf32>, vector<1x8x8xf32>, vector<1x8x8xf32>, vector<1x8x8xf32> -> vector<4x8x8xf32>
    "tpu.trace_start"() <{level = 10 : i32, message = "hqd,hkd->hqk"}> : () -> ()
    %cst_59 = arith.constant dense<0.000000e+00> : vector<4x8x8xf32>
    %137 = tpu.matmul %118, %127, %cst_59 {dimension_numbers = #tpu.dot_dimension_numbers<[2], [2], [1], [1], [0, 0, 0, 1, 1, 1], [0], [0]>} : vector<4x8x8xf32>, vector<4x8x8xf32>, vector<4x8x8xf32> -> vector<4x8x8xf32>
    "tpu.trace_stop"() : () -> ()
    %cst_60 = arith.constant dense<0xFF800000> : vector<4x8xf32>
    %138 = vector.multi_reduction <maximumf>, %137, %cst_60 [2] : vector<4x8x8xf32> to vector<4x8xf32>
    %139 = vector.shape_cast %138 : vector<4x8xf32> to vector<4x8x1xf32>
    %140 = vector.broadcast %139 : vector<4x8x1xf32> to vector<4x8x8xf32>
    %141 = arith.subf %137, %140 : vector<4x8x8xf32>
    %142 = math.exp %141 : vector<4x8x8xf32>
    %cst_61 = arith.constant dense<0.000000e+00> : vector<4x8xf32>
    %143 = vector.multi_reduction <add>, %142, %cst_61 [2] : vector<4x8x8xf32> to vector<4x8xf32>
    %144 = vector.shape_cast %143 : vector<4x8xf32> to vector<4x8x1xf32>
    %145 = tpu.reciprocal %144 : vector<4x8x1xf32> -> vector<4x8x1xf32>
    %146 = vector.broadcast %145 : vector<4x8x1xf32> to vector<4x8x8xf32>
    %147 = arith.mulf %142, %146 : vector<4x8x8xf32>
    "tpu.trace_start"() <{level = 10 : i32, message = "hqk,hkd->hqd"}> : () -> ()
    %cst_62 = arith.constant dense<0.000000e+00> : vector<4x8x8xf32>
    %148 = tpu.matmul %147, %136, %cst_62 {dimension_numbers = #tpu.dot_dimension_numbers<[2], [1], [1], [2], [0, 0, 0, 1, 1, 2], [0], [0]>} : vector<4x8x8xf32>, vector<4x8x8xf32>, vector<4x8x8xf32> -> vector<4x8x8xf32>
    "tpu.trace_stop"() : () -> ()
    %c0_63 = arith.constant 0 : index
    %c0_64 = arith.constant 0 : index
    %c0_65 = arith.constant 0 : index
    %149 = vector.load %arg20[%c0_63, %c0_64, %c0_65] : memref<4x8x32xf32, #tpu.memory_space<vmem>>, vector<4x8x32xf32>
    "tpu.trace_start"() <{level = 10 : i32, message = "hqd,hde->hqe"}> : () -> ()
    %cst_66 = arith.constant dense<0.000000e+00> : vector<4x8x32xf32>
    %150 = tpu.matmul %148, %149, %cst_66 {dimension_numbers = #tpu.dot_dimension_numbers<[2], [1], [1], [2], [0, 0, 0, 1, 1, 2], [0], [0]>} : vector<4x8x8xf32>, vector<4x8x32xf32>, vector<4x8x32xf32> -> vector<4x8x32xf32>
    "tpu.trace_stop"() : () -> ()
    %cst_67 = arith.constant dense<0.000000e+00> : vector<8x32xf32>
    %151 = vector.multi_reduction <add>, %150, %cst_67 [0] : vector<4x8x32xf32> to vector<8x32xf32>
    %c0_68 = arith.constant 0 : index
    %c0_69 = arith.constant 0 : index
    %152 = vector.load %arg21[%c0_68, %c0_69] : memref<1x32xf32, #tpu.memory_space<vmem>>, vector<1x32xf32>
    %153 = vector.broadcast %152 : vector<1x32xf32> to vector<8x32xf32>
    %154 = arith.addf %151, %153 : vector<8x32xf32>
    %155 = arith.addf %154, %92 : vector<8x32xf32>
    %c0_70 = arith.constant 0 : index
    %c0_71 = arith.constant 0 : index
    %156 = vector.load %arg22[%c0_70, %c0_71] : memref<1x32xf32, #tpu.memory_space<vmem>>, vector<1x32xf32>
    %c0_72 = arith.constant 0 : index
    %c0_73 = arith.constant 0 : index
    %157 = vector.load %arg23[%c0_72, %c0_73] : memref<1x32xf32, #tpu.memory_space<vmem>>, vector<1x32xf32>
    %cst_74 = arith.constant dense<0.000000e+00> : vector<8xf32>
    %158 = vector.multi_reduction <add>, %155, %cst_74 [1] : vector<8x32xf32> to vector<8xf32>
    %159 = vector.shape_cast %158 : vector<8xf32> to vector<8x1xf32>
    %cst_75 = arith.constant 3.200000e+01 : f32
    %160 = vector.broadcast %cst_75 : f32 to vector<8x1xf32>
    %161 = arith.divf %159, %160 : vector<8x1xf32>
    %162 = vector.broadcast %161 : vector<8x1xf32> to vector<8x32xf32>
    %163 = arith.subf %155, %162 : vector<8x32xf32>
    %164 = arith.mulf %163, %163 : vector<8x32xf32>
    %cst_76 = arith.constant dense<0.000000e+00> : vector<8xf32>
    %165 = vector.multi_reduction <add>, %164, %cst_76 [1] : vector<8x32xf32> to vector<8xf32>
    %166 = vector.shape_cast %165 : vector<8xf32> to vector<8x1xf32>
    %cst_77 = arith.constant 3.200000e+01 : f32
    %167 = vector.broadcast %cst_77 : f32 to vector<8x1xf32>
    %168 = arith.divf %166, %167 : vector<8x1xf32>
    %169 = vector.broadcast %161 : vector<8x1xf32> to vector<8x32xf32>
    %170 = arith.subf %155, %169 : vector<8x32xf32>
    %cst_78 = arith.constant 9.99999974E-6 : f32
    %171 = vector.broadcast %cst_78 : f32 to vector<8x1xf32>
    %172 = arith.addf %168, %171 : vector<8x1xf32>
    %173 = math.rsqrt %172 : vector<8x1xf32>
    %174 = vector.broadcast %173 : vector<8x1xf32> to vector<8x32xf32>
    %175 = arith.mulf %170, %174 : vector<8x32xf32>
    %176 = vector.broadcast %156 : vector<1x32xf32> to vector<8x32xf32>
    %177 = arith.mulf %175, %176 : vector<8x32xf32>
    %178 = vector.broadcast %157 : vector<1x32xf32> to vector<8x32xf32>
    %179 = arith.addf %177, %178 : vector<8x32xf32>
    %c0_79 = arith.constant 0 : index
    %c0_80 = arith.constant 0 : index
    %180 = vector.load %arg24[%c0_79, %c0_80] : memref<32x128xf32, #tpu.memory_space<vmem>>, vector<32x128xf32>
    %cst_81 = arith.constant dense<0.000000e+00> : vector<8x128xf32>
    %181 = tpu.matmul %179, %180, %cst_81 {dimension_numbers = #tpu.dot_dimension_numbers<[1], [0], [0], [1], [0, 0, 1, 1], [], []>} : vector<8x32xf32>, vector<32x128xf32>, vector<8x128xf32> -> vector<8x128xf32>
    %c0_82 = arith.constant 0 : index
    %c0_83 = arith.constant 0 : index
    %182 = vector.load %arg25[%c0_82, %c0_83] : memref<1x128xf32, #tpu.memory_space<vmem>>, vector<1x128xf32>
    %183 = vector.broadcast %182 : vector<1x128xf32> to vector<8x128xf32>
    %184 = arith.addf %181, %183 : vector<8x128xf32>
    %cst_84 = arith.constant 0.000000e+00 : f32
    %185 = vector.broadcast %cst_84 : f32 to vector<8x128xf32>
    %186 = arith.maximumf %184, %185 : vector<8x128xf32>
    %c0_85 = arith.constant 0 : index
    %c0_86 = arith.constant 0 : index
    %187 = vector.load %arg26[%c0_85, %c0_86] : memref<128x32xf32, #tpu.memory_space<vmem>>, vector<128x32xf32>
    %cst_87 = arith.constant dense<0.000000e+00> : vector<8x32xf32>
    %188 = tpu.matmul %186, %187, %cst_87 {dimension_numbers = #tpu.dot_dimension_numbers<[1], [0], [0], [1], [0, 0, 1, 1], [], []>} : vector<8x128xf32>, vector<128x32xf32>, vector<8x32xf32> -> vector<8x32xf32>
    %c0_88 = arith.constant 0 : index
    %c0_89 = arith.constant 0 : index
    %189 = vector.load %arg27[%c0_88, %c0_89] : memref<1x32xf32, #tpu.memory_space<vmem>>, vector<1x32xf32>
    %190 = vector.broadcast %189 : vector<1x32xf32> to vector<8x32xf32>
    %191 = arith.addf %188, %190 : vector<8x32xf32>
    %192 = arith.addf %191, %179 : vector<8x32xf32>
    %c0_90 = arith.constant 0 : index
    %c0_91 = arith.constant 0 : index
    %193 = vector.load %arg28[%c0_90, %c0_91] : memref<1x32xf32, #tpu.memory_space<vmem>>, vector<1x32xf32>
    %c0_92 = arith.constant 0 : index
    %c0_93 = arith.constant 0 : index
    %194 = vector.load %arg29[%c0_92, %c0_93] : memref<1x32xf32, #tpu.memory_space<vmem>>, vector<1x32xf32>
    %cst_94 = arith.constant dense<0.000000e+00> : vector<8xf32>
    %195 = vector.multi_reduction <add>, %192, %cst_94 [1] : vector<8x32xf32> to vector<8xf32>
    %196 = vector.shape_cast %195 : vector<8xf32> to vector<8x1xf32>
    %cst_95 = arith.constant 3.200000e+01 : f32
    %197 = vector.broadcast %cst_95 : f32 to vector<8x1xf32>
    %198 = arith.divf %196, %197 : vector<8x1xf32>
    %199 = vector.broadcast %198 : vector<8x1xf32> to vector<8x32xf32>
    %200 = arith.subf %192, %199 : vector<8x32xf32>
    %201 = arith.mulf %200, %200 : vector<8x32xf32>
    %cst_96 = arith.constant dense<0.000000e+00> : vector<8xf32>
    %202 = vector.multi_reduction <add>, %201, %cst_96 [1] : vector<8x32xf32> to vector<8xf32>
    %203 = vector.shape_cast %202 : vector<8xf32> to vector<8x1xf32>
    %cst_97 = arith.constant 3.200000e+01 : f32
    %204 = vector.broadcast %cst_97 : f32 to vector<8x1xf32>
    %205 = arith.divf %203, %204 : vector<8x1xf32>
    %206 = vector.broadcast %198 : vector<8x1xf32> to vector<8x32xf32>
    %207 = arith.subf %192, %206 : vector<8x32xf32>
    %cst_98 = arith.constant 9.99999974E-6 : f32
    %208 = vector.broadcast %cst_98 : f32 to vector<8x1xf32>
    %209 = arith.addf %205, %208 : vector<8x1xf32>
    %210 = math.rsqrt %209 : vector<8x1xf32>
    %211 = vector.broadcast %210 : vector<8x1xf32> to vector<8x32xf32>
    %212 = arith.mulf %207, %211 : vector<8x32xf32>
    %213 = vector.broadcast %193 : vector<1x32xf32> to vector<8x32xf32>
    %214 = arith.mulf %212, %213 : vector<8x32xf32>
    %215 = vector.broadcast %194 : vector<1x32xf32> to vector<8x32xf32>
    %216 = arith.addf %214, %215 : vector<8x32xf32>
    %217 = vector.shape_cast %216 : vector<8x32xf32> to vector<1x8x32xf32>
    %c0_99 = arith.constant 0 : index
    %c0_100 = arith.constant 0 : index
    %c0_101 = arith.constant 0 : index
    %218 = vector.load %arg30[%c0_99, %c0_100, %c0_101] : memref<1x8x32xf32, #tpu.memory_space<vmem>>, vector<1x8x32xf32>
    tpu.vector_store %arg30[%c0_99, %c0_100, %c0_101], %217 {strides = array<i32>} : memref<1x8x32xf32, #tpu.memory_space<vmem>>, vector<1x8x32xf32>,
    return
  }
  func.func @transform_0(%arg0: i32) -> (i32, i32, i32) {
    %c0_i32 = arith.constant 0 : i32
    %c0_i32_0 = arith.constant 0 : i32
    %c0_i32_1 = arith.constant 0 : i32
    return %arg0, %c0_i32, %c0_i32_0 : i32, i32, i32
  }
  func.func @transform_1(%arg0: i32) -> (i32, i32, i32) {
    %c0_i32 = arith.constant 0 : i32
    %c0_i32_0 = arith.constant 0 : i32
    %c0_i32_1 = arith.constant 0 : i32
    return %arg0, %c0_i32, %c0_i32_0 : i32, i32, i32
  }
  func.func @transform_2(%arg0: i32) -> (i32, i32, i32) {
    %c0_i32 = arith.constant 0 : i32
    %c0_i32_0 = arith.constant 0 : i32
    %c0_i32_1 = arith.constant 0 : i32
    return %arg0, %c0_i32, %c0_i32_0 : i32, i32, i32
  }
  func.func @transform_3(%arg0: i32) -> (i32, i32) {
    %c0_i32 = arith.constant 0 : i32
    %c0_i32_0 = arith.constant 0 : i32
    %c0_i32_1 = arith.constant 0 : i32
    return %c0_i32, %c0_i32_0 : i32, i32
  }
  func.func @transform_4(%arg0: i32) -> (i32, i32) {
    %c0_i32 = arith.constant 0 : i32
    %c0_i32_0 = arith.constant 0 : i32
    %c0_i32_1 = arith.constant 0 : i32
    return %c0_i32, %c0_i32_0 : i32, i32
  }
  func.func @transform_5(%arg0: i32) -> (i32, i32) {
    %c0_i32 = arith.constant 0 : i32
    %c0_i32_0 = arith.constant 0 : i32
    %c0_i32_1 = arith.constant 0 : i32
    return %c0_i32, %c0_i32_0 : i32, i32
  }
  func.func @transform_6(%arg0: i32) -> (i32, i32) {
    %c0_i32 = arith.constant 0 : i32
    %c0_i32_0 = arith.constant 0 : i32
    %c0_i32_1 = arith.constant 0 : i32
    return %c0_i32, %c0_i32_0 : i32, i32
  }
  func.func @transform_7(%arg0: i32) -> (i32, i32) {
    %c0_i32 = arith.constant 0 : i32
    %c0_i32_0 = arith.constant 0 : i32
    %c0_i32_1 = arith.constant 0 : i32
    return %c0_i32, %c0_i32_0 : i32, i32
  }
  func.func @transform_8(%arg0: i32) -> (i32, i32) {
    %c0_i32 = arith.constant 0 : i32
    %c0_i32_0 = arith.constant 0 : i32
    %c0_i32_1 = arith.constant 0 : i32
    return %c0_i32, %c0_i32_0 : i32, i32
  }
  func.func @transform_9(%arg0: i32) -> (i32, i32, i32) {
    %c0_i32 = arith.constant 0 : i32
    %c0_i32_0 = arith.constant 0 : i32
    %c0_i32_1 = arith.constant 0 : i32
    %c0_i32_2 = arith.constant 0 : i32
    return %c0_i32, %c0_i32_0, %c0_i32_1 : i32, i32, i32
  }
  func.func @transform_10(%arg0: i32) -> (i32, i32) {
    %c0_i32 = arith.constant 0 : i32
    %c0_i32_0 = arith.constant 0 : i32
    %c0_i32_1 = arith.constant 0 : i32
    return %c0_i32, %c0_i32_0 : i32, i32
  }
  func.func @transform_11(%arg0: i32) -> (i32, i32) {
    %c0_i32 = arith.constant 0 : i32
    %c0_i32_0 = arith.constant 0 : i32
    %c0_i32_1 = arith.constant 0 : i32
    return %c0_i32, %c0_i32_0 : i32, i32
  }
  func.func @transform_12(%arg0: i32) -> (i32, i32) {
    %c0_i32 = arith.constant 0 : i32
    %c0_i32_0 = arith.constant 0 : i32
    %c0_i32_1 = arith.constant 0 : i32
    return %c0_i32, %c0_i32_0 : i32, i32
  }
  func.func @transform_13(%arg0: i32) -> (i32, i32) {
    %c0_i32 = arith.constant 0 : i32
    %c0_i32_0 = arith.constant 0 : i32
    %c0_i32_1 = arith.constant 0 : i32
    return %c0_i32, %c0_i32_0 : i32, i32
  }
  func.func @transform_14(%arg0: i32) -> (i32, i32) {
    %c0_i32 = arith.constant 0 : i32
    %c0_i32_0 = arith.constant 0 : i32
    %c0_i32_1 = arith.constant 0 : i32
    return %c0_i32, %c0_i32_0 : i32, i32
  }
  func.func @transform_15(%arg0: i32) -> (i32, i32) {
    %c0_i32 = arith.constant 0 : i32
    %c0_i32_0 = arith.constant 0 : i32
    %c0_i32_1 = arith.constant 0 : i32
    return %c0_i32, %c0_i32_0 : i32, i32
  }
  func.func @transform_16(%arg0: i32) -> (i32, i32) {
    %c0_i32 = arith.constant 0 : i32
    %c0_i32_0 = arith.constant 0 : i32
    %c0_i32_1 = arith.constant 0 : i32
    return %c0_i32, %c0_i32_0 : i32, i32
  }
  func.func @transform_17(%arg0: i32) -> (i32, i32) {
    %c0_i32 = arith.constant 0 : i32
    %c0_i32_0 = arith.constant 0 : i32
    %c0_i32_1 = arith.constant 0 : i32
    return %c0_i32, %c0_i32_0 : i32, i32
  }
  func.func @transform_18(%arg0: i32) -> (i32, i32) {
    %c0_i32 = arith.constant 0 : i32
    %c0_i32_0 = arith.constant 0 : i32
    %c0_i32_1 = arith.constant 0 : i32
    return %c0_i32, %c0_i32_0 : i32, i32
  }
  func.func @transform_19(%arg0: i32) -> (i32, i32, i32) {
    %c0_i32 = arith.constant 0 : i32
    %c0_i32_0 = arith.constant 0 : i32
    %c0_i32_1 = arith.constant 0 : i32
    %c0_i32_2 = arith.constant 0 : i32
    return %c0_i32, %c0_i32_0, %c0_i32_1 : i32, i32, i32
  }
  func.func @transform_20(%arg0: i32) -> (i32, i32) {
    %c0_i32 = arith.constant 0 : i32
    %c0_i32_0 = arith.constant 0 : i32
    %c0_i32_1 = arith.constant 0 : i32
    return %c0_i32, %c0_i32_0 : i32, i32
  }
  func.func @transform_21(%arg0: i32) -> (i32, i32) {
    %c0_i32 = arith.constant 0 : i32
    %c0_i32_0 = arith.constant 0 : i32
    %c0_i32_1 = arith.constant 0 : i32
    return %c0_i32, %c0_i32_0 : i32, i32
  }
  func.func @transform_22(%arg0: i32) -> (i32, i32) {
    %c0_i32 = arith.constant 0 : i32
    %c0_i32_0 = arith.constant 0 : i32
    %c0_i32_1 = arith.constant 0 : i32
    return %c0_i32, %c0_i32_0 : i32, i32
  }
  func.func @transform_23(%arg0: i32) -> (i32, i32) {
    %c0_i32 = arith.constant 0 : i32
    %c0_i32_0 = arith.constant 0 : i32
    %c0_i32_1 = arith.constant 0 : i32
    return %c0_i32, %c0_i32_0 : i32, i32
  }
  func.func @transform_24(%arg0: i32) -> (i32, i32) {
    %c0_i32 = arith.constant 0 : i32
    %c0_i32_0 = arith.constant 0 : i32
    %c0_i32_1 = arith.constant 0 : i32
    return %c0_i32, %c0_i32_0 : i32, i32
  }
  func.func @transform_25(%arg0: i32) -> (i32, i32) {
    %c0_i32 = arith.constant 0 : i32
    %c0_i32_0 = arith.constant 0 : i32
    %c0_i32_1 = arith.constant 0 : i32
    return %c0_i32, %c0_i32_0 : i32, i32
  }
  func.func @transform_26(%arg0: i32) -> (i32, i32) {
    %c0_i32 = arith.constant 0 : i32
    %c0_i32_0 = arith.constant 0 : i32
    %c0_i32_1 = arith.constant 0 : i32
    return %c0_i32, %c0_i32_0 : i32, i32
  }
  func.func @transform_27(%arg0: i32) -> (i32, i32) {
    %c0_i32 = arith.constant 0 : i32
    %c0_i32_0 = arith.constant 0 : i32
    %c0_i32_1 = arith.constant 0 : i32
    return %c0_i32, %c0_i32_0 : i32, i32
  }
  func.func @transform_28(%arg0: i32) -> (i32, i32) {
    %c0_i32 = arith.constant 0 : i32
    %c0_i32_0 = arith.constant 0 : i32
    %c0_i32_1 = arith.constant 0 : i32
    return %c0_i32, %c0_i32_0 : i32, i32
  }
  func.func @transform_29(%arg0: i32) -> (i32, i32, i32) {
    %c0_i32 = arith.constant 0 : i32
    %c0_i32_0 = arith.constant 0 : i32
    %c0_i32_1 = arith.constant 0 : i32
    return %arg0, %c0_i32, %c0_i32_0 : i32, i32, i32
  }
}

</mosaic_0001>

<llo_original>
// kernel: tpu_custom_call.1
$region0: #{tpu_custom_call.1}
  #allocation0 [shape = 'u32[]', space=smem, size = 0x4, offset = 0x4, fixed_abs, tag = 'smem constant byte address 0x4 - core index']
  #allocation1 [shape = 'u32[144,128]{1,0:T(1,128)}', space=vmem, size = 0x12000, scoped, tag = 'internal scratch']
  %s0 = inlined_call_operand.smem [shape: u32[30], index: -1, kind: input, shape index: {}]
  %s1 = sld [smem:[%s0]]
  %s2 = scalar_lea.smem %s0, 1
  %s3 = sld [smem:[%s2]]
  %s4 = scalar_lea.smem %s0, 2
  %s5 = sld [smem:[%s4]]
  %s6 = scalar_lea.smem %s0, 3
  %s7 = sld [smem:[%s6]]
  %s8 = scalar_lea.smem %s0, 4
  %s9 = sld [smem:[%s8]]
  %s10 = scalar_lea.smem %s0, 5
  %s11 = sld [smem:[%s10]]
  %s12 = scalar_lea.smem %s0, 6
  %s13 = sld [smem:[%s12]]
  %s14 = scalar_lea.smem %s0, 7
  %s15 = sld [smem:[%s14]]
  %s16 = scalar_lea.smem %s0, 8
  %s17 = sld [smem:[%s16]]
  %s18 = scalar_lea.smem %s0, 9
  %s19 = sld [smem:[%s18]]
  %s20 = scalar_lea.smem %s0, 10
  %s21 = sld [smem:[%s20]]
  %s22 = scalar_lea.smem %s0, 11
  %s23 = sld [smem:[%s22]]
  %s24 = scalar_lea.smem %s0, 12
  %s25 = sld [smem:[%s24]]
  %s26 = scalar_lea.smem %s0, 13
  %s27 = sld [smem:[%s26]]
  %s28 = scalar_lea.smem %s0, 14
  %s29 = sld [smem:[%s28]]
  %s30 = scalar_lea.smem %s0, 15
  %s31 = sld [smem:[%s30]]
  %s32 = scalar_lea.smem %s0, 16
  %s33 = sld [smem:[%s32]]
  %s34 = scalar_lea.smem %s0, 17
  %s35 = sld [smem:[%s34]]
  %s36 = scalar_lea.smem %s0, 18
  %s37 = sld [smem:[%s36]]
  %s38 = scalar_lea.smem %s0, 19
  %s39 = sld [smem:[%s38]]
  %s40 = scalar_lea.smem %s0, 20
  %s41 = sld [smem:[%s40]]
  %s42 = scalar_lea.smem %s0, 21
  %s43 = sld [smem:[%s42]]
  %s44 = scalar_lea.smem %s0, 22
  %s45 = sld [smem:[%s44]]
  %s46 = scalar_lea.smem %s0, 23
  %s47 = sld [smem:[%s46]]
  %s48 = scalar_lea.smem %s0, 24
  %s49 = sld [smem:[%s48]]
  %s50 = scalar_lea.smem %s0, 25
  %s51 = sld [smem:[%s50]]
  %s52 = scalar_lea.smem %s0, 26
  %s53 = sld [smem:[%s52]]
  %s54 = scalar_lea.smem %s0, 27
  %s55 = sld [smem:[%s54]]
  %s56 = scalar_lea.smem %s0, 28
  %s57 = sld [smem:[%s56]]
  %s58 = scalar_lea.smem %s0, 29
  %s59 = sld [smem:[%s58]]
  %s60 = sld [smem:[#allocation0]]
  $region205: #{tpu_custom_call.1} parent=0
    _
  %s62 = ssub.s32 1, %s60
  %s63 = scalar_select 0, %s62, %s60
  $region1: #{tpu_custom_call.1} parent=0
    #allocation2 [shape = 'u8[8192]{0}', space=vmem, size = 0x2000, scoped, tag = 'input window, operand 0']
    #allocation3 [shape = 's32[2]{0}', space=sflag, size = 0x8, scoped, tag = 'scoped memory for tpu_custom_call.1']
    #allocation4 [shape = 's32[2]{0}', space=sflag, size = 0x8, scoped, tag = 'scoped memory for tpu_custom_call.1']
    #allocation5 [shape = 'u8[8192]{0}', space=vmem, size = 0x2000, scoped, tag = 'input window, operand 1']
    #allocation6 [shape = 's32[2]{0}', space=sflag, size = 0x8, scoped, tag = 'scoped memory for tpu_custom_call.1']
    #allocation7 [shape = 'u8[8192]{0}', space=vmem, size = 0x2000, scoped, tag = 'input window, operand 2']
    #allocation8 [shape = 'u8[512]{0}', space=vmem, size = 0x400, scoped, tag = 'input window, operand 4, single buffered']
    #allocation9 [shape = 's32[1]{0}', space=sflag, size = 0x4, scoped, tag = 'scoped memory for tpu_custom_call.1']
    #allocation10 [shape = 'u8[512]{0}', space=vmem, size = 0x400, scoped, tag = 'input window, operand 6, single buffered']
    #allocation11 [shape = 'u8[512]{0}', space=vmem, size = 0x400, scoped, tag = 'input window, operand 8, single buffered']
    #allocation12 [shape = 's32[1]{0}', space=sflag, size = 0x4, scoped, tag = 'scoped memory for tpu_custom_call.1']
    #allocation13 [shape = 'u8[512]{0}', space=vmem, size = 0x400, scoped, tag = 'input window, operand 10, single buffered']
    #allocation14 [shape = 'u8[512]{0}', space=vmem, size = 0x400, scoped, tag = 'input window, operand 11, single buffered']
    #allocation15 [shape = 's32[1]{0}', space=sflag, size = 0x4, scoped, tag = 'scoped memory for tpu_custom_call.1']
    #allocation16 [shape = 'u8[512]{0}', space=vmem, size = 0x400, scoped, tag = 'input window, operand 12, single buffered']
    #allocation17 [shape = 'u8[512]{0}', space=vmem, size = 0x400, scoped, tag = 'input window, operand 14, single buffered']
    #allocation18 [shape = 's32[1]{0}', space=sflag, size = 0x4, scoped, tag = 'scoped memory for tpu_custom_call.1']
    #allocation19 [shape = 'u8[512]{0}', space=vmem, size = 0x400, scoped, tag = 'input window, operand 16, single buffered']
    #allocation20 [shape = 'u8[16384]{0}', space=vmem, size = 0x4000, scoped, tag = 'input window, operand 17, single buffered']
    #allocation21 [shape = 's32[1]{0}', space=sflag, size = 0x4, scoped, tag = 'scoped memory for tpu_custom_call.1']
    #allocation22 [shape = 'u8[16384]{0}', space=vmem, size = 0x4000, scoped, tag = 'input window, operand 19, single buffered']
    #allocation23 [shape = 'u8[16384]{0}', space=vmem, size = 0x4000, scoped, tag = 'input window, operand 23, single buffered']
    #allocation24 [shape = 's32[1]{0}', space=sflag, size = 0x4, scoped, tag = 'scoped memory for tpu_custom_call.1']
    #allocation25 [shape = 'u8[8192]{0}', space=vmem, size = 0x2000, scoped, tag = 'output window, operand 0']
    %64 = vsyncpa [#allocation3], 0
    %s65 = scalar_lea.sflag [#allocation3], 1
    %66 = vsyncpa %s65, 0
    %67 = vsyncpa [#allocation6], 0
    %s68 = scalar_lea.sflag [#allocation6], 1
    %69 = vsyncpa %s68, 0
    %70 = vsyncpa [#allocation9], 0
    %71 = vsyncpa [#allocation12], 0
    %72 = vsyncpa [#allocation15], 0
    %73 = vsyncpa [#allocation18], 0
    %74 = vsyncpa [#allocation21], 0
    %75 = vsyncpa [#allocation24], 0
    %76 = vsyncpa [#allocation4], 0
    %s77 = scalar_lea.sflag [#allocation4], 1
    %78 = vsyncpa %s77, 0
    loop: start=0, step=1, limit=4
    $region2: #{tpu_custom_call.1} parent=1 // loop_pre_header
      _
    $region3: #{tpu_custom_call.1} parent=1 // loop_header
      %s80 = sphi 0, %s84
      %p81 = scmp.ge.s32.totalorder %s80, 4
      %s90 = sphi 0, %s92
      %s93 = sphi 0, %s90
      %s94 = sphi 0, %s93
      %s110 = sphi 0, %s94
      %s116 = sphi 0, %s118
      %s119 = sphi 0, %s116
      %s120 = sphi 0, %s119
      %s136 = sphi 0, %s120
      %s142 = sphi 0, %s144
      %s145 = sphi 0, %s142
      %s146 = sphi 0, %s145
      %s162 = sphi 0, %s146
      %s166 = sphi 0, %s166
      %s168 = sphi 0, %s166
      %s169 = sphi 0, %s168
      %s183 = sphi 0, %s169
      %s187 = sphi 0, %s187
      %s189 = sphi 0, %s187
      %s190 = sphi 0, %s189
      %s204 = sphi 0, %s190
      %s208 = sphi 0, %s208
      %s210 = sphi 0, %s208
      %s211 = sphi 0, %s210
      %s225 = sphi 0, %s211
      %s229 = sphi 0, %s229
      %s231 = sphi 0, %s229
      %s232 = sphi 0, %s231
      %s246 = sphi 0, %s232
      %s250 = sphi 0, %s250
      %s252 = sphi 0, %s250
      %s253 = sphi 0, %s252
      %s267 = sphi 0, %s253
      %s271 = sphi 0, %s271
      %s273 = sphi 0, %s271
      %s274 = sphi 0, %s273
      %s288 = sphi 0, %s274
      %s292 = sphi 0, %s292
      %s294 = sphi 0, %s292
      %s295 = sphi 0, %s294
      %s309 = sphi 0, %s295
      %s313 = sphi 0, %s313
      %s315 = sphi 0, %s313
      %s316 = sphi 0, %s315
      %s330 = sphi 0, %s316
      %s334 = sphi 0, %s334
      %s336 = sphi 0, %s334
      %s337 = sphi 0, %s336
      %s351 = sphi 0, %s337
      %s355 = sphi 0, %s355
      %s357 = sphi 0, %s355
      %s358 = sphi 0, %s357
      %s372 = sphi 0, %s358
      %s376 = sphi 0, %s376
      %s378 = sphi 0, %s376
      %s379 = sphi 0, %s378
      %s393 = sphi 0, %s379
      %s397 = sphi 0, %s397
      %s399 = sphi 0, %s397
      %s400 = sphi 0, %s399
      %s414 = sphi 0, %s400
      %s418 = sphi 0, %s418
      %s420 = sphi 0, %s418
      %s421 = sphi 0, %s420
      %s435 = sphi 0, %s421
      %s439 = sphi 0, %s439
      %s441 = sphi 0, %s439
      %s442 = sphi 0, %s441
      %s456 = sphi 0, %s442
      %s460 = sphi 0, %s460
      %s462 = sphi 0, %s460
      %s463 = sphi 0, %s462
      %s477 = sphi 0, %s463
      %s481 = sphi 0, %s481
      %s483 = sphi 0, %s481
      %s484 = sphi 0, %s483
      %s498 = sphi 0, %s484
      %s502 = sphi 0, %s502
      %s504 = sphi 0, %s502
      %s505 = sphi 0, %s504
      %s519 = sphi 0, %s505
      %s523 = sphi 0, %s523
      %s525 = sphi 0, %s523
      %s526 = sphi 0, %s525
      %s540 = sphi 0, %s526
      %s544 = sphi 0, %s544
      %s546 = sphi 0, %s544
      %s547 = sphi 0, %s546
      %s561 = sphi 0, %s547
      %s565 = sphi 0, %s565
      %s567 = sphi 0, %s565
      %s568 = sphi 0, %s567
      %s582 = sphi 0, %s568
      %s586 = sphi 0, %s586
      %s588 = sphi 0, %s586
      %s589 = sphi 0, %s588
      %s603 = sphi 0, %s589
      %s607 = sphi 0, %s607
      %s609 = sphi 0, %s607
      %s610 = sphi 0, %s609
      %s624 = sphi 0, %s610
      %s628 = sphi 0, %s628
      %s630 = sphi 0, %s628
      %s631 = sphi 0, %s630
      %s645 = sphi 0, %s631
      %s649 = sphi 0, %s649
      %s651 = sphi 0, %s649
      %s652 = sphi 0, %s651
      %s666 = sphi 0, %s652
      %s670 = sphi 0, %s670
      %s672 = sphi 0, %s670
      %s673 = sphi 0, %s672
      %s687 = sphi 0, %s673
      %s691 = sphi 0, %s691
      %s693 = sphi 0, %s691
      %s694 = sphi 0, %s693
      %s708 = sphi 0, %s694
      %s714 = sphi 0, %s716
      %s717 = sphi 0, %s714
      %s718 = sphi 0, %s717
      %s734 = sphi 0, %s718
    $region4: #{tpu_custom_call.1} parent=1 // loop_header_branch
      %83 = sbr.rel (%p81) target = $region8
    $region5: #{tpu_custom_call.1} parent=1 // loop_body
      %s85 = ssub.s32 %s80, 1
      %s86 = ssub.s32 %s80, 2
      %s87 = sadd.s32 %s80, 1
      %s88 = ssub.s32 %s80, %s87
      %p89 = scmp.eq.s32.totalorder %s88, 0
      %s91 = sadd.s32 %s90, 1
      %s92 = scalar_select %p89, %s90, %s91
      %p95 = pneg %p89
      %p96 = scmp.eq.s32.totalorder %s80, 1
      %p97 = por %p95, %p96
      %p98 = scmp.ne.s32.totalorder %s90, %s93
      %p99 = scmp.eq.s32.totalorder %s80, 0
      %p100 = por %p98, %p99
      %p101 = scmp.ne.s32.totalorder %s90, %s93
      %p102 = scmp.eq.s32.totalorder %s85, 1
      %p103 = por %p101, %p102
      %p104 = scmp.ne.s32.totalorder %s93, %s94
      %p105 = scmp.eq.s32.totalorder %s85, 0
      %p106 = por %p104, %p105
      %p107 = scmp.ne.s32.totalorder %s93, %s94
      %p108 = scmp.eq.s32.totalorder %s86, 1
      %p109 = por %p107, %p108
      %p111 = scmp.ne.s32.totalorder %s94, %s110
      %p112 = scmp.eq.s32.totalorder %s86, 0
      %p113 = por %p111, %p112
      %s114 = ssub.s32 %s80, %s87
      %p115 = scmp.eq.s32.totalorder %s114, 0
      %s117 = sadd.s32 %s116, 1
      %s118 = scalar_select %p115, %s116, %s117
      %p121 = pneg %p115
      %p122 = scmp.eq.s32.totalorder %s80, 1
      %p123 = por %p121, %p122
      %p124 = scmp.ne.s32.totalorder %s116, %s119
      %p125 = scmp.eq.s32.totalorder %s80, 0
      %p126 = por %p124, %p125
      %p127 = scmp.ne.s32.totalorder %s116, %s119
      %p128 = scmp.eq.s32.totalorder %s85, 1
      %p129 = por %p127, %p128
      %p130 = scmp.ne.s32.totalorder %s119, %s120
      %p131 = scmp.eq.s32.totalorder %s85, 0
      %p132 = por %p130, %p131
      %p133 = scmp.ne.s32.totalorder %s119, %s120
      %p134 = scmp.eq.s32.totalorder %s86, 1
      %p135 = por %p133, %p134
      %p137 = scmp.ne.s32.totalorder %s120, %s136
      %p138 = scmp.eq.s32.totalorder %s86, 0
      %p139 = por %p137, %p138
      %s140 = ssub.s32 %s80, %s87
      %p141 = scmp.eq.s32.totalorder %s140, 0
      %s143 = sadd.s32 %s142, 1
      %s144 = scalar_select %p141, %s142, %s143
      %p147 = pneg %p141
      %p148 = scmp.eq.s32.totalorder %s80, 1
      %p149 = por %p147, %p148
      %p150 = scmp.ne.s32.totalorder %s142, %s145
      %p151 = scmp.eq.s32.totalorder %s80, 0
      %p152 = por %p150, %p151
      %p153 = scmp.ne.s32.totalorder %s142, %s145
      %p154 = scmp.eq.s32.totalorder %s85, 1
      %p155 = por %p153, %p154
      %p156 = scmp.ne.s32.totalorder %s145, %s146
      %p157 = scmp.eq.s32.totalorder %s85, 0
      %p158 = por %p156, %p157
      %p159 = scmp.ne.s32.totalorder %s145, %s146
      %p160 = scmp.eq.s32.totalorder %s86, 1
      %p161 = por %p159, %p160
      %p163 = scmp.ne.s32.totalorder %s146, %s162
      %p164 = scmp.eq.s32.totalorder %s86, 0
      %p165 = por %p163, %p164
      %s167 = sadd.s32 %s166, 1
      %p170 = scmp.eq.s32.totalorder %s80, 1
      %p171 = scmp.ne.s32.totalorder %s166, %s168
      %p172 = scmp.eq.s32.totalorder %s80, 0
      %p173 = por %p171, %p172
      %p174 = scmp.ne.s32.totalorder %s166, %s168
      %p175 = scmp.eq.s32.totalorder %s85, 1
      %p176 = por %p174, %p175
      %p177 = scmp.ne.s32.totalorder %s168, %s169
      %p178 = scmp.eq.s32.totalorder %s85, 0
      %p179 = por %p177, %p178
      %p180 = scmp.ne.s32.totalorder %s168, %s169
      %p181 = scmp.eq.s32.totalorder %s86, 1
      %p182 = por %p180, %p181
      %p184 = scmp.ne.s32.totalorder %s169, %s183
      %p185 = scmp.eq.s32.totalorder %s86, 0
      %p186 = por %p184, %p185
      %s188 = sadd.s32 %s187, 1
      %p191 = scmp.eq.s32.totalorder %s80, 1
      %p192 = scmp.ne.s32.totalorder %s187, %s189
      %p193 = scmp.eq.s32.totalorder %s80, 0
      %p194 = por %p192, %p193
      %p195 = scmp.ne.s32.totalorder %s187, %s189
      %p196 = scmp.eq.s32.totalorder %s85, 1
      %p197 = por %p195, %p196
      %p198 = scmp.ne.s32.totalorder %s189, %s190
      %p199 = scmp.eq.s32.totalorder %s85, 0
      %p200 = por %p198, %p199
      %p201 = scmp.ne.s32.totalorder %s189, %s190
      %p202 = scmp.eq.s32.totalorder %s86, 1
      %p203 = por %p201, %p202
      %p205 = scmp.ne.s32.totalorder %s190, %s204
      %p206 = scmp.eq.s32.totalorder %s86, 0
      %p207 = por %p205, %p206
      %s209 = sadd.s32 %s208, 1
      %p212 = scmp.eq.s32.totalorder %s80, 1
      %p213 = scmp.ne.s32.totalorder %s208, %s210
      %p214 = scmp.eq.s32.totalorder %s80, 0
      %p215 = por %p213, %p214
      %p216 = scmp.ne.s32.totalorder %s208, %s210
      %p217 = scmp.eq.s32.totalorder %s85, 1
      %p218 = por %p216, %p217
      %p219 = scmp.ne.s32.totalorder %s210, %s211
      %p220 = scmp.eq.s32.totalorder %s85, 0
      %p221 = por %p219, %p220
      %p222 = scmp.ne.s32.totalorder %s210, %s211
      %p223 = scmp.eq.s32.totalorder %s86, 1
      %p224 = por %p222, %p223
      %p226 = scmp.ne.s32.totalorder %s211, %s225
      %p227 = scmp.eq.s32.totalorder %s86, 0
      %p228 = por %p226, %p227
      %s230 = sadd.s32 %s229, 1
      %p233 = scmp.eq.s32.totalorder %s80, 1
      %p234 = scmp.ne.s32.totalorder %s229, %s231
      %p235 = scmp.eq.s32.totalorder %s80, 0
      %p236 = por %p234, %p235
      %p237 = scmp.ne.s32.totalorder %s229, %s231
      %p238 = scmp.eq.s32.totalorder %s85, 1
      %p239 = por %p237, %p238
      %p240 = scmp.ne.s32.totalorder %s231, %s232
      %p241 = scmp.eq.s32.totalorder %s85, 0
      %p242 = por %p240, %p241
      %p243 = scmp.ne.s32.totalorder %s231, %s232
      %p244 = scmp.eq.s32.totalorder %s86, 1
      %p245 = por %p243, %p244
      %p247 = scmp.ne.s32.totalorder %s232, %s246
      %p248 = scmp.eq.s32.totalorder %s86, 0
      %p249 = por %p247, %p248
      %s251 = sadd.s32 %s250, 1
      %p254 = scmp.eq.s32.totalorder %s80, 1
      %p255 = scmp.ne.s32.totalorder %s250, %s252
      %p256 = scmp.eq.s32.totalorder %s80, 0
      %p257 = por %p255, %p256
      %p258 = scmp.ne.s32.totalorder %s250, %s252
      %p259 = scmp.eq.s32.totalorder %s85, 1
      %p260 = por %p258, %p259
      %p261 = scmp.ne.s32.totalorder %s252, %s253
      %p262 = scmp.eq.s32.totalorder %s85, 0
      %p263 = por %p261, %p262
      %p264 = scmp.ne.s32.totalorder %s252, %s253
      %p265 = scmp.eq.s32.totalorder %s86, 1
      %p266 = por %p264, %p265
      %p268 = scmp.ne.s32.totalorder %s253, %s267
      %p269 = scmp.eq.s32.totalorder %s86, 0
      %p270 = por %p268, %p269
      %s272 = sadd.s32 %s271, 1
      %p275 = scmp.eq.s32.totalorder %s80, 1
      %p276 = scmp.ne.s32.totalorder %s271, %s273
      %p277 = scmp.eq.s32.totalorder %s80, 0
      %p278 = por %p276, %p277
      %p279 = scmp.ne.s32.totalorder %s271, %s273
      %p280 = scmp.eq.s32.totalorder %s85, 1
      %p281 = por %p279, %p280
      %p282 = scmp.ne.s32.totalorder %s273, %s274
      %p283 = scmp.eq.s32.totalorder %s85, 0
      %p284 = por %p282, %p283
      %p285 = scmp.ne.s32.totalorder %s273, %s274
      %p286 = scmp.eq.s32.totalorder %s86, 1
      %p287 = por %p285, %p286
      %p289 = scmp.ne.s32.totalorder %s274, %s288
      %p290 = scmp.eq.s32.totalorder %s86, 0
      %p291 = por %p289, %p290
      %s293 = sadd.s32 %s292, 1
      %p296 = scmp.eq.s32.totalorder %s80, 1
      %p297 = scmp.ne.s32.totalorder %s292, %s294
      %p298 = scmp.eq.s32.totalorder %s80, 0
      %p299 = por %p297, %p298
      %p300 = scmp.ne.s32.totalorder %s292, %s294
      %p301 = scmp.eq.s32.totalorder %s85, 1
      %p302 = por %p300, %p301
      %p303 = scmp.ne.s32.totalorder %s294, %s295
      %p304 = scmp.eq.s32.totalorder %s85, 0
      %p305 = por %p303, %p304
      %p306 = scmp.ne.s32.totalorder %s294, %s295
      %p307 = scmp.eq.s32.totalorder %s86, 1
      %p308 = por %p306, %p307
      %p310 = scmp.ne.s32.totalorder %s295, %s309
      %p311 = scmp.eq.s32.totalorder %s86, 0
      %p312 = por %p310, %p311
      %s314 = sadd.s32 %s313, 1
      %p317 = scmp.eq.s32.totalorder %s80, 1
      %p318 = scmp.ne.s32.totalorder %s313, %s315
      %p319 = scmp.eq.s32.totalorder %s80, 0
      %p320 = por %p318, %p319
      %p321 = scmp.ne.s32.totalorder %s313, %s315
      %p322 = scmp.eq.s32.totalorder %s85, 1
      %p323 = por %p321, %p322
      %p324 = scmp.ne.s32.totalorder %s315, %s316
      %p325 = scmp.eq.s32.totalorder %s85, 0
      %p326 = por %p324, %p325
      %p327 = scmp.ne.s32.totalorder %s315, %s316
      %p328 = scmp.eq.s32.totalorder %s86, 1
      %p329 = por %p327, %p328
      %p331 = scmp.ne.s32.totalorder %s316, %s330
      %p332 = scmp.eq.s32.totalorder %s86, 0
      %p333 = por %p331, %p332
      %s335 = sadd.s32 %s334, 1
      %p338 = scmp.eq.s32.totalorder %s80, 1
      %p339 = scmp.ne.s32.totalorder %s334, %s336
      %p340 = scmp.eq.s32.totalorder %s80, 0
      %p341 = por %p339, %p340
      %p342 = scmp.ne.s32.totalorder %s334, %s336
      %p343 = scmp.eq.s32.totalorder %s85, 1
      %p344 = por %p342, %p343
      %p345 = scmp.ne.s32.totalorder %s336, %s337
      %p346 = scmp.eq.s32.totalorder %s85, 0
      %p347 = por %p345, %p346
      %p348 = scmp.ne.s32.totalorder %s336, %s337
      %p349 = scmp.eq.s32.totalorder %s86, 1
      %p350 = por %p348, %p349
      %p352 = scmp.ne.s32.totalorder %s337, %s351
      %p353 = scmp.eq.s32.totalorder %s86, 0
      %p354 = por %p352, %p353
      %s356 = sadd.s32 %s355, 1
      %p359 = scmp.eq.s32.totalorder %s80, 1
      %p360 = scmp.ne.s32.totalorder %s355, %s357
      %p361 = scmp.eq.s32.totalorder %s80, 0
      %p362 = por %p360, %p361
      %p363 = scmp.ne.s32.totalorder %s355, %s357
      %p364 = scmp.eq.s32.totalorder %s85, 1
      %p365 = por %p363, %p364
      %p366 = scmp.ne.s32.totalorder %s357, %s358
      %p367 = scmp.eq.s32.totalorder %s85, 0
      %p368 = por %p366, %p367
      %p369 = scmp.ne.s32.totalorder %s357, %s358
      %p370 = scmp.eq.s32.totalorder %s86, 1
      %p371 = por %p369, %p370
      %p373 = scmp.ne.s32.totalorder %s358, %s372
      %p374 = scmp.eq.s32.totalorder %s86, 0
      %p375 = por %p373, %p374
      %s377 = sadd.s32 %s376, 1
      %p380 = scmp.eq.s32.totalorder %s80, 1
      %p381 = scmp.ne.s32.totalorder %s376, %s378
      %p382 = scmp.eq.s32.totalorder %s80, 0
      %p383 = por %p381, %p382
      %p384 = scmp.ne.s32.totalorder %s376, %s378
      %p385 = scmp.eq.s32.totalorder %s85, 1
      %p386 = por %p384, %p385
      %p387 = scmp.ne.s32.totalorder %s378, %s379
      %p388 = scmp.eq.s32.totalorder %s85, 0
      %p389 = por %p387, %p388
      %p390 = scmp.ne.s32.totalorder %s378, %s379
      %p391 = scmp.eq.s32.totalorder %s86, 1
      %p392 = por %p390, %p391
      %p394 = scmp.ne.s32.totalorder %s379, %s393
      %p395 = scmp.eq.s32.totalorder %s86, 0
      %p396 = por %p394, %p395
      %s398 = sadd.s32 %s397, 1
      %p401 = scmp.eq.s32.totalorder %s80, 1
      %p402 = scmp.ne.s32.totalorder %s397, %s399
      %p403 = scmp.eq.s32.totalorder %s80, 0
      %p404 = por %p402, %p403
      %p405 = scmp.ne.s32.totalorder %s397, %s399
      %p406 = scmp.eq.s32.totalorder %s85, 1
      %p407 = por %p405, %p406
      %p408 = scmp.ne.s32.totalorder %s399, %s400
      %p409 = scmp.eq.s32.totalorder %s85, 0
      %p410 = por %p408, %p409
      %p411 = scmp.ne.s32.totalorder %s399, %s400
      %p412 = scmp.eq.s32.totalorder %s86, 1
      %p413 = por %p411, %p412
      %p415 = scmp.ne.s32.totalorder %s400, %s414
      %p416 = scmp.eq.s32.totalorder %s86, 0
      %p417 = por %p415, %p416
      %s419 = sadd.s32 %s418, 1
      %p422 = scmp.eq.s32.totalorder %s80, 1
      %p423 = scmp.ne.s32.totalorder %s418, %s420
      %p424 = scmp.eq.s32.totalorder %s80, 0
      %p425 = por %p423, %p424
      %p426 = scmp.ne.s32.totalorder %s418, %s420
      %p427 = scmp.eq.s32.totalorder %s85, 1
      %p428 = por %p426, %p427
      %p429 = scmp.ne.s32.totalorder %s420, %s421
      %p430 = scmp.eq.s32.totalorder %s85, 0
      %p431 = por %p429, %p430
      %p432 = scmp.ne.s32.totalorder %s420, %s421
      %p433 = scmp.eq.s32.totalorder %s86, 1
      %p434 = por %p432, %p433
      %p436 = scmp.ne.s32.totalorder %s421, %s435
      %p437 = scmp.eq.s32.totalorder %s86, 0
      %p438 = por %p436, %p437
      %s440 = sadd.s32 %s439, 1
      %p443 = scmp.eq.s32.totalorder %s80, 1
      %p444 = scmp.ne.s32.totalorder %s439, %s441
      %p445 = scmp.eq.s32.totalorder %s80, 0
      %p446 = por %p444, %p445
      %p447 = scmp.ne.s32.totalorder %s439, %s441
      %p448 = scmp.eq.s32.totalorder %s85, 1
      %p449 = por %p447, %p448
      %p450 = scmp.ne.s32.totalorder %s441, %s442
      %p451 = scmp.eq.s32.totalorder %s85, 0
      %p452 = por %p450, %p451
      %p453 = scmp.ne.s32.totalorder %s441, %s442
      %p454 = scmp.eq.s32.totalorder %s86, 1
      %p455 = por %p453, %p454
      %p457 = scmp.ne.s32.totalorder %s442, %s456
      %p458 = scmp.eq.s32.totalorder %s86, 0
      %p459 = por %p457, %p458
      %s461 = sadd.s32 %s460, 1
      %p464 = scmp.eq.s32.totalorder %s80, 1
      %p465 = scmp.ne.s32.totalorder %s460, %s462
      %p466 = scmp.eq.s32.totalorder %s80, 0
      %p467 = por %p465, %p466
      %p468 = scmp.ne.s32.totalorder %s460, %s462
      %p469 = scmp.eq.s32.totalorder %s85, 1
      %p470 = por %p468, %p469
      %p471 = scmp.ne.s32.totalorder %s462, %s463
      %p472 = scmp.eq.s32.totalorder %s85, 0
      %p473 = por %p471, %p472
      %p474 = scmp.ne.s32.totalorder %s462, %s463
      %p475 = scmp.eq.s32.totalorder %s86, 1
      %p476 = por %p474, %p475
      %p478 = scmp.ne.s32.totalorder %s463, %s477
      %p479 = scmp.eq.s32.totalorder %s86, 0
      %p480 = por %p478, %p479
      %s482 = sadd.s32 %s481, 1
      %p485 = scmp.eq.s32.totalorder %s80, 1
      %p486 = scmp.ne.s32.totalorder %s481, %s483
      %p487 = scmp.eq.s32.totalorder %s80, 0
      %p488 = por %p486, %p487
      %p489 = scmp.ne.s32.totalorder %s481, %s483
      %p490 = scmp.eq.s32.totalorder %s85, 1
      %p491 = por %p489, %p490
      %p492 = scmp.ne.s32.totalorder %s483, %s484
      %p493 = scmp.eq.s32.totalorder %s85, 0
      %p494 = por %p492, %p493
      %p495 = scmp.ne.s32.totalorder %s483, %s484
      %p496 = scmp.eq.s32.totalorder %s86, 1
      %p497 = por %p495, %p496
      %p499 = scmp.ne.s32.totalorder %s484, %s498
      %p500 = scmp.eq.s32.totalorder %s86, 0
      %p501 = por %p499, %p500
      %s503 = sadd.s32 %s502, 1
      %p506 = scmp.eq.s32.totalorder %s80, 1
      %p507 = scmp.ne.s32.totalorder %s502, %s504
      %p508 = scmp.eq.s32.totalorder %s80, 0
      %p509 = por %p507, %p508
      %p510 = scmp.ne.s32.totalorder %s502, %s504
      %p511 = scmp.eq.s32.totalorder %s85, 1
      %p512 = por %p510, %p511
      %p513 = scmp.ne.s32.totalorder %s504, %s505
      %p514 = scmp.eq.s32.totalorder %s85, 0
      %p515 = por %p513, %p514
      %p516 = scmp.ne.s32.totalorder %s504, %s505
      %p517 = scmp.eq.s32.totalorder %s86, 1
      %p518 = por %p516, %p517
      %p520 = scmp.ne.s32.totalorder %s505, %s519
      %p521 = scmp.eq.s32.totalorder %s86, 0
      %p522 = por %p520, %p521
      %s524 = sadd.s32 %s523, 1
      %p527 = scmp.eq.s32.totalorder %s80, 1
      %p528 = scmp.ne.s32.totalorder %s523, %s525
      %p529 = scmp.eq.s32.totalorder %s80, 0
      %p530 = por %p528, %p529
      %p531 = scmp.ne.s32.totalorder %s523, %s525
      %p532 = scmp.eq.s32.totalorder %s85, 1
      %p533 = por %p531, %p532
      %p534 = scmp.ne.s32.totalorder %s525, %s526
      %p535 = scmp.eq.s32.totalorder %s85, 0
      %p536 = por %p534, %p535
      %p537 = scmp.ne.s32.totalorder %s525, %s526
      %p538 = scmp.eq.s32.totalorder %s86, 1
      %p539 = por %p537, %p538
      %p541 = scmp.ne.s32.totalorder %s526, %s540
      %p542 = scmp.eq.s32.totalorder %s86, 0
      %p543 = por %p541, %p542
      %s545 = sadd.s32 %s544, 1
      %p548 = scmp.eq.s32.totalorder %s80, 1
      %p549 = scmp.ne.s32.totalorder %s544, %s546
      %p550 = scmp.eq.s32.totalorder %s80, 0
      %p551 = por %p549, %p550
      %p552 = scmp.ne.s32.totalorder %s544, %s546
      %p553 = scmp.eq.s32.totalorder %s85, 1
      %p554 = por %p552, %p553
      %p555 = scmp.ne.s32.totalorder %s546, %s547
      %p556 = scmp.eq.s32.totalorder %s85, 0
      %p557 = por %p555, %p556
      %p558 = scmp.ne.s32.totalorder %s546, %s547
      %p559 = scmp.eq.s32.totalorder %s86, 1
      %p560 = por %p558, %p559
      %p562 = scmp.ne.s32.totalorder %s547, %s561
      %p563 = scmp.eq.s32.totalorder %s86, 0
      %p564 = por %p562, %p563
      %s566 = sadd.s32 %s565, 1
      %p569 = scmp.eq.s32.totalorder %s80, 1
      %p570 = scmp.ne.s32.totalorder %s565, %s567
      %p571 = scmp.eq.s32.totalorder %s80, 0
      %p572 = por %p570, %p571
      %p573 = scmp.ne.s32.totalorder %s565, %s567
      %p574 = scmp.eq.s32.totalorder %s85, 1
      %p575 = por %p573, %p574
      %p576 = scmp.ne.s32.totalorder %s567, %s568
      %p577 = scmp.eq.s32.totalorder %s85, 0
      %p578 = por %p576, %p577
      %p579 = scmp.ne.s32.totalorder %s567, %s568
      %p580 = scmp.eq.s32.totalorder %s86, 1
      %p581 = por %p579, %p580
      %p583 = scmp.ne.s32.totalorder %s568, %s582
      %p584 = scmp.eq.s32.totalorder %s86, 0
      %p585 = por %p583, %p584
      %s587 = sadd.s32 %s586, 1
      %p590 = scmp.eq.s32.totalorder %s80, 1
      %p591 = scmp.ne.s32.totalorder %s586, %s588
      %p592 = scmp.eq.s32.totalorder %s80, 0
      %p593 = por %p591, %p592
      %p594 = scmp.ne.s32.totalorder %s586, %s588
      %p595 = scmp.eq.s32.totalorder %s85, 1
      %p596 = por %p594, %p595
      %p597 = scmp.ne.s32.totalorder %s588, %s589
      %p598 = scmp.eq.s32.totalorder %s85, 0
      %p599 = por %p597, %p598
      %p600 = scmp.ne.s32.totalorder %s588, %s589
      %p601 = scmp.eq.s32.totalorder %s86, 1
      %p602 = por %p600, %p601
      %p604 = scmp.ne.s32.totalorder %s589, %s603
      %p605 = scmp.eq.s32.totalorder %s86, 0
      %p606 = por %p604, %p605
      %s608 = sadd.s32 %s607, 1
      %p611 = scmp.eq.s32.totalorder %s80, 1
      %p612 = scmp.ne.s32.totalorder %s607, %s609
      %p613 = scmp.eq.s32.totalorder %s80, 0
      %p614 = por %p612, %p613
      %p615 = scmp.ne.s32.totalorder %s607, %s609
      %p616 = scmp.eq.s32.totalorder %s85, 1
      %p617 = por %p615, %p616
      %p618 = scmp.ne.s32.totalorder %s609, %s610
      %p619 = scmp.eq.s32.totalorder %s85, 0
      %p620 = por %p618, %p619
      %p621 = scmp.ne.s32.totalorder %s609, %s610
      %p622 = scmp.eq.s32.totalorder %s86, 1
      %p623 = por %p621, %p622
      %p625 = scmp.ne.s32.totalorder %s610, %s624
      %p626 = scmp.eq.s32.totalorder %s86, 0
      %p627 = por %p625, %p626
      %s629 = sadd.s32 %s628, 1
      %p632 = scmp.eq.s32.totalorder %s80, 1
      %p633 = scmp.ne.s32.totalorder %s628, %s630
      %p634 = scmp.eq.s32.totalorder %s80, 0
      %p635 = por %p633, %p634
      %p636 = scmp.ne.s32.totalorder %s628, %s630
      %p637 = scmp.eq.s32.totalorder %s85, 1
      %p638 = por %p636, %p637
      %p639 = scmp.ne.s32.totalorder %s630, %s631
      %p640 = scmp.eq.s32.totalorder %s85, 0
      %p641 = por %p639, %p640
      %p642 = scmp.ne.s32.totalorder %s630, %s631
      %p643 = scmp.eq.s32.totalorder %s86, 1
      %p644 = por %p642, %p643
      %p646 = scmp.ne.s32.totalorder %s631, %s645
      %p647 = scmp.eq.s32.totalorder %s86, 0
      %p648 = por %p646, %p647
      %s650 = sadd.s32 %s649, 1
      %p653 = scmp.eq.s32.totalorder %s80, 1
      %p654 = scmp.ne.s32.totalorder %s649, %s651
      %p655 = scmp.eq.s32.totalorder %s80, 0
      %p656 = por %p654, %p655
      %p657 = scmp.ne.s32.totalorder %s649, %s651
      %p658 = scmp.eq.s32.totalorder %s85, 1
      %p659 = por %p657, %p658
      %p660 = scmp.ne.s32.totalorder %s651, %s652
      %p661 = scmp.eq.s32.totalorder %s85, 0
      %p662 = por %p660, %p661
      %p663 = scmp.ne.s32.totalorder %s651, %s652
      %p664 = scmp.eq.s32.totalorder %s86, 1
      %p665 = por %p663, %p664
      %p667 = scmp.ne.s32.totalorder %s652, %s666
      %p668 = scmp.eq.s32.totalorder %s86, 0
      %p669 = por %p667, %p668
      %s671 = sadd.s32 %s670, 1
      %p674 = scmp.eq.s32.totalorder %s80, 1
      %p675 = scmp.ne.s32.totalorder %s670, %s672
      %p676 = scmp.eq.s32.totalorder %s80, 0
      %p677 = por %p675, %p676
      %p678 = scmp.ne.s32.totalorder %s670, %s672
      %p679 = scmp.eq.s32.totalorder %s85, 1
      %p680 = por %p678, %p679
      %p681 = scmp.ne.s32.totalorder %s672, %s673
      %p682 = scmp.eq.s32.totalorder %s85, 0
      %p683 = por %p681, %p682
      %p684 = scmp.ne.s32.totalorder %s672, %s673
      %p685 = scmp.eq.s32.totalorder %s86, 1
      %p686 = por %p684, %p685
      %p688 = scmp.ne.s32.totalorder %s673, %s687
      %p689 = scmp.eq.s32.totalorder %s86, 0
      %p690 = por %p688, %p689
      %s692 = sadd.s32 %s691, 1
      %p695 = scmp.eq.s32.totalorder %s80, 1
      %p696 = scmp.ne.s32.totalorder %s691, %s693
      %p697 = scmp.eq.s32.totalorder %s80, 0
      %p698 = por %p696, %p697
      %p699 = scmp.ne.s32.totalorder %s691, %s693
      %p700 = scmp.eq.s32.totalorder %s85, 1
      %p701 = por %p699, %p700
      %p702 = scmp.ne.s32.totalorder %s693, %s694
      %p703 = scmp.eq.s32.totalorder %s85, 0
      %p704 = por %p702, %p703
      %p705 = scmp.ne.s32.totalorder %s693, %s694
      %p706 = scmp.eq.s32.totalorder %s86, 1
      %p707 = por %p705, %p706
      %p709 = scmp.ne.s32.totalorder %s694, %s708
      %p710 = scmp.eq.s32.totalorder %s86, 0
      %p711 = por %p709, %p710
      %s712 = ssub.s32 %s80, %s87
      %p713 = scmp.eq.s32.totalorder %s712, 0
      %s715 = sadd.s32 %s714, 1
      %s716 = scalar_select %p713, %s714, %s715
      %p719 = pneg %p713
      %p720 = scmp.eq.s32.totalorder %s80, 1
      %p721 = por %p719, %p720
      %p722 = scmp.ne.s32.totalorder %s714, %s717
      %p723 = scmp.eq.s32.totalorder %s80, 0
      %p724 = por %p722, %p723
      %p725 = scmp.ne.s32.totalorder %s714, %s717
      %p726 = scmp.eq.s32.totalorder %s85, 1
      %p727 = por %p725, %p726
      %p728 = scmp.ne.s32.totalorder %s717, %s718
      %p729 = scmp.eq.s32.totalorder %s85, 0
      %p730 = por %p728, %p729
      %p731 = scmp.ne.s32.totalorder %s717, %s718
      %p732 = scmp.eq.s32.totalorder %s86, 1
      %p733 = por %p731, %p732
      %p735 = scmp.ne.s32.totalorder %s718, %s734
      %p736 = scmp.eq.s32.totalorder %s86, 0
      %p737 = por %p735, %p736
      %p738 = scmp.le.s32.totalorder 1, %s80
      %p739 = scmp.lt.s32.totalorder %s80, 3
      %p740 = pnand %p738, %p739
      %p741 = pneg %p740
      // Predicated region
      $region9: #{tpu_custom_call.1} parent=5 // pred_check
        _
      $region10: #{tpu_custom_call.1} parent=5 // pred_check_branch
        %743 = sbr.rel (%p740) target = $region12
      $region11: #{tpu_custom_call.1} parent=5 // pred_region
        %s744 = ssub.s32 %s80, 1
        // Predicated region
        $region13: #{tpu_custom_call.1} parent=11 // pred_check
          %p745 = pneg %p179
        $region14: #{tpu_custom_call.1} parent=11 // pred_check_branch
          %747 = sbr.rel (%p745) target = $region16
        $region15: #{tpu_custom_call.1} parent=11 // pred_region
          _
        $region16: #{tpu_custom_call.1} parent=11 // pred_fallthru
          _
        // Predicated region
        $region17: #{tpu_custom_call.1} parent=11 // pred_check
          %p748 = pneg %p200
        $region18: #{tpu_custom_call.1} parent=11 // pred_check_branch
          %750 = sbr.rel (%p748) target = $region20
        $region19: #{tpu_custom_call.1} parent=11 // pred_region
          %s752 = ssub.s32 16, 16
          %753 = vsyncadd [#allocation9], %s752
          %s755 = sshll.u32 [#allocation8], 4
          %s756 = int_to_ptr.vmem [resolvable:$true] %s755
          %758 = dma.hbm_to_vmem [thread:$0]  %s9, 16, %s756, [#allocation9]
        $region20: #{tpu_custom_call.1} parent=11 // pred_fallthru
          _
        // Predicated region
        $region21: #{tpu_custom_call.1} parent=11 // pred_check
          %p759 = pneg %p221
        $region22: #{tpu_custom_call.1} parent=11 // pred_check_branch
          %761 = sbr.rel (%p759) target = $region24
        $region23: #{tpu_custom_call.1} parent=11 // pred_region
          _
        $region24: #{tpu_custom_call.1} parent=11 // pred_fallthru
          _
        // Predicated region
        $region25: #{tpu_custom_call.1} parent=11 // pred_check
          %p762 = pneg %p242
        $region26: #{tpu_custom_call.1} parent=11 // pred_check_branch
          %764 = sbr.rel (%p762) target = $region28
        $region27: #{tpu_custom_call.1} parent=11 // pred_region
          %s766 = ssub.s32 16, 16
          %767 = vsyncadd [#allocation9], %s766
          %s769 = sshll.u32 [#allocation10], 4
          %s770 = int_to_ptr.vmem [resolvable:$true] %s769
          %772 = dma.hbm_to_vmem [thread:$0]  %s13, 16, %s770, [#allocation9]
        $region28: #{tpu_custom_call.1} parent=11 // pred_fallthru
          _
        // Predicated region
        $region29: #{tpu_custom_call.1} parent=11 // pred_check
          %p773 = pneg %p263
        $region30: #{tpu_custom_call.1} parent=11 // pred_check_branch
          %775 = sbr.rel (%p773) target = $region32
        $region31: #{tpu_custom_call.1} parent=11 // pred_region
          _
        $region32: #{tpu_custom_call.1} parent=11 // pred_fallthru
          _
        // Predicated region
        $region33: #{tpu_custom_call.1} parent=11 // pred_check
          %p776 = pneg %p284
        $region34: #{tpu_custom_call.1} parent=11 // pred_check_branch
          %778 = sbr.rel (%p776) target = $region36
        $region35: #{tpu_custom_call.1} parent=11 // pred_region
          %s780 = ssub.s32 16, 16
          %781 = vsyncadd [#allocation12], %s780
          %s783 = sshll.u32 [#allocation11], 4
          %s784 = int_to_ptr.vmem [resolvable:$true] %s783
          %786 = dma.hbm_to_vmem [thread:$0]  %s17, 16, %s784, [#allocation12]
        $region36: #{tpu_custom_call.1} parent=11 // pred_fallthru
          _
        // Predicated region
        $region37: #{tpu_custom_call.1} parent=11 // pred_check
          %p787 = pneg %p305
        $region38: #{tpu_custom_call.1} parent=11 // pred_check_branch
          %789 = sbr.rel (%p787) target = $region40
        $region39: #{tpu_custom_call.1} parent=11 // pred_region
          _
        $region40: #{tpu_custom_call.1} parent=11 // pred_fallthru
          _
        // Predicated region
        $region41: #{tpu_custom_call.1} parent=11 // pred_check
          %p790 = pneg %p326
        $region42: #{tpu_custom_call.1} parent=11 // pred_check_branch
          %792 = sbr.rel (%p790) target = $region44
        $region43: #{tpu_custom_call.1} parent=11 // pred_region
          %s794 = ssub.s32 16, 16
          %795 = vsyncadd [#allocation12], %s794
          %s797 = sshll.u32 [#allocation13], 4
          %s798 = int_to_ptr.vmem [resolvable:$true] %s797
          %800 = dma.hbm_to_vmem [thread:$0]  %s21, 16, %s798, [#allocation12]
        $region44: #{tpu_custom_call.1} parent=11 // pred_fallthru
          _
        // Predicated region
        $region45: #{tpu_custom_call.1} parent=11 // pred_check
          %p801 = pneg %p347
        $region46: #{tpu_custom_call.1} parent=11 // pred_check_branch
          %803 = sbr.rel (%p801) target = $region48
        $region47: #{tpu_custom_call.1} parent=11 // pred_region
          %s805 = ssub.s32 16, 16
          %806 = vsyncadd [#allocation15], %s805
          %s808 = sshll.u32 [#allocation14], 4
          %s809 = int_to_ptr.vmem [resolvable:$true] %s808
          %811 = dma.hbm_to_vmem [thread:$0]  %s23, 16, %s809, [#allocation15]
        $region48: #{tpu_custom_call.1} parent=11 // pred_fallthru
          _
        // Predicated region
        $region49: #{tpu_custom_call.1} parent=11 // pred_check
          %p812 = pneg %p368
        $region50: #{tpu_custom_call.1} parent=11 // pred_check_branch
          %814 = sbr.rel (%p812) target = $region52
        $region51: #{tpu_custom_call.1} parent=11 // pred_region
          %s816 = ssub.s32 16, 16
          %817 = vsyncadd [#allocation15], %s816
          %s819 = sshll.u32 [#allocation16], 4
          %s820 = int_to_ptr.vmem [resolvable:$true] %s819
          %822 = dma.hbm_to_vmem [thread:$0]  %s25, 16, %s820, [#allocation15]
        $region52: #{tpu_custom_call.1} parent=11 // pred_fallthru
          _
        // Predicated region
        $region53: #{tpu_custom_call.1} parent=11 // pred_check
          %p823 = pneg %p389
        $region54: #{tpu_custom_call.1} parent=11 // pred_check_branch
          %825 = sbr.rel (%p823) target = $region56
        $region55: #{tpu_custom_call.1} parent=11 // pred_region
          _
        $region56: #{tpu_custom_call.1} parent=11 // pred_fallthru
          _
        // Predicated region
        $region57: #{tpu_custom_call.1} parent=11 // pred_check
          %p826 = pneg %p410
        $region58: #{tpu_custom_call.1} parent=11 // pred_check_branch
          %828 = sbr.rel (%p826) target = $region60
        $region59: #{tpu_custom_call.1} parent=11 // pred_region
          %s830 = ssub.s32 16, 16
          %831 = vsyncadd [#allocation18], %s830
          %s833 = sshll.u32 [#allocation17], 4
          %s834 = int_to_ptr.vmem [resolvable:$true] %s833
          %836 = dma.hbm_to_vmem [thread:$0]  %s29, 16, %s834, [#allocation18]
        $region60: #{tpu_custom_call.1} parent=11 // pred_fallthru
          _
        // Predicated region
        $region61: #{tpu_custom_call.1} parent=11 // pred_check
          %p837 = pneg %p431
        $region62: #{tpu_custom_call.1} parent=11 // pred_check_branch
          %839 = sbr.rel (%p837) target = $region64
        $region63: #{tpu_custom_call.1} parent=11 // pred_region
          _
        $region64: #{tpu_custom_call.1} parent=11 // pred_fallthru
          _
        // Predicated region
        $region65: #{tpu_custom_call.1} parent=11 // pred_check
          %p840 = pneg %p452
        $region66: #{tpu_custom_call.1} parent=11 // pred_check_branch
          %842 = sbr.rel (%p840) target = $region68
        $region67: #{tpu_custom_call.1} parent=11 // pred_region
          %s844 = ssub.s32 16, 16
          %845 = vsyncadd [#allocation18], %s844
          %s847 = sshll.u32 [#allocation19], 4
          %s848 = int_to_ptr.vmem [resolvable:$true] %s847
          %850 = dma.hbm_to_vmem [thread:$0]  %s33, 16, %s848, [#allocation18]
        $region68: #{tpu_custom_call.1} parent=11 // pred_fallthru
          _
        // Predicated region
        $region69: #{tpu_custom_call.1} parent=11 // pred_check
          %p851 = pneg %p473
        $region70: #{tpu_custom_call.1} parent=11 // pred_check_branch
          %853 = sbr.rel (%p851) target = $region72
        $region71: #{tpu_custom_call.1} parent=11 // pred_region
          %s855 = ssub.s32 512, 512
          %856 = vsyncadd [#allocation21], %s855
          %s857 = sshll.u32 [#allocation20], 4
          %s858 = int_to_ptr.vmem [resolvable:$true] %s857
          %863 = dma.hbm_to_vmem [thread:$0]  %s35, 512, %s858, [#allocation21], 128, 128, 8
        $region72: #{tpu_custom_call.1} parent=11 // pred_fallthru
          _
        // Predicated region
        $region73: #{tpu_custom_call.1} parent=11 // pred_check
          %p864 = pneg %p494
        $region74: #{tpu_custom_call.1} parent=11 // pred_check_branch
          %866 = sbr.rel (%p864) target = $region76
        $region75: #{tpu_custom_call.1} parent=11 // pred_region
          _
        $region76: #{tpu_custom_call.1} parent=11 // pred_fallthru
          _
        // Predicated region
        $region77: #{tpu_custom_call.1} parent=11 // pred_check
          %p867 = pneg %p515
        $region78: #{tpu_custom_call.1} parent=11 // pred_check_branch
          %869 = sbr.rel (%p867) target = $region80
        $region79: #{tpu_custom_call.1} parent=11 // pred_region
          %s871 = ssub.s32 512, 512
          %872 = vsyncadd [#allocation21], %s871
          %s873 = sshll.u32 [#allocation22], 4
          %s874 = int_to_ptr.vmem [resolvable:$true] %s873
          %879 = dma.hbm_to_vmem [thread:$0]  %s39, 512, %s874, [#allocation21], 128, 128, 8
        $region80: #{tpu_custom_call.1} parent=11 // pred_fallthru
          _
        // Predicated region
        $region81: #{tpu_custom_call.1} parent=11 // pred_check
          %p880 = pneg %p536
        $region82: #{tpu_custom_call.1} parent=11 // pred_check_branch
          %882 = sbr.rel (%p880) target = $region84
        $region83: #{tpu_custom_call.1} parent=11 // pred_region
          _
        $region84: #{tpu_custom_call.1} parent=11 // pred_fallthru
          _
        // Predicated region
        $region85: #{tpu_custom_call.1} parent=11 // pred_check
          %p883 = pneg %p557
        $region86: #{tpu_custom_call.1} parent=11 // pred_check_branch
          %885 = sbr.rel (%p883) target = $region88
        $region87: #{tpu_custom_call.1} parent=11 // pred_region
          _
        $region88: #{tpu_custom_call.1} parent=11 // pred_fallthru
          _
        // Predicated region
        $region89: #{tpu_custom_call.1} parent=11 // pred_check
          %p886 = pneg %p578
        $region90: #{tpu_custom_call.1} parent=11 // pred_check_branch
          %888 = sbr.rel (%p886) target = $region92
        $region91: #{tpu_custom_call.1} parent=11 // pred_region
          _
        $region92: #{tpu_custom_call.1} parent=11 // pred_fallthru
          _
        // Predicated region
        $region93: #{tpu_custom_call.1} parent=11 // pred_check
          %p889 = pneg %p599
        $region94: #{tpu_custom_call.1} parent=11 // pred_check_branch
          %891 = sbr.rel (%p889) target = $region96
        $region95: #{tpu_custom_call.1} parent=11 // pred_region
          %s893 = ssub.s32 512, 512
          %894 = vsyncadd [#allocation24], %s893
          %s895 = sshll.u32 [#allocation23], 4
          %s896 = int_to_ptr.vmem [resolvable:$true] %s895
          %901 = dma.hbm_to_vmem [thread:$0]  %s47, 512, %s896, [#allocation24], 128, 128, 8
        $region96: #{tpu_custom_call.1} parent=11 // pred_fallthru
          _
        // Predicated region
        $region97: #{tpu_custom_call.1} parent=11 // pred_check
          %p902 = pneg %p620
        $region98: #{tpu_custom_call.1} parent=11 // pred_check_branch
          %904 = sbr.rel (%p902) target = $region100
        $region99: #{tpu_custom_call.1} parent=11 // pred_region
          _
        $region100: #{tpu_custom_call.1} parent=11 // pred_fallthru
          _
        // Predicated region
        $region101: #{tpu_custom_call.1} parent=11 // pred_check
          %p905 = pneg %p641
        $region102: #{tpu_custom_call.1} parent=11 // pred_check_branch
          %907 = sbr.rel (%p905) target = $region104
        $region103: #{tpu_custom_call.1} parent=11 // pred_region
          _
        $region104: #{tpu_custom_call.1} parent=11 // pred_fallthru
          _
        // Predicated region
        $region105: #{tpu_custom_call.1} parent=11 // pred_check
          %p908 = pneg %p662
        $region106: #{tpu_custom_call.1} parent=11 // pred_check_branch
          %910 = sbr.rel (%p908) target = $region108
        $region107: #{tpu_custom_call.1} parent=11 // pred_region
          _
        $region108: #{tpu_custom_call.1} parent=11 // pred_fallthru
          _
        // Predicated region
        $region109: #{tpu_custom_call.1} parent=11 // pred_check
          %p911 = pneg %p683
        $region110: #{tpu_custom_call.1} parent=11 // pred_check_branch
          %913 = sbr.rel (%p911) target = $region112
        $region111: #{tpu_custom_call.1} parent=11 // pred_region
          _
        $region112: #{tpu_custom_call.1} parent=11 // pred_fallthru
          _
        // Predicated region
        $region113: #{tpu_custom_call.1} parent=11 // pred_check
          %p914 = pneg %p704
        $region114: #{tpu_custom_call.1} parent=11 // pred_check_branch
          %916 = sbr.rel (%p914) target = $region116
        $region115: #{tpu_custom_call.1} parent=11 // pred_region
          _
        $region116: #{tpu_custom_call.1} parent=11 // pred_fallthru
          _
      $region12: #{tpu_custom_call.1} parent=5 // pred_fallthru
        _
      %p917 = scmp.lt.s32.totalorder %s80, 2
      // Predicated region
      $region117: #{tpu_custom_call.1} parent=5 // pred_check
        %p918 = pneg %p917
      $region118: #{tpu_custom_call.1} parent=5 // pred_check_branch
        %920 = sbr.rel (%p918) target = $region120
      $region119: #{tpu_custom_call.1} parent=5 // pred_region
        // Predicated region
        $region121: #{tpu_custom_call.1} parent=119 // pred_check
          %p921 = pneg %p100
        $region122: #{tpu_custom_call.1} parent=119 // pred_check_branch
          %923 = sbr.rel (%p921) target = $region124
        $region123: #{tpu_custom_call.1} parent=119 // pred_region
          %s924 = sand.u32 %s90, 1
          %s925 = scalar_lea.sflag [#allocation3], %s924
          %s926 = sand.u32 %s90, 1
          %s927 = smul.addr %s926, 8
          %s928 = scalar_lea.vmem [#allocation2], %s927
          %s930 = ssub.s32 128, 128
          %931 = vsyncadd %s925, %s930
          %s932 = smul.addr %s80, 128
          %s933 = scalar_lea.hbm %s1, %s932
          %s935 = sshll.u32 %s928, 4
          %s936 = int_to_ptr.vmem [resolvable:$true] %s935
          %938 = dma.hbm_to_vmem [thread:$0]  %s933, 128, %s936, %s925
        $region124: #{tpu_custom_call.1} parent=119 // pred_fallthru
          _
        // Predicated region
        $region125: #{tpu_custom_call.1} parent=119 // pred_check
          %p939 = pneg %p126
        $region126: #{tpu_custom_call.1} parent=119 // pred_check_branch
          %941 = sbr.rel (%p939) target = $region128
        $region127: #{tpu_custom_call.1} parent=119 // pred_region
          %s942 = sand.u32 %s80, 1
          %s943 = scalar_lea.sflag [#allocation6], %s942
          %s944 = sand.u32 %s116, 1
          %s945 = smul.addr %s944, 8
          %s946 = scalar_lea.vmem [#allocation5], %s945
          %s948 = ssub.s32 128, 128
          %949 = vsyncadd %s943, %s948
          %s950 = smul.addr %s80, 128
          %s951 = scalar_lea.hbm %s3, %s950
          %s953 = sshll.u32 %s946, 4
          %s954 = int_to_ptr.vmem [resolvable:$true] %s953
          %956 = dma.hbm_to_vmem [thread:$0]  %s951, 128, %s954, %s943
        $region128: #{tpu_custom_call.1} parent=119 // pred_fallthru
          _
        // Predicated region
        $region129: #{tpu_custom_call.1} parent=119 // pred_check
          %p957 = pneg %p152
        $region130: #{tpu_custom_call.1} parent=119 // pred_check_branch
          %959 = sbr.rel (%p957) target = $region132
        $region131: #{tpu_custom_call.1} parent=119 // pred_region
          %s960 = sand.u32 %s80, 1
          %s961 = scalar_lea.sflag [#allocation6], %s960
          %s962 = sand.u32 %s142, 1
          %s963 = smul.addr %s962, 8
          %s964 = scalar_lea.vmem [#allocation7], %s963
          %s966 = ssub.s32 128, 128
          %967 = vsyncadd %s961, %s966
          %s968 = smul.addr %s80, 128
          %s969 = scalar_lea.hbm %s5, %s968
          %s971 = sshll.u32 %s964, 4
          %s972 = int_to_ptr.vmem [resolvable:$true] %s971
          %974 = dma.hbm_to_vmem [thread:$0]  %s969, 128, %s972, %s961
        $region132: #{tpu_custom_call.1} parent=119 // pred_fallthru
          _
      $region120: #{tpu_custom_call.1} parent=5 // pred_fallthru
        _
      %p975 = scmp.le.s32.totalorder 1, %s80
      %p976 = scmp.lt.s32.totalorder %s80, 3
      %p977 = pnand %p975, %p976
      %p978 = pneg %p977
      // Predicated region
      $region133: #{tpu_custom_call.1} parent=5 // pred_check
        _
      $region134: #{tpu_custom_call.1} parent=5 // pred_check_branch
        %980 = sbr.rel (%p977) target = $region136
      $region135: #{tpu_custom_call.1} parent=5 // pred_region
        %s981 = ssub.s32 %s80, 1
        %s982 = sand.u32 %s93, 1
        %s983 = scalar_lea.sflag [#allocation3], %s982
        %s984 = sand.u32 %s93, 1
        %s985 = smul.addr %s984, 8
        %s986 = scalar_lea.vmem [#allocation2], %s985
        // Predicated region
        $region137: #{tpu_custom_call.1} parent=135 // pred_check
          %p987 = pneg %p106
        $region138: #{tpu_custom_call.1} parent=135 // pred_check_branch
          %989 = sbr.rel (%p987) target = $region140
        $region139: #{tpu_custom_call.1} parent=135 // pred_region
          %990 = dma.done %s983, 128
        $region140: #{tpu_custom_call.1} parent=135 // pred_fallthru
          _
        %s991 = sand.u32 %s85, 1
        %s992 = scalar_lea.sflag [#allocation6], %s991
        %s993 = sand.u32 %s119, 1
        %s994 = smul.addr %s993, 8
        %s995 = scalar_lea.vmem [#allocation5], %s994
        // Predicated region
        $region141: #{tpu_custom_call.1} parent=135 // pred_check
          %p996 = pneg %p132
        $region142: #{tpu_custom_call.1} parent=135 // pred_check_branch
          %998 = sbr.rel (%p996) target = $region144
        $region143: #{tpu_custom_call.1} parent=135 // pred_region
          %999 = dma.done %s992, 128
        $region144: #{tpu_custom_call.1} parent=135 // pred_fallthru
          _
        %s1000 = sand.u32 %s85, 1
        %s1001 = scalar_lea.sflag [#allocation6], %s1000
        %s1002 = sand.u32 %s145, 1
        %s1003 = smul.addr %s1002, 8
        %s1004 = scalar_lea.vmem [#allocation7], %s1003
        // Predicated region
        $region145: #{tpu_custom_call.1} parent=135 // pred_check
          %p1005 = pneg %p158
        $region146: #{tpu_custom_call.1} parent=135 // pred_check_branch
          %1007 = sbr.rel (%p1005) target = $region148
        $region147: #{tpu_custom_call.1} parent=135 // pred_region
          %1008 = dma.done %s1001, 128
        $region148: #{tpu_custom_call.1} parent=135 // pred_fallthru
          _
        // Predicated region
        $region149: #{tpu_custom_call.1} parent=135 // pred_check
          %p1009 = pneg %p200
        $region150: #{tpu_custom_call.1} parent=135 // pred_check_branch
          %1011 = sbr.rel (%p1009) target = $region152
        $region151: #{tpu_custom_call.1} parent=135 // pred_region
          %1012 = dma.done [#allocation9], 16
        $region152: #{tpu_custom_call.1} parent=135 // pred_fallthru
          _
        // Predicated region
        $region153: #{tpu_custom_call.1} parent=135 // pred_check
          %p1013 = pneg %p242
        $region154: #{tpu_custom_call.1} parent=135 // pred_check_branch
          %1015 = sbr.rel (%p1013) target = $region156
        $region155: #{tpu_custom_call.1} parent=135 // pred_region
          %1016 = dma.done [#allocation9], 16
        $region156: #{tpu_custom_call.1} parent=135 // pred_fallthru
          _
        // Predicated region
        $region157: #{tpu_custom_call.1} parent=135 // pred_check
          %p1017 = pneg %p284
        $region158: #{tpu_custom_call.1} parent=135 // pred_check_branch
          %1019 = sbr.rel (%p1017) target = $region160
        $region159: #{tpu_custom_call.1} parent=135 // pred_region
          %1020 = dma.done [#allocation12], 16
        $region160: #{tpu_custom_call.1} parent=135 // pred_fallthru
          _
        // Predicated region
        $region161: #{tpu_custom_call.1} parent=135 // pred_check
          %p1021 = pneg %p326
        $region162: #{tpu_custom_call.1} parent=135 // pred_check_branch
          %1023 = sbr.rel (%p1021) target = $region164
        $region163: #{tpu_custom_call.1} parent=135 // pred_region
          %1024 = dma.done [#allocation12], 16
        $region164: #{tpu_custom_call.1} parent=135 // pred_fallthru
          _
        // Predicated region
        $region165: #{tpu_custom_call.1} parent=135 // pred_check
          %p1025 = pneg %p347
        $region166: #{tpu_custom_call.1} parent=135 // pred_check_branch
          %1027 = sbr.rel (%p1025) target = $region168
        $region167: #{tpu_custom_call.1} parent=135 // pred_region
          %1028 = dma.done [#allocation15], 16
        $region168: #{tpu_custom_call.1} parent=135 // pred_fallthru
          _
        // Predicated region
        $region169: #{tpu_custom_call.1} parent=135 // pred_check
          %p1029 = pneg %p368
        $region170: #{tpu_custom_call.1} parent=135 // pred_check_branch
          %1031 = sbr.rel (%p1029) target = $region172
        $region171: #{tpu_custom_call.1} parent=135 // pred_region
          %1032 = dma.done [#allocation15], 16
        $region172: #{tpu_custom_call.1} parent=135 // pred_fallthru
          _
        // Predicated region
        $region173: #{tpu_custom_call.1} parent=135 // pred_check
          %p1033 = pneg %p410
        $region174: #{tpu_custom_call.1} parent=135 // pred_check_branch
          %1035 = sbr.rel (%p1033) target = $region176
        $region175: #{tpu_custom_call.1} parent=135 // pred_region
          %1036 = dma.done [#allocation18], 16
        $region176: #{tpu_custom_call.1} parent=135 // pred_fallthru
          _
        // Predicated region
        $region177: #{tpu_custom_call.1} parent=135 // pred_check
          %p1037 = pneg %p452
        $region178: #{tpu_custom_call.1} parent=135 // pred_check_branch
          %1039 = sbr.rel (%p1037) target = $region180
        $region179: #{tpu_custom_call.1} parent=135 // pred_region
          %1040 = dma.done [#allocation18], 16
        $region180: #{tpu_custom_call.1} parent=135 // pred_fallthru
          _
        // Predicated region
        $region181: #{tpu_custom_call.1} parent=135 // pred_check
          %p1041 = pneg %p473
        $region182: #{tpu_custom_call.1} parent=135 // pred_check_branch
          %1043 = sbr.rel (%p1041) target = $region184
        $region183: #{tpu_custom_call.1} parent=135 // pred_region
          %1044 = dma.done [#allocation21], 512
        $region184: #{tpu_custom_call.1} parent=135 // pred_fallthru
          _
        // Predicated region
        $region185: #{tpu_custom_call.1} parent=135 // pred_check
          %p1045 = pneg %p515
        $region186: #{tpu_custom_call.1} parent=135 // pred_check_branch
          %1047 = sbr.rel (%p1045) target = $region188
        $region187: #{tpu_custom_call.1} parent=135 // pred_region
          %1048 = dma.done [#allocation21], 512
        $region188: #{tpu_custom_call.1} parent=135 // pred_fallthru
          _
        // Predicated region
        $region189: #{tpu_custom_call.1} parent=135 // pred_check
          %p1049 = pneg %p599
        $region190: #{tpu_custom_call.1} parent=135 // pred_check_branch
          %1051 = sbr.rel (%p1049) target = $region192
        $region191: #{tpu_custom_call.1} parent=135 // pred_region
          %1052 = dma.done [#allocation24], 512
        $region192: #{tpu_custom_call.1} parent=135 // pred_fallthru
          _
        %s1053 = sand.u32 %s93, 1
        %s1054 = scalar_lea.sflag [#allocation3], %s1053
        %s1055 = sand.u32 %s93, 1
        %s1056 = smul.addr %s1055, 8
        %s1057 = scalar_lea.vmem [#allocation2], %s1056
        %p1058 = pneg %p106
        %p1059 = pneg %p103
        %s1060 = sand.u32 %s85, 1
        %s1061 = scalar_lea.sflag [#allocation6], %s1060
        %s1062 = sand.u32 %s119, 1
        %s1063 = smul.addr %s1062, 8
        %s1064 = scalar_lea.vmem [#allocation5], %s1063
        %p1065 = pneg %p132
        %p1066 = pneg %p129
        %s1067 = sand.u32 %s85, 1
        %s1068 = scalar_lea.sflag [#allocation6], %s1067
        %s1069 = sand.u32 %s145, 1
        %s1070 = smul.addr %s1069, 8
        %s1071 = scalar_lea.vmem [#allocation7], %s1070
        %p1072 = pneg %p158
        %p1073 = pneg %p155
        %p1074 = pneg %p179
        %p1075 = pneg %p176
        %p1076 = pneg %p200
        %p1077 = pneg %p197
        %p1078 = pneg %p221
        %p1079 = pneg %p218
        %p1080 = pneg %p242
        %p1081 = pneg %p239
        %p1082 = pneg %p263
        %p1083 = pneg %p260
        %p1084 = pneg %p284
        %p1085 = pneg %p281
        %p1086 = pneg %p305
        %p1087 = pneg %p302
        %p1088 = pneg %p326
        %p1089 = pneg %p323
        %p1090 = pneg %p347
        %p1091 = pneg %p344
        %p1092 = pneg %p368
        %p1093 = pneg %p365
        %p1094 = pneg %p389
        %p1095 = pneg %p386
        %p1096 = pneg %p410
        %p1097 = pneg %p407
        %p1098 = pneg %p431
        %p1099 = pneg %p428
        %p1100 = pneg %p452
        %p1101 = pneg %p449
        %p1102 = pneg %p473
        %p1103 = pneg %p470
        %p1104 = pneg %p494
        %p1105 = pneg %p491
        %p1106 = pneg %p515
        %p1107 = pneg %p512
        %p1108 = pneg %p536
        %p1109 = pneg %p533
        %p1110 = pneg %p557
        %p1111 = pneg %p554
        %p1112 = pneg %p578
        %p1113 = pneg %p575
        %p1114 = pneg %p599
        %p1115 = pneg %p596
        %p1116 = pneg %p620
        %p1117 = pneg %p617
        %p1118 = pneg %p641
        %p1119 = pneg %p638
        %p1120 = pneg %p662
        %p1121 = pneg %p659
        %p1122 = pneg %p683
        %p1123 = pneg %p680
        %p1124 = pneg %p704
        %p1125 = pneg %p701
        %p1126 = pneg %p730
        %p1127 = pneg %p727
        %s1128 = sand.u32 %s717, 1
        %s1129 = scalar_lea.sflag [#allocation4], %s1128
        %s1130 = sand.u32 %s717, 1
        %s1131 = smul.addr %s1130, 8
        %s1132 = scalar_lea.vmem [#allocation25], %s1131
        %v1133 = vld [vmem:[%s986] sm:$0xff]
        %v1134 = vld [vmem:[%s995] sm:$0xff]
        %v1135 = vld [vmem:[%s1004] sm:$0xff]
        %v1136 = vld [vmem:[%s7] sm:$0xff]
        %v1137 = vld [vmem:[%s7 + $0x8] sm:$0xff]
        %v1138 = vld [vmem:[%s7 + $0x10] sm:$0xff]
        %v1139 = vld [vmem:[%s7 + $0x18] sm:$0xff]
        %v1140 = vld [vmem:[#allocation8] sm:$0x1]
        %v1142 = vlaneseq
        %v1143 = vshrl.u32 %v1142, 7
        %v1144 = vsub.s32 0, %v1143
        %v1145 = vrot.slane %v1140, %v1144
        %vm1147 = vcmask 261120
        %v1149 = vsel %vm1147, %v1133, 0
        %1151 = vmatprep.subr.mxu0 0.0
        %1152 = vmatpush1.msra.mxu0 %v1136
        %1153 = vmatprep.subr.mxu0 0.0
        %1154 = vmatpush1.msra.mxu0 %v1137
        %1155 = vmatprep.subr.mxu0 0.0
        %1156 = vmatpush1.msra.mxu0 %v1138
        %1157 = vmatprep.subr.mxu0 0.0
        %1158 = vmatpush1.msra.mxu0 %v1139
        %1159 = vmatprep.subr.mxu0 0.0
        %1160 = vmatpush1.msra.mxu0 0.0
        %1161 = vmatprep.subr.mxu0 0.0
        %1162 = vmatpush1.msra.mxu0 0.0
        %1163 = vmatprep.subr.mxu0 0.0
        %1164 = vmatpush1.msra.mxu0 0.0
        %1165 = vmatprep.subr.mxu0 0.0
        %1166 = vmatpush1.msra.mxu0 0.0
        %1167 = vmatprep.subr.mxu0 0.0
        %1168 = vmatpush1.msra.mxu0 0.0
        %1169 = vmatprep.subr.mxu0 0.0
        %1170 = vmatpush1.msra.mxu0 0.0
        %1171 = vmatprep.subr.mxu0 0.0
        %1172 = vmatpush1.msra.mxu0 0.0
        %1173 = vmatprep.subr.mxu0 0.0
        %1174 = vmatpush1.msra.mxu0 0.0
        %1175 = vmatprep.subr.mxu0 0.0
        %1176 = vmatpush1.msra.mxu0 0.0
        %1177 = vmatprep.subr.mxu0 0.0
        %1178 = vmatpush1.msra.mxu0 0.0
        %1179 = vmatprep.subr.mxu0 0.0
        %1180 = vmatpush1.msra.mxu0 0.0
        %1181 = vmatprep.subr.mxu0 0.0
        %1182 = vmatpush1.msra.mxu0 0.0
        %1183 = vmatprep.subr.mxu0 0.0
        %1184 = vmatpush1.msra.mxu0 0.0
        %1185 = vmatprep.subr.mxu0 0.0
        %1186 = vmatpush1.msra.mxu0 0.0
        %1187 = vmatprep.subr.mxu0 0.0
        %1188 = vmatpush1.msra.mxu0 0.0
        %1189 = vmatprep.subr.mxu0 0.0
        %1190 = vmatpush1.msra.mxu0 0.0
        %1191 = vmatprep.subr.mxu0 0.0
        %1192 = vmatpush1.msra.mxu0 0.0
        %1193 = vmatprep.subr.mxu0 0.0
        %1194 = vmatpush1.msra.mxu0 0.0
        %1195 = vmatprep.subr.mxu0 0.0
        %1196 = vmatpush1.msra.mxu0 0.0
        %1197 = vmatprep.subr.mxu0 0.0
        %1198 = vmatpush1.msra.mxu0 0.0
        %1199 = vmatprep.subr.mxu0 0.0
        %1200 = vmatpush1.msra.mxu0 0.0
        %1201 = vmatprep.subr.mxu0 0.0
        %1202 = vmatpush1.msra.mxu0 0.0
        %1203 = vmatprep.subr.mxu0 0.0
        %1204 = vmatpush1.msra.mxu0 0.0
        %1205 = vmatprep.subr.mxu0 0.0
        %1206 = vmatpush1.msra.mxu0 0.0
        %1207 = vmatprep.subr.mxu0 0.0
        %1208 = vmatpush1.msra.mxu0 0.0
        %1209 = vmatprep.subr.mxu0 0.0
        %1210 = vmatpush1.msra.mxu0 0.0
        %1211 = vmatprep.subr.mxu0 0.0
        %1212 = vmatpush1.msra.mxu0 0.0
        %1213 = vmatprep.subr.mxu0 0.0
        %1214 = vmatpush1.msra.mxu0 0.0
        %1215 = vmatprep.mubr.f32.mxu0 0.0
        %1216 = vmatmul.mubr.f32.gmra.mrb[0].mxu0 %v1149
        %v1217 = vpop.f32.mrb[0].mxu0
        %v1218 = vadd.f32 %v1145, %v1217
        %v1219 = vpop.f32.mrb[0].mxu0
        %1220 = vdwg.mxu0
        %v1221 = vld [vmem:[%s11] sm:$0xff]
        %v1222 = vld [vmem:[%s11 + $0x8] sm:$0xff]
        %v1223 = vld [vmem:[%s11 + $0x10] sm:$0xff]
        %v1224 = vld [vmem:[%s11 + $0x18] sm:$0xff]
        %v1225 = vld [vmem:[#allocation10] sm:$0x1]
        %v1227 = vlaneseq
        %v1228 = vshrl.u32 %v1227, 7
        %v1229 = vsub.s32 0, %v1228
        %v1230 = vrot.slane %v1225, %v1229
        %1232 = vmatprep.subr.mxu0 0.0
        %1233 = vmatpush1.msra.mxu0 %v1221
        %1234 = vmatprep.subr.mxu0 0.0
        %1235 = vmatpush1.msra.mxu0 %v1222
        %1236 = vmatprep.subr.mxu0 0.0
        %1237 = vmatpush1.msra.mxu0 %v1223
        %1238 = vmatprep.subr.mxu0 0.0
        %1239 = vmatpush1.msra.mxu0 %v1224
        %1240 = vmatprep.subr.mxu0 0.0
        %1241 = vmatpush1.msra.mxu0 0.0
        %1242 = vmatprep.subr.mxu0 0.0
        %1243 = vmatpush1.msra.mxu0 0.0
        %1244 = vmatprep.subr.mxu0 0.0
        %1245 = vmatpush1.msra.mxu0 0.0
        %1246 = vmatprep.subr.mxu0 0.0
        %1247 = vmatpush1.msra.mxu0 0.0
        %1248 = vmatprep.subr.mxu0 0.0
        %1249 = vmatpush1.msra.mxu0 0.0
        %1250 = vmatprep.subr.mxu0 0.0
        %1251 = vmatpush1.msra.mxu0 0.0
        %1252 = vmatprep.subr.mxu0 0.0
        %1253 = vmatpush1.msra.mxu0 0.0
        %1254 = vmatprep.subr.mxu0 0.0
        %1255 = vmatpush1.msra.mxu0 0.0
        %1256 = vmatprep.subr.mxu0 0.0
        %1257 = vmatpush1.msra.mxu0 0.0
        %1258 = vmatprep.subr.mxu0 0.0
        %1259 = vmatpush1.msra.mxu0 0.0
        %1260 = vmatprep.subr.mxu0 0.0
        %1261 = vmatpush1.msra.mxu0 0.0
        %1262 = vmatprep.subr.mxu0 0.0
        %1263 = vmatpush1.msra.mxu0 0.0
        %1264 = vmatprep.subr.mxu0 0.0
        %1265 = vmatpush1.msra.mxu0 0.0
        %1266 = vmatprep.subr.mxu0 0.0
        %1267 = vmatpush1.msra.mxu0 0.0
        %1268 = vmatprep.subr.mxu0 0.0
        %1269 = vmatpush1.msra.mxu0 0.0
        %1270 = vmatprep.subr.mxu0 0.0
        %1271 = vmatpush1.msra.mxu0 0.0
        %1272 = vmatprep.subr.mxu0 0.0
        %1273 = vmatpush1.msra.mxu0 0.0
        %1274 = vmatprep.subr.mxu0 0.0
        %1275 = vmatpush1.msra.mxu0 0.0
        %1276 = vmatprep.subr.mxu0 0.0
        %1277 = vmatpush1.msra.mxu0 0.0
        %1278 = vmatprep.subr.mxu0 0.0
        %1279 = vmatpush1.msra.mxu0 0.0
        %1280 = vmatprep.subr.mxu0 0.0
        %1281 = vmatpush1.msra.mxu0 0.0
        %1282 = vmatprep.subr.mxu0 0.0
        %1283 = vmatpush1.msra.mxu0 0.0
        %1284 = vmatprep.subr.mxu0 0.0
        %1285 = vmatpush1.msra.mxu0 0.0
        %1286 = vmatprep.subr.mxu0 0.0
        %1287 = vmatpush1.msra.mxu0 0.0
        %1288 = vmatprep.subr.mxu0 0.0
        %1289 = vmatpush1.msra.mxu0 0.0
        %1290 = vmatprep.subr.mxu0 0.0
        %1291 = vmatpush1.msra.mxu0 0.0
        %1292 = vmatprep.subr.mxu0 0.0
        %1293 = vmatpush1.msra.mxu0 0.0
        %1294 = vmatprep.subr.mxu0 0.0
        %1295 = vmatpush1.msra.mxu0 0.0
        %1296 = vmatprep.mubr.f32.mxu0 0.0
        %1297 = vmatmul.mubr.f32.gmra.mrb[0].mxu0 %v1149
        %v1298 = vpop.f32.mrb[0].mxu0
        %v1299 = vadd.f32 %v1230, %v1298
        %v1300 = vpop.f32.mrb[0].mxu0
        %1301 = vdwg.mxu0
        %v1302 = vld [vmem:[%s15] sm:$0xff]
        %v1303 = vld [vmem:[%s15 + $0x8] sm:$0xff]
        %v1304 = vld [vmem:[%s15 + $0x10] sm:$0xff]
        %v1305 = vld [vmem:[%s15 + $0x18] sm:$0xff]
        %v1306 = vld [vmem:[#allocation11] sm:$0x1]
        %v1308 = vlaneseq
        %v1309 = vshrl.u32 %v1308, 7
        %v1310 = vsub.s32 0, %v1309
        %v1311 = vrot.slane %v1306, %v1310
        %1313 = vmatprep.subr.mxu0 0.0
        %1314 = vmatpush1.msra.mxu0 %v1302
        %1315 = vmatprep.subr.mxu0 0.0
        %1316 = vmatpush1.msra.mxu0 %v1303
        %1317 = vmatprep.subr.mxu0 0.0
        %1318 = vmatpush1.msra.mxu0 %v1304
        %1319 = vmatprep.subr.mxu0 0.0
        %1320 = vmatpush1.msra.mxu0 %v1305
        %1321 = vmatprep.subr.mxu0 0.0
        %1322 = vmatpush1.msra.mxu0 0.0
        %1323 = vmatprep.subr.mxu0 0.0
        %1324 = vmatpush1.msra.mxu0 0.0
        %1325 = vmatprep.subr.mxu0 0.0
        %1326 = vmatpush1.msra.mxu0 0.0
        %1327 = vmatprep.subr.mxu0 0.0
        %1328 = vmatpush1.msra.mxu0 0.0
        %1329 = vmatprep.subr.mxu0 0.0
        %1330 = vmatpush1.msra.mxu0 0.0
        %1331 = vmatprep.subr.mxu0 0.0
        %1332 = vmatpush1.msra.mxu0 0.0
        %1333 = vmatprep.subr.mxu0 0.0
        %1334 = vmatpush1.msra.mxu0 0.0
        %1335 = vmatprep.subr.mxu0 0.0
        %1336 = vmatpush1.msra.mxu0 0.0
        %1337 = vmatprep.subr.mxu0 0.0
        %1338 = vmatpush1.msra.mxu0 0.0
        %1339 = vmatprep.subr.mxu0 0.0
        %1340 = vmatpush1.msra.mxu0 0.0
        %1341 = vmatprep.subr.mxu0 0.0
        %1342 = vmatpush1.msra.mxu0 0.0
        %1343 = vmatprep.subr.mxu0 0.0
        %1344 = vmatpush1.msra.mxu0 0.0
        %1345 = vmatprep.subr.mxu0 0.0
        %1346 = vmatpush1.msra.mxu0 0.0
        %1347 = vmatprep.subr.mxu0 0.0
        %1348 = vmatpush1.msra.mxu0 0.0
        %1349 = vmatprep.subr.mxu0 0.0
        %1350 = vmatpush1.msra.mxu0 0.0
        %1351 = vmatprep.subr.mxu0 0.0
        %1352 = vmatpush1.msra.mxu0 0.0
        %1353 = vmatprep.subr.mxu0 0.0
        %1354 = vmatpush1.msra.mxu0 0.0
        %1355 = vmatprep.subr.mxu0 0.0
        %1356 = vmatpush1.msra.mxu0 0.0
        %1357 = vmatprep.subr.mxu0 0.0
        %1358 = vmatpush1.msra.mxu0 0.0
        %1359 = vmatprep.subr.mxu0 0.0
        %1360 = vmatpush1.msra.mxu0 0.0
        %1361 = vmatprep.subr.mxu0 0.0
        %1362 = vmatpush1.msra.mxu0 0.0
        %1363 = vmatprep.subr.mxu0 0.0
        %1364 = vmatpush1.msra.mxu0 0.0
        %1365 = vmatprep.subr.mxu0 0.0
        %1366 = vmatpush1.msra.mxu0 0.0
        %1367 = vmatprep.subr.mxu0 0.0
        %1368 = vmatpush1.msra.mxu0 0.0
        %1369 = vmatprep.subr.mxu0 0.0
        %1370 = vmatpush1.msra.mxu0 0.0
        %1371 = vmatprep.subr.mxu0 0.0
        %1372 = vmatpush1.msra.mxu0 0.0
        %1373 = vmatprep.subr.mxu0 0.0
        %1374 = vmatpush1.msra.mxu0 0.0
        %1375 = vmatprep.subr.mxu0 0.0
        %1376 = vmatpush1.msra.mxu0 0.0
        %1377 = vmatprep.mubr.f32.mxu0 0.0
        %1378 = vmatmul.mubr.f32.gmra.mrb[0].mxu0 %v1149
        %v1379 = vpop.f32.mrb[0].mxu0
        %v1380 = vadd.f32 %v1311, %v1379
        %v1381 = vpop.f32.mrb[0].mxu0
        %1382 = vdwg.mxu0
        %v1383 = vmul.f32 %v1218, 0.17677669
        %1385 = vrot.lane.b32.xlu0 %v1383, 120
        %v1386 = vpop.permute.xlu0 %1385
        %1387 = vrot.lane.b32.xlu0 %v1383, 112
        %v1388 = vpop.permute.xlu0 %1387
        %1389 = vrot.lane.b32.xlu0 %v1383, 104
        %v1390 = vpop.permute.xlu0 %1389
        %1392 = vrot.lane.b32.xlu0 %v1299, 120
        %v1393 = vpop.permute.xlu0 %1392
        %1394 = vrot.lane.b32.xlu0 %v1299, 112
        %v1395 = vpop.permute.xlu0 %1394
        %1396 = vrot.lane.b32.xlu0 %v1299, 104
        %v1397 = vpop.permute.xlu0 %1396
        %1399 = vrot.lane.b32.xlu0 %v1380, 120
        %v1400 = vpop.permute.xlu0 %1399
        %1402 = vrot.lane.b32.xlu0 %v1380, 112
        %v1403 = vpop.permute.xlu0 %1402
        %1405 = vrot.lane.b32.xlu0 %v1380, 104
        %v1406 = vpop.permute.xlu0 %1405
        %vm1408 = vcmask 64512
        %v1409 = vsel %vm1408, %v1383, 0
        %v1411 = vsel %vm1408, %v1299, 0
        %1413 = vmatprep.subr.mxu0 0.0
        %1414 = vmatpush1.xpose.msra.mxu0 %v1411
        %1415 = vmatprep.subr.mxu0 0.0
        %1416 = vmatpush1.xpose.msra.mxu0 0.0
        %1417 = vmatprep.subr.mxu0 0.0
        %1418 = vmatpush1.xpose.msra.mxu0 0.0
        %1419 = vmatprep.subr.mxu0 0.0
        %1420 = vmatpush1.xpose.msra.mxu0 0.0
        %1421 = vmatprep.subr.mxu0 0.0
        %1422 = vmatpush1.xpose.msra.mxu0 0.0
        %1423 = vmatprep.subr.mxu0 0.0
        %1424 = vmatpush1.xpose.msra.mxu0 0.0
        %1425 = vmatprep.subr.mxu0 0.0
        %1426 = vmatpush1.xpose.msra.mxu0 0.0
        %1427 = vmatprep.subr.mxu0 0.0
        %1428 = vmatpush1.xpose.msra.mxu0 0.0
        %1429 = vmatprep.subr.mxu0 0.0
        %1430 = vmatpush1.xpose.msra.mxu0 0.0
        %1431 = vmatprep.subr.mxu0 0.0
        %1432 = vmatpush1.xpose.msra.mxu0 0.0
        %1433 = vmatprep.subr.mxu0 0.0
        %1434 = vmatpush1.xpose.msra.mxu0 0.0
        %1435 = vmatprep.subr.mxu0 0.0
        %1436 = vmatpush1.xpose.msra.mxu0 0.0
        %1437 = vmatprep.subr.mxu0 0.0
        %1438 = vmatpush1.xpose.msra.mxu0 0.0
        %1439 = vmatprep.subr.mxu0 0.0
        %1440 = vmatpush1.xpose.msra.mxu0 0.0
        %1441 = vmatprep.subr.mxu0 0.0
        %1442 = vmatpush1.xpose.msra.mxu0 0.0
        %1443 = vmatprep.subr.mxu0 0.0
        %1444 = vmatpush1.xpose.msra.mxu0 0.0
        %1445 = vmatprep.subr.mxu0 0.0
        %1446 = vmatpush1.xpose.msra.mxu0 0.0
        %1447 = vmatprep.subr.mxu0 0.0
        %1448 = vmatpush1.xpose.msra.mxu0 0.0
        %1449 = vmatprep.subr.mxu0 0.0
        %1450 = vmatpush1.xpose.msra.mxu0 0.0
        %1451 = vmatprep.subr.mxu0 0.0
        %1452 = vmatpush1.xpose.msra.mxu0 0.0
        %1453 = vmatprep.subr.mxu0 0.0
        %1454 = vmatpush1.xpose.msra.mxu0 0.0
        %1455 = vmatprep.subr.mxu0 0.0
        %1456 = vmatpush1.xpose.msra.mxu0 0.0
        %1457 = vmatprep.subr.mxu0 0.0
        %1458 = vmatpush1.xpose.msra.mxu0 0.0
        %1459 = vmatprep.subr.mxu0 0.0
        %1460 = vmatpush1.xpose.msra.mxu0 0.0
        %1461 = vmatprep.subr.mxu0 0.0
        %1462 = vmatpush1.xpose.msra.mxu0 0.0
        %1463 = vmatprep.subr.mxu0 0.0
        %1464 = vmatpush1.xpose.msra.mxu0 0.0
        %1465 = vmatprep.subr.mxu0 0.0
        %1466 = vmatpush1.xpose.msra.mxu0 0.0
        %1467 = vmatprep.subr.mxu0 0.0
        %1468 = vmatpush1.xpose.msra.mxu0 0.0
        %1469 = vmatprep.subr.mxu0 0.0
        %1470 = vmatpush1.xpose.msra.mxu0 0.0
        %1471 = vmatprep.subr.mxu0 0.0
        %1472 = vmatpush1.xpose.msra.mxu0 0.0
        %1473 = vmatprep.subr.mxu0 0.0
        %1474 = vmatpush1.xpose.msra.mxu0 0.0
        %1475 = vmatprep.subr.mxu0 0.0
        %1476 = vmatpush1.xpose.msra.mxu0 0.0
        %1477 = vmatprep.mubr.f32.mxu0 0.0
        %1478 = vmatmul.mubr.f32.gmra.mrb[0].mxu0 %v1409
        %v1479 = vpop.f32.mrb[0].mxu0
        %v1480 = vadd.f32 0.0, %v1479
        %v1481 = vpop.f32.mrb[0].mxu0
        %1482 = vdwg.mxu0
        %v1483 = vsel %vm1408, %v1386, 0
        %v1485 = vsel %vm1408, %v1393, 0
        %1487 = vmatprep.subr.mxu0 0.0
        %1488 = vmatpush1.xpose.msra.mxu0 %v1485
        %1489 = vmatprep.subr.mxu0 0.0
        %1490 = vmatpush1.xpose.msra.mxu0 0.0
        %1491 = vmatprep.subr.mxu0 0.0
        %1492 = vmatpush1.xpose.msra.mxu0 0.0
        %1493 = vmatprep.subr.mxu0 0.0
        %1494 = vmatpush1.xpose.msra.mxu0 0.0
        %1495 = vmatprep.subr.mxu0 0.0
        %1496 = vmatpush1.xpose.msra.mxu0 0.0
        %1497 = vmatprep.subr.mxu0 0.0
        %1498 = vmatpush1.xpose.msra.mxu0 0.0
        %1499 = vmatprep.subr.mxu0 0.0
        %1500 = vmatpush1.xpose.msra.mxu0 0.0
        %1501 = vmatprep.subr.mxu0 0.0
        %1502 = vmatpush1.xpose.msra.mxu0 0.0
        %1503 = vmatprep.subr.mxu0 0.0
        %1504 = vmatpush1.xpose.msra.mxu0 0.0
        %1505 = vmatprep.subr.mxu0 0.0
        %1506 = vmatpush1.xpose.msra.mxu0 0.0
        %1507 = vmatprep.subr.mxu0 0.0
        %1508 = vmatpush1.xpose.msra.mxu0 0.0
        %1509 = vmatprep.subr.mxu0 0.0
        %1510 = vmatpush1.xpose.msra.mxu0 0.0
        %1511 = vmatprep.subr.mxu0 0.0
        %1512 = vmatpush1.xpose.msra.mxu0 0.0
        %1513 = vmatprep.subr.mxu0 0.0
        %1514 = vmatpush1.xpose.msra.mxu0 0.0
        %1515 = vmatprep.subr.mxu0 0.0
        %1516 = vmatpush1.xpose.msra.mxu0 0.0
        %1517 = vmatprep.subr.mxu0 0.0
        %1518 = vmatpush1.xpose.msra.mxu0 0.0
        %1519 = vmatprep.subr.mxu0 0.0
        %1520 = vmatpush1.xpose.msra.mxu0 0.0
        %1521 = vmatprep.subr.mxu0 0.0
        %1522 = vmatpush1.xpose.msra.mxu0 0.0
        %1523 = vmatprep.subr.mxu0 0.0
        %1524 = vmatpush1.xpose.msra.mxu0 0.0
        %1525 = vmatprep.subr.mxu0 0.0
        %1526 = vmatpush1.xpose.msra.mxu0 0.0
        %1527 = vmatprep.subr.mxu0 0.0
        %1528 = vmatpush1.xpose.msra.mxu0 0.0
        %1529 = vmatprep.subr.mxu0 0.0
        %1530 = vmatpush1.xpose.msra.mxu0 0.0
        %1531 = vmatprep.subr.mxu0 0.0
        %1532 = vmatpush1.xpose.msra.mxu0 0.0
        %1533 = vmatprep.subr.mxu0 0.0
        %1534 = vmatpush1.xpose.msra.mxu0 0.0
        %1535 = vmatprep.subr.mxu0 0.0
        %1536 = vmatpush1.xpose.msra.mxu0 0.0
        %1537 = vmatprep.subr.mxu0 0.0
        %1538 = vmatpush1.xpose.msra.mxu0 0.0
        %1539 = vmatprep.subr.mxu0 0.0
        %1540 = vmatpush1.xpose.msra.mxu0 0.0
        %1541 = vmatprep.subr.mxu0 0.0
        %1542 = vmatpush1.xpose.msra.mxu0 0.0
        %1543 = vmatprep.subr.mxu0 0.0
        %1544 = vmatpush1.xpose.msra.mxu0 0.0
        %1545 = vmatprep.subr.mxu0 0.0
        %1546 = vmatpush1.xpose.msra.mxu0 0.0
        %1547 = vmatprep.subr.mxu0 0.0
        %1548 = vmatpush1.xpose.msra.mxu0 0.0
        %1549 = vmatprep.subr.mxu0 0.0
        %1550 = vmatpush1.xpose.msra.mxu0 0.0
        %1551 = vmatprep.mubr.f32.mxu0 0.0
        %1552 = vmatmul.mubr.f32.gmra.mrb[0].mxu0 %v1483
        %v1553 = vpop.f32.mrb[0].mxu0
        %v1554 = vadd.f32 0.0, %v1553
        %v1555 = vpop.f32.mrb[0].mxu0
        %1556 = vdwg.mxu0
        %v1557 = vsel %vm1408, %v1388, 0
        %v1559 = vsel %vm1408, %v1395, 0
        %1561 = vmatprep.subr.mxu0 0.0
        %1562 = vmatpush1.xpose.msra.mxu0 %v1559
        %1563 = vmatprep.subr.mxu0 0.0
        %1564 = vmatpush1.xpose.msra.mxu0 0.0
        %1565 = vmatprep.subr.mxu0 0.0
        %1566 = vmatpush1.xpose.msra.mxu0 0.0
        %1567 = vmatprep.subr.mxu0 0.0
        %1568 = vmatpush1.xpose.msra.mxu0 0.0
        %1569 = vmatprep.subr.mxu0 0.0
        %1570 = vmatpush1.xpose.msra.mxu0 0.0
        %1571 = vmatprep.subr.mxu0 0.0
        %1572 = vmatpush1.xpose.msra.mxu0 0.0
        %1573 = vmatprep.subr.mxu0 0.0
        %1574 = vmatpush1.xpose.msra.mxu0 0.0
        %1575 = vmatprep.subr.mxu0 0.0
        %1576 = vmatpush1.xpose.msra.mxu0 0.0
        %1577 = vmatprep.subr.mxu0 0.0
        %1578 = vmatpush1.xpose.msra.mxu0 0.0
        %1579 = vmatprep.subr.mxu0 0.0
        %1580 = vmatpush1.xpose.msra.mxu0 0.0
        %1581 = vmatprep.subr.mxu0 0.0
        %1582 = vmatpush1.xpose.msra.mxu0 0.0
        %1583 = vmatprep.subr.mxu0 0.0
        %1584 = vmatpush1.xpose.msra.mxu0 0.0
        %1585 = vmatprep.subr.mxu0 0.0
        %1586 = vmatpush1.xpose.msra.mxu0 0.0
        %1587 = vmatprep.subr.mxu0 0.0
        %1588 = vmatpush1.xpose.msra.mxu0 0.0
        %1589 = vmatprep.subr.mxu0 0.0
        %1590 = vmatpush1.xpose.msra.mxu0 0.0
        %1591 = vmatprep.subr.mxu0 0.0
        %1592 = vmatpush1.xpose.msra.mxu0 0.0
        %1593 = vmatprep.subr.mxu0 0.0
        %1594 = vmatpush1.xpose.msra.mxu0 0.0
        %1595 = vmatprep.subr.mxu0 0.0
        %1596 = vmatpush1.xpose.msra.mxu0 0.0
        %1597 = vmatprep.subr.mxu0 0.0
        %1598 = vmatpush1.xpose.msra.mxu0 0.0
        %1599 = vmatprep.subr.mxu0 0.0
        %1600 = vmatpush1.xpose.msra.mxu0 0.0
        %1601 = vmatprep.subr.mxu0 0.0
        %1602 = vmatpush1.xpose.msra.mxu0 0.0
        %1603 = vmatprep.subr.mxu0 0.0
        %1604 = vmatpush1.xpose.msra.mxu0 0.0
        %1605 = vmatprep.subr.mxu0 0.0
        %1606 = vmatpush1.xpose.msra.mxu0 0.0
        %1607 = vmatprep.subr.mxu0 0.0
        %1608 = vmatpush1.xpose.msra.mxu0 0.0
        %1609 = vmatprep.subr.mxu0 0.0
        %1610 = vmatpush1.xpose.msra.mxu0 0.0
        %1611 = vmatprep.subr.mxu0 0.0
        %1612 = vmatpush1.xpose.msra.mxu0 0.0
        %1613 = vmatprep.subr.mxu0 0.0
        %1614 = vmatpush1.xpose.msra.mxu0 0.0
        %1615 = vmatprep.subr.mxu0 0.0
        %1616 = vmatpush1.xpose.msra.mxu0 0.0
        %1617 = vmatprep.subr.mxu0 0.0
        %1618 = vmatpush1.xpose.msra.mxu0 0.0
        %1619 = vmatprep.subr.mxu0 0.0
        %1620 = vmatpush1.xpose.msra.mxu0 0.0
        %1621 = vmatprep.subr.mxu0 0.0
        %1622 = vmatpush1.xpose.msra.mxu0 0.0
        %1623 = vmatprep.subr.mxu0 0.0
        %1624 = vmatpush1.xpose.msra.mxu0 0.0
        %1625 = vmatprep.mubr.f32.mxu0 0.0
        %1626 = vmatmul.mubr.f32.gmra.mrb[0].mxu0 %v1557
        %v1627 = vpop.f32.mrb[0].mxu0
        %v1628 = vadd.f32 0.0, %v1627
        %v1629 = vpop.f32.mrb[0].mxu0
        %1630 = vdwg.mxu0
        %v1631 = vsel %vm1408, %v1390, 0
        %v1633 = vsel %vm1408, %v1397, 0
        %1635 = vmatprep.subr.mxu0 0.0
        %1636 = vmatpush1.xpose.msra.mxu0 %v1633
        %1637 = vmatprep.subr.mxu0 0.0
        %1638 = vmatpush1.xpose.msra.mxu0 0.0
        %1639 = vmatprep.subr.mxu0 0.0
        %1640 = vmatpush1.xpose.msra.mxu0 0.0
        %1641 = vmatprep.subr.mxu0 0.0
        %1642 = vmatpush1.xpose.msra.mxu0 0.0
        %1643 = vmatprep.subr.mxu0 0.0
        %1644 = vmatpush1.xpose.msra.mxu0 0.0
        %1645 = vmatprep.subr.mxu0 0.0
        %1646 = vmatpush1.xpose.msra.mxu0 0.0
        %1647 = vmatprep.subr.mxu0 0.0
        %1648 = vmatpush1.xpose.msra.mxu0 0.0
        %1649 = vmatprep.subr.mxu0 0.0
        %1650 = vmatpush1.xpose.msra.mxu0 0.0
        %1651 = vmatprep.subr.mxu0 0.0
        %1652 = vmatpush1.xpose.msra.mxu0 0.0
        %1653 = vmatprep.subr.mxu0 0.0
        %1654 = vmatpush1.xpose.msra.mxu0 0.0
        %1655 = vmatprep.subr.mxu0 0.0
        %1656 = vmatpush1.xpose.msra.mxu0 0.0
        %1657 = vmatprep.subr.mxu0 0.0
        %1658 = vmatpush1.xpose.msra.mxu0 0.0
        %1659 = vmatprep.subr.mxu0 0.0
        %1660 = vmatpush1.xpose.msra.mxu0 0.0
        %1661 = vmatprep.subr.mxu0 0.0
        %1662 = vmatpush1.xpose.msra.mxu0 0.0
        %1663 = vmatprep.subr.mxu0 0.0
        %1664 = vmatpush1.xpose.msra.mxu0 0.0
        %1665 = vmatprep.subr.mxu0 0.0
        %1666 = vmatpush1.xpose.msra.mxu0 0.0
        %1667 = vmatprep.subr.mxu0 0.0
        %1668 = vmatpush1.xpose.msra.mxu0 0.0
        %1669 = vmatprep.subr.mxu0 0.0
        %1670 = vmatpush1.xpose.msra.mxu0 0.0
        %1671 = vmatprep.subr.mxu0 0.0
        %1672 = vmatpush1.xpose.msra.mxu0 0.0
        %1673 = vmatprep.subr.mxu0 0.0
        %1674 = vmatpush1.xpose.msra.mxu0 0.0
        %1675 = vmatprep.subr.mxu0 0.0
        %1676 = vmatpush1.xpose.msra.mxu0 0.0
        %1677 = vmatprep.subr.mxu0 0.0
        %1678 = vmatpush1.xpose.msra.mxu0 0.0
        %1679 = vmatprep.subr.mxu0 0.0
        %1680 = vmatpush1.xpose.msra.mxu0 0.0
        %1681 = vmatprep.subr.mxu0 0.0
        %1682 = vmatpush1.xpose.msra.mxu0 0.0
        %1683 = vmatprep.subr.mxu0 0.0
        %1684 = vmatpush1.xpose.msra.mxu0 0.0
        %1685 = vmatprep.subr.mxu0 0.0
        %1686 = vmatpush1.xpose.msra.mxu0 0.0
        %1687 = vmatprep.subr.mxu0 0.0
        %1688 = vmatpush1.xpose.msra.mxu0 0.0
        %1689 = vmatprep.subr.mxu0 0.0
        %1690 = vmatpush1.xpose.msra.mxu0 0.0
        %1691 = vmatprep.subr.mxu0 0.0
        %1692 = vmatpush1.xpose.msra.mxu0 0.0
        %1693 = vmatprep.subr.mxu0 0.0
        %1694 = vmatpush1.xpose.msra.mxu0 0.0
        %1695 = vmatprep.subr.mxu0 0.0
        %1696 = vmatpush1.xpose.msra.mxu0 0.0
        %1697 = vmatprep.subr.mxu0 0.0
        %1698 = vmatpush1.xpose.msra.mxu0 0.0
        %1699 = vmatprep.mubr.f32.mxu0 0.0
        %1700 = vmatmul.mubr.f32.gmra.mrb[0].mxu0 %v1631
        %v1701 = vpop.f32.mrb[0].mxu0
        %v1702 = vadd.f32 0.0, %v1701
        %v1703 = vpop.f32.mrb[0].mxu0
        %1704 = vdwg.mxu0
        %v1705 = vsel %vm1408, %v1480, -inf
        %1706 = vmax.xlane.f32.xlu0 %v1705
        %v1707 = vpop.xlane.xlu0 %1706
        %v1708 = vsel %vm1408, %v1554, -inf
        %1709 = vmax.xlane.f32.xlu0 %v1708
        %v1710 = vpop.xlane.xlu0 %1709
        %v1711 = vsel %vm1408, %v1628, -inf
        %1712 = vmax.xlane.f32.xlu0 %v1711
        %v1713 = vpop.xlane.xlu0 %1712
        %v1714 = vsel %vm1408, %v1702, -inf
        %1715 = vmax.xlane.f32.xlu0 %v1714
        %v1716 = vpop.xlane.xlu0 %1715
        %v1717 = vsub.f32 %v1480, %v1707
        %v1718 = vsub.f32 %v1554, %v1710
        %v1719 = vsub.f32 %v1628, %v1713
        %v1720 = vsub.f32 %v1702, %v1716
        %v1721 = vmul.f32 %v1717, 1.442695
        %v1722 = vpow.pop %v1721
        %v1723 = vmul.f32 %v1718, 1.442695
        %v1724 = vpow.pop %v1723
        %v1725 = vmul.f32 %v1719, 1.442695
        %v1726 = vpow.pop %v1725
        %v1727 = vmul.f32 %v1720, 1.442695
        %v1728 = vpow.pop %v1727
        %v1729 = vsel %vm1408, %v1722, 0.0
        %1730 = vadd.xlane.f32.xlu0 %v1729
        %v1731 = vpop.xlane.xlu0 %1730
        %v1732 = vsel %vm1408, %v1724, 0.0
        %1733 = vadd.xlane.f32.xlu0 %v1732
        %v1734 = vpop.xlane.xlu0 %1733
        %v1735 = vsel %vm1408, %v1726, 0.0
        %1736 = vadd.xlane.f32.xlu0 %v1735
        %v1737 = vpop.xlane.xlu0 %1736
        %v1738 = vsel %vm1408, %v1728, 0.0
        %1739 = vadd.xlane.f32.xlu0 %v1738
        %v1740 = vpop.xlane.xlu0 %1739
        %v1741 = vrcp.pop %v1731
        %v1742 = vrcp.pop %v1734
        %v1743 = vrcp.pop %v1737
        %v1744 = vrcp.pop %v1740
        %v1745 = vmul.f32 %v1722, %v1741
        %v1746 = vmul.f32 %v1724, %v1742
        %v1747 = vmul.f32 %v1726, %v1743
        %v1748 = vmul.f32 %v1728, %v1744
        %v1750 = vsel %vm1408, %v1745, 0
        %1752 = vmatprep.subr.mxu0 0.0
        %1753 = vmatpush1.msra.mxu0 %v1380
        %1754 = vmatprep.subr.mxu0 0.0
        %1755 = vmatpush1.msra.mxu0 0.0
        %1756 = vmatprep.subr.mxu0 0.0
        %1757 = vmatpush1.msra.mxu0 0.0
        %1758 = vmatprep.subr.mxu0 0.0
        %1759 = vmatpush1.msra.mxu0 0.0
        %1760 = vmatprep.subr.mxu0 0.0
        %1761 = vmatpush1.msra.mxu0 0.0
        %1762 = vmatprep.subr.mxu0 0.0
        %1763 = vmatpush1.msra.mxu0 0.0
        %1764 = vmatprep.subr.mxu0 0.0
        %1765 = vmatpush1.msra.mxu0 0.0
        %1766 = vmatprep.subr.mxu0 0.0
        %1767 = vmatpush1.msra.mxu0 0.0
        %1768 = vmatprep.subr.mxu0 0.0
        %1769 = vmatpush1.msra.mxu0 0.0
        %1770 = vmatprep.subr.mxu0 0.0
        %1771 = vmatpush1.msra.mxu0 0.0
        %1772 = vmatprep.subr.mxu0 0.0
        %1773 = vmatpush1.msra.mxu0 0.0
        %1774 = vmatprep.subr.mxu0 0.0
        %1775 = vmatpush1.msra.mxu0 0.0
        %1776 = vmatprep.subr.mxu0 0.0
        %1777 = vmatpush1.msra.mxu0 0.0
        %1778 = vmatprep.subr.mxu0 0.0
        %1779 = vmatpush1.msra.mxu0 0.0
        %1780 = vmatprep.subr.mxu0 0.0
        %1781 = vmatpush1.msra.mxu0 0.0
        %1782 = vmatprep.subr.mxu0 0.0
        %1783 = vmatpush1.msra.mxu0 0.0
        %1784 = vmatprep.subr.mxu0 0.0
        %1785 = vmatpush1.msra.mxu0 0.0
        %1786 = vmatprep.subr.mxu0 0.0
        %1787 = vmatpush1.msra.mxu0 0.0
        %1788 = vmatprep.subr.mxu0 0.0
        %1789 = vmatpush1.msra.mxu0 0.0
        %1790 = vmatprep.subr.mxu0 0.0
        %1791 = vmatpush1.msra.mxu0 0.0
        %1792 = vmatprep.subr.mxu0 0.0
        %1793 = vmatpush1.msra.mxu0 0.0
        %1794 = vmatprep.subr.mxu0 0.0
        %1795 = vmatpush1.msra.mxu0 0.0
        %1796 = vmatprep.subr.mxu0 0.0
        %1797 = vmatpush1.msra.mxu0 0.0
        %1798 = vmatprep.subr.mxu0 0.0
        %1799 = vmatpush1.msra.mxu0 0.0
        %1800 = vmatprep.subr.mxu0 0.0
        %1801 = vmatpush1.msra.mxu0 0.0
        %1802 = vmatprep.subr.mxu0 0.0
        %1803 = vmatpush1.msra.mxu0 0.0
        %1804 = vmatprep.subr.mxu0 0.0
        %1805 = vmatpush1.msra.mxu0 0.0
        %1806 = vmatprep.subr.mxu0 0.0
        %1807 = vmatpush1.msra.mxu0 0.0
        %1808 = vmatprep.subr.mxu0 0.0
        %1809 = vmatpush1.msra.mxu0 0.0
        %1810 = vmatprep.subr.mxu0 0.0
        %1811 = vmatpush1.msra.mxu0 0.0
        %1812 = vmatprep.subr.mxu0 0.0
        %1813 = vmatpush1.msra.mxu0 0.0
        %1814 = vmatprep.subr.mxu0 0.0
        %1815 = vmatpush1.msra.mxu0 0.0
        %1816 = vmatprep.mubr.f32.mxu0 0.0
        %1817 = vmatmul.mubr.f32.gmra.mrb[0].mxu0 %v1750
        %v1818 = vpop.f32.mrb[0].mxu0
        %v1819 = vadd.f32 0.0, %v1818
        %v1820 = vpop.f32.mrb[0].mxu0
        %1821 = vdwg.mxu0
        %v1823 = vsel %vm1408, %v1746, 0
        %1825 = vmatprep.subr.mxu0 0.0
        %1826 = vmatpush1.msra.mxu0 %v1400
        %1827 = vmatprep.subr.mxu0 0.0
        %1828 = vmatpush1.msra.mxu0 0.0
        %1829 = vmatprep.subr.mxu0 0.0
        %1830 = vmatpush1.msra.mxu0 0.0
        %1831 = vmatprep.subr.mxu0 0.0
        %1832 = vmatpush1.msra.mxu0 0.0
        %1833 = vmatprep.subr.mxu0 0.0
        %1834 = vmatpush1.msra.mxu0 0.0
        %1835 = vmatprep.subr.mxu0 0.0
        %1836 = vmatpush1.msra.mxu0 0.0
        %1837 = vmatprep.subr.mxu0 0.0
        %1838 = vmatpush1.msra.mxu0 0.0
        %1839 = vmatprep.subr.mxu0 0.0
        %1840 = vmatpush1.msra.mxu0 0.0
        %1841 = vmatprep.subr.mxu0 0.0
        %1842 = vmatpush1.msra.mxu0 0.0
        %1843 = vmatprep.subr.mxu0 0.0
        %1844 = vmatpush1.msra.mxu0 0.0
        %1845 = vmatprep.subr.mxu0 0.0
        %1846 = vmatpush1.msra.mxu0 0.0
        %1847 = vmatprep.subr.mxu0 0.0
        %1848 = vmatpush1.msra.mxu0 0.0
        %1849 = vmatprep.subr.mxu0 0.0
        %1850 = vmatpush1.msra.mxu0 0.0
        %1851 = vmatprep.subr.mxu0 0.0
        %1852 = vmatpush1.msra.mxu0 0.0
        %1853 = vmatprep.subr.mxu0 0.0
        %1854 = vmatpush1.msra.mxu0 0.0
        %1855 = vmatprep.subr.mxu0 0.0
        %1856 = vmatpush1.msra.mxu0 0.0
        %1857 = vmatprep.subr.mxu0 0.0
        %1858 = vmatpush1.msra.mxu0 0.0
        %1859 = vmatprep.subr.mxu0 0.0
        %1860 = vmatpush1.msra.mxu0 0.0
        %1861 = vmatprep.subr.mxu0 0.0
        %1862 = vmatpush1.msra.mxu0 0.0
        %1863 = vmatprep.subr.mxu0 0.0
        %1864 = vmatpush1.msra.mxu0 0.0
        %1865 = vmatprep.subr.mxu0 0.0
        %1866 = vmatpush1.msra.mxu0 0.0
        %1867 = vmatprep.subr.mxu0 0.0
        %1868 = vmatpush1.msra.mxu0 0.0
        %1869 = vmatprep.subr.mxu0 0.0
        %1870 = vmatpush1.msra.mxu0 0.0
        %1871 = vmatprep.subr.mxu0 0.0
        %1872 = vmatpush1.msra.mxu0 0.0
        %1873 = vmatprep.subr.mxu0 0.0
        %1874 = vmatpush1.msra.mxu0 0.0
        %1875 = vmatprep.subr.mxu0 0.0
        %1876 = vmatpush1.msra.mxu0 0.0
        %1877 = vmatprep.subr.mxu0 0.0
        %1878 = vmatpush1.msra.mxu0 0.0
        %1879 = vmatprep.subr.mxu0 0.0
        %1880 = vmatpush1.msra.mxu0 0.0
        %1881 = vmatprep.subr.mxu0 0.0
        %1882 = vmatpush1.msra.mxu0 0.0
        %1883 = vmatprep.subr.mxu0 0.0
        %1884 = vmatpush1.msra.mxu0 0.0
        %1885 = vmatprep.subr.mxu0 0.0
        %1886 = vmatpush1.msra.mxu0 0.0
        %1887 = vmatprep.subr.mxu0 0.0
        %1888 = vmatpush1.msra.mxu0 0.0
        %1889 = vmatprep.mubr.f32.mxu0 0.0
        %1890 = vmatmul.mubr.f32.gmra.mrb[0].mxu0 %v1823
        %v1891 = vpop.f32.mrb[0].mxu0
        %v1892 = vadd.f32 0.0, %v1891
        %v1893 = vpop.f32.mrb[0].mxu0
        %1894 = vdwg.mxu0
        %v1896 = vsel %vm1408, %v1747, 0
        %1898 = vmatprep.subr.mxu0 0.0
        %1899 = vmatpush1.msra.mxu0 %v1403
        %1900 = vmatprep.subr.mxu0 0.0
        %1901 = vmatpush1.msra.mxu0 0.0
        %1902 = vmatprep.subr.mxu0 0.0
        %1903 = vmatpush1.msra.mxu0 0.0
        %1904 = vmatprep.subr.mxu0 0.0
        %1905 = vmatpush1.msra.mxu0 0.0
        %1906 = vmatprep.subr.mxu0 0.0
        %1907 = vmatpush1.msra.mxu0 0.0
        %1908 = vmatprep.subr.mxu0 0.0
        %1909 = vmatpush1.msra.mxu0 0.0
        %1910 = vmatprep.subr.mxu0 0.0
        %1911 = vmatpush1.msra.mxu0 0.0
        %1912 = vmatprep.subr.mxu0 0.0
        %1913 = vmatpush1.msra.mxu0 0.0
        %1914 = vmatprep.subr.mxu0 0.0
        %1915 = vmatpush1.msra.mxu0 0.0
        %1916 = vmatprep.subr.mxu0 0.0
        %1917 = vmatpush1.msra.mxu0 0.0
        %1918 = vmatprep.subr.mxu0 0.0
        %1919 = vmatpush1.msra.mxu0 0.0
        %1920 = vmatprep.subr.mxu0 0.0
        %1921 = vmatpush1.msra.mxu0 0.0
        %1922 = vmatprep.subr.mxu0 0.0
        %1923 = vmatpush1.msra.mxu0 0.0
        %1924 = vmatprep.subr.mxu0 0.0
        %1925 = vmatpush1.msra.mxu0 0.0
        %1926 = vmatprep.subr.mxu0 0.0
        %1927 = vmatpush1.msra.mxu0 0.0
        %1928 = vmatprep.subr.mxu0 0.0
        %1929 = vmatpush1.msra.mxu0 0.0
        %1930 = vmatprep.subr.mxu0 0.0
        %1931 = vmatpush1.msra.mxu0 0.0
        %1932 = vmatprep.subr.mxu0 0.0
        %1933 = vmatpush1.msra.mxu0 0.0
        %1934 = vmatprep.subr.mxu0 0.0
        %1935 = vmatpush1.msra.mxu0 0.0
        %1936 = vmatprep.subr.mxu0 0.0
        %1937 = vmatpush1.msra.mxu0 0.0
        %1938 = vmatprep.subr.mxu0 0.0
        %1939 = vmatpush1.msra.mxu0 0.0
        %1940 = vmatprep.subr.mxu0 0.0
        %1941 = vmatpush1.msra.mxu0 0.0
        %1942 = vmatprep.subr.mxu0 0.0
        %1943 = vmatpush1.msra.mxu0 0.0
        %1944 = vmatprep.subr.mxu0 0.0
        %1945 = vmatpush1.msra.mxu0 0.0
        %1946 = vmatprep.subr.mxu0 0.0
        %1947 = vmatpush1.msra.mxu0 0.0
        %1948 = vmatprep.subr.mxu0 0.0
        %1949 = vmatpush1.msra.mxu0 0.0
        %1950 = vmatprep.subr.mxu0 0.0
        %1951 = vmatpush1.msra.mxu0 0.0
        %1952 = vmatprep.subr.mxu0 0.0
        %1953 = vmatpush1.msra.mxu0 0.0
        %1954 = vmatprep.subr.mxu0 0.0
        %1955 = vmatpush1.msra.mxu0 0.0
        %1956 = vmatprep.subr.mxu0 0.0
        %1957 = vmatpush1.msra.mxu0 0.0
        %1958 = vmatprep.subr.mxu0 0.0
        %1959 = vmatpush1.msra.mxu0 0.0
        %1960 = vmatprep.subr.mxu0 0.0
        %1961 = vmatpush1.msra.mxu0 0.0
        %1962 = vmatprep.mubr.f32.mxu0 0.0
        %1963 = vmatmul.mubr.f32.gmra.mrb[0].mxu0 %v1896
        %v1964 = vpop.f32.mrb[0].mxu0
        %v1965 = vadd.f32 0.0, %v1964
        %v1966 = vpop.f32.mrb[0].mxu0
        %1967 = vdwg.mxu0
        %v1969 = vsel %vm1408, %v1748, 0
        %1971 = vmatprep.subr.mxu0 0.0
        %1972 = vmatpush1.msra.mxu0 %v1406
        %1973 = vmatprep.subr.mxu0 0.0
        %1974 = vmatpush1.msra.mxu0 0.0
        %1975 = vmatprep.subr.mxu0 0.0
        %1976 = vmatpush1.msra.mxu0 0.0
        %1977 = vmatprep.subr.mxu0 0.0
        %1978 = vmatpush1.msra.mxu0 0.0
        %1979 = vmatprep.subr.mxu0 0.0
        %1980 = vmatpush1.msra.mxu0 0.0
        %1981 = vmatprep.subr.mxu0 0.0
        %1982 = vmatpush1.msra.mxu0 0.0
        %1983 = vmatprep.subr.mxu0 0.0
        %1984 = vmatpush1.msra.mxu0 0.0
        %1985 = vmatprep.subr.mxu0 0.0
        %1986 = vmatpush1.msra.mxu0 0.0
        %1987 = vmatprep.subr.mxu0 0.0
        %1988 = vmatpush1.msra.mxu0 0.0
        %1989 = vmatprep.subr.mxu0 0.0
        %1990 = vmatpush1.msra.mxu0 0.0
        %1991 = vmatprep.subr.mxu0 0.0
        %1992 = vmatpush1.msra.mxu0 0.0
        %1993 = vmatprep.subr.mxu0 0.0
        %1994 = vmatpush1.msra.mxu0 0.0
        %1995 = vmatprep.subr.mxu0 0.0
        %1996 = vmatpush1.msra.mxu0 0.0
        %1997 = vmatprep.subr.mxu0 0.0
        %1998 = vmatpush1.msra.mxu0 0.0
        %1999 = vmatprep.subr.mxu0 0.0
        %2000 = vmatpush1.msra.mxu0 0.0
        %2001 = vmatprep.subr.mxu0 0.0
        %2002 = vmatpush1.msra.mxu0 0.0
        %2003 = vmatprep.subr.mxu0 0.0
        %2004 = vmatpush1.msra.mxu0 0.0
        %2005 = vmatprep.subr.mxu0 0.0
        %2006 = vmatpush1.msra.mxu0 0.0
        %2007 = vmatprep.subr.mxu0 0.0
        %2008 = vmatpush1.msra.mxu0 0.0
        %2009 = vmatprep.subr.mxu0 0.0
        %2010 = vmatpush1.msra.mxu0 0.0
        %2011 = vmatprep.subr.mxu0 0.0
        %2012 = vmatpush1.msra.mxu0 0.0
        %2013 = vmatprep.subr.mxu0 0.0
        %2014 = vmatpush1.msra.mxu0 0.0
        %2015 = vmatprep.subr.mxu0 0.0
        %2016 = vmatpush1.msra.mxu0 0.0
        %2017 = vmatprep.subr.mxu0 0.0
        %2018 = vmatpush1.msra.mxu0 0.0
        %2019 = vmatprep.subr.mxu0 0.0
        %2020 = vmatpush1.msra.mxu0 0.0
        %2021 = vmatprep.subr.mxu0 0.0
        %2022 = vmatpush1.msra.mxu0 0.0
        %2023 = vmatprep.subr.mxu0 0.0
        %2024 = vmatpush1.msra.mxu0 0.0
        %2025 = vmatprep.subr.mxu0 0.0
        %2026 = vmatpush1.msra.mxu0 0.0
        %2027 = vmatprep.subr.mxu0 0.0
        %2028 = vmatpush1.msra.mxu0 0.0
        %2029 = vmatprep.subr.mxu0 0.0
        %2030 = vmatpush1.msra.mxu0 0.0
        %2031 = vmatprep.subr.mxu0 0.0
        %2032 = vmatpush1.msra.mxu0 0.0
        %2033 = vmatprep.subr.mxu0 0.0
        %2034 = vmatpush1.msra.mxu0 0.0
        %2035 = vmatprep.mubr.f32.mxu0 0.0
        %2036 = vmatmul.mubr.f32.gmra.mrb[0].mxu0 %v1969
        %v2037 = vpop.f32.mrb[0].mxu0
        %v2038 = vadd.f32 0.0, %v2037
        %v2039 = vpop.f32.mrb[0].mxu0
        %2040 = vdwg.mxu0
        %v2041 = vld [vmem:[%s19] sm:$0xff]
        %v2042 = vld [vmem:[%s19 + $0x8] sm:$0xff]
        %v2043 = vld [vmem:[%s19 + $0x10] sm:$0xff]
        %v2044 = vld [vmem:[%s19 + $0x18] sm:$0xff]
        %v2046 = vsel %vm1408, %v1819, 0
        %2048 = vmatprep.subr.mxu0 0.0
        %2049 = vmatpush1.msra.mxu0 %v2041
        %2050 = vmatprep.subr.mxu0 0.0
        %2051 = vmatpush1.msra.mxu0 0.0
        %2052 = vmatprep.subr.mxu0 0.0
        %2053 = vmatpush1.msra.mxu0 0.0
        %2054 = vmatprep.subr.mxu0 0.0
        %2055 = vmatpush1.msra.mxu0 0.0
        %2056 = vmatprep.subr.mxu0 0.0
        %2057 = vmatpush1.msra.mxu0 0.0
        %2058 = vmatprep.subr.mxu0 0.0
        %2059 = vmatpush1.msra.mxu0 0.0
        %2060 = vmatprep.subr.mxu0 0.0
        %2061 = vmatpush1.msra.mxu0 0.0
        %2062 = vmatprep.subr.mxu0 0.0
        %2063 = vmatpush1.msra.mxu0 0.0
        %2064 = vmatprep.subr.mxu0 0.0
        %2065 = vmatpush1.msra.mxu0 0.0
        %2066 = vmatprep.subr.mxu0 0.0
        %2067 = vmatpush1.msra.mxu0 0.0
        %2068 = vmatprep.subr.mxu0 0.0
        %2069 = vmatpush1.msra.mxu0 0.0
        %2070 = vmatprep.subr.mxu0 0.0
        %2071 = vmatpush1.msra.mxu0 0.0
        %2072 = vmatprep.subr.mxu0 0.0
        %2073 = vmatpush1.msra.mxu0 0.0
        %2074 = vmatprep.subr.mxu0 0.0
        %2075 = vmatpush1.msra.mxu0 0.0
        %2076 = vmatprep.subr.mxu0 0.0
        %2077 = vmatpush1.msra.mxu0 0.0
        %2078 = vmatprep.subr.mxu0 0.0
        %2079 = vmatpush1.msra.mxu0 0.0
        %2080 = vmatprep.subr.mxu0 0.0
        %2081 = vmatpush1.msra.mxu0 0.0
        %2082 = vmatprep.subr.mxu0 0.0
        %2083 = vmatpush1.msra.mxu0 0.0
        %2084 = vmatprep.subr.mxu0 0.0
        %2085 = vmatpush1.msra.mxu0 0.0
        %2086 = vmatprep.subr.mxu0 0.0
        %2087 = vmatpush1.msra.mxu0 0.0
        %2088 = vmatprep.subr.mxu0 0.0
        %2089 = vmatpush1.msra.mxu0 0.0
        %2090 = vmatprep.subr.mxu0 0.0
        %2091 = vmatpush1.msra.mxu0 0.0
        %2092 = vmatprep.subr.mxu0 0.0
        %2093 = vmatpush1.msra.mxu0 0.0
        %2094 = vmatprep.subr.mxu0 0.0
        %2095 = vmatpush1.msra.mxu0 0.0
        %2096 = vmatprep.subr.mxu0 0.0
        %2097 = vmatpush1.msra.mxu0 0.0
        %2098 = vmatprep.subr.mxu0 0.0
        %2099 = vmatpush1.msra.mxu0 0.0
        %2100 = vmatprep.subr.mxu0 0.0
        %2101 = vmatpush1.msra.mxu0 0.0
        %2102 = vmatprep.subr.mxu0 0.0
        %2103 = vmatpush1.msra.mxu0 0.0
        %2104 = vmatprep.subr.mxu0 0.0
        %2105 = vmatpush1.msra.mxu0 0.0
        %2106 = vmatprep.subr.mxu0 0.0
        %2107 = vmatpush1.msra.mxu0 0.0
        %2108 = vmatprep.subr.mxu0 0.0
        %2109 = vmatpush1.msra.mxu0 0.0
        %2110 = vmatprep.subr.mxu0 0.0
        %2111 = vmatpush1.msra.mxu0 0.0
        %2112 = vmatprep.mubr.f32.mxu0 0.0
        %2113 = vmatmul.mubr.f32.gmra.mrb[0].mxu0 %v2046
        %v2114 = vpop.f32.mrb[0].mxu0
        %v2115 = vadd.f32 0.0, %v2114
        %v2116 = vpop.f32.mrb[0].mxu0
        %2117 = vdwg.mxu0
        %v2119 = vsel %vm1408, %v1892, 0
        %2121 = vmatprep.subr.mxu0 0.0
        %2122 = vmatpush1.msra.mxu0 %v2042
        %2123 = vmatprep.subr.mxu0 0.0
        %2124 = vmatpush1.msra.mxu0 0.0
        %2125 = vmatprep.subr.mxu0 0.0
        %2126 = vmatpush1.msra.mxu0 0.0
        %2127 = vmatprep.subr.mxu0 0.0
        %2128 = vmatpush1.msra.mxu0 0.0
        %2129 = vmatprep.subr.mxu0 0.0
        %2130 = vmatpush1.msra.mxu0 0.0
        %2131 = vmatprep.subr.mxu0 0.0
        %2132 = vmatpush1.msra.mxu0 0.0
        %2133 = vmatprep.subr.mxu0 0.0
        %2134 = vmatpush1.msra.mxu0 0.0
        %2135 = vmatprep.subr.mxu0 0.0
        %2136 = vmatpush1.msra.mxu0 0.0
        %2137 = vmatprep.subr.mxu0 0.0
        %2138 = vmatpush1.msra.mxu0 0.0
        %2139 = vmatprep.subr.mxu0 0.0
        %2140 = vmatpush1.msra.mxu0 0.0
        %2141 = vmatprep.subr.mxu0 0.0
        %2142 = vmatpush1.msra.mxu0 0.0
        %2143 = vmatprep.subr.mxu0 0.0
        %2144 = vmatpush1.msra.mxu0 0.0
        %2145 = vmatprep.subr.mxu0 0.0
        %2146 = vmatpush1.msra.mxu0 0.0
        %2147 = vmatprep.subr.mxu0 0.0
        %2148 = vmatpush1.msra.mxu0 0.0
        %2149 = vmatprep.subr.mxu0 0.0
        %2150 = vmatpush1.msra.mxu0 0.0
        %2151 = vmatprep.subr.mxu0 0.0
        %2152 = vmatpush1.msra.mxu0 0.0
        %2153 = vmatprep.subr.mxu0 0.0
        %2154 = vmatpush1.msra.mxu0 0.0
        %2155 = vmatprep.subr.mxu0 0.0
        %2156 = vmatpush1.msra.mxu0 0.0
        %2157 = vmatprep.subr.mxu0 0.0
        %2158 = vmatpush1.msra.mxu0 0.0
        %2159 = vmatprep.subr.mxu0 0.0
        %2160 = vmatpush1.msra.mxu0 0.0
        %2161 = vmatprep.subr.mxu0 0.0
        %2162 = vmatpush1.msra.mxu0 0.0
        %2163 = vmatprep.subr.mxu0 0.0
        %2164 = vmatpush1.msra.mxu0 0.0
        %2165 = vmatprep.subr.mxu0 0.0
        %2166 = vmatpush1.msra.mxu0 0.0
        %2167 = vmatprep.subr.mxu0 0.0
        %2168 = vmatpush1.msra.mxu0 0.0
        %2169 = vmatprep.subr.mxu0 0.0
        %2170 = vmatpush1.msra.mxu0 0.0
        %2171 = vmatprep.subr.mxu0 0.0
        %2172 = vmatpush1.msra.mxu0 0.0
        %2173 = vmatprep.subr.mxu0 0.0
        %2174 = vmatpush1.msra.mxu0 0.0
        %2175 = vmatprep.subr.mxu0 0.0
        %2176 = vmatpush1.msra.mxu0 0.0
        %2177 = vmatprep.subr.mxu0 0.0
        %2178 = vmatpush1.msra.mxu0 0.0
        %2179 = vmatprep.subr.mxu0 0.0
        %2180 = vmatpush1.msra.mxu0 0.0
        %2181 = vmatprep.subr.mxu0 0.0
        %2182 = vmatpush1.msra.mxu0 0.0
        %2183 = vmatprep.subr.mxu0 0.0
        %2184 = vmatpush1.msra.mxu0 0.0
        %2185 = vmatprep.mubr.f32.mxu0 0.0
        %2186 = vmatmul.mubr.f32.gmra.mrb[0].mxu0 %v2119
        %v2187 = vpop.f32.mrb[0].mxu0
        %v2188 = vadd.f32 0.0, %v2187
        %v2189 = vpop.f32.mrb[0].mxu0
        %2190 = vdwg.mxu0
        %v2192 = vsel %vm1408, %v1965, 0
        %2194 = vmatprep.subr.mxu0 0.0
        %2195 = vmatpush1.msra.mxu0 %v2043
        %2196 = vmatprep.subr.mxu0 0.0
        %2197 = vmatpush1.msra.mxu0 0.0
        %2198 = vmatprep.subr.mxu0 0.0
        %2199 = vmatpush1.msra.mxu0 0.0
        %2200 = vmatprep.subr.mxu0 0.0
        %2201 = vmatpush1.msra.mxu0 0.0
        %2202 = vmatprep.subr.mxu0 0.0
        %2203 = vmatpush1.msra.mxu0 0.0
        %2204 = vmatprep.subr.mxu0 0.0
        %2205 = vmatpush1.msra.mxu0 0.0
        %2206 = vmatprep.subr.mxu0 0.0
        %2207 = vmatpush1.msra.mxu0 0.0
        %2208 = vmatprep.subr.mxu0 0.0
        %2209 = vmatpush1.msra.mxu0 0.0
        %2210 = vmatprep.subr.mxu0 0.0
        %2211 = vmatpush1.msra.mxu0 0.0
        %2212 = vmatprep.subr.mxu0 0.0
        %2213 = vmatpush1.msra.mxu0 0.0
        %2214 = vmatprep.subr.mxu0 0.0
        %2215 = vmatpush1.msra.mxu0 0.0
        %2216 = vmatprep.subr.mxu0 0.0
        %2217 = vmatpush1.msra.mxu0 0.0
        %2218 = vmatprep.subr.mxu0 0.0
        %2219 = vmatpush1.msra.mxu0 0.0
        %2220 = vmatprep.subr.mxu0 0.0
        %2221 = vmatpush1.msra.mxu0 0.0
        %2222 = vmatprep.subr.mxu0 0.0
        %2223 = vmatpush1.msra.mxu0 0.0
        %2224 = vmatprep.subr.mxu0 0.0
        %2225 = vmatpush1.msra.mxu0 0.0
        %2226 = vmatprep.subr.mxu0 0.0
        %2227 = vmatpush1.msra.mxu0 0.0
        %2228 = vmatprep.subr.mxu0 0.0
        %2229 = vmatpush1.msra.mxu0 0.0
        %2230 = vmatprep.subr.mxu0 0.0
        %2231 = vmatpush1.msra.mxu0 0.0
        %2232 = vmatprep.subr.mxu0 0.0
        %2233 = vmatpush1.msra.mxu0 0.0
        %2234 = vmatprep.subr.mxu0 0.0
        %2235 = vmatpush1.msra.mxu0 0.0
        %2236 = vmatprep.subr.mxu0 0.0
        %2237 = vmatpush1.msra.mxu0 0.0
        %2238 = vmatprep.subr.mxu0 0.0
        %2239 = vmatpush1.msra.mxu0 0.0
        %2240 = vmatprep.subr.mxu0 0.0
        %2241 = vmatpush1.msra.mxu0 0.0
        %2242 = vmatprep.subr.mxu0 0.0
        %2243 = vmatpush1.msra.mxu0 0.0
        %2244 = vmatprep.subr.mxu0 0.0
        %2245 = vmatpush1.msra.mxu0 0.0
        %2246 = vmatprep.subr.mxu0 0.0
        %2247 = vmatpush1.msra.mxu0 0.0
        %2248 = vmatprep.subr.mxu0 0.0
        %2249 = vmatpush1.msra.mxu0 0.0
        %2250 = vmatprep.subr.mxu0 0.0
        %2251 = vmatpush1.msra.mxu0 0.0
        %2252 = vmatprep.subr.mxu0 0.0
        %2253 = vmatpush1.msra.mxu0 0.0
        %2254 = vmatprep.subr.mxu0 0.0
        %2255 = vmatpush1.msra.mxu0 0.0
        %2256 = vmatprep.subr.mxu0 0.0
        %2257 = vmatpush1.msra.mxu0 0.0
        %2258 = vmatprep.mubr.f32.mxu0 0.0
        %2259 = vmatmul.mubr.f32.gmra.mrb[0].mxu0 %v2192
        %v2260 = vpop.f32.mrb[0].mxu0
        %v2261 = vadd.f32 0.0, %v2260
        %v2262 = vpop.f32.mrb[0].mxu0
        %2263 = vdwg.mxu0
        %v2265 = vsel %vm1408, %v2038, 0
        %2267 = vmatprep.subr.mxu0 0.0
        %2268 = vmatpush1.msra.mxu0 %v2044
        %2269 = vmatprep.subr.mxu0 0.0
        %2270 = vmatpush1.msra.mxu0 0.0
        %2271 = vmatprep.subr.mxu0 0.0
        %2272 = vmatpush1.msra.mxu0 0.0
        %2273 = vmatprep.subr.mxu0 0.0
        %2274 = vmatpush1.msra.mxu0 0.0
        %2275 = vmatprep.subr.mxu0 0.0
        %2276 = vmatpush1.msra.mxu0 0.0
        %2277 = vmatprep.subr.mxu0 0.0
        %2278 = vmatpush1.msra.mxu0 0.0
        %2279 = vmatprep.subr.mxu0 0.0
        %2280 = vmatpush1.msra.mxu0 0.0
        %2281 = vmatprep.subr.mxu0 0.0
        %2282 = vmatpush1.msra.mxu0 0.0
        %2283 = vmatprep.subr.mxu0 0.0
        %2284 = vmatpush1.msra.mxu0 0.0
        %2285 = vmatprep.subr.mxu0 0.0
        %2286 = vmatpush1.msra.mxu0 0.0
        %2287 = vmatprep.subr.mxu0 0.0
        %2288 = vmatpush1.msra.mxu0 0.0
        %2289 = vmatprep.subr.mxu0 0.0
        %2290 = vmatpush1.msra.mxu0 0.0
        %2291 = vmatprep.subr.mxu0 0.0
        %2292 = vmatpush1.msra.mxu0 0.0
        %2293 = vmatprep.subr.mxu0 0.0
        %2294 = vmatpush1.msra.mxu0 0.0
        %2295 = vmatprep.subr.mxu0 0.0
        %2296 = vmatpush1.msra.mxu0 0.0
        %2297 = vmatprep.subr.mxu0 0.0
        %2298 = vmatpush1.msra.mxu0 0.0
        %2299 = vmatprep.subr.mxu0 0.0
        %2300 = vmatpush1.msra.mxu0 0.0
        %2301 = vmatprep.subr.mxu0 0.0
        %2302 = vmatpush1.msra.mxu0 0.0
        %2303 = vmatprep.subr.mxu0 0.0
        %2304 = vmatpush1.msra.mxu0 0.0
        %2305 = vmatprep.subr.mxu0 0.0
        %2306 = vmatpush1.msra.mxu0 0.0
        %2307 = vmatprep.subr.mxu0 0.0
        %2308 = vmatpush1.msra.mxu0 0.0
        %2309 = vmatprep.subr.mxu0 0.0
        %2310 = vmatpush1.msra.mxu0 0.0
        %2311 = vmatprep.subr.mxu0 0.0
        %2312 = vmatpush1.msra.mxu0 0.0
        %2313 = vmatprep.subr.mxu0 0.0
        %2314 = vmatpush1.msra.mxu0 0.0
        %2315 = vmatprep.subr.mxu0 0.0
        %2316 = vmatpush1.msra.mxu0 0.0
        %2317 = vmatprep.subr.mxu0 0.0
        %2318 = vmatpush1.msra.mxu0 0.0
        %2319 = vmatprep.subr.mxu0 0.0
        %2320 = vmatpush1.msra.mxu0 0.0
        %2321 = vmatprep.subr.mxu0 0.0
        %2322 = vmatpush1.msra.mxu0 0.0
        %2323 = vmatprep.subr.mxu0 0.0
        %2324 = vmatpush1.msra.mxu0 0.0
        %2325 = vmatprep.subr.mxu0 0.0
        %2326 = vmatpush1.msra.mxu0 0.0
        %2327 = vmatprep.subr.mxu0 0.0
        %2328 = vmatpush1.msra.mxu0 0.0
        %2329 = vmatprep.subr.mxu0 0.0
        %2330 = vmatpush1.msra.mxu0 0.0
        %2331 = vmatprep.mubr.f32.mxu0 0.0
        %2332 = vmatmul.mubr.f32.gmra.mrb[0].mxu0 %v2265
        %v2333 = vpop.f32.mrb[0].mxu0
        %v2334 = vadd.f32 0.0, %v2333
        %v2335 = vpop.f32.mrb[0].mxu0
        %2336 = vdwg.mxu0
        %v2337 = vsel %vm1147, %v2115, 0.0
        %v2338 = vsel %vm1147, %v2188, 0.0
        %v2339 = vadd.f32 %v2337, %v2338
        %v2340 = vsel %vm1147, %v2261, 0.0
        %v2341 = vadd.f32 %v2339, %v2340
        %v2342 = vsel %vm1147, %v2334, 0.0
        %v2343 = vadd.f32 %v2341, %v2342
        %v2344 = vld [vmem:[#allocation13] sm:$0x1]
        %v2346 = vlaneseq
        %v2347 = vshrl.u32 %v2346, 7
        %v2348 = vsub.s32 0, %v2347
        %v2349 = vrot.slane %v2344, %v2348
        %v2351 = vadd.f32 %v2343, %v2349
        %v2352 = vadd.f32 %v2351, %v1133
        %v2353 = vld [vmem:[#allocation14] sm:$0x1]
        %v2354 = vld [vmem:[#allocation16] sm:$0x1]
        %v2355 = vsel %vm1147, %v2352, 0.0
        %2356 = vadd.xlane.f32.xlu0 %v2355
        %v2357 = vpop.xlane.xlu0 %2356
        %v2358 = vrcp.pop 32.0
        %v2359 = vmul.f32 %v2357, %v2358
        %v2360 = vsub.f32 %v2352, %v2359
        %v2361 = vmul.f32 %v2360, %v2360
        %v2362 = vsel %vm1147, %v2361, 0.0
        %2363 = vadd.xlane.f32.xlu0 %v2362
        %v2364 = vpop.xlane.xlu0 %2363
        %v2365 = vmul.f32 %v2364, %v2358
        %v2366 = vadd.f32 %v2365, 1e-05
        %v2367 = vrsqrt.pop %v2366
        %v2368 = vmul.f32 %v2360, %v2367
        %v2370 = vlaneseq
        %v2371 = vshrl.u32 %v2370, 7
        %v2372 = vsub.s32 0, %v2371
        %v2373 = vrot.slane %v2353, %v2372
        %v2375 = vmul.f32 %v2368, %v2373
        %v2377 = vlaneseq
        %v2378 = vshrl.u32 %v2377, 7
        %v2379 = vsub.s32 0, %v2378
        %v2380 = vrot.slane %v2354, %v2379
        %v2382 = vadd.f32 %v2375, %v2380
        %v2383 = vld [vmem:[%s27] sm:$0xff]
        %v2384 = vld [vmem:[%s27 + $0x8] sm:$0xff]
        %v2385 = vld [vmem:[%s27 + $0x10] sm:$0xff]
        %v2386 = vld [vmem:[%s27 + $0x18] sm:$0xff]
        %v2387 = vld [vmem:[#allocation17] sm:$0x1]
        %v2389 = vlaneseq
        %v2390 = vshrl.u32 %v2389, 7
        %v2391 = vsub.s32 0, %v2390
        %v2392 = vrot.slane %v2387, %v2391
        %v2395 = vsel %vm1147, %v2382, 0
        %2397 = vmatprep.subr.mxu0 0.0
        %2398 = vmatpush1.msra.mxu0 %v2383
        %2399 = vmatprep.subr.mxu0 0.0
        %2400 = vmatpush1.msra.mxu0 %v2384
        %2401 = vmatprep.subr.mxu0 0.0
        %2402 = vmatpush1.msra.mxu0 %v2385
        %2403 = vmatprep.subr.mxu0 0.0
        %2404 = vmatpush1.msra.mxu0 %v2386
        %2405 = vmatprep.subr.mxu0 0.0
        %2406 = vmatpush1.msra.mxu0 0.0
        %2407 = vmatprep.subr.mxu0 0.0
        %2408 = vmatpush1.msra.mxu0 0.0
        %2409 = vmatprep.subr.mxu0 0.0
        %2410 = vmatpush1.msra.mxu0 0.0
        %2411 = vmatprep.subr.mxu0 0.0
        %2412 = vmatpush1.msra.mxu0 0.0
        %2413 = vmatprep.subr.mxu0 0.0
        %2414 = vmatpush1.msra.mxu0 0.0
        %2415 = vmatprep.subr.mxu0 0.0
        %2416 = vmatpush1.msra.mxu0 0.0
        %2417 = vmatprep.subr.mxu0 0.0
        %2418 = vmatpush1.msra.mxu0 0.0
        %2419 = vmatprep.subr.mxu0 0.0
        %2420 = vmatpush1.msra.mxu0 0.0
        %2421 = vmatprep.subr.mxu0 0.0
        %2422 = vmatpush1.msra.mxu0 0.0
        %2423 = vmatprep.subr.mxu0 0.0
        %2424 = vmatpush1.msra.mxu0 0.0
        %2425 = vmatprep.subr.mxu0 0.0
        %2426 = vmatpush1.msra.mxu0 0.0
        %2427 = vmatprep.subr.mxu0 0.0
        %2428 = vmatpush1.msra.mxu0 0.0
        %2429 = vmatprep.subr.mxu0 0.0
        %2430 = vmatpush1.msra.mxu0 0.0
        %2431 = vmatprep.subr.mxu0 0.0
        %2432 = vmatpush1.msra.mxu0 0.0
        %2433 = vmatprep.subr.mxu0 0.0
        %2434 = vmatpush1.msra.mxu0 0.0
        %2435 = vmatprep.subr.mxu0 0.0
        %2436 = vmatpush1.msra.mxu0 0.0
        %2437 = vmatprep.subr.mxu0 0.0
        %2438 = vmatpush1.msra.mxu0 0.0
        %2439 = vmatprep.subr.mxu0 0.0
        %2440 = vmatpush1.msra.mxu0 0.0
        %2441 = vmatprep.subr.mxu0 0.0
        %2442 = vmatpush1.msra.mxu0 0.0
        %2443 = vmatprep.subr.mxu0 0.0
        %2444 = vmatpush1.msra.mxu0 0.0
        %2445 = vmatprep.subr.mxu0 0.0
        %2446 = vmatpush1.msra.mxu0 0.0
        %2447 = vmatprep.subr.mxu0 0.0
        %2448 = vmatpush1.msra.mxu0 0.0
        %2449 = vmatprep.subr.mxu0 0.0
        %2450 = vmatpush1.msra.mxu0 0.0
        %2451 = vmatprep.subr.mxu0 0.0
        %2452 = vmatpush1.msra.mxu0 0.0
        %2453 = vmatprep.subr.mxu0 0.0
        %2454 = vmatpush1.msra.mxu0 0.0
        %2455 = vmatprep.subr.mxu0 0.0
        %2456 = vmatpush1.msra.mxu0 0.0
        %2457 = vmatprep.subr.mxu0 0.0
        %2458 = vmatpush1.msra.mxu0 0.0
        %2459 = vmatprep.subr.mxu0 0.0
        %2460 = vmatpush1.msra.mxu0 0.0
        %2461 = vmatprep.mubr.f32.mxu0 0.0
        %2462 = vmatmul.mubr.f32.gmra.mrb[0].mxu0 %v2395
        %v2463 = vpop.f32.mrb[0].mxu0
        %v2464 = vadd.f32 %v2392, %v2463
        %v2465 = vpop.f32.mrb[0].mxu0
        %2466 = vdwg.mxu0
        %v2467 = vld [vmem:[%s31] sm:$0xff]
        %v2468 = vld [vmem:[%s31 + $0x8] sm:$0xff]
        %v2469 = vld [vmem:[%s31 + $0x10] sm:$0xff]
        %v2470 = vld [vmem:[%s31 + $0x18] sm:$0xff]
        %v2471 = vld [vmem:[#allocation19] sm:$0x1]
        %v2473 = vlaneseq
        %v2474 = vshrl.u32 %v2473, 7
        %v2475 = vsub.s32 0, %v2474
        %v2476 = vrot.slane %v2471, %v2475
        %v2479 = vsel %vm1147, %v1135, 0
        %2481 = vmatprep.subr.mxu0 0.0
        %2482 = vmatpush1.msra.mxu0 %v2467
        %2483 = vmatprep.subr.mxu0 0.0
        %2484 = vmatpush1.msra.mxu0 %v2468
        %2485 = vmatprep.subr.mxu0 0.0
        %2486 = vmatpush1.msra.mxu0 %v2469
        %2487 = vmatprep.subr.mxu0 0.0
        %2488 = vmatpush1.msra.mxu0 %v2470
        %2489 = vmatprep.subr.mxu0 0.0
        %2490 = vmatpush1.msra.mxu0 0.0
        %2491 = vmatprep.subr.mxu0 0.0
        %2492 = vmatpush1.msra.mxu0 0.0
        %2493 = vmatprep.subr.mxu0 0.0
        %2494 = vmatpush1.msra.mxu0 0.0
        %2495 = vmatprep.subr.mxu0 0.0
        %2496 = vmatpush1.msra.mxu0 0.0
        %2497 = vmatprep.subr.mxu0 0.0
        %2498 = vmatpush1.msra.mxu0 0.0
        %2499 = vmatprep.subr.mxu0 0.0
        %2500 = vmatpush1.msra.mxu0 0.0
        %2501 = vmatprep.subr.mxu0 0.0
        %2502 = vmatpush1.msra.mxu0 0.0
        %2503 = vmatprep.subr.mxu0 0.0
        %2504 = vmatpush1.msra.mxu0 0.0
        %2505 = vmatprep.subr.mxu0 0.0
        %2506 = vmatpush1.msra.mxu0 0.0
        %2507 = vmatprep.subr.mxu0 0.0
        %2508 = vmatpush1.msra.mxu0 0.0
        %2509 = vmatprep.subr.mxu0 0.0
        %2510 = vmatpush1.msra.mxu0 0.0
        %2511 = vmatprep.subr.mxu0 0.0
        %2512 = vmatpush1.msra.mxu0 0.0
        %2513 = vmatprep.subr.mxu0 0.0
        %2514 = vmatpush1.msra.mxu0 0.0
        %2515 = vmatprep.subr.mxu0 0.0
        %2516 = vmatpush1.msra.mxu0 0.0
        %2517 = vmatprep.subr.mxu0 0.0
        %2518 = vmatpush1.msra.mxu0 0.0
        %2519 = vmatprep.subr.mxu0 0.0
        %2520 = vmatpush1.msra.mxu0 0.0
        %2521 = vmatprep.subr.mxu0 0.0
        %2522 = vmatpush1.msra.mxu0 0.0
        %2523 = vmatprep.subr.mxu0 0.0
        %2524 = vmatpush1.msra.mxu0 0.0
        %2525 = vmatprep.subr.mxu0 0.0
        %2526 = vmatpush1.msra.mxu0 0.0
        %2527 = vmatprep.subr.mxu0 0.0
        %2528 = vmatpush1.msra.mxu0 0.0
        %2529 = vmatprep.subr.mxu0 0.0
        %2530 = vmatpush1.msra.mxu0 0.0
        %2531 = vmatprep.subr.mxu0 0.0
        %2532 = vmatpush1.msra.mxu0 0.0
        %2533 = vmatprep.subr.mxu0 0.0
        %2534 = vmatpush1.msra.mxu0 0.0
        %2535 = vmatprep.subr.mxu0 0.0
        %2536 = vmatpush1.msra.mxu0 0.0
        %2537 = vmatprep.subr.mxu0 0.0
        %2538 = vmatpush1.msra.mxu0 0.0
        %2539 = vmatprep.subr.mxu0 0.0
        %2540 = vmatpush1.msra.mxu0 0.0
        %2541 = vmatprep.subr.mxu0 0.0
        %2542 = vmatpush1.msra.mxu0 0.0
        %2543 = vmatprep.subr.mxu0 0.0
        %2544 = vmatpush1.msra.mxu0 0.0
        %2545 = vmatprep.mubr.f32.mxu0 0.0
        %2546 = vmatmul.mubr.f32.gmra.mrb[0].mxu0 %v2479
        %v2547 = vpop.f32.mrb[0].mxu0
        %v2548 = vadd.f32 %v2476, %v2547
        %v2549 = vpop.f32.mrb[0].mxu0
        %2550 = vdwg.mxu0
        %v2551 = vld [vmem:[#allocation20] sm:$0xff]
        %v2552 = vld [vmem:[#allocation20 + $0x8] sm:$0xff]
        %v2553 = vld [vmem:[#allocation20 + $0x10] sm:$0xff]
        %v2554 = vld [vmem:[#allocation20 + $0x18] sm:$0xff]
        %v2555 = vld [vmem:[%s37] sm:$0x1]
        %v2557 = vlaneseq
        %v2558 = vshrl.u32 %v2557, 7
        %v2559 = vsub.s32 0, %v2558
        %v2560 = vrot.slane %v2555, %v2559
        %v2563 = vsel %vm1147, %v1134, 0
        %2565 = vmatprep.subr.mxu0 0.0
        %2566 = vmatpush1.msra.mxu0 %v2551
        %2567 = vmatprep.subr.mxu0 0.0
        %2568 = vmatpush1.msra.mxu0 %v2552
        %2569 = vmatprep.subr.mxu0 0.0
        %2570 = vmatpush1.msra.mxu0 %v2553
        %2571 = vmatprep.subr.mxu0 0.0
        %2572 = vmatpush1.msra.mxu0 %v2554
        %2573 = vmatprep.subr.mxu0 0.0
        %2574 = vmatpush1.msra.mxu0 0.0
        %2575 = vmatprep.subr.mxu0 0.0
        %2576 = vmatpush1.msra.mxu0 0.0
        %2577 = vmatprep.subr.mxu0 0.0
        %2578 = vmatpush1.msra.mxu0 0.0
        %2579 = vmatprep.subr.mxu0 0.0
        %2580 = vmatpush1.msra.mxu0 0.0
        %2581 = vmatprep.subr.mxu0 0.0
        %2582 = vmatpush1.msra.mxu0 0.0
        %2583 = vmatprep.subr.mxu0 0.0
        %2584 = vmatpush1.msra.mxu0 0.0
        %2585 = vmatprep.subr.mxu0 0.0
        %2586 = vmatpush1.msra.mxu0 0.0
        %2587 = vmatprep.subr.mxu0 0.0
        %2588 = vmatpush1.msra.mxu0 0.0
        %2589 = vmatprep.subr.mxu0 0.0
        %2590 = vmatpush1.msra.mxu0 0.0
        %2591 = vmatprep.subr.mxu0 0.0
        %2592 = vmatpush1.msra.mxu0 0.0
        %2593 = vmatprep.subr.mxu0 0.0
        %2594 = vmatpush1.msra.mxu0 0.0
        %2595 = vmatprep.subr.mxu0 0.0
        %2596 = vmatpush1.msra.mxu0 0.0
        %2597 = vmatprep.subr.mxu0 0.0
        %2598 = vmatpush1.msra.mxu0 0.0
        %2599 = vmatprep.subr.mxu0 0.0
        %2600 = vmatpush1.msra.mxu0 0.0
        %2601 = vmatprep.subr.mxu0 0.0
        %2602 = vmatpush1.msra.mxu0 0.0
        %2603 = vmatprep.subr.mxu0 0.0
        %2604 = vmatpush1.msra.mxu0 0.0
        %2605 = vmatprep.subr.mxu0 0.0
        %2606 = vmatpush1.msra.mxu0 0.0
        %2607 = vmatprep.subr.mxu0 0.0
        %2608 = vmatpush1.msra.mxu0 0.0
        %2609 = vmatprep.subr.mxu0 0.0
        %2610 = vmatpush1.msra.mxu0 0.0
        %2611 = vmatprep.subr.mxu0 0.0
        %2612 = vmatpush1.msra.mxu0 0.0
        %2613 = vmatprep.subr.mxu0 0.0
        %2614 = vmatpush1.msra.mxu0 0.0
        %2615 = vmatprep.subr.mxu0 0.0
        %2616 = vmatpush1.msra.mxu0 0.0
        %2617 = vmatprep.subr.mxu0 0.0
        %2618 = vmatpush1.msra.mxu0 0.0
        %2619 = vmatprep.subr.mxu0 0.0
        %2620 = vmatpush1.msra.mxu0 0.0
        %2621 = vmatprep.subr.mxu0 0.0
        %2622 = vmatpush1.msra.mxu0 0.0
        %2623 = vmatprep.subr.mxu0 0.0
        %2624 = vmatpush1.msra.mxu0 0.0
        %2625 = vmatprep.subr.mxu0 0.0
        %2626 = vmatpush1.msra.mxu0 0.0
        %2627 = vmatprep.subr.mxu0 0.0
        %2628 = vmatpush1.msra.mxu0 0.0
        %2629 = vmatprep.mubr.f32.mxu0 0.0
        %2630 = vmatmul.mubr.f32.gmra.mrb[0].mxu0 %v2563
        %v2631 = vpop.f32.mrb[0].mxu0
        %v2632 = vadd.f32 %v2560, %v2631
        %v2633 = vpop.f32.mrb[0].mxu0
        %2634 = vdwg.mxu0
        %v2635 = vmul.f32 %v2464, 0.17677669
        %2637 = vrot.lane.b32.xlu0 %v2635, 120
        %v2638 = vpop.permute.xlu0 %2637
        %2639 = vrot.lane.b32.xlu0 %v2635, 112
        %v2640 = vpop.permute.xlu0 %2639
        %2641 = vrot.lane.b32.xlu0 %v2635, 104
        %v2642 = vpop.permute.xlu0 %2641
        %2644 = vrot.lane.b32.xlu0 %v2548, 120
        %v2645 = vpop.permute.xlu0 %2644
        %2646 = vrot.lane.b32.xlu0 %v2548, 112
        %v2647 = vpop.permute.xlu0 %2646
        %2648 = vrot.lane.b32.xlu0 %v2548, 104
        %v2649 = vpop.permute.xlu0 %2648
        %2651 = vrot.lane.b32.xlu0 %v2632, 120
        %v2652 = vpop.permute.xlu0 %2651
        %2654 = vrot.lane.b32.xlu0 %v2632, 112
        %v2655 = vpop.permute.xlu0 %2654
        %2657 = vrot.lane.b32.xlu0 %v2632, 104
        %v2658 = vpop.permute.xlu0 %2657
        %v2660 = vsel %vm1408, %v2635, 0
        %v2662 = vsel %vm1408, %v2548, 0
        %2664 = vmatprep.subr.mxu0 0.0
        %2665 = vmatpush1.xpose.msra.mxu0 %v2662
        %2666 = vmatprep.subr.mxu0 0.0
        %2667 = vmatpush1.xpose.msra.mxu0 0.0
        %2668 = vmatprep.subr.mxu0 0.0
        %2669 = vmatpush1.xpose.msra.mxu0 0.0
        %2670 = vmatprep.subr.mxu0 0.0
        %2671 = vmatpush1.xpose.msra.mxu0 0.0
        %2672 = vmatprep.subr.mxu0 0.0
        %2673 = vmatpush1.xpose.msra.mxu0 0.0
        %2674 = vmatprep.subr.mxu0 0.0
        %2675 = vmatpush1.xpose.msra.mxu0 0.0
        %2676 = vmatprep.subr.mxu0 0.0
        %2677 = vmatpush1.xpose.msra.mxu0 0.0
        %2678 = vmatprep.subr.mxu0 0.0
        %2679 = vmatpush1.xpose.msra.mxu0 0.0
        %2680 = vmatprep.subr.mxu0 0.0
        %2681 = vmatpush1.xpose.msra.mxu0 0.0
        %2682 = vmatprep.subr.mxu0 0.0
        %2683 = vmatpush1.xpose.msra.mxu0 0.0
        %2684 = vmatprep.subr.mxu0 0.0
        %2685 = vmatpush1.xpose.msra.mxu0 0.0
        %2686 = vmatprep.subr.mxu0 0.0
        %2687 = vmatpush1.xpose.msra.mxu0 0.0
        %2688 = vmatprep.subr.mxu0 0.0
        %2689 = vmatpush1.xpose.msra.mxu0 0.0
        %2690 = vmatprep.subr.mxu0 0.0
        %2691 = vmatpush1.xpose.msra.mxu0 0.0
        %2692 = vmatprep.subr.mxu0 0.0
        %2693 = vmatpush1.xpose.msra.mxu0 0.0
        %2694 = vmatprep.subr.mxu0 0.0
        %2695 = vmatpush1.xpose.msra.mxu0 0.0
        %2696 = vmatprep.subr.mxu0 0.0
        %2697 = vmatpush1.xpose.msra.mxu0 0.0
        %2698 = vmatprep.subr.mxu0 0.0
        %2699 = vmatpush1.xpose.msra.mxu0 0.0
        %2700 = vmatprep.subr.mxu0 0.0
        %2701 = vmatpush1.xpose.msra.mxu0 0.0
        %2702 = vmatprep.subr.mxu0 0.0
        %2703 = vmatpush1.xpose.msra.mxu0 0.0
        %2704 = vmatprep.subr.mxu0 0.0
        %2705 = vmatpush1.xpose.msra.mxu0 0.0
        %2706 = vmatprep.subr.mxu0 0.0
        %2707 = vmatpush1.xpose.msra.mxu0 0.0
        %2708 = vmatprep.subr.mxu0 0.0
        %2709 = vmatpush1.xpose.msra.mxu0 0.0
        %2710 = vmatprep.subr.mxu0 0.0
        %2711 = vmatpush1.xpose.msra.mxu0 0.0
        %2712 = vmatprep.subr.mxu0 0.0
        %2713 = vmatpush1.xpose.msra.mxu0 0.0
        %2714 = vmatprep.subr.mxu0 0.0
        %2715 = vmatpush1.xpose.msra.mxu0 0.0
        %2716 = vmatprep.subr.mxu0 0.0
        %2717 = vmatpush1.xpose.msra.mxu0 0.0
        %2718 = vmatprep.subr.mxu0 0.0
        %2719 = vmatpush1.xpose.msra.mxu0 0.0
        %2720 = vmatprep.subr.mxu0 0.0
        %2721 = vmatpush1.xpose.msra.mxu0 0.0
        %2722 = vmatprep.subr.mxu0 0.0
        %2723 = vmatpush1.xpose.msra.mxu0 0.0
        %2724 = vmatprep.subr.mxu0 0.0
        %2725 = vmatpush1.xpose.msra.mxu0 0.0
        %2726 = vmatprep.subr.mxu0 0.0
        %2727 = vmatpush1.xpose.msra.mxu0 0.0
        %2728 = vmatprep.mubr.f32.mxu0 0.0
        %2729 = vmatmul.mubr.f32.gmra.mrb[0].mxu0 %v2660
        %v2730 = vpop.f32.mrb[0].mxu0
        %v2731 = vadd.f32 0.0, %v2730
        %v2732 = vpop.f32.mrb[0].mxu0
        %2733 = vdwg.mxu0
        %v2734 = vsel %vm1408, %v2638, 0
        %v2736 = vsel %vm1408, %v2645, 0
        %2738 = vmatprep.subr.mxu0 0.0
        %2739 = vmatpush1.xpose.msra.mxu0 %v2736
        %2740 = vmatprep.subr.mxu0 0.0
        %2741 = vmatpush1.xpose.msra.mxu0 0.0
        %2742 = vmatprep.subr.mxu0 0.0
        %2743 = vmatpush1.xpose.msra.mxu0 0.0
        %2744 = vmatprep.subr.mxu0 0.0
        %2745 = vmatpush1.xpose.msra.mxu0 0.0
        %2746 = vmatprep.subr.mxu0 0.0
        %2747 = vmatpush1.xpose.msra.mxu0 0.0
        %2748 = vmatprep.subr.mxu0 0.0
        %2749 = vmatpush1.xpose.msra.mxu0 0.0
        %2750 = vmatprep.subr.mxu0 0.0
        %2751 = vmatpush1.xpose.msra.mxu0 0.0
        %2752 = vmatprep.subr.mxu0 0.0
        %2753 = vmatpush1.xpose.msra.mxu0 0.0
        %2754 = vmatprep.subr.mxu0 0.0
        %2755 = vmatpush1.xpose.msra.mxu0 0.0
        %2756 = vmatprep.subr.mxu0 0.0
        %2757 = vmatpush1.xpose.msra.mxu0 0.0
        %2758 = vmatprep.subr.mxu0 0.0
        %2759 = vmatpush1.xpose.msra.mxu0 0.0
        %2760 = vmatprep.subr.mxu0 0.0
        %2761 = vmatpush1.xpose.msra.mxu0 0.0
        %2762 = vmatprep.subr.mxu0 0.0
        %2763 = vmatpush1.xpose.msra.mxu0 0.0
        %2764 = vmatprep.subr.mxu0 0.0
        %2765 = vmatpush1.xpose.msra.mxu0 0.0
        %2766 = vmatprep.subr.mxu0 0.0
        %2767 = vmatpush1.xpose.msra.mxu0 0.0
        %2768 = vmatprep.subr.mxu0 0.0
        %2769 = vmatpush1.xpose.msra.mxu0 0.0
        %2770 = vmatprep.subr.mxu0 0.0
        %2771 = vmatpush1.xpose.msra.mxu0 0.0
        %2772 = vmatprep.subr.mxu0 0.0
        %2773 = vmatpush1.xpose.msra.mxu0 0.0
        %2774 = vmatprep.subr.mxu0 0.0
        %2775 = vmatpush1.xpose.msra.mxu0 0.0
        %2776 = vmatprep.subr.mxu0 0.0
        %2777 = vmatpush1.xpose.msra.mxu0 0.0
        %2778 = vmatprep.subr.mxu0 0.0
        %2779 = vmatpush1.xpose.msra.mxu0 0.0
        %2780 = vmatprep.subr.mxu0 0.0
        %2781 = vmatpush1.xpose.msra.mxu0 0.0
        %2782 = vmatprep.subr.mxu0 0.0
        %2783 = vmatpush1.xpose.msra.mxu0 0.0
        %2784 = vmatprep.subr.mxu0 0.0
        %2785 = vmatpush1.xpose.msra.mxu0 0.0
        %2786 = vmatprep.subr.mxu0 0.0
        %2787 = vmatpush1.xpose.msra.mxu0 0.0
        %2788 = vmatprep.subr.mxu0 0.0
        %2789 = vmatpush1.xpose.msra.mxu0 0.0
        %2790 = vmatprep.subr.mxu0 0.0
        %2791 = vmatpush1.xpose.msra.mxu0 0.0
        %2792 = vmatprep.subr.mxu0 0.0
        %2793 = vmatpush1.xpose.msra.mxu0 0.0
        %2794 = vmatprep.subr.mxu0 0.0
        %2795 = vmatpush1.xpose.msra.mxu0 0.0
        %2796 = vmatprep.subr.mxu0 0.0
        %2797 = vmatpush1.xpose.msra.mxu0 0.0
        %2798 = vmatprep.subr.mxu0 0.0
        %2799 = vmatpush1.xpose.msra.mxu0 0.0
        %2800 = vmatprep.subr.mxu0 0.0
        %2801 = vmatpush1.xpose.msra.mxu0 0.0
        %2802 = vmatprep.mubr.f32.mxu0 0.0
        %2803 = vmatmul.mubr.f32.gmra.mrb[0].mxu0 %v2734
        %v2804 = vpop.f32.mrb[0].mxu0
        %v2805 = vadd.f32 0.0, %v2804
        %v2806 = vpop.f32.mrb[0].mxu0
        %2807 = vdwg.mxu0
        %v2808 = vsel %vm1408, %v2640, 0
        %v2810 = vsel %vm1408, %v2647, 0
        %2812 = vmatprep.subr.mxu0 0.0
        %2813 = vmatpush1.xpose.msra.mxu0 %v2810
        %2814 = vmatprep.subr.mxu0 0.0
        %2815 = vmatpush1.xpose.msra.mxu0 0.0
        %2816 = vmatprep.subr.mxu0 0.0
        %2817 = vmatpush1.xpose.msra.mxu0 0.0
        %2818 = vmatprep.subr.mxu0 0.0
        %2819 = vmatpush1.xpose.msra.mxu0 0.0
        %2820 = vmatprep.subr.mxu0 0.0
        %2821 = vmatpush1.xpose.msra.mxu0 0.0
        %2822 = vmatprep.subr.mxu0 0.0
        %2823 = vmatpush1.xpose.msra.mxu0 0.0
        %2824 = vmatprep.subr.mxu0 0.0
        %2825 = vmatpush1.xpose.msra.mxu0 0.0
        %2826 = vmatprep.subr.mxu0 0.0
        %2827 = vmatpush1.xpose.msra.mxu0 0.0
        %2828 = vmatprep.subr.mxu0 0.0
        %2829 = vmatpush1.xpose.msra.mxu0 0.0
        %2830 = vmatprep.subr.mxu0 0.0
        %2831 = vmatpush1.xpose.msra.mxu0 0.0
        %2832 = vmatprep.subr.mxu0 0.0
        %2833 = vmatpush1.xpose.msra.mxu0 0.0
        %2834 = vmatprep.subr.mxu0 0.0
        %2835 = vmatpush1.xpose.msra.mxu0 0.0
        %2836 = vmatprep.subr.mxu0 0.0
        %2837 = vmatpush1.xpose.msra.mxu0 0.0
        %2838 = vmatprep.subr.mxu0 0.0
        %2839 = vmatpush1.xpose.msra.mxu0 0.0
        %2840 = vmatprep.subr.mxu0 0.0
        %2841 = vmatpush1.xpose.msra.mxu0 0.0
        %2842 = vmatprep.subr.mxu0 0.0
        %2843 = vmatpush1.xpose.msra.mxu0 0.0
        %2844 = vmatprep.subr.mxu0 0.0
        %2845 = vmatpush1.xpose.msra.mxu0 0.0
        %2846 = vmatprep.subr.mxu0 0.0
        %2847 = vmatpush1.xpose.msra.mxu0 0.0
        %2848 = vmatprep.subr.mxu0 0.0
        %2849 = vmatpush1.xpose.msra.mxu0 0.0
        %2850 = vmatprep.subr.mxu0 0.0
        %2851 = vmatpush1.xpose.msra.mxu0 0.0
        %2852 = vmatprep.subr.mxu0 0.0
        %2853 = vmatpush1.xpose.msra.mxu0 0.0
        %2854 = vmatprep.subr.mxu0 0.0
        %2855 = vmatpush1.xpose.msra.mxu0 0.0
        %2856 = vmatprep.subr.mxu0 0.0
        %2857 = vmatpush1.xpose.msra.mxu0 0.0
        %2858 = vmatprep.subr.mxu0 0.0
        %2859 = vmatpush1.xpose.msra.mxu0 0.0
        %2860 = vmatprep.subr.mxu0 0.0
        %2861 = vmatpush1.xpose.msra.mxu0 0.0
        %2862 = vmatprep.subr.mxu0 0.0
        %2863 = vmatpush1.xpose.msra.mxu0 0.0
        %2864 = vmatprep.subr.mxu0 0.0
        %2865 = vmatpush1.xpose.msra.mxu0 0.0
        %2866 = vmatprep.subr.mxu0 0.0
        %2867 = vmatpush1.xpose.msra.mxu0 0.0
        %2868 = vmatprep.subr.mxu0 0.0
        %2869 = vmatpush1.xpose.msra.mxu0 0.0
        %2870 = vmatprep.subr.mxu0 0.0
        %2871 = vmatpush1.xpose.msra.mxu0 0.0
        %2872 = vmatprep.subr.mxu0 0.0
        %2873 = vmatpush1.xpose.msra.mxu0 0.0
        %2874 = vmatprep.subr.mxu0 0.0
        %2875 = vmatpush1.xpose.msra.mxu0 0.0
        %2876 = vmatprep.mubr.f32.mxu0 0.0
        %2877 = vmatmul.mubr.f32.gmra.mrb[0].mxu0 %v2808
        %v2878 = vpop.f32.mrb[0].mxu0
        %v2879 = vadd.f32 0.0, %v2878
        %v2880 = vpop.f32.mrb[0].mxu0
        %2881 = vdwg.mxu0
        %v2882 = vsel %vm1408, %v2642, 0
        %v2884 = vsel %vm1408, %v2649, 0
        %2886 = vmatprep.subr.mxu0 0.0
        %2887 = vmatpush1.xpose.msra.mxu0 %v2884
        %2888 = vmatprep.subr.mxu0 0.0
        %2889 = vmatpush1.xpose.msra.mxu0 0.0
        %2890 = vmatprep.subr.mxu0 0.0
        %2891 = vmatpush1.xpose.msra.mxu0 0.0
        %2892 = vmatprep.subr.mxu0 0.0
        %2893 = vmatpush1.xpose.msra.mxu0 0.0
        %2894 = vmatprep.subr.mxu0 0.0
        %2895 = vmatpush1.xpose.msra.mxu0 0.0
        %2896 = vmatprep.subr.mxu0 0.0
        %2897 = vmatpush1.xpose.msra.mxu0 0.0
        %2898 = vmatprep.subr.mxu0 0.0
        %2899 = vmatpush1.xpose.msra.mxu0 0.0
        %2900 = vmatprep.subr.mxu0 0.0
        %2901 = vmatpush1.xpose.msra.mxu0 0.0
        %2902 = vmatprep.subr.mxu0 0.0
        %2903 = vmatpush1.xpose.msra.mxu0 0.0
        %2904 = vmatprep.subr.mxu0 0.0
        %2905 = vmatpush1.xpose.msra.mxu0 0.0
        %2906 = vmatprep.subr.mxu0 0.0
        %2907 = vmatpush1.xpose.msra.mxu0 0.0
        %2908 = vmatprep.subr.mxu0 0.0
        %2909 = vmatpush1.xpose.msra.mxu0 0.0
        %2910 = vmatprep.subr.mxu0 0.0
        %2911 = vmatpush1.xpose.msra.mxu0 0.0
        %2912 = vmatprep.subr.mxu0 0.0
        %2913 = vmatpush1.xpose.msra.mxu0 0.0
        %2914 = vmatprep.subr.mxu0 0.0
        %2915 = vmatpush1.xpose.msra.mxu0 0.0
        %2916 = vmatprep.subr.mxu0 0.0
        %2917 = vmatpush1.xpose.msra.mxu0 0.0
        %2918 = vmatprep.subr.mxu0 0.0
        %2919 = vmatpush1.xpose.msra.mxu0 0.0
        %2920 = vmatprep.subr.mxu0 0.0
        %2921 = vmatpush1.xpose.msra.mxu0 0.0
        %2922 = vmatprep.subr.mxu0 0.0
        %2923 = vmatpush1.xpose.msra.mxu0 0.0
        %2924 = vmatprep.subr.mxu0 0.0
        %2925 = vmatpush1.xpose.msra.mxu0 0.0
        %2926 = vmatprep.subr.mxu0 0.0
        %2927 = vmatpush1.xpose.msra.mxu0 0.0
        %2928 = vmatprep.subr.mxu0 0.0
        %2929 = vmatpush1.xpose.msra.mxu0 0.0
        %2930 = vmatprep.subr.mxu0 0.0
        %2931 = vmatpush1.xpose.msra.mxu0 0.0
        %2932 = vmatprep.subr.mxu0 0.0
        %2933 = vmatpush1.xpose.msra.mxu0 0.0
        %2934 = vmatprep.subr.mxu0 0.0
        %2935 = vmatpush1.xpose.msra.mxu0 0.0
        %2936 = vmatprep.subr.mxu0 0.0
        %2937 = vmatpush1.xpose.msra.mxu0 0.0
        %2938 = vmatprep.subr.mxu0 0.0
        %2939 = vmatpush1.xpose.msra.mxu0 0.0
        %2940 = vmatprep.subr.mxu0 0.0
        %2941 = vmatpush1.xpose.msra.mxu0 0.0
        %2942 = vmatprep.subr.mxu0 0.0
        %2943 = vmatpush1.xpose.msra.mxu0 0.0
        %2944 = vmatprep.subr.mxu0 0.0
        %2945 = vmatpush1.xpose.msra.mxu0 0.0
        %2946 = vmatprep.subr.mxu0 0.0
        %2947 = vmatpush1.xpose.msra.mxu0 0.0
        %2948 = vmatprep.subr.mxu0 0.0
        %2949 = vmatpush1.xpose.msra.mxu0 0.0
        %2950 = vmatprep.mubr.f32.mxu0 0.0
        %2951 = vmatmul.mubr.f32.gmra.mrb[0].mxu0 %v2882
        %v2952 = vpop.f32.mrb[0].mxu0
        %v2953 = vadd.f32 0.0, %v2952
        %v2954 = vpop.f32.mrb[0].mxu0
        %2955 = vdwg.mxu0
        %v2956 = vsel %vm1408, %v2731, -inf
        %2957 = vmax.xlane.f32.xlu0 %v2956
        %v2958 = vpop.xlane.xlu0 %2957
        %v2959 = vsel %vm1408, %v2805, -inf
        %2960 = vmax.xlane.f32.xlu0 %v2959
        %v2961 = vpop.xlane.xlu0 %2960
        %v2962 = vsel %vm1408, %v2879, -inf
        %2963 = vmax.xlane.f32.xlu0 %v2962
        %v2964 = vpop.xlane.xlu0 %2963
        %v2965 = vsel %vm1408, %v2953, -inf
        %2966 = vmax.xlane.f32.xlu0 %v2965
        %v2967 = vpop.xlane.xlu0 %2966
        %v2968 = vsub.f32 %v2731, %v2958
        %v2969 = vsub.f32 %v2805, %v2961
        %v2970 = vsub.f32 %v2879, %v2964
        %v2971 = vsub.f32 %v2953, %v2967
        %v2972 = vmul.f32 %v2968, 1.442695
        %v2973 = vpow.pop %v2972
        %v2974 = vmul.f32 %v2969, 1.442695
        %v2975 = vpow.pop %v2974
        %v2976 = vmul.f32 %v2970, 1.442695
        %v2977 = vpow.pop %v2976
        %v2978 = vmul.f32 %v2971, 1.442695
        %v2979 = vpow.pop %v2978
        %v2980 = vsel %vm1408, %v2973, 0.0
        %2981 = vadd.xlane.f32.xlu0 %v2980
        %v2982 = vpop.xlane.xlu0 %2981
        %v2983 = vsel %vm1408, %v2975, 0.0
        %2984 = vadd.xlane.f32.xlu0 %v2983
        %v2985 = vpop.xlane.xlu0 %2984
        %v2986 = vsel %vm1408, %v2977, 0.0
        %2987 = vadd.xlane.f32.xlu0 %v2986
        %v2988 = vpop.xlane.xlu0 %2987
        %v2989 = vsel %vm1408, %v2979, 0.0
        %2990 = vadd.xlane.f32.xlu0 %v2989
        %v2991 = vpop.xlane.xlu0 %2990
        %v2992 = vrcp.pop %v2982
        %v2993 = vrcp.pop %v2985
        %v2994 = vrcp.pop %v2988
        %v2995 = vrcp.pop %v2991
        %v2996 = vmul.f32 %v2973, %v2992
        %v2997 = vmul.f32 %v2975, %v2993
        %v2998 = vmul.f32 %v2977, %v2994
        %v2999 = vmul.f32 %v2979, %v2995
        %v3001 = vsel %vm1408, %v2996, 0
        %3003 = vmatprep.subr.mxu0 0.0
        %3004 = vmatpush1.msra.mxu0 %v2632
        %3005 = vmatprep.subr.mxu0 0.0
        %3006 = vmatpush1.msra.mxu0 0.0
        %3007 = vmatprep.subr.mxu0 0.0
        %3008 = vmatpush1.msra.mxu0 0.0
        %3009 = vmatprep.subr.mxu0 0.0
        %3010 = vmatpush1.msra.mxu0 0.0
        %3011 = vmatprep.subr.mxu0 0.0
        %3012 = vmatpush1.msra.mxu0 0.0
        %3013 = vmatprep.subr.mxu0 0.0
        %3014 = vmatpush1.msra.mxu0 0.0
        %3015 = vmatprep.subr.mxu0 0.0
        %3016 = vmatpush1.msra.mxu0 0.0
        %3017 = vmatprep.subr.mxu0 0.0
        %3018 = vmatpush1.msra.mxu0 0.0
        %3019 = vmatprep.subr.mxu0 0.0
        %3020 = vmatpush1.msra.mxu0 0.0
        %3021 = vmatprep.subr.mxu0 0.0
        %3022 = vmatpush1.msra.mxu0 0.0
        %3023 = vmatprep.subr.mxu0 0.0
        %3024 = vmatpush1.msra.mxu0 0.0
        %3025 = vmatprep.subr.mxu0 0.0
        %3026 = vmatpush1.msra.mxu0 0.0
        %3027 = vmatprep.subr.mxu0 0.0
        %3028 = vmatpush1.msra.mxu0 0.0
        %3029 = vmatprep.subr.mxu0 0.0
        %3030 = vmatpush1.msra.mxu0 0.0
        %3031 = vmatprep.subr.mxu0 0.0
        %3032 = vmatpush1.msra.mxu0 0.0
        %3033 = vmatprep.subr.mxu0 0.0
        %3034 = vmatpush1.msra.mxu0 0.0
        %3035 = vmatprep.subr.mxu0 0.0
        %3036 = vmatpush1.msra.mxu0 0.0
        %3037 = vmatprep.subr.mxu0 0.0
        %3038 = vmatpush1.msra.mxu0 0.0
        %3039 = vmatprep.subr.mxu0 0.0
        %3040 = vmatpush1.msra.mxu0 0.0
        %3041 = vmatprep.subr.mxu0 0.0
        %3042 = vmatpush1.msra.mxu0 0.0
        %3043 = vmatprep.subr.mxu0 0.0
        %3044 = vmatpush1.msra.mxu0 0.0
        %3045 = vmatprep.subr.mxu0 0.0
        %3046 = vmatpush1.msra.mxu0 0.0
        %3047 = vmatprep.subr.mxu0 0.0
        %3048 = vmatpush1.msra.mxu0 0.0
        %3049 = vmatprep.subr.mxu0 0.0
        %3050 = vmatpush1.msra.mxu0 0.0
        %3051 = vmatprep.subr.mxu0 0.0
        %3052 = vmatpush1.msra.mxu0 0.0
        %3053 = vmatprep.subr.mxu0 0.0
        %3054 = vmatpush1.msra.mxu0 0.0
        %3055 = vmatprep.subr.mxu0 0.0
        %3056 = vmatpush1.msra.mxu0 0.0
        %3057 = vmatprep.subr.mxu0 0.0
        %3058 = vmatpush1.msra.mxu0 0.0
        %3059 = vmatprep.subr.mxu0 0.0
        %3060 = vmatpush1.msra.mxu0 0.0
        %3061 = vmatprep.subr.mxu0 0.0
        %3062 = vmatpush1.msra.mxu0 0.0
        %3063 = vmatprep.subr.mxu0 0.0
        %3064 = vmatpush1.msra.mxu0 0.0
        %3065 = vmatprep.subr.mxu0 0.0
        %3066 = vmatpush1.msra.mxu0 0.0
        %3067 = vmatprep.mubr.f32.mxu0 0.0
        %3068 = vmatmul.mubr.f32.gmra.mrb[0].mxu0 %v3001
        %v3069 = vpop.f32.mrb[0].mxu0
        %v3070 = vadd.f32 0.0, %v3069
        %v3071 = vpop.f32.mrb[0].mxu0
        %3072 = vdwg.mxu0
        %v3074 = vsel %vm1408, %v2997, 0
        %3076 = vmatprep.subr.mxu0 0.0
        %3077 = vmatpush1.msra.mxu0 %v2652
        %3078 = vmatprep.subr.mxu0 0.0
        %3079 = vmatpush1.msra.mxu0 0.0
        %3080 = vmatprep.subr.mxu0 0.0
        %3081 = vmatpush1.msra.mxu0 0.0
        %3082 = vmatprep.subr.mxu0 0.0
        %3083 = vmatpush1.msra.mxu0 0.0
        %3084 = vmatprep.subr.mxu0 0.0
        %3085 = vmatpush1.msra.mxu0 0.0
        %3086 = vmatprep.subr.mxu0 0.0
        %3087 = vmatpush1.msra.mxu0 0.0
        %3088 = vmatprep.subr.mxu0 0.0
        %3089 = vmatpush1.msra.mxu0 0.0
        %3090 = vmatprep.subr.mxu0 0.0
        %3091 = vmatpush1.msra.mxu0 0.0
        %3092 = vmatprep.subr.mxu0 0.0
        %3093 = vmatpush1.msra.mxu0 0.0
        %3094 = vmatprep.subr.mxu0 0.0
        %3095 = vmatpush1.msra.mxu0 0.0
        %3096 = vmatprep.subr.mxu0 0.0
        %3097 = vmatpush1.msra.mxu0 0.0
        %3098 = vmatprep.subr.mxu0 0.0
        %3099 = vmatpush1.msra.mxu0 0.0
        %3100 = vmatprep.subr.mxu0 0.0
        %3101 = vmatpush1.msra.mxu0 0.0
        %3102 = vmatprep.subr.mxu0 0.0
        %3103 = vmatpush1.msra.mxu0 0.0
        %3104 = vmatprep.subr.mxu0 0.0
        %3105 = vmatpush1.msra.mxu0 0.0
        %3106 = vmatprep.subr.mxu0 0.0
        %3107 = vmatpush1.msra.mxu0 0.0
        %3108 = vmatprep.subr.mxu0 0.0
        %3109 = vmatpush1.msra.mxu0 0.0
        %3110 = vmatprep.subr.mxu0 0.0
        %3111 = vmatpush1.msra.mxu0 0.0
        %3112 = vmatprep.subr.mxu0 0.0
        %3113 = vmatpush1.msra.mxu0 0.0
        %3114 = vmatprep.subr.mxu0 0.0
        %3115 = vmatpush1.msra.mxu0 0.0
        %3116 = vmatprep.subr.mxu0 0.0
        %3117 = vmatpush1.msra.mxu0 0.0
        %3118 = vmatprep.subr.mxu0 0.0
        %3119 = vmatpush1.msra.mxu0 0.0
        %3120 = vmatprep.subr.mxu0 0.0
        %3121 = vmatpush1.msra.mxu0 0.0
        %3122 = vmatprep.subr.mxu0 0.0
        %3123 = vmatpush1.msra.mxu0 0.0
        %3124 = vmatprep.subr.mxu0 0.0
        %3125 = vmatpush1.msra.mxu0 0.0
        %3126 = vmatprep.subr.mxu0 0.0
        %3127 = vmatpush1.msra.mxu0 0.0
        %3128 = vmatprep.subr.mxu0 0.0
        %3129 = vmatpush1.msra.mxu0 0.0
        %3130 = vmatprep.subr.mxu0 0.0
        %3131 = vmatpush1.msra.mxu0 0.0
        %3132 = vmatprep.subr.mxu0 0.0
        %3133 = vmatpush1.msra.mxu0 0.0
        %3134 = vmatprep.subr.mxu0 0.0
        %3135 = vmatpush1.msra.mxu0 0.0
        %3136 = vmatprep.subr.mxu0 0.0
        %3137 = vmatpush1.msra.mxu0 0.0
        %3138 = vmatprep.subr.mxu0 0.0
        %3139 = vmatpush1.msra.mxu0 0.0
        %3140 = vmatprep.mubr.f32.mxu0 0.0
        %3141 = vmatmul.mubr.f32.gmra.mrb[0].mxu0 %v3074
        %v3142 = vpop.f32.mrb[0].mxu0
        %v3143 = vadd.f32 0.0, %v3142
        %v3144 = vpop.f32.mrb[0].mxu0
        %3145 = vdwg.mxu0
        %v3147 = vsel %vm1408, %v2998, 0
        %3149 = vmatprep.subr.mxu0 0.0
        %3150 = vmatpush1.msra.mxu0 %v2655
        %3151 = vmatprep.subr.mxu0 0.0
        %3152 = vmatpush1.msra.mxu0 0.0
        %3153 = vmatprep.subr.mxu0 0.0
        %3154 = vmatpush1.msra.mxu0 0.0
        %3155 = vmatprep.subr.mxu0 0.0
        %3156 = vmatpush1.msra.mxu0 0.0
        %3157 = vmatprep.subr.mxu0 0.0
        %3158 = vmatpush1.msra.mxu0 0.0
        %3159 = vmatprep.subr.mxu0 0.0
        %3160 = vmatpush1.msra.mxu0 0.0
        %3161 = vmatprep.subr.mxu0 0.0
        %3162 = vmatpush1.msra.mxu0 0.0
        %3163 = vmatprep.subr.mxu0 0.0
        %3164 = vmatpush1.msra.mxu0 0.0
        %3165 = vmatprep.subr.mxu0 0.0
        %3166 = vmatpush1.msra.mxu0 0.0
        %3167 = vmatprep.subr.mxu0 0.0
        %3168 = vmatpush1.msra.mxu0 0.0
        %3169 = vmatprep.subr.mxu0 0.0
        %3170 = vmatpush1.msra.mxu0 0.0
        %3171 = vmatprep.subr.mxu0 0.0
        %3172 = vmatpush1.msra.mxu0 0.0
        %3173 = vmatprep.subr.mxu0 0.0
        %3174 = vmatpush1.msra.mxu0 0.0
        %3175 = vmatprep.subr.mxu0 0.0
        %3176 = vmatpush1.msra.mxu0 0.0
        %3177 = vmatprep.subr.mxu0 0.0
        %3178 = vmatpush1.msra.mxu0 0.0
        %3179 = vmatprep.subr.mxu0 0.0
        %3180 = vmatpush1.msra.mxu0 0.0
        %3181 = vmatprep.subr.mxu0 0.0
        %3182 = vmatpush1.msra.mxu0 0.0
        %3183 = vmatprep.subr.mxu0 0.0
        %3184 = vmatpush1.msra.mxu0 0.0
        %3185 = vmatprep.subr.mxu0 0.0
        %3186 = vmatpush1.msra.mxu0 0.0
        %3187 = vmatprep.subr.mxu0 0.0
        %3188 = vmatpush1.msra.mxu0 0.0
        %3189 = vmatprep.subr.mxu0 0.0
        %3190 = vmatpush1.msra.mxu0 0.0
        %3191 = vmatprep.subr.mxu0 0.0
        %3192 = vmatpush1.msra.mxu0 0.0
        %3193 = vmatprep.subr.mxu0 0.0
        %3194 = vmatpush1.msra.mxu0 0.0
        %3195 = vmatprep.subr.mxu0 0.0
        %3196 = vmatpush1.msra.mxu0 0.0
        %3197 = vmatprep.subr.mxu0 0.0
        %3198 = vmatpush1.msra.mxu0 0.0
        %3199 = vmatprep.subr.mxu0 0.0
        %3200 = vmatpush1.msra.mxu0 0.0
        %3201 = vmatprep.subr.mxu0 0.0
        %3202 = vmatpush1.msra.mxu0 0.0
        %3203 = vmatprep.subr.mxu0 0.0
        %3204 = vmatpush1.msra.mxu0 0.0
        %3205 = vmatprep.subr.mxu0 0.0
        %3206 = vmatpush1.msra.mxu0 0.0
        %3207 = vmatprep.subr.mxu0 0.0
        %3208 = vmatpush1.msra.mxu0 0.0
        %3209 = vmatprep.subr.mxu0 0.0
        %3210 = vmatpush1.msra.mxu0 0.0
        %3211 = vmatprep.subr.mxu0 0.0
        %3212 = vmatpush1.msra.mxu0 0.0
        %3213 = vmatprep.mubr.f32.mxu0 0.0
        %3214 = vmatmul.mubr.f32.gmra.mrb[0].mxu0 %v3147
        %v3215 = vpop.f32.mrb[0].mxu0
        %v3216 = vadd.f32 0.0, %v3215
        %v3217 = vpop.f32.mrb[0].mxu0
        %3218 = vdwg.mxu0
        %v3220 = vsel %vm1408, %v2999, 0
        %3222 = vmatprep.subr.mxu0 0.0
        %3223 = vmatpush1.msra.mxu0 %v2658
        %3224 = vmatprep.subr.mxu0 0.0
        %3225 = vmatpush1.msra.mxu0 0.0
        %3226 = vmatprep.subr.mxu0 0.0
        %3227 = vmatpush1.msra.mxu0 0.0
        %3228 = vmatprep.subr.mxu0 0.0
        %3229 = vmatpush1.msra.mxu0 0.0
        %3230 = vmatprep.subr.mxu0 0.0
        %3231 = vmatpush1.msra.mxu0 0.0
        %3232 = vmatprep.subr.mxu0 0.0
        %3233 = vmatpush1.msra.mxu0 0.0
        %3234 = vmatprep.subr.mxu0 0.0
        %3235 = vmatpush1.msra.mxu0 0.0
        %3236 = vmatprep.subr.mxu0 0.0
        %3237 = vmatpush1.msra.mxu0 0.0
        %3238 = vmatprep.subr.mxu0 0.0
        %3239 = vmatpush1.msra.mxu0 0.0
        %3240 = vmatprep.subr.mxu0 0.0
        %3241 = vmatpush1.msra.mxu0 0.0
        %3242 = vmatprep.subr.mxu0 0.0
        %3243 = vmatpush1.msra.mxu0 0.0
        %3244 = vmatprep.subr.mxu0 0.0
        %3245 = vmatpush1.msra.mxu0 0.0
        %3246 = vmatprep.subr.mxu0 0.0
        %3247 = vmatpush1.msra.mxu0 0.0
        %3248 = vmatprep.subr.mxu0 0.0
        %3249 = vmatpush1.msra.mxu0 0.0
        %3250 = vmatprep.subr.mxu0 0.0
        %3251 = vmatpush1.msra.mxu0 0.0
        %3252 = vmatprep.subr.mxu0 0.0
        %3253 = vmatpush1.msra.mxu0 0.0
        %3254 = vmatprep.subr.mxu0 0.0
        %3255 = vmatpush1.msra.mxu0 0.0
        %3256 = vmatprep.subr.mxu0 0.0
        %3257 = vmatpush1.msra.mxu0 0.0
        %3258 = vmatprep.subr.mxu0 0.0
        %3259 = vmatpush1.msra.mxu0 0.0
        %3260 = vmatprep.subr.mxu0 0.0
        %3261 = vmatpush1.msra.mxu0 0.0
        %3262 = vmatprep.subr.mxu0 0.0
        %3263 = vmatpush1.msra.mxu0 0.0
        %3264 = vmatprep.subr.mxu0 0.0
        %3265 = vmatpush1.msra.mxu0 0.0
        %3266 = vmatprep.subr.mxu0 0.0
        %3267 = vmatpush1.msra.mxu0 0.0
        %3268 = vmatprep.subr.mxu0 0.0
        %3269 = vmatpush1.msra.mxu0 0.0
        %3270 = vmatprep.subr.mxu0 0.0
        %3271 = vmatpush1.msra.mxu0 0.0
        %3272 = vmatprep.subr.mxu0 0.0
        %3273 = vmatpush1.msra.mxu0 0.0
        %3274 = vmatprep.subr.mxu0 0.0
        %3275 = vmatpush1.msra.mxu0 0.0
        %3276 = vmatprep.subr.mxu0 0.0
        %3277 = vmatpush1.msra.mxu0 0.0
        %3278 = vmatprep.subr.mxu0 0.0
        %3279 = vmatpush1.msra.mxu0 0.0
        %3280 = vmatprep.subr.mxu0 0.0
        %3281 = vmatpush1.msra.mxu0 0.0
        %3282 = vmatprep.subr.mxu0 0.0
        %3283 = vmatpush1.msra.mxu0 0.0
        %3284 = vmatprep.subr.mxu0 0.0
        %3285 = vmatpush1.msra.mxu0 0.0
        %3286 = vmatprep.mubr.f32.mxu0 0.0
        %3287 = vmatmul.mubr.f32.gmra.mrb[0].mxu0 %v3220
        %v3288 = vpop.f32.mrb[0].mxu0
        %v3289 = vadd.f32 0.0, %v3288
        %v3290 = vpop.f32.mrb[0].mxu0
        %3291 = vdwg.mxu0
        %v3292 = vld [vmem:[#allocation22] sm:$0xff]
        %v3293 = vld [vmem:[#allocation22 + $0x8] sm:$0xff]
        %v3294 = vld [vmem:[#allocation22 + $0x10] sm:$0xff]
        %v3295 = vld [vmem:[#allocation22 + $0x18] sm:$0xff]
        %v3297 = vsel %vm1408, %v3070, 0
        %3299 = vmatprep.subr.mxu0 0.0
        %3300 = vmatpush1.msra.mxu0 %v3292
        %3301 = vmatprep.subr.mxu0 0.0
        %3302 = vmatpush1.msra.mxu0 0.0
        %3303 = vmatprep.subr.mxu0 0.0
        %3304 = vmatpush1.msra.mxu0 0.0
        %3305 = vmatprep.subr.mxu0 0.0
        %3306 = vmatpush1.msra.mxu0 0.0
        %3307 = vmatprep.subr.mxu0 0.0
        %3308 = vmatpush1.msra.mxu0 0.0
        %3309 = vmatprep.subr.mxu0 0.0
        %3310 = vmatpush1.msra.mxu0 0.0
        %3311 = vmatprep.subr.mxu0 0.0
        %3312 = vmatpush1.msra.mxu0 0.0
        %3313 = vmatprep.subr.mxu0 0.0
        %3314 = vmatpush1.msra.mxu0 0.0
        %3315 = vmatprep.subr.mxu0 0.0
        %3316 = vmatpush1.msra.mxu0 0.0
        %3317 = vmatprep.subr.mxu0 0.0
        %3318 = vmatpush1.msra.mxu0 0.0
        %3319 = vmatprep.subr.mxu0 0.0
        %3320 = vmatpush1.msra.mxu0 0.0
        %3321 = vmatprep.subr.mxu0 0.0
        %3322 = vmatpush1.msra.mxu0 0.0
        %3323 = vmatprep.subr.mxu0 0.0
        %3324 = vmatpush1.msra.mxu0 0.0
        %3325 = vmatprep.subr.mxu0 0.0
        %3326 = vmatpush1.msra.mxu0 0.0
        %3327 = vmatprep.subr.mxu0 0.0
        %3328 = vmatpush1.msra.mxu0 0.0
        %3329 = vmatprep.subr.mxu0 0.0
        %3330 = vmatpush1.msra.mxu0 0.0
        %3331 = vmatprep.subr.mxu0 0.0
        %3332 = vmatpush1.msra.mxu0 0.0
        %3333 = vmatprep.subr.mxu0 0.0
        %3334 = vmatpush1.msra.mxu0 0.0
        %3335 = vmatprep.subr.mxu0 0.0
        %3336 = vmatpush1.msra.mxu0 0.0
        %3337 = vmatprep.subr.mxu0 0.0
        %3338 = vmatpush1.msra.mxu0 0.0
        %3339 = vmatprep.subr.mxu0 0.0
        %3340 = vmatpush1.msra.mxu0 0.0
        %3341 = vmatprep.subr.mxu0 0.0
        %3342 = vmatpush1.msra.mxu0 0.0
        %3343 = vmatprep.subr.mxu0 0.0
        %3344 = vmatpush1.msra.mxu0 0.0
        %3345 = vmatprep.subr.mxu0 0.0
        %3346 = vmatpush1.msra.mxu0 0.0
        %3347 = vmatprep.subr.mxu0 0.0
        %3348 = vmatpush1.msra.mxu0 0.0
        %3349 = vmatprep.subr.mxu0 0.0
        %3350 = vmatpush1.msra.mxu0 0.0
        %3351 = vmatprep.subr.mxu0 0.0
        %3352 = vmatpush1.msra.mxu0 0.0
        %3353 = vmatprep.subr.mxu0 0.0
        %3354 = vmatpush1.msra.mxu0 0.0
        %3355 = vmatprep.subr.mxu0 0.0
        %3356 = vmatpush1.msra.mxu0 0.0
        %3357 = vmatprep.subr.mxu0 0.0
        %3358 = vmatpush1.msra.mxu0 0.0
        %3359 = vmatprep.subr.mxu0 0.0
        %3360 = vmatpush1.msra.mxu0 0.0
        %3361 = vmatprep.subr.mxu0 0.0
        %3362 = vmatpush1.msra.mxu0 0.0
        %3363 = vmatprep.mubr.f32.mxu0 0.0
        %3364 = vmatmul.mubr.f32.gmra.mrb[0].mxu0 %v3297
        %v3365 = vpop.f32.mrb[0].mxu0
        %v3366 = vadd.f32 0.0, %v3365
        %v3367 = vpop.f32.mrb[0].mxu0
        %3368 = vdwg.mxu0
        %v3370 = vsel %vm1408, %v3143, 0
        %3372 = vmatprep.subr.mxu0 0.0
        %3373 = vmatpush1.msra.mxu0 %v3293
        %3374 = vmatprep.subr.mxu0 0.0
        %3375 = vmatpush1.msra.mxu0 0.0
        %3376 = vmatprep.subr.mxu0 0.0
        %3377 = vmatpush1.msra.mxu0 0.0
        %3378 = vmatprep.subr.mxu0 0.0
        %3379 = vmatpush1.msra.mxu0 0.0
        %3380 = vmatprep.subr.mxu0 0.0
        %3381 = vmatpush1.msra.mxu0 0.0
        %3382 = vmatprep.subr.mxu0 0.0
        %3383 = vmatpush1.msra.mxu0 0.0
        %3384 = vmatprep.subr.mxu0 0.0
        %3385 = vmatpush1.msra.mxu0 0.0
        %3386 = vmatprep.subr.mxu0 0.0
        %3387 = vmatpush1.msra.mxu0 0.0
        %3388 = vmatprep.subr.mxu0 0.0
        %3389 = vmatpush1.msra.mxu0 0.0
        %3390 = vmatprep.subr.mxu0 0.0
        %3391 = vmatpush1.msra.mxu0 0.0
        %3392 = vmatprep.subr.mxu0 0.0
        %3393 = vmatpush1.msra.mxu0 0.0
        %3394 = vmatprep.subr.mxu0 0.0
        %3395 = vmatpush1.msra.mxu0 0.0
        %3396 = vmatprep.subr.mxu0 0.0
        %3397 = vmatpush1.msra.mxu0 0.0
        %3398 = vmatprep.subr.mxu0 0.0
        %3399 = vmatpush1.msra.mxu0 0.0
        %3400 = vmatprep.subr.mxu0 0.0
        %3401 = vmatpush1.msra.mxu0 0.0
        %3402 = vmatprep.subr.mxu0 0.0
        %3403 = vmatpush1.msra.mxu0 0.0
        %3404 = vmatprep.subr.mxu0 0.0
        %3405 = vmatpush1.msra.mxu0 0.0
        %3406 = vmatprep.subr.mxu0 0.0
        %3407 = vmatpush1.msra.mxu0 0.0
        %3408 = vmatprep.subr.mxu0 0.0
        %3409 = vmatpush1.msra.mxu0 0.0
        %3410 = vmatprep.subr.mxu0 0.0
        %3411 = vmatpush1.msra.mxu0 0.0
        %3412 = vmatprep.subr.mxu0 0.0
        %3413 = vmatpush1.msra.mxu0 0.0
        %3414 = vmatprep.subr.mxu0 0.0
        %3415 = vmatpush1.msra.mxu0 0.0
        %3416 = vmatprep.subr.mxu0 0.0
        %3417 = vmatpush1.msra.mxu0 0.0
        %3418 = vmatprep.subr.mxu0 0.0
        %3419 = vmatpush1.msra.mxu0 0.0
        %3420 = vmatprep.subr.mxu0 0.0
        %3421 = vmatpush1.msra.mxu0 0.0
        %3422 = vmatprep.subr.mxu0 0.0
        %3423 = vmatpush1.msra.mxu0 0.0
        %3424 = vmatprep.subr.mxu0 0.0
        %3425 = vmatpush1.msra.mxu0 0.0
        %3426 = vmatprep.subr.mxu0 0.0
        %3427 = vmatpush1.msra.mxu0 0.0
        %3428 = vmatprep.subr.mxu0 0.0
        %3429 = vmatpush1.msra.mxu0 0.0
        %3430 = vmatprep.subr.mxu0 0.0
        %3431 = vmatpush1.msra.mxu0 0.0
        %3432 = vmatprep.subr.mxu0 0.0
        %3433 = vmatpush1.msra.mxu0 0.0
        %3434 = vmatprep.subr.mxu0 0.0
        %3435 = vmatpush1.msra.mxu0 0.0
        %3436 = vmatprep.mubr.f32.mxu0 0.0
        %3437 = vmatmul.mubr.f32.gmra.mrb[0].mxu0 %v3370
        %v3438 = vpop.f32.mrb[0].mxu0
        %v3439 = vadd.f32 0.0, %v3438
        %v3440 = vpop.f32.mrb[0].mxu0
        %3441 = vdwg.mxu0
        %v3443 = vsel %vm1408, %v3216, 0
        %3445 = vmatprep.subr.mxu0 0.0
        %3446 = vmatpush1.msra.mxu0 %v3294
        %3447 = vmatprep.subr.mxu0 0.0
        %3448 = vmatpush1.msra.mxu0 0.0
        %3449 = vmatprep.subr.mxu0 0.0
        %3450 = vmatpush1.msra.mxu0 0.0
        %3451 = vmatprep.subr.mxu0 0.0
        %3452 = vmatpush1.msra.mxu0 0.0
        %3453 = vmatprep.subr.mxu0 0.0
        %3454 = vmatpush1.msra.mxu0 0.0
        %3455 = vmatprep.subr.mxu0 0.0
        %3456 = vmatpush1.msra.mxu0 0.0
        %3457 = vmatprep.subr.mxu0 0.0
        %3458 = vmatpush1.msra.mxu0 0.0
        %3459 = vmatprep.subr.mxu0 0.0
        %3460 = vmatpush1.msra.mxu0 0.0
        %3461 = vmatprep.subr.mxu0 0.0
        %3462 = vmatpush1.msra.mxu0 0.0
        %3463 = vmatprep.subr.mxu0 0.0
        %3464 = vmatpush1.msra.mxu0 0.0
        %3465 = vmatprep.subr.mxu0 0.0
        %3466 = vmatpush1.msra.mxu0 0.0
        %3467 = vmatprep.subr.mxu0 0.0
        %3468 = vmatpush1.msra.mxu0 0.0
        %3469 = vmatprep.subr.mxu0 0.0
        %3470 = vmatpush1.msra.mxu0 0.0
        %3471 = vmatprep.subr.mxu0 0.0
        %3472 = vmatpush1.msra.mxu0 0.0
        %3473 = vmatprep.subr.mxu0 0.0
        %3474 = vmatpush1.msra.mxu0 0.0
        %3475 = vmatprep.subr.mxu0 0.0
        %3476 = vmatpush1.msra.mxu0 0.0
        %3477 = vmatprep.subr.mxu0 0.0
        %3478 = vmatpush1.msra.mxu0 0.0
        %3479 = vmatprep.subr.mxu0 0.0
        %3480 = vmatpush1.msra.mxu0 0.0
        %3481 = vmatprep.subr.mxu0 0.0
        %3482 = vmatpush1.msra.mxu0 0.0
        %3483 = vmatprep.subr.mxu0 0.0
        %3484 = vmatpush1.msra.mxu0 0.0
        %3485 = vmatprep.subr.mxu0 0.0
        %3486 = vmatpush1.msra.mxu0 0.0
        %3487 = vmatprep.subr.mxu0 0.0
        %3488 = vmatpush1.msra.mxu0 0.0
        %3489 = vmatprep.subr.mxu0 0.0
        %3490 = vmatpush1.msra.mxu0 0.0
        %3491 = vmatprep.subr.mxu0 0.0
        %3492 = vmatpush1.msra.mxu0 0.0
        %3493 = vmatprep.subr.mxu0 0.0
        %3494 = vmatpush1.msra.mxu0 0.0
        %3495 = vmatprep.subr.mxu0 0.0
        %3496 = vmatpush1.msra.mxu0 0.0
        %3497 = vmatprep.subr.mxu0 0.0
        %3498 = vmatpush1.msra.mxu0 0.0
        %3499 = vmatprep.subr.mxu0 0.0
        %3500 = vmatpush1.msra.mxu0 0.0
        %3501 = vmatprep.subr.mxu0 0.0
        %3502 = vmatpush1.msra.mxu0 0.0
        %3503 = vmatprep.subr.mxu0 0.0
        %3504 = vmatpush1.msra.mxu0 0.0
        %3505 = vmatprep.subr.mxu0 0.0
        %3506 = vmatpush1.msra.mxu0 0.0
        %3507 = vmatprep.subr.mxu0 0.0
        %3508 = vmatpush1.msra.mxu0 0.0
        %3509 = vmatprep.mubr.f32.mxu0 0.0
        %3510 = vmatmul.mubr.f32.gmra.mrb[0].mxu0 %v3443
        %v3511 = vpop.f32.mrb[0].mxu0
        %v3512 = vadd.f32 0.0, %v3511
        %v3513 = vpop.f32.mrb[0].mxu0
        %3514 = vdwg.mxu0
        %v3516 = vsel %vm1408, %v3289, 0
        %3518 = vmatprep.subr.mxu0 0.0
        %3519 = vmatpush1.msra.mxu0 %v3295
        %3520 = vmatprep.subr.mxu0 0.0
        %3521 = vmatpush1.msra.mxu0 0.0
        %3522 = vmatprep.subr.mxu0 0.0
        %3523 = vmatpush1.msra.mxu0 0.0
        %3524 = vmatprep.subr.mxu0 0.0
        %3525 = vmatpush1.msra.mxu0 0.0
        %3526 = vmatprep.subr.mxu0 0.0
        %3527 = vmatpush1.msra.mxu0 0.0
        %3528 = vmatprep.subr.mxu0 0.0
        %3529 = vmatpush1.msra.mxu0 0.0
        %3530 = vmatprep.subr.mxu0 0.0
        %3531 = vmatpush1.msra.mxu0 0.0
        %3532 = vmatprep.subr.mxu0 0.0
        %3533 = vmatpush1.msra.mxu0 0.0
        %3534 = vmatprep.subr.mxu0 0.0
        %3535 = vmatpush1.msra.mxu0 0.0
        %3536 = vmatprep.subr.mxu0 0.0
        %3537 = vmatpush1.msra.mxu0 0.0
        %3538 = vmatprep.subr.mxu0 0.0
        %3539 = vmatpush1.msra.mxu0 0.0
        %3540 = vmatprep.subr.mxu0 0.0
        %3541 = vmatpush1.msra.mxu0 0.0
        %3542 = vmatprep.subr.mxu0 0.0
        %3543 = vmatpush1.msra.mxu0 0.0
        %3544 = vmatprep.subr.mxu0 0.0
        %3545 = vmatpush1.msra.mxu0 0.0
        %3546 = vmatprep.subr.mxu0 0.0
        %3547 = vmatpush1.msra.mxu0 0.0
        %3548 = vmatprep.subr.mxu0 0.0
        %3549 = vmatpush1.msra.mxu0 0.0
        %3550 = vmatprep.subr.mxu0 0.0
        %3551 = vmatpush1.msra.mxu0 0.0
        %3552 = vmatprep.subr.mxu0 0.0
        %3553 = vmatpush1.msra.mxu0 0.0
        %3554 = vmatprep.subr.mxu0 0.0
        %3555 = vmatpush1.msra.mxu0 0.0
        %3556 = vmatprep.subr.mxu0 0.0
        %3557 = vmatpush1.msra.mxu0 0.0
        %3558 = vmatprep.subr.mxu0 0.0
        %3559 = vmatpush1.msra.mxu0 0.0
        %3560 = vmatprep.subr.mxu0 0.0
        %3561 = vmatpush1.msra.mxu0 0.0
        %3562 = vmatprep.subr.mxu0 0.0
        %3563 = vmatpush1.msra.mxu0 0.0
        %3564 = vmatprep.subr.mxu0 0.0
        %3565 = vmatpush1.msra.mxu0 0.0
        %3566 = vmatprep.subr.mxu0 0.0
        %3567 = vmatpush1.msra.mxu0 0.0
        %3568 = vmatprep.subr.mxu0 0.0
        %3569 = vmatpush1.msra.mxu0 0.0
        %3570 = vmatprep.subr.mxu0 0.0
        %3571 = vmatpush1.msra.mxu0 0.0
        %3572 = vmatprep.subr.mxu0 0.0
        %3573 = vmatpush1.msra.mxu0 0.0
        %3574 = vmatprep.subr.mxu0 0.0
        %3575 = vmatpush1.msra.mxu0 0.0
        %3576 = vmatprep.subr.mxu0 0.0
        %3577 = vmatpush1.msra.mxu0 0.0
        %3578 = vmatprep.subr.mxu0 0.0
        %3579 = vmatpush1.msra.mxu0 0.0
        %3580 = vmatprep.subr.mxu0 0.0
        %3581 = vmatpush1.msra.mxu0 0.0
        %3582 = vmatprep.mubr.f32.mxu0 0.0
        %3583 = vmatmul.mubr.f32.gmra.mrb[0].mxu0 %v3516
        %v3584 = vpop.f32.mrb[0].mxu0
        %v3585 = vadd.f32 0.0, %v3584
        %v3586 = vpop.f32.mrb[0].mxu0
        %3587 = vdwg.mxu0
        %v3588 = vsel %vm1147, %v3366, 0.0
        %v3589 = vsel %vm1147, %v3439, 0.0
        %v3590 = vadd.f32 %v3588, %v3589
        %v3591 = vsel %vm1147, %v3512, 0.0
        %v3592 = vadd.f32 %v3590, %v3591
        %v3593 = vsel %vm1147, %v3585, 0.0
        %v3594 = vadd.f32 %v3592, %v3593
        %v3595 = vld [vmem:[%s41] sm:$0x1]
        %v3597 = vlaneseq
        %v3598 = vshrl.u32 %v3597, 7
        %v3599 = vsub.s32 0, %v3598
        %v3600 = vrot.slane %v3595, %v3599
        %v3602 = vadd.f32 %v3594, %v3600
        %v3603 = vadd.f32 %v3602, %v2382
        %v3604 = vld [vmem:[%s43] sm:$0x1]
        %v3605 = vld [vmem:[%s45] sm:$0x1]
        %v3606 = vsel %vm1147, %v3603, 0.0
        %3607 = vadd.xlane.f32.xlu0 %v3606
        %v3608 = vpop.xlane.xlu0 %3607
        %v3609 = vmul.f32 %v3608, %v2358
        %v3610 = vsub.f32 %v3603, %v3609
        %v3611 = vmul.f32 %v3610, %v3610
        %v3612 = vsel %vm1147, %v3611, 0.0
        %3613 = vadd.xlane.f32.xlu0 %v3612
        %v3614 = vpop.xlane.xlu0 %3613
        %v3615 = vmul.f32 %v3614, %v2358
        %v3616 = vadd.f32 %v3615, 1e-05
        %v3617 = vrsqrt.pop %v3616
        %v3618 = vmul.f32 %v3610, %v3617
        %v3620 = vlaneseq
        %v3621 = vshrl.u32 %v3620, 7
        %v3622 = vsub.s32 0, %v3621
        %v3623 = vrot.slane %v3604, %v3622
        %v3625 = vmul.f32 %v3618, %v3623
        %v3627 = vlaneseq
        %v3628 = vshrl.u32 %v3627, 7
        %v3629 = vsub.s32 0, %v3628
        %v3630 = vrot.slane %v3605, %v3629
        %v3632 = vadd.f32 %v3625, %v3630
        %v3633 = vld [vmem:[#allocation23] sm:$0xff]
        %v3634 = vld [vmem:[#allocation23 + $0x8] sm:$0xff]
        %v3635 = vld [vmem:[#allocation23 + $0x10] sm:$0xff]
        %v3636 = vld [vmem:[#allocation23 + $0x18] sm:$0xff]
        %v3637 = vld [vmem:[%s49] sm:$0x1]
        %v3639 = vlaneseq
        %v3640 = vshrl.u32 %v3639, 7
        %v3641 = vsub.s32 0, %v3640
        %v3642 = vrot.slane %v3637, %v3641
        %v3645 = vsel %vm1147, %v3632, 0
        %3647 = vmatprep.subr.mxu0 0.0
        %3648 = vmatpush1.msra.mxu0 %v3633
        %3649 = vmatprep.subr.mxu0 0.0
        %3650 = vmatpush1.msra.mxu0 %v3634
        %3651 = vmatprep.subr.mxu0 0.0
        %3652 = vmatpush1.msra.mxu0 %v3635
        %3653 = vmatprep.subr.mxu0 0.0
        %3654 = vmatpush1.msra.mxu0 %v3636
        %3655 = vmatprep.subr.mxu0 0.0
        %3656 = vmatpush1.msra.mxu0 0.0
        %3657 = vmatprep.subr.mxu0 0.0
        %3658 = vmatpush1.msra.mxu0 0.0
        %3659 = vmatprep.subr.mxu0 0.0
        %3660 = vmatpush1.msra.mxu0 0.0
        %3661 = vmatprep.subr.mxu0 0.0
        %3662 = vmatpush1.msra.mxu0 0.0
        %3663 = vmatprep.subr.mxu0 0.0
        %3664 = vmatpush1.msra.mxu0 0.0
        %3665 = vmatprep.subr.mxu0 0.0
        %3666 = vmatpush1.msra.mxu0 0.0
        %3667 = vmatprep.subr.mxu0 0.0
        %3668 = vmatpush1.msra.mxu0 0.0
        %3669 = vmatprep.subr.mxu0 0.0
        %3670 = vmatpush1.msra.mxu0 0.0
        %3671 = vmatprep.subr.mxu0 0.0
        %3672 = vmatpush1.msra.mxu0 0.0
        %3673 = vmatprep.subr.mxu0 0.0
        %3674 = vmatpush1.msra.mxu0 0.0
        %3675 = vmatprep.subr.mxu0 0.0
        %3676 = vmatpush1.msra.mxu0 0.0
        %3677 = vmatprep.subr.mxu0 0.0
        %3678 = vmatpush1.msra.mxu0 0.0
        %3679 = vmatprep.subr.mxu0 0.0
        %3680 = vmatpush1.msra.mxu0 0.0
        %3681 = vmatprep.subr.mxu0 0.0
        %3682 = vmatpush1.msra.mxu0 0.0
        %3683 = vmatprep.subr.mxu0 0.0
        %3684 = vmatpush1.msra.mxu0 0.0
        %3685 = vmatprep.subr.mxu0 0.0
        %3686 = vmatpush1.msra.mxu0 0.0
        %3687 = vmatprep.subr.mxu0 0.0
        %3688 = vmatpush1.msra.mxu0 0.0
        %3689 = vmatprep.subr.mxu0 0.0
        %3690 = vmatpush1.msra.mxu0 0.0
        %3691 = vmatprep.subr.mxu0 0.0
        %3692 = vmatpush1.msra.mxu0 0.0
        %3693 = vmatprep.subr.mxu0 0.0
        %3694 = vmatpush1.msra.mxu0 0.0
        %3695 = vmatprep.subr.mxu0 0.0
        %3696 = vmatpush1.msra.mxu0 0.0
        %3697 = vmatprep.subr.mxu0 0.0
        %3698 = vmatpush1.msra.mxu0 0.0
        %3699 = vmatprep.subr.mxu0 0.0
        %3700 = vmatpush1.msra.mxu0 0.0
        %3701 = vmatprep.subr.mxu0 0.0
        %3702 = vmatpush1.msra.mxu0 0.0
        %3703 = vmatprep.subr.mxu0 0.0
        %3704 = vmatpush1.msra.mxu0 0.0
        %3705 = vmatprep.subr.mxu0 0.0
        %3706 = vmatpush1.msra.mxu0 0.0
        %3707 = vmatprep.subr.mxu0 0.0
        %3708 = vmatpush1.msra.mxu0 0.0
        %3709 = vmatprep.subr.mxu0 0.0
        %3710 = vmatpush1.msra.mxu0 0.0
        %3711 = vmatprep.mubr.f32.mxu0 0.0
        %3712 = vmatmul.mubr.f32.gmra.mrb[0].mxu0 %v3645
        %v3713 = vpop.f32.mrb[0].mxu0
        %v3714 = vadd.f32 %v3642, %v3713
        %v3715 = vpop.f32.mrb[0].mxu0
        %3716 = vdwg.mxu0
        %v3717 = vmax.f32 %v3714, 0.0
        %v3718 = vld [vmem:[%s51] sm:$0xff]
        %v3719 = vld [vmem:[%s51 + $0x8] sm:$0xff]
        %v3720 = vld [vmem:[%s51 + $0x10] sm:$0xff]
        %v3721 = vld [vmem:[%s51 + $0x18] sm:$0xff]
        %v3722 = vld [vmem:[%s51 + $0x20] sm:$0xff]
        %v3723 = vld [vmem:[%s51 + $0x28] sm:$0xff]
        %v3724 = vld [vmem:[%s51 + $0x30] sm:$0xff]
        %v3725 = vld [vmem:[%s51 + $0x38] sm:$0xff]
        %v3726 = vld [vmem:[%s51 + $0x40] sm:$0xff]
        %v3727 = vld [vmem:[%s51 + $0x48] sm:$0xff]
        %v3728 = vld [vmem:[%s51 + $0x50] sm:$0xff]
        %v3729 = vld [vmem:[%s51 + $0x58] sm:$0xff]
        %v3730 = vld [vmem:[%s51 + $0x60] sm:$0xff]
        %v3731 = vld [vmem:[%s51 + $0x68] sm:$0xff]
        %v3732 = vld [vmem:[%s51 + $0x70] sm:$0xff]
        %v3733 = vld [vmem:[%s51 + $0x78] sm:$0xff]
        %v3734 = vld [vmem:[%s53] sm:$0x1]
        %v3736 = vlaneseq
        %v3737 = vshrl.u32 %v3736, 7
        %v3738 = vsub.s32 0, %v3737
        %v3739 = vrot.slane %v3734, %v3738
        %3741 = vmatprep.subr.mxu0 0.0
        %3742 = vmatpush1.msra.mxu0 %v3718
        %3743 = vmatprep.subr.mxu0 0.0
        %3744 = vmatpush1.msra.mxu0 %v3719
        %3745 = vmatprep.subr.mxu0 0.0
        %3746 = vmatpush1.msra.mxu0 %v3720
        %3747 = vmatprep.subr.mxu0 0.0
        %3748 = vmatpush1.msra.mxu0 %v3721
        %3749 = vmatprep.subr.mxu0 0.0
        %3750 = vmatpush1.msra.mxu0 %v3722
        %3751 = vmatprep.subr.mxu0 0.0
        %3752 = vmatpush1.msra.mxu0 %v3723
        %3753 = vmatprep.subr.mxu0 0.0
        %3754 = vmatpush1.msra.mxu0 %v3724
        %3755 = vmatprep.subr.mxu0 0.0
        %3756 = vmatpush1.msra.mxu0 %v3725
        %3757 = vmatprep.subr.mxu0 0.0
        %3758 = vmatpush1.msra.mxu0 %v3726
        %3759 = vmatprep.subr.mxu0 0.0
        %3760 = vmatpush1.msra.mxu0 %v3727
        %3761 = vmatprep.subr.mxu0 0.0
        %3762 = vmatpush1.msra.mxu0 %v3728
        %3763 = vmatprep.subr.mxu0 0.0
        %3764 = vmatpush1.msra.mxu0 %v3729
        %3765 = vmatprep.subr.mxu0 0.0
        %3766 = vmatpush1.msra.mxu0 %v3730
        %3767 = vmatprep.subr.mxu0 0.0
        %3768 = vmatpush1.msra.mxu0 %v3731
        %3769 = vmatprep.subr.mxu0 0.0
        %3770 = vmatpush1.msra.mxu0 %v3732
        %3771 = vmatprep.subr.mxu0 0.0
        %3772 = vmatpush1.msra.mxu0 %v3733
        %3773 = vmatprep.subr.mxu0 0.0
        %3774 = vmatpush1.msra.mxu0 0.0
        %3775 = vmatprep.subr.mxu0 0.0
        %3776 = vmatpush1.msra.mxu0 0.0
        %3777 = vmatprep.subr.mxu0 0.0
        %3778 = vmatpush1.msra.mxu0 0.0
        %3779 = vmatprep.subr.mxu0 0.0
        %3780 = vmatpush1.msra.mxu0 0.0
        %3781 = vmatprep.subr.mxu0 0.0
        %3782 = vmatpush1.msra.mxu0 0.0
        %3783 = vmatprep.subr.mxu0 0.0
        %3784 = vmatpush1.msra.mxu0 0.0
        %3785 = vmatprep.subr.mxu0 0.0
        %3786 = vmatpush1.msra.mxu0 0.0
        %3787 = vmatprep.subr.mxu0 0.0
        %3788 = vmatpush1.msra.mxu0 0.0
        %3789 = vmatprep.subr.mxu0 0.0
        %3790 = vmatpush1.msra.mxu0 0.0
        %3791 = vmatprep.subr.mxu0 0.0
        %3792 = vmatpush1.msra.mxu0 0.0
        %3793 = vmatprep.subr.mxu0 0.0
        %3794 = vmatpush1.msra.mxu0 0.0
        %3795 = vmatprep.subr.mxu0 0.0
        %3796 = vmatpush1.msra.mxu0 0.0
        %3797 = vmatprep.subr.mxu0 0.0
        %3798 = vmatpush1.msra.mxu0 0.0
        %3799 = vmatprep.subr.mxu0 0.0
        %3800 = vmatpush1.msra.mxu0 0.0
        %3801 = vmatprep.subr.mxu0 0.0
        %3802 = vmatpush1.msra.mxu0 0.0
        %3803 = vmatprep.subr.mxu0 0.0
        %3804 = vmatpush1.msra.mxu0 0.0
        %3805 = vmatprep.mubr.f32.mxu0 0.0
        %3806 = vmatmul.mubr.f32.gmra.mrb[0].mxu0 %v3717
        %v3807 = vpop.f32.mrb[0].mxu0
        %v3808 = vadd.f32 %v3739, %v3807
        %v3809 = vpop.f32.mrb[0].mxu0
        %3810 = vdwg.mxu0
        %v3811 = vadd.f32 %v3808, %v3632
        %v3812 = vld [vmem:[%s55] sm:$0x1]
        %v3813 = vld [vmem:[%s57] sm:$0x1]
        %v3814 = vsel %vm1147, %v3811, 0.0
        %3815 = vadd.xlane.f32.xlu0 %v3814
        %v3816 = vpop.xlane.xlu0 %3815
        %v3817 = vmul.f32 %v3816, %v2358
        %v3818 = vsub.f32 %v3811, %v3817
        %v3819 = vmul.f32 %v3818, %v3818
        %v3820 = vsel %vm1147, %v3819, 0.0
        %3821 = vadd.xlane.f32.xlu0 %v3820
        %v3822 = vpop.xlane.xlu0 %3821
        %v3823 = vmul.f32 %v3822, %v2358
        %v3824 = vadd.f32 %v3823, 1e-05
        %v3825 = vrsqrt.pop %v3824
        %v3826 = vmul.f32 %v3818, %v3825
        %v3828 = vlaneseq
        %v3829 = vshrl.u32 %v3828, 7
        %v3830 = vsub.s32 0, %v3829
        %v3831 = vrot.slane %v3812, %v3830
        %v3833 = vmul.f32 %v3826, %v3831
        %v3835 = vlaneseq
        %v3836 = vshrl.u32 %v3835, 7
        %v3837 = vsub.s32 0, %v3836
        %v3838 = vrot.slane %v3813, %v3837
        %v3840 = vadd.f32 %v3833, %v3838
        %3841 = vst.msk [vmem:[%s1132] sm:$0xff] %vm1147, %v3840
        %s3842 = sand.u32 %s717, 1
        %s3843 = scalar_lea.sflag [#allocation4], %s3842
        %s3844 = sand.u32 %s717, 1
        %s3845 = smul.addr %s3844, 8
        %s3846 = scalar_lea.vmem [#allocation25], %s3845
        // Predicated region
        $region193: #{tpu_custom_call.1} parent=135 // pred_check
          %p3847 = pneg %p727
        $region194: #{tpu_custom_call.1} parent=135 // pred_check_branch
          %3849 = sbr.rel (%p3847) target = $region196
        $region195: #{tpu_custom_call.1} parent=135 // pred_region
          %s3851 = ssub.s32 128, 128
          %3852 = vsyncadd %s3843, %s3851
          %s3853 = smul.addr %s85, 128
          %s3854 = scalar_lea.hbm %s59, %s3853
          %s3856 = sshll.u32 %s3846, 4
          %s3857 = int_to_ptr.vmem [resolvable:$true] %s3856
          %3859 = dma.vmem_to_hbm [thread:$0]  %s3857, 128, %s3854, %s3843
        $region196: #{tpu_custom_call.1} parent=135 // pred_fallthru
          _
      $region136: #{tpu_custom_call.1} parent=5 // pred_fallthru
        _
      %p3860 = scmp.le.s32.totalorder 2, %s80
      // Predicated region
      $region197: #{tpu_custom_call.1} parent=5 // pred_check
        %p3861 = pneg %p3860
      $region198: #{tpu_custom_call.1} parent=5 // pred_check_branch
        %3863 = sbr.rel (%p3861) target = $region200
      $region199: #{tpu_custom_call.1} parent=5 // pred_region
        %s3864 = ssub.s32 %s80, 2
        // Predicated region
        $region201: #{tpu_custom_call.1} parent=199 // pred_check
          %p3865 = pneg %p733
        $region202: #{tpu_custom_call.1} parent=199 // pred_check_branch
          %3867 = sbr.rel (%p3865) target = $region204
        $region203: #{tpu_custom_call.1} parent=199 // pred_region
          %s3868 = sand.u32 %s718, 1
          %s3869 = scalar_lea.sflag [#allocation4], %s3868
          %s3870 = sand.u32 %s718, 1
          %s3871 = smul.addr %s3870, 8
          %s3872 = scalar_lea.vmem [#allocation25], %s3871
          %3873 = dma.done %s3869, 128
        $region204: #{tpu_custom_call.1} parent=199 // pred_fallthru
          _
      $region200: #{tpu_custom_call.1} parent=5 // pred_fallthru
        _
    $region6: #{tpu_custom_call.1} parent=1 // loop_footer
      %s84 = sadd.s32 1, %s80
    $region7: #{tpu_custom_call.1} parent=1 // loop_footer_branch
      %79 = sbr.rel target = $region3
    $region8: #{tpu_custom_call.1} parent=1 // loop_exit
      _
    %3874 = vsyncpa [#allocation3], 1
    %s3875 = scalar_lea.sflag [#allocation3], 1
    %3876 = vsyncpa %s3875, 1
    %3877 = vsyncpa [#allocation6], 1
    %s3878 = scalar_lea.sflag [#allocation6], 1
    %3879 = vsyncpa %s3878, 1
    %3880 = vsyncpa [#allocation9], 1
    %3881 = vsyncpa [#allocation12], 1
    %3882 = vsyncpa [#allocation15], 1
    %3883 = vsyncpa [#allocation18], 1
    %3884 = vsyncpa [#allocation21], 1
    %3885 = vsyncpa [#allocation24], 1
    %3886 = vsyncpa [#allocation4], 1
    %s3887 = scalar_lea.sflag [#allocation4], 1
    %3888 = vsyncpa %s3887, 1

// kernel: tpu_custom_call.1
$region0: #{tpu_custom_call.1}
  #allocation0 [shape = 'u32[]', space=smem, size = 0x4, offset = 0x4, fixed_abs, tag = 'smem constant byte address 0x4 - core index']
  #allocation1 [shape = 'u32[144,128]{1,0:T(1,128)}', space=vmem, size = 0x12000, scoped, tag = 'internal scratch']
  %s0 = inlined_call_operand.smem [shape: u32[30], index: -1, kind: input, shape index: {}]
  %s1 = sld [smem:[%s0]]
  %s2 = scalar_lea.smem %s0, 1
  %s3 = sld [smem:[%s2]]
  %s4 = scalar_lea.smem %s0, 2
  %s5 = sld [smem:[%s4]]
  %s6 = scalar_lea.smem %s0, 3
  %s7 = sld [smem:[%s6]]
  %s8 = scalar_lea.smem %s0, 4
  %s9 = sld [smem:[%s8]]
  %s10 = scalar_lea.smem %s0, 5
  %s11 = sld [smem:[%s10]]
  %s12 = scalar_lea.smem %s0, 6
  %s13 = sld [smem:[%s12]]
  %s14 = scalar_lea.smem %s0, 7
  %s15 = sld [smem:[%s14]]
  %s16 = scalar_lea.smem %s0, 8
  %s17 = sld [smem:[%s16]]
  %s18 = scalar_lea.smem %s0, 9
  %s19 = sld [smem:[%s18]]
  %s20 = scalar_lea.smem %s0, 10
  %s21 = sld [smem:[%s20]]
  %s22 = scalar_lea.smem %s0, 11
  %s23 = sld [smem:[%s22]]
  %s24 = scalar_lea.smem %s0, 12
  %s25 = sld [smem:[%s24]]
  %s26 = scalar_lea.smem %s0, 13
  %s27 = sld [smem:[%s26]]
  %s28 = scalar_lea.smem %s0, 14
  %s29 = sld [smem:[%s28]]
  %s30 = scalar_lea.smem %s0, 15
  %s31 = sld [smem:[%s30]]
  %s32 = scalar_lea.smem %s0, 16
  %s33 = sld [smem:[%s32]]
  %s34 = scalar_lea.smem %s0, 17
  %s35 = sld [smem:[%s34]]
  %s36 = scalar_lea.smem %s0, 18
  %s37 = sld [smem:[%s36]]
  %s38 = scalar_lea.smem %s0, 19
  %s39 = sld [smem:[%s38]]
  %s40 = scalar_lea.smem %s0, 20
  %s41 = sld [smem:[%s40]]
  %s42 = scalar_lea.smem %s0, 21
  %s43 = sld [smem:[%s42]]
  %s44 = scalar_lea.smem %s0, 22
  %s45 = sld [smem:[%s44]]
  %s46 = scalar_lea.smem %s0, 23
  %s47 = sld [smem:[%s46]]
  %s48 = scalar_lea.smem %s0, 24
  %s49 = sld [smem:[%s48]]
  %s50 = scalar_lea.smem %s0, 25
  %s51 = sld [smem:[%s50]]
  %s52 = scalar_lea.smem %s0, 26
  %s53 = sld [smem:[%s52]]
  %s54 = scalar_lea.smem %s0, 27
  %s55 = sld [smem:[%s54]]
  %s56 = scalar_lea.smem %s0, 28
  %s57 = sld [smem:[%s56]]
  %s58 = scalar_lea.smem %s0, 29
  %s59 = sld [smem:[%s58]]
  %s60 = sld [smem:[#allocation0]]
  $region205: #{tpu_custom_call.1} parent=0
    _
  %s62 = ssub.s32 1, %s60
  %s63 = scalar_select 0, %s62, %s60
  $region1: #{tpu_custom_call.1} parent=0
    #allocation2 [shape = 'u8[8192]{0}', space=vmem, size = 0x2000, scoped, tag = 'input window, operand 0']
    #allocation3 [shape = 's32[2]{0}', space=sflag, size = 0x8, scoped, tag = 'scoped memory for tpu_custom_call.1']
    #allocation4 [shape = 's32[2]{0}', space=sflag, size = 0x8, scoped, tag = 'scoped memory for tpu_custom_call.1']
    #allocation5 [shape = 'u8[8192]{0}', space=vmem, size = 0x2000, scoped, tag = 'input window, operand 1']
    #allocation6 [shape = 's32[2]{0}', space=sflag, size = 0x8, scoped, tag = 'scoped memory for tpu_custom_call.1']
    #allocation7 [shape = 'u8[8192]{0}', space=vmem, size = 0x2000, scoped, tag = 'input window, operand 2']
    #allocation8 [shape = 'u8[512]{0}', space=vmem, size = 0x400, scoped, tag = 'input window, operand 4, single buffered']
    #allocation9 [shape = 's32[1]{0}', space=sflag, size = 0x4, scoped, tag = 'scoped memory for tpu_custom_call.1']
    #allocation10 [shape = 'u8[512]{0}', space=vmem, size = 0x400, scoped, tag = 'input window, operand 6, single buffered']
    #allocation11 [shape = 'u8[512]{0}', space=vmem, size = 0x400, scoped, tag = 'input window, operand 8, single buffered']
    #allocation12 [shape = 's32[1]{0}', space=sflag, size = 0x4, scoped, tag = 'scoped memory for tpu_custom_call.1']
    #allocation13 [shape = 'u8[512]{0}', space=vmem, size = 0x400, scoped, tag = 'input window, operand 10, single buffered']
    #allocation14 [shape = 'u8[512]{0}', space=vmem, size = 0x400, scoped, tag = 'input window, operand 11, single buffered']
    #allocation15 [shape = 's32[1]{0}', space=sflag, size = 0x4, scoped, tag = 'scoped memory for tpu_custom_call.1']
    #allocation16 [shape = 'u8[512]{0}', space=vmem, size = 0x400, scoped, tag = 'input window, operand 12, single buffered']
    #allocation17 [shape = 'u8[512]{0}', space=vmem, size = 0x400, scoped, tag = 'input window, operand 14, single buffered']
    #allocation18 [shape = 's32[1]{0}', space=sflag, size = 0x4, scoped, tag = 'scoped memory for tpu_custom_call.1']
    #allocation19 [shape = 'u8[512]{0}', space=vmem, size = 0x400, scoped, tag = 'input window, operand 16, single buffered']
    #allocation20 [shape = 'u8[16384]{0}', space=vmem, size = 0x4000, scoped, tag = 'input window, operand 17, single buffered']
    #allocation21 [shape = 's32[1]{0}', space=sflag, size = 0x4, scoped, tag = 'scoped memory for tpu_custom_call.1']
    #allocation22 [shape = 'u8[16384]{0}', space=vmem, size = 0x4000, scoped, tag = 'input window, operand 19, single buffered']
    #allocation23 [shape = 'u8[16384]{0}', space=vmem, size = 0x4000, scoped, tag = 'input window, operand 23, single buffered']
    #allocation24 [shape = 's32[1]{0}', space=sflag, size = 0x4, scoped, tag = 'scoped memory for tpu_custom_call.1']
    #allocation25 [shape = 'u8[8192]{0}', space=vmem, size = 0x2000, scoped, tag = 'output window, operand 0']
    %64 = vsyncpa [#allocation3], 0
    %s65 = scalar_lea.sflag [#allocation3], 1
    %66 = vsyncpa %s65, 0
    %67 = vsyncpa [#allocation6], 0
    %s68 = scalar_lea.sflag [#allocation6], 1
    %69 = vsyncpa %s68, 0
    %70 = vsyncpa [#allocation9], 0
    %71 = vsyncpa [#allocation12], 0
    %72 = vsyncpa [#allocation15], 0
    %73 = vsyncpa [#allocation18], 0
    %74 = vsyncpa [#allocation21], 0
    %75 = vsyncpa [#allocation24], 0
    %76 = vsyncpa [#allocation4], 0
    %s77 = scalar_lea.sflag [#allocation4], 1
    %78 = vsyncpa %s77, 0
    loop: start=0, step=1, limit=4
    $region2: #{tpu_custom_call.1} parent=1 // loop_pre_header
      _
    $region3: #{tpu_custom_call.1} parent=1 // loop_header
      %s80 = sphi 0, %s84
      %p81 = scmp.ge.s32.totalorder %s80, 4
      %s90 = sphi 0, %s92
      %s93 = sphi 0, %s90
      %s94 = sphi 0, %s93
      %s110 = sphi 0, %s94
      %s116 = sphi 0, %s118
      %s119 = sphi 0, %s116
      %s120 = sphi 0, %s119
      %s136 = sphi 0, %s120
      %s142 = sphi 0, %s144
      %s145 = sphi 0, %s142
      %s146 = sphi 0, %s145
      %s162 = sphi 0, %s146
      %s166 = sphi 0, %s166
      %s168 = sphi 0, %s166
      %s169 = sphi 0, %s168
      %s183 = sphi 0, %s169
      %s187 = sphi 0, %s187
      %s189 = sphi 0, %s187
      %s190 = sphi 0, %s189
      %s204 = sphi 0, %s190
      %s208 = sphi 0, %s208
      %s210 = sphi 0, %s208
      %s211 = sphi 0, %s210
      %s225 = sphi 0, %s211
      %s229 = sphi 0, %s229
      %s231 = sphi 0, %s229
      %s232 = sphi 0, %s231
      %s246 = sphi 0, %s232
      %s250 = sphi 0, %s250
      %s252 = sphi 0, %s250
      %s253 = sphi 0, %s252
      %s267 = sphi 0, %s253
      %s271 = sphi 0, %s271
      %s273 = sphi 0, %s271
      %s274 = sphi 0, %s273
      %s288 = sphi 0, %s274
      %s292 = sphi 0, %s292
      %s294 = sphi 0, %s292
      %s295 = sphi 0, %s294
      %s309 = sphi 0, %s295
      %s313 = sphi 0, %s313
      %s315 = sphi 0, %s313
      %s316 = sphi 0, %s315
      %s330 = sphi 0, %s316
      %s334 = sphi 0, %s334
      %s336 = sphi 0, %s334
      %s337 = sphi 0, %s336
      %s351 = sphi 0, %s337
      %s355 = sphi 0, %s355
      %s357 = sphi 0, %s355
      %s358 = sphi 0, %s357
      %s372 = sphi 0, %s358
      %s376 = sphi 0, %s376
      %s378 = sphi 0, %s376
      %s379 = sphi 0, %s378
      %s393 = sphi 0, %s379
      %s397 = sphi 0, %s397
      %s399 = sphi 0, %s397
      %s400 = sphi 0, %s399
      %s414 = sphi 0, %s400
      %s418 = sphi 0, %s418
      %s420 = sphi 0, %s418
      %s421 = sphi 0, %s420
      %s435 = sphi 0, %s421
      %s439 = sphi 0, %s439
      %s441 = sphi 0, %s439
      %s442 = sphi 0, %s441
      %s456 = sphi 0, %s442
      %s460 = sphi 0, %s460
      %s462 = sphi 0, %s460
      %s463 = sphi 0, %s462
      %s477 = sphi 0, %s463
      %s481 = sphi 0, %s481
      %s483 = sphi 0, %s481
      %s484 = sphi 0, %s483
      %s498 = sphi 0, %s484
      %s502 = sphi 0, %s502
      %s504 = sphi 0, %s502
      %s505 = sphi 0, %s504
      %s519 = sphi 0, %s505
      %s523 = sphi 0, %s523
      %s525 = sphi 0, %s523
      %s526 = sphi 0, %s525
      %s540 = sphi 0, %s526
      %s544 = sphi 0, %s544
      %s546 = sphi 0, %s544
      %s547 = sphi 0, %s546
      %s561 = sphi 0, %s547
      %s565 = sphi 0, %s565
      %s567 = sphi 0, %s565
      %s568 = sphi 0, %s567
      %s582 = sphi 0, %s568
      %s586 = sphi 0, %s586
      %s588 = sphi 0, %s586
      %s589 = sphi 0, %s588
      %s603 = sphi 0, %s589
      %s607 = sphi 0, %s607
      %s609 = sphi 0, %s607
      %s610 = sphi 0, %s609
      %s624 = sphi 0, %s610
      %s628 = sphi 0, %s628
      %s630 = sphi 0, %s628
      %s631 = sphi 0, %s630
      %s645 = sphi 0, %s631
      %s649 = sphi 0, %s649
      %s651 = sphi 0, %s649
      %s652 = sphi 0, %s651
      %s666 = sphi 0, %s652
      %s670 = sphi 0, %s670
      %s672 = sphi 0, %s670
      %s673 = sphi 0, %s672
      %s687 = sphi 0, %s673
      %s691 = sphi 0, %s691
      %s693 = sphi 0, %s691
      %s694 = sphi 0, %s693
      %s708 = sphi 0, %s694
      %s714 = sphi 0, %s716
      %s717 = sphi 0, %s714
      %s718 = sphi 0, %s717
      %s734 = sphi 0, %s718
    $region4: #{tpu_custom_call.1} parent=1 // loop_header_branch
      %83 = sbr.rel (%p81) target = $region8
    $region5: #{tpu_custom_call.1} parent=1 // loop_body
      %s85 = ssub.s32 %s80, 1
      %s86 = ssub.s32 %s80, 2
      %s87 = sadd.s32 %s80, 1
      %s88 = ssub.s32 %s80, %s87
      %p89 = scmp.eq.s32.totalorder %s88, 0
      %s91 = sadd.s32 %s90, 1
      %s92 = scalar_select %p89, %s90, %s91
      %p95 = pneg %p89
      %p96 = scmp.eq.s32.totalorder %s80, 1
      %p97 = por %p95, %p96
      %p98 = scmp.ne.s32.totalorder %s90, %s93
      %p99 = scmp.eq.s32.totalorder %s80, 0
      %p100 = por %p98, %p99
      %p101 = scmp.ne.s32.totalorder %s90, %s93
      %p102 = scmp.eq.s32.totalorder %s85, 1
      %p103 = por %p101, %p102
      %p104 = scmp.ne.s32.totalorder %s93, %s94
      %p105 = scmp.eq.s32.totalorder %s85, 0
      %p106 = por %p104, %p105
      %p107 = scmp.ne.s32.totalorder %s93, %s94
      %p108 = scmp.eq.s32.totalorder %s86, 1
      %p109 = por %p107, %p108
      %p111 = scmp.ne.s32.totalorder %s94, %s110
      %p112 = scmp.eq.s32.totalorder %s86, 0
      %p113 = por %p111, %p112
      %s114 = ssub.s32 %s80, %s87
      %p115 = scmp.eq.s32.totalorder %s114, 0
      %s117 = sadd.s32 %s116, 1
      %s118 = scalar_select %p115, %s116, %s117
      %p121 = pneg %p115
      %p122 = scmp.eq.s32.totalorder %s80, 1
      %p123 = por %p121, %p122
      %p124 = scmp.ne.s32.totalorder %s116, %s119
      %p125 = scmp.eq.s32.totalorder %s80, 0
      %p126 = por %p124, %p125
      %p127 = scmp.ne.s32.totalorder %s116, %s119
      %p128 = scmp.eq.s32.totalorder %s85, 1
      %p129 = por %p127, %p128
      %p130 = scmp.ne.s32.totalorder %s119, %s120
      %p131 = scmp.eq.s32.totalorder %s85, 0
      %p132 = por %p130, %p131
      %p133 = scmp.ne.s32.totalorder %s119, %s120
      %p134 = scmp.eq.s32.totalorder %s86, 1
      %p135 = por %p133, %p134
      %p137 = scmp.ne.s32.totalorder %s120, %s136
      %p138 = scmp.eq.s32.totalorder %s86, 0
      %p139 = por %p137, %p138
      %s140 = ssub.s32 %s80, %s87
      %p141 = scmp.eq.s32.totalorder %s140, 0
      %s143 = sadd.s32 %s142, 1
      %s144 = scalar_select %p141, %s142, %s143
      %p147 = pneg %p141
      %p148 = scmp.eq.s32.totalorder %s80, 1
      %p149 = por %p147, %p148
      %p150 = scmp.ne.s32.totalorder %s142, %s145
      %p151 = scmp.eq.s32.totalorder %s80, 0
      %p152 = por %p150, %p151
      %p153 = scmp.ne.s32.totalorder %s142, %s145
      %p154 = scmp.eq.s32.totalorder %s85, 1
      %p155 = por %p153, %p154
      %p156 = scmp.ne.s32.totalorder %s145, %s146
      %p157 = scmp.eq.s32.totalorder %s85, 0
      %p158 = por %p156, %p157
      %p159 = scmp.ne.s32.totalorder %s145, %s146
      %p160 = scmp.eq.s32.totalorder %s86, 1
      %p161 = por %p159, %p160
      %p163 = scmp.ne.s32.totalorder %s146, %s162
      %p164 = scmp.eq.s32.totalorder %s86, 0
      %p165 = por %p163, %p164
      %s167 = sadd.s32 %s166, 1
      %p170 = scmp.eq.s32.totalorder %s80, 1
      %p171 = scmp.ne.s32.totalorder %s166, %s168
      %p172 = scmp.eq.s32.totalorder %s80, 0
      %p173 = por %p171, %p172
      %p174 = scmp.ne.s32.totalorder %s166, %s168
      %p175 = scmp.eq.s32.totalorder %s85, 1
      %p176 = por %p174, %p175
      %p177 = scmp.ne.s32.totalorder %s168, %s169
      %p178 = scmp.eq.s32.totalorder %s85, 0
      %p179 = por %p177, %p178
      %p180 = scmp.ne.s32.totalorder %s168, %s169
      %p181 = scmp.eq.s32.totalorder %s86, 1
      %p182 = por %p180, %p181
      %p184 = scmp.ne.s32.totalorder %s169, %s183
      %p185 = scmp.eq.s32.totalorder %s86, 0
      %p186 = por %p184, %p185
      %s188 = sadd.s32 %s187, 1
      %p191 = scmp.eq.s32.totalorder %s80, 1
      %p192 = scmp.ne.s32.totalorder %s187, %s189
      %p193 = scmp.eq.s32.totalorder %s80, 0
      %p194 = por %p192, %p193
      %p195 = scmp.ne.s32.totalorder %s187, %s189
      %p196 = scmp.eq.s32.totalorder %s85, 1
      %p197 = por %p195, %p196
      %p198 = scmp.ne.s32.totalorder %s189, %s190
      %p199 = scmp.eq.s32.totalorder %s85, 0
      %p200 = por %p198, %p199
      %p201 = scmp.ne.s32.totalorder %s189, %s190
      %p202 = scmp.eq.s32.totalorder %s86, 1
      %p203 = por %p201, %p202
      %p205 = scmp.ne.s32.totalorder %s190, %s204
      %p206 = scmp.eq.s32.totalorder %s86, 0
      %p207 = por %p205, %p206
      %s209 = sadd.s32 %s208, 1
      %p212 = scmp.eq.s32.totalorder %s80, 1
      %p213 = scmp.ne.s32.totalorder %s208, %s210
      %p214 = scmp.eq.s32.totalorder %s80, 0
      %p215 = por %p213, %p214
      %p216 = scmp.ne.s32.totalorder %s208, %s210
      %p217 = scmp.eq.s32.totalorder %s85, 1
      %p218 = por %p216, %p217
      %p219 = scmp.ne.s32.totalorder %s210, %s211
      %p220 = scmp.eq.s32.totalorder %s85, 0
      %p221 = por %p219, %p220
      %p222 = scmp.ne.s32.totalorder %s210, %s211
      %p223 = scmp.eq.s32.totalorder %s86, 1
      %p224 = por %p222, %p223
      %p226 = scmp.ne.s32.totalorder %s211, %s225
      %p227 = scmp.eq.s32.totalorder %s86, 0
      %p228 = por %p226, %p227
      %s230 = sadd.s32 %s229, 1
      %p233 = scmp.eq.s32.totalorder %s80, 1
      %p234 = scmp.ne.s32.totalorder %s229, %s231
      %p235 = scmp.eq.s32.totalorder %s80, 0
      %p236 = por %p234, %p235
      %p237 = scmp.ne.s32.totalorder %s229, %s231
      %p238 = scmp.eq.s32.totalorder %s85, 1
      %p239 = por %p237, %p238
      %p240 = scmp.ne.s32.totalorder %s231, %s232
      %p241 = scmp.eq.s32.totalorder %s85, 0
      %p242 = por %p240, %p241
      %p243 = scmp.ne.s32.totalorder %s231, %s232
      %p244 = scmp.eq.s32.totalorder %s86, 1
      %p245 = por %p243, %p244
      %p247 = scmp.ne.s32.totalorder %s232, %s246
      %p248 = scmp.eq.s32.totalorder %s86, 0
      %p249 = por %p247, %p248
      %s251 = sadd.s32 %s250, 1
      %p254 = scmp.eq.s32.totalorder %s80, 1
      %p255 = scmp.ne.s32.totalorder %s250, %s252
      %p256 = scmp.eq.s32.totalorder %s80, 0
      %p257 = por %p255, %p256
      %p258 = scmp.ne.s32.totalorder %s250, %s252
      %p259 = scmp.eq.s32.totalorder %s85, 1
      %p260 = por %p258, %p259
      %p261 = scmp.ne.s32.totalorder %s252, %s253
      %p262 = scmp.eq.s32.totalorder %s85, 0
      %p263 = por %p261, %p262
      %p264 = scmp.ne.s32.totalorder %s252, %s253
      %p265 = scmp.eq.s32.totalorder %s86, 1
      %p266 = por %p264, %p265
      %p268 = scmp.ne.s32.totalorder %s253, %s267
      %p269 = scmp.eq.s32.totalorder %s86, 0
      %p270 = por %p268, %p269
      %s272 = sadd.s32 %s271, 1
      %p275 = scmp.eq.s32.totalorder %s80, 1
      %p276 = scmp.ne.s32.totalorder %s271, %s273
      %p277 = scmp.eq.s32.totalorder %s80, 0
      %p278 = por %p276, %p277
      %p279 = scmp.ne.s32.totalorder %s271, %s273
      %p280 = scmp.eq.s32.totalorder %s85, 1
      %p281 = por %p279, %p280
      %p282 = scmp.ne.s32.totalorder %s273, %s274
      %p283 = scmp.eq.s32.totalorder %s85, 0
      %p284 = por %p282, %p283
      %p285 = scmp.ne.s32.totalorder %s273, %s274
      %p286 = scmp.eq.s32.totalorder %s86, 1
      %p287 = por %p285, %p286
      %p289 = scmp.ne.s32.totalorder %s274, %s288
      %p290 = scmp.eq.s32.totalorder %s86, 0
      %p291 = por %p289, %p290
      %s293 = sadd.s32 %s292, 1
      %p296 = scmp.eq.s32.totalorder %s80, 1
      %p297 = scmp.ne.s32.totalorder %s292, %s294
      %p298 = scmp.eq.s32.totalorder %s80, 0
      %p299 = por %p297, %p298
      %p300 = scmp.ne.s32.totalorder %s292, %s294
      %p301 = scmp.eq.s32.totalorder %s85, 1
      %p302 = por %p300, %p301
      %p303 = scmp.ne.s32.totalorder %s294, %s295
      %p304 = scmp.eq.s32.totalorder %s85, 0
      %p305 = por %p303, %p304
      %p306 = scmp.ne.s32.totalorder %s294, %s295
      %p307 = scmp.eq.s32.totalorder %s86, 1
      %p308 = por %p306, %p307
      %p310 = scmp.ne.s32.totalorder %s295, %s309
      %p311 = scmp.eq.s32.totalorder %s86, 0
      %p312 = por %p310, %p311
      %s314 = sadd.s32 %s313, 1
      %p317 = scmp.eq.s32.totalorder %s80, 1
      %p318 = scmp.ne.s32.totalorder %s313, %s315
      %p319 = scmp.eq.s32.totalorder %s80, 0
      %p320 = por %p318, %p319
      %p321 = scmp.ne.s32.totalorder %s313, %s315
      %p322 = scmp.eq.s32.totalorder %s85, 1
      %p323 = por %p321, %p322
      %p324 = scmp.ne.s32.totalorder %s315, %s316
      %p325 = scmp.eq.s32.totalorder %s85, 0
      %p326 = por %p324, %p325
      %p327 = scmp.ne.s32.totalorder %s315, %s316
      %p328 = scmp.eq.s32.totalorder %s86, 1
      %p329 = por %p327, %p328
      %p331 = scmp.ne.s32.totalorder %s316, %s330
      %p332 = scmp.eq.s32.totalorder %s86, 0
      %p333 = por %p331, %p332
      %s335 = sadd.s32 %s334, 1
      %p338 = scmp.eq.s32.totalorder %s80, 1
      %p339 = scmp.ne.s32.totalorder %s334, %s336
      %p340 = scmp.eq.s32.totalorder %s80, 0
      %p341 = por %p339, %p340
      %p342 = scmp.ne.s32.totalorder %s334, %s336
      %p343 = scmp.eq.s32.totalorder %s85, 1
      %p344 = por %p342, %p343
      %p345 = scmp.ne.s32.totalorder %s336, %s337
      %p346 = scmp.eq.s32.totalorder %s85, 0
      %p347 = por %p345, %p346
      %p348 = scmp.ne.s32.totalorder %s336, %s337
      %p349 = scmp.eq.s32.totalorder %s86, 1
      %p350 = por %p348, %p349
      %p352 = scmp.ne.s32.totalorder %s337, %s351
      %p353 = scmp.eq.s32.totalorder %s86, 0
      %p354 = por %p352, %p353
      %s356 = sadd.s32 %s355, 1
      %p359 = scmp.eq.s32.totalorder %s80, 1
      %p360 = scmp.ne.s32.totalorder %s355, %s357
      %p361 = scmp.eq.s32.totalorder %s80, 0
      %p362 = por %p360, %p361
      %p363 = scmp.ne.s32.totalorder %s355, %s357
      %p364 = scmp.eq.s32.totalorder %s85, 1
      %p365 = por %p363, %p364
      %p366 = scmp.ne.s32.totalorder %s357, %s358
      %p367 = scmp.eq.s32.totalorder %s85, 0
      %p368 = por %p366, %p367
      %p369 = scmp.ne.s32.totalorder %s357, %s358
      %p370 = scmp.eq.s32.totalorder %s86, 1
      %p371 = por %p369, %p370
      %p373 = scmp.ne.s32.totalorder %s358, %s372
      %p374 = scmp.eq.s32.totalorder %s86, 0
      %p375 = por %p373, %p374
      %s377 = sadd.s32 %s376, 1
      %p380 = scmp.eq.s32.totalorder %s80, 1
      %p381 = scmp.ne.s32.totalorder %s376, %s378
      %p382 = scmp.eq.s32.totalorder %s80, 0
      %p383 = por %p381, %p382
      %p384 = scmp.ne.s32.totalorder %s376, %s378
      %p385 = scmp.eq.s32.totalorder %s85, 1
      %p386 = por %p384, %p385
      %p387 = scmp.ne.s32.totalorder %s378, %s379
      %p388 = scmp.eq.s32.totalorder %s85, 0
      %p389 = por %p387, %p388
      %p390 = scmp.ne.s32.totalorder %s378, %s379
      %p391 = scmp.eq.s32.totalorder %s86, 1
      %p392 = por %p390, %p391
      %p394 = scmp.ne.s32.totalorder %s379, %s393
      %p395 = scmp.eq.s32.totalorder %s86, 0
      %p396 = por %p394, %p395
      %s398 = sadd.s32 %s397, 1
      %p401 = scmp.eq.s32.totalorder %s80, 1
      %p402 = scmp.ne.s32.totalorder %s397, %s399
      %p403 = scmp.eq.s32.totalorder %s80, 0
      %p404 = por %p402, %p403
      %p405 = scmp.ne.s32.totalorder %s397, %s399
      %p406 = scmp.eq.s32.totalorder %s85, 1
      %p407 = por %p405, %p406
      %p408 = scmp.ne.s32.totalorder %s399, %s400
      %p409 = scmp.eq.s32.totalorder %s85, 0
      %p410 = por %p408, %p409
      %p411 = scmp.ne.s32.totalorder %s399, %s400
      %p412 = scmp.eq.s32.totalorder %s86, 1
      %p413 = por %p411, %p412
      %p415 = scmp.ne.s32.totalorder %s400, %s414
      %p416 = scmp.eq.s32.totalorder %s86, 0
      %p417 = por %p415, %p416
      %s419 = sadd.s32 %s418, 1
      %p422 = scmp.eq.s32.totalorder %s80, 1
      %p423 = scmp.ne.s32.totalorder %s418, %s420
      %p424 = scmp.eq.s32.totalorder %s80, 0
      %p425 = por %p423, %p424
      %p426 = scmp.ne.s32.totalorder %s418, %s420
      %p427 = scmp.eq.s32.totalorder %s85, 1
      %p428 = por %p426, %p427
      %p429 = scmp.ne.s32.totalorder %s420, %s421
      %p430 = scmp.eq.s32.totalorder %s85, 0
      %p431 = por %p429, %p430
      %p432 = scmp.ne.s32.totalorder %s420, %s421
      %p433 = scmp.eq.s32.totalorder %s86, 1
      %p434 = por %p432, %p433
      %p436 = scmp.ne.s32.totalorder %s421, %s435
      %p437 = scmp.eq.s32.totalorder %s86, 0
      %p438 = por %p436, %p437
      %s440 = sadd.s32 %s439, 1
      %p443 = scmp.eq.s32.totalorder %s80, 1
      %p444 = scmp.ne.s32.totalorder %s439, %s441
      %p445 = scmp.eq.s32.totalorder %s80, 0
      %p446 = por %p444, %p445
      %p447 = scmp.ne.s32.totalorder %s439, %s441
      %p448 = scmp.eq.s32.totalorder %s85, 1
      %p449 = por %p447, %p448
      %p450 = scmp.ne.s32.totalorder %s441, %s442
      %p451 = scmp.eq.s32.totalorder %s85, 0
      %p452 = por %p450, %p451
      %p453 = scmp.ne.s32.totalorder %s441, %s442
      %p454 = scmp.eq.s32.totalorder %s86, 1
      %p455 = por %p453, %p454
      %p457 = scmp.ne.s32.totalorder %s442, %s456
      %p458 = scmp.eq.s32.totalorder %s86, 0
      %p459 = por %p457, %p458
      %s461 = sadd.s32 %s460, 1
      %p464 = scmp.eq.s32.totalorder %s80, 1
      %p465 = scmp.ne.s32.totalorder %s460, %s462
      %p466 = scmp.eq.s32.totalorder %s80, 0
      %p467 = por %p465, %p466
      %p468 = scmp.ne.s32.totalorder %s460, %s462
      %p469 = scmp.eq.s32.totalorder %s85, 1
      %p470 = por %p468, %p469
      %p471 = scmp.ne.s32.totalorder %s462, %s463
      %p472 = scmp.eq.s32.totalorder %s85, 0
      %p473 = por %p471, %p472
      %p474 = scmp.ne.s32.totalorder %s462, %s463
      %p475 = scmp.eq.s32.totalorder %s86, 1
      %p476 = por %p474, %p475
      %p478 = scmp.ne.s32.totalorder %s463, %s477
      %p479 = scmp.eq.s32.totalorder %s86, 0
      %p480 = por %p478, %p479
      %s482 = sadd.s32 %s481, 1
      %p485 = scmp.eq.s32.totalorder %s80, 1
      %p486 = scmp.ne.s32.totalorder %s481, %s483
      %p487 = scmp.eq.s32.totalorder %s80, 0
      %p488 = por %p486, %p487
      %p489 = scmp.ne.s32.totalorder %s481, %s483
      %p490 = scmp.eq.s32.totalorder %s85, 1
      %p491 = por %p489, %p490
      %p492 = scmp.ne.s32.totalorder %s483, %s484
      %p493 = scmp.eq.s32.totalorder %s85, 0
      %p494 = por %p492, %p493
      %p495 = scmp.ne.s32.totalorder %s483, %s484
      %p496 = scmp.eq.s32.totalorder %s86, 1
      %p497 = por %p495, %p496
      %p499 = scmp.ne.s32.totalorder %s484, %s498
      %p500 = scmp.eq.s32.totalorder %s86, 0
      %p501 = por %p499, %p500
      %s503 = sadd.s32 %s502, 1
      %p506 = scmp.eq.s32.totalorder %s80, 1
      %p507 = scmp.ne.s32.totalorder %s502, %s504
      %p508 = scmp.eq.s32.totalorder %s80, 0
      %p509 = por %p507, %p508
      %p510 = scmp.ne.s32.totalorder %s502, %s504
      %p511 = scmp.eq.s32.totalorder %s85, 1
      %p512 = por %p510, %p511
      %p513 = scmp.ne.s32.totalorder %s504, %s505
      %p514 = scmp.eq.s32.totalorder %s85, 0
      %p515 = por %p513, %p514
      %p516 = scmp.ne.s32.totalorder %s504, %s505
      %p517 = scmp.eq.s32.totalorder %s86, 1
      %p518 = por %p516, %p517
      %p520 = scmp.ne.s32.totalorder %s505, %s519
      %p521 = scmp.eq.s32.totalorder %s86, 0
      %p522 = por %p520, %p521
      %s524 = sadd.s32 %s523, 1
      %p527 = scmp.eq.s32.totalorder %s80, 1
      %p528 = scmp.ne.s32.totalorder %s523, %s525
      %p529 = scmp.eq.s32.totalorder %s80, 0
      %p530 = por %p528, %p529
      %p531 = scmp.ne.s32.totalorder %s523, %s525
      %p532 = scmp.eq.s32.totalorder %s85, 1
      %p533 = por %p531, %p532
      %p534 = scmp.ne.s32.totalorder %s525, %s526
      %p535 = scmp.eq.s32.totalorder %s85, 0
      %p536 = por %p534, %p535
      %p537 = scmp.ne.s32.totalorder %s525, %s526
      %p538 = scmp.eq.s32.totalorder %s86, 1
      %p539 = por %p537, %p538
      %p541 = scmp.ne.s32.totalorder %s526, %s540
      %p542 = scmp.eq.s32.totalorder %s86, 0
      %p543 = por %p541, %p542
      %s545 = sadd.s32 %s544, 1
      %p548 = scmp.eq.s32.totalorder %s80, 1
      %p549 = scmp.ne.s32.totalorder %s544, %s546
      %p550 = scmp.eq.s32.totalorder %s80, 0
      %p551 = por %p549, %p550
      %p552 = scmp.ne.s32.totalorder %s544, %s546
      %p553 = scmp.eq.s32.totalorder %s85, 1
      %p554 = por %p552, %p553
      %p555 = scmp.ne.s32.totalorder %s546, %s547
      %p556 = scmp.eq.s32.totalorder %s85, 0
      %p557 = por %p555, %p556
      %p558 = scmp.ne.s32.totalorder %s546, %s547
      %p559 = scmp.eq.s32.totalorder %s86, 1
      %p560 = por %p558, %p559
      %p562 = scmp.ne.s32.totalorder %s547, %s561
      %p563 = scmp.eq.s32.totalorder %s86, 0
      %p564 = por %p562, %p563
      %s566 = sadd.s32 %s565, 1
      %p569 = scmp.eq.s32.totalorder %s80, 1
      %p570 = scmp.ne.s32.totalorder %s565, %s567
      %p571 = scmp.eq.s32.totalorder %s80, 0
      %p572 = por %p570, %p571
      %p573 = scmp.ne.s32.totalorder %s565, %s567
      %p574 = scmp.eq.s32.totalorder %s85, 1
      %p575 = por %p573, %p574
      %p576 = scmp.ne.s32.totalorder %s567, %s568
      %p577 = scmp.eq.s32.totalorder %s85, 0
      %p578 = por %p576, %p577
      %p579 = scmp.ne.s32.totalorder %s567, %s568
      %p580 = scmp.eq.s32.totalorder %s86, 1
      %p581 = por %p579, %p580
      %p583 = scmp.ne.s32.totalorder %s568, %s582
      %p584 = scmp.eq.s32.totalorder %s86, 0
      %p585 = por %p583, %p584
      %s587 = sadd.s32 %s586, 1
      %p590 = scmp.eq.s32.totalorder %s80, 1
      %p591 = scmp.ne.s32.totalorder %s586, %s588
      %p592 = scmp.eq.s32.totalorder %s80, 0
      %p593 = por %p591, %p592
      %p594 = scmp.ne.s32.totalorder %s586, %s588
      %p595 = scmp.eq.s32.totalorder %s85, 1
      %p596 = por %p594, %p595
      %p597 = scmp.ne.s32.totalorder %s588, %s589
      %p598 = scmp.eq.s32.totalorder %s85, 0
      %p599 = por %p597, %p598
      %p600 = scmp.ne.s32.totalorder %s588, %s589
      %p601 = scmp.eq.s32.totalorder %s86, 1
      %p602 = por %p600, %p601
      %p604 = scmp.ne.s32.totalorder %s589, %s603
      %p605 = scmp.eq.s32.totalorder %s86, 0
      %p606 = por %p604, %p605
      %s608 = sadd.s32 %s607, 1
      %p611 = scmp.eq.s32.totalorder %s80, 1
      %p612 = scmp.ne.s32.totalorder %s607, %s609
      %p613 = scmp.eq.s32.totalorder %s80, 0
      %p614 = por %p612, %p613
      %p615 = scmp.ne.s32.totalorder %s607, %s609
      %p616 = scmp.eq.s32.totalorder %s85, 1
      %p617 = por %p615, %p616
      %p618 = scmp.ne.s32.totalorder %s609, %s610
      %p619 = scmp.eq.s32.totalorder %s85, 0
      %p620 = por %p618, %p619
      %p621 = scmp.ne.s32.totalorder %s609, %s610
      %p622 = scmp.eq.s32.totalorder %s86, 1
      %p623 = por %p621, %p622
      %p625 = scmp.ne.s32.totalorder %s610, %s624
      %p626 = scmp.eq.s32.totalorder %s86, 0
      %p627 = por %p625, %p626
      %s629 = sadd.s32 %s628, 1
      %p632 = scmp.eq.s32.totalorder %s80, 1
      %p633 = scmp.ne.s32.totalorder %s628, %s630
      %p634 = scmp.eq.s32.totalorder %s80, 0
      %p635 = por %p633, %p634
      %p636 = scmp.ne.s32.totalorder %s628, %s630
      %p637 = scmp.eq.s32.totalorder %s85, 1
      %p638 = por %p636, %p637
      %p639 = scmp.ne.s32.totalorder %s630, %s631
      %p640 = scmp.eq.s32.totalorder %s85, 0
      %p641 = por %p639, %p640
      %p642 = scmp.ne.s32.totalorder %s630, %s631
      %p643 = scmp.eq.s32.totalorder %s86, 1
      %p644 = por %p642, %p643
      %p646 = scmp.ne.s32.totalorder %s631, %s645
      %p647 = scmp.eq.s32.totalorder %s86, 0
      %p648 = por %p646, %p647
      %s650 = sadd.s32 %s649, 1
      %p653 = scmp.eq.s32.totalorder %s80, 1
      %p654 = scmp.ne.s32.totalorder %s649, %s651
      %p655 = scmp.eq.s32.totalorder %s80, 0
      %p656 = por %p654, %p655
      %p657 = scmp.ne.s32.totalorder %s649, %s651
      %p658 = scmp.eq.s32.totalorder %s85, 1
      %p659 = por %p657, %p658
      %p660 = scmp.ne.s32.totalorder %s651, %s652
      %p661 = scmp.eq.s32.totalorder %s85, 0
      %p662 = por %p660, %p661
      %p663 = scmp.ne.s32.totalorder %s651, %s652
      %p664 = scmp.eq.s32.totalorder %s86, 1
      %p665 = por %p663, %p664
      %p667 = scmp.ne.s32.totalorder %s652, %s666
      %p668 = scmp.eq.s32.totalorder %s86, 0
      %p669 = por %p667, %p668
      %s671 = sadd.s32 %s670, 1
      %p674 = scmp.eq.s32.totalorder %s80, 1
      %p675 = scmp.ne.s32.totalorder %s670, %s672
      %p676 = scmp.eq.s32.totalorder %s80, 0
      %p677 = por %p675, %p676
      %p678 = scmp.ne.s32.totalorder %s670, %s672
      %p679 = scmp.eq.s32.totalorder %s85, 1
      %p680 = por %p678, %p679
      %p681 = scmp.ne.s32.totalorder %s672, %s673
      %p682 = scmp.eq.s32.totalorder %s85, 0
      %p683 = por %p681, %p682
      %p684 = scmp.ne.s32.totalorder %s672, %s673
      %p685 = scmp.eq.s32.totalorder %s86, 1
      %p686 = por %p684, %p685
      %p688 = scmp.ne.s32.totalorder %s673, %s687
      %p689 = scmp.eq.s32.totalorder %s86, 0
      %p690 = por %p688, %p689
      %s692 = sadd.s32 %s691, 1
      %p695 = scmp.eq.s32.totalorder %s80, 1
      %p696 = scmp.ne.s32.totalorder %s691, %s693
      %p697 = scmp.eq.s32.totalorder %s80, 0
      %p698 = por %p696, %p697
      %p699 = scmp.ne.s32.totalorder %s691, %s693
      %p700 = scmp.eq.s32.totalorder %s85, 1
      %p701 = por %p699, %p700
      %p702 = scmp.ne.s32.totalorder %s693, %s694
      %p703 = scmp.eq.s32.totalorder %s85, 0
      %p704 = por %p702, %p703
      %p705 = scmp.ne.s32.totalorder %s693, %s694
      %p706 = scmp.eq.s32.totalorder %s86, 1
      %p707 = por %p705, %p706
      %p709 = scmp.ne.s32.totalorder %s694, %s708
      %p710 = scmp.eq.s32.totalorder %s86, 0
      %p711 = por %p709, %p710
      %s712 = ssub.s32 %s80, %s87
      %p713 = scmp.eq.s32.totalorder %s712, 0
      %s715 = sadd.s32 %s714, 1
      %s716 = scalar_select %p713, %s714, %s715
      %p719 = pneg %p713
      %p720 = scmp.eq.s32.totalorder %s80, 1
      %p721 = por %p719, %p720
      %p722 = scmp.ne.s32.totalorder %s714, %s717
      %p723 = scmp.eq.s32.totalorder %s80, 0
      %p724 = por %p722, %p723
      %p725 = scmp.ne.s32.totalorder %s714, %s717
      %p726 = scmp.eq.s32.totalorder %s85, 1
      %p727 = por %p725, %p726
      %p728 = scmp.ne.s32.totalorder %s717, %s718
      %p729 = scmp.eq.s32.totalorder %s85, 0
      %p730 = por %p728, %p729
      %p731 = scmp.ne.s32.totalorder %s717, %s718
      %p732 = scmp.eq.s32.totalorder %s86, 1
      %p733 = por %p731, %p732
      %p735 = scmp.ne.s32.totalorder %s718, %s734
      %p736 = scmp.eq.s32.totalorder %s86, 0
      %p737 = por %p735, %p736
      %p738 = scmp.le.s32.totalorder 1, %s80
      %p739 = scmp.lt.s32.totalorder %s80, 3
      %p740 = pnand %p738, %p739
      %p741 = pneg %p740
      // Predicated region
      $region9: #{tpu_custom_call.1} parent=5 // pred_check
        _
      $region10: #{tpu_custom_call.1} parent=5 // pred_check_branch
        %743 = sbr.rel (%p740) target = $region12
      $region11: #{tpu_custom_call.1} parent=5 // pred_region
        %s744 = ssub.s32 %s80, 1
        // Predicated region
        $region13: #{tpu_custom_call.1} parent=11 // pred_check
          %p745 = pneg %p179
        $region14: #{tpu_custom_call.1} parent=11 // pred_check_branch
          %747 = sbr.rel (%p745) target = $region16
        $region15: #{tpu_custom_call.1} parent=11 // pred_region
          _
        $region16: #{tpu_custom_call.1} parent=11 // pred_fallthru
          _
        // Predicated region
        $region17: #{tpu_custom_call.1} parent=11 // pred_check
          %p748 = pneg %p200
        $region18: #{tpu_custom_call.1} parent=11 // pred_check_branch
          %750 = sbr.rel (%p748) target = $region20
        $region19: #{tpu_custom_call.1} parent=11 // pred_region
          %s752 = ssub.s32 16, 16
          %753 = vsyncadd [#allocation9], %s752
          %s755 = sshll.u32 [#allocation8], 4
          %s756 = int_to_ptr.vmem [resolvable:$true] %s755
          %758 = dma.hbm_to_vmem [thread:$0]  %s9, 16, %s756, [#allocation9]
        $region20: #{tpu_custom_call.1} parent=11 // pred_fallthru
          _
        // Predicated region
        $region21: #{tpu_custom_call.1} parent=11 // pred_check
          %p759 = pneg %p221
        $region22: #{tpu_custom_call.1} parent=11 // pred_check_branch
          %761 = sbr.rel (%p759) target = $region24
        $region23: #{tpu_custom_call.1} parent=11 // pred_region
          _
        $region24: #{tpu_custom_call.1} parent=11 // pred_fallthru
          _
        // Predicated region
        $region25: #{tpu_custom_call.1} parent=11 // pred_check
          %p762 = pneg %p242
        $region26: #{tpu_custom_call.1} parent=11 // pred_check_branch
          %764 = sbr.rel (%p762) target = $region28
        $region27: #{tpu_custom_call.1} parent=11 // pred_region
          %s766 = ssub.s32 16, 16
          %767 = vsyncadd [#allocation9], %s766
          %s769 = sshll.u32 [#allocation10], 4
          %s770 = int_to_ptr.vmem [resolvable:$true] %s769
          %772 = dma.hbm_to_vmem [thread:$0]  %s13, 16, %s770, [#allocation9]
        $region28: #{tpu_custom_call.1} parent=11 // pred_fallthru
          _
        // Predicated region
        $region29: #{tpu_custom_call.1} parent=11 // pred_check
          %p773 = pneg %p263
        $region30: #{tpu_custom_call.1} parent=11 // pred_check_branch
          %775 = sbr.rel (%p773) target = $region32
        $region31: #{tpu_custom_call.1} parent=11 // pred_region
          _
        $region32: #{tpu_custom_call.1} parent=11 // pred_fallthru
          _
        // Predicated region
        $region33: #{tpu_custom_call.1} parent=11 // pred_check
          %p776 = pneg %p284
        $region34: #{tpu_custom_call.1} parent=11 // pred_check_branch
          %778 = sbr.rel (%p776) target = $region36
        $region35: #{tpu_custom_call.1} parent=11 // pred_region
          %s780 = ssub.s32 16, 16
          %781 = vsyncadd [#allocation12], %s780
          %s783 = sshll.u32 [#allocation11], 4
          %s784 = int_to_ptr.vmem [resolvable:$true] %s783
          %786 = dma.hbm_to_vmem [thread:$0]  %s17, 16, %s784, [#allocation12]
        $region36: #{tpu_custom_call.1} parent=11 // pred_fallthru
          _
        // Predicated region
        $region37: #{tpu_custom_call.1} parent=11 // pred_check
          %p787 = pneg %p305
        $region38: #{tpu_custom_call.1} parent=11 // pred_check_branch
          %789 = sbr.rel (%p787) target = $region40
        $region39: #{tpu_custom_call.1} parent=11 // pred_region
          _
        $region40: #{tpu_custom_call.1} parent=11 // pred_fallthru
          _
        // Predicated region
        $region41: #{tpu_custom_call.1} parent=11 // pred_check
          %p790 = pneg %p326
        $region42: #{tpu_custom_call.1} parent=11 // pred_check_branch
          %792 = sbr.rel (%p790) target = $region44
        $region43: #{tpu_custom_call.1} parent=11 // pred_region
          %s794 = ssub.s32 16, 16
          %795 = vsyncadd [#allocation12], %s794
          %s797 = sshll.u32 [#allocation13], 4
          %s798 = int_to_ptr.vmem [resolvable:$true] %s797
          %800 = dma.hbm_to_vmem [thread:$0]  %s21, 16, %s798, [#allocation12]
        $region44: #{tpu_custom_call.1} parent=11 // pred_fallthru
          _
        // Predicated region
        $region45: #{tpu_custom_call.1} parent=11 // pred_check
          %p801 = pneg %p347
        $region46: #{tpu_custom_call.1} parent=11 // pred_check_branch
          %803 = sbr.rel (%p801) target = $region48
        $region47: #{tpu_custom_call.1} parent=11 // pred_region
          %s805 = ssub.s32 16, 16
          %806 = vsyncadd [#allocation15], %s805
          %s808 = sshll.u32 [#allocation14], 4
          %s809 = int_to_ptr.vmem [resolvable:$true] %s808
          %811 = dma.hbm_to_vmem [thread:$0]  %s23, 16, %s809, [#allocation15]
        $region48: #{tpu_custom_call.1} parent=11 // pred_fallthru
          _
        // Predicated region
        $region49: #{tpu_custom_call.1} parent=11 // pred_check
          %p812 = pneg %p368
        $region50: #{tpu_custom_call.1} parent=11 // pred_check_branch
          %814 = sbr.rel (%p812) target = $region52
        $region51: #{tpu_custom_call.1} parent=11 // pred_region
          %s816 = ssub.s32 16, 16
          %817 = vsyncadd [#allocation15], %s816
          %s819 = sshll.u32 [#allocation16], 4
          %s820 = int_to_ptr.vmem [resolvable:$true] %s819
          %822 = dma.hbm_to_vmem [thread:$0]  %s25, 16, %s820, [#allocation15]
        $region52: #{tpu_custom_call.1} parent=11 // pred_fallthru
          _
        // Predicated region
        $region53: #{tpu_custom_call.1} parent=11 // pred_check
          %p823 = pneg %p389
        $region54: #{tpu_custom_call.1} parent=11 // pred_check_branch
          %825 = sbr.rel (%p823) target = $region56
        $region55: #{tpu_custom_call.1} parent=11 // pred_region
          _
        $region56: #{tpu_custom_call.1} parent=11 // pred_fallthru
          _
        // Predicated region
        $region57: #{tpu_custom_call.1} parent=11 // pred_check
          %p826 = pneg %p410
        $region58: #{tpu_custom_call.1} parent=11 // pred_check_branch
          %828 = sbr.rel (%p826) target = $region60
        $region59: #{tpu_custom_call.1} parent=11 // pred_region
          %s830 = ssub.s32 16, 16
          %831 = vsyncadd [#allocation18], %s830
          %s833 = sshll.u32 [#allocation17], 4
          %s834 = int_to_ptr.vmem [resolvable:$true] %s833
          %836 = dma.hbm_to_vmem [thread:$0]  %s29, 16, %s834, [#allocation18]
        $region60: #{tpu_custom_call.1} parent=11 // pred_fallthru
          _
        // Predicated region
        $region61: #{tpu_custom_call.1} parent=11 // pred_check
          %p837 = pneg %p431
        $region62: #{tpu_custom_call.1} parent=11 // pred_check_branch
          %839 = sbr.rel (%p837) target = $region64
        $region63: #{tpu_custom_call.1} parent=11 // pred_region
          _
        $region64: #{tpu_custom_call.1} parent=11 // pred_fallthru
          _
        // Predicated region
        $region65: #{tpu_custom_call.1} parent=11 // pred_check
          %p840 = pneg %p452
        $region66: #{tpu_custom_call.1} parent=11 // pred_check_branch
          %842 = sbr.rel (%p840) target = $region68
        $region67: #{tpu_custom_call.1} parent=11 // pred_region
          %s844 = ssub.s32 16, 16
          %845 = vsyncadd [#allocation18], %s844
          %s847 = sshll.u32 [#allocation19], 4
          %s848 = int_to_ptr.vmem [resolvable:$true] %s847
          %850 = dma.hbm_to_vmem [thread:$0]  %s33, 16, %s848, [#allocation18]
        $region68: #{tpu_custom_call.1} parent=11 // pred_fallthru
          _
        // Predicated region
        $region69: #{tpu_custom_call.1} parent=11 // pred_check
          %p851 = pneg %p473
        $region70: #{tpu_custom_call.1} parent=11 // pred_check_branch
          %853 = sbr.rel (%p851) target = $region72
        $region71: #{tpu_custom_call.1} parent=11 // pred_region
          %s855 = ssub.s32 512, 512
          %856 = vsyncadd [#allocation21], %s855
          %s857 = sshll.u32 [#allocation20], 4
          %s858 = int_to_ptr.vmem [resolvable:$true] %s857
          %863 = dma.hbm_to_vmem [thread:$0]  %s35, 512, %s858, [#allocation21], 128, 128, 8
        $region72: #{tpu_custom_call.1} parent=11 // pred_fallthru
          _
        // Predicated region
        $region73: #{tpu_custom_call.1} parent=11 // pred_check
          %p864 = pneg %p494
        $region74: #{tpu_custom_call.1} parent=11 // pred_check_branch
          %866 = sbr.rel (%p864) target = $region76
        $region75: #{tpu_custom_call.1} parent=11 // pred_region
          _
        $region76: #{tpu_custom_call.1} parent=11 // pred_fallthru
          _
        // Predicated region
        $region77: #{tpu_custom_call.1} parent=11 // pred_check
          %p867 = pneg %p515
        $region78: #{tpu_custom_call.1} parent=11 // pred_check_branch
          %869 = sbr.rel (%p867) target = $region80
        $region79: #{tpu_custom_call.1} parent=11 // pred_region
          %s871 = ssub.s32 512, 512
          %872 = vsyncadd [#allocation21], %s871
          %s873 = sshll.u32 [#allocation22], 4
          %s874 = int_to_ptr.vmem [resolvable:$true] %s873
          %879 = dma.hbm_to_vmem [thread:$0]  %s39, 512, %s874, [#allocation21], 128, 128, 8
        $region80: #{tpu_custom_call.1} parent=11 // pred_fallthru
          _
        // Predicated region
        $region81: #{tpu_custom_call.1} parent=11 // pred_check
          %p880 = pneg %p536
        $region82: #{tpu_custom_call.1} parent=11 // pred_check_branch
          %882 = sbr.rel (%p880) target = $region84
        $region83: #{tpu_custom_call.1} parent=11 // pred_region
          _
        $region84: #{tpu_custom_call.1} parent=11 // pred_fallthru
          _
        // Predicated region
        $region85: #{tpu_custom_call.1} parent=11 // pred_check
          %p883 = pneg %p557
        $region86: #{tpu_custom_call.1} parent=11 // pred_check_branch
          %885 = sbr.rel (%p883) target = $region88
        $region87: #{tpu_custom_call.1} parent=11 // pred_region
          _
        $region88: #{tpu_custom_call.1} parent=11 // pred_fallthru
          _
        // Predicated region
        $region89: #{tpu_custom_call.1} parent=11 // pred_check
          %p886 = pneg %p578
        $region90: #{tpu_custom_call.1} parent=11 // pred_check_branch
          %888 = sbr.rel (%p886) target = $region92
        $region91: #{tpu_custom_call.1} parent=11 // pred_region
          _
        $region92: #{tpu_custom_call.1} parent=11 // pred_fallthru
          _
        // Predicated region
        $region93: #{tpu_custom_call.1} parent=11 // pred_check
          %p889 = pneg %p599
        $region94: #{tpu_custom_call.1} parent=11 // pred_check_branch
          %891 = sbr.rel (%p889) target = $region96
        $region95: #{tpu_custom_call.1} parent=11 // pred_region
          %s893 = ssub.s32 512, 512
          %894 = vsyncadd [#allocation24], %s893
          %s895 = sshll.u32 [#allocation23], 4
          %s896 = int_to_ptr.vmem [resolvable:$true] %s895
          %901 = dma.hbm_to_vmem [thread:$0]  %s47, 512, %s896, [#allocation24], 128, 128, 8
        $region96: #{tpu_custom_call.1} parent=11 // pred_fallthru
          _
        // Predicated region
        $region97: #{tpu_custom_call.1} parent=11 // pred_check
          %p902 = pneg %p620
        $region98: #{tpu_custom_call.1} parent=11 // pred_check_branch
          %904 = sbr.rel (%p902) target = $region100
        $region99: #{tpu_custom_call.1} parent=11 // pred_region
          _
        $region100: #{tpu_custom_call.1} parent=11 // pred_fallthru
          _
        // Predicated region
        $region101: #{tpu_custom_call.1} parent=11 // pred_check
          %p905 = pneg %p641
        $region102: #{tpu_custom_call.1} parent=11 // pred_check_branch
          %907 = sbr.rel (%p905) target = $region104
        $region103: #{tpu_custom_call.1} parent=11 // pred_region
          _
        $region104: #{tpu_custom_call.1} parent=11 // pred_fallthru
          _
        // Predicated region
        $region105: #{tpu_custom_call.1} parent=11 // pred_check
          %p908 = pneg %p662
        $region106: #{tpu_custom_call.1} parent=11 // pred_check_branch
          %910 = sbr.rel (%p908) target = $region108
        $region107: #{tpu_custom_call.1} parent=11 // pred_region
          _
        $region108: #{tpu_custom_call.1} parent=11 // pred_fallthru
          _
        // Predicated region
        $region109: #{tpu_custom_call.1} parent=11 // pred_check
          %p911 = pneg %p683
        $region110: #{tpu_custom_call.1} parent=11 // pred_check_branch
          %913 = sbr.rel (%p911) target = $region112
        $region111: #{tpu_custom_call.1} parent=11 // pred_region
          _
        $region112: #{tpu_custom_call.1} parent=11 // pred_fallthru
          _
        // Predicated region
        $region113: #{tpu_custom_call.1} parent=11 // pred_check
          %p914 = pneg %p704
        $region114: #{tpu_custom_call.1} parent=11 // pred_check_branch
          %916 = sbr.rel (%p914) target = $region116
        $region115: #{tpu_custom_call.1} parent=11 // pred_region
          _
        $region116: #{tpu_custom_call.1} parent=11 // pred_fallthru
          _
      $region12: #{tpu_custom_call.1} parent=5 // pred_fallthru
        _
      %p917 = scmp.lt.s32.totalorder %s80, 2
      // Predicated region
      $region117: #{tpu_custom_call.1} parent=5 // pred_check
        %p918 = pneg %p917
      $region118: #{tpu_custom_call.1} parent=5 // pred_check_branch
        %920 = sbr.rel (%p918) target = $region120
      $region119: #{tpu_custom_call.1} parent=5 // pred_region
        // Predicated region
        $region121: #{tpu_custom_call.1} parent=119 // pred_check
          %p921 = pneg %p100
        $region122: #{tpu_custom_call.1} parent=119 // pred_check_branch
          %923 = sbr.rel (%p921) target = $region124
        $region123: #{tpu_custom_call.1} parent=119 // pred_region
          %s924 = sand.u32 %s90, 1
          %s925 = scalar_lea.sflag [#allocation3], %s924
          %s926 = sand.u32 %s90, 1
          %s927 = smul.addr %s926, 8
          %s928 = scalar_lea.vmem [#allocation2], %s927
          %s930 = ssub.s32 128, 128
          %931 = vsyncadd %s925, %s930
          %s932 = smul.addr %s80, 128
          %s933 = scalar_lea.hbm %s1, %s932
          %s935 = sshll.u32 %s928, 4
          %s936 = int_to_ptr.vmem [resolvable:$true] %s935
          %938 = dma.hbm_to_vmem [thread:$0]  %s933, 128, %s936, %s925
        $region124: #{tpu_custom_call.1} parent=119 // pred_fallthru
          _
        // Predicated region
        $region125: #{tpu_custom_call.1} parent=119 // pred_check
          %p939 = pneg %p126
        $region126: #{tpu_custom_call.1} parent=119 // pred_check_branch
          %941 = sbr.rel (%p939) target = $region128
        $region127: #{tpu_custom_call.1} parent=119 // pred_region
          %s942 = sand.u32 %s80, 1
          %s943 = scalar_lea.sflag [#allocation6], %s942
          %s944 = sand.u32 %s116, 1
          %s945 = smul.addr %s944, 8
          %s946 = scalar_lea.vmem [#allocation5], %s945
          %s948 = ssub.s32 128, 128
          %949 = vsyncadd %s943, %s948
          %s950 = smul.addr %s80, 128
          %s951 = scalar_lea.hbm %s3, %s950
          %s953 = sshll.u32 %s946, 4
          %s954 = int_to_ptr.vmem [resolvable:$true] %s953
          %956 = dma.hbm_to_vmem [thread:$0]  %s951, 128, %s954, %s943
        $region128: #{tpu_custom_call.1} parent=119 // pred_fallthru
          _
        // Predicated region
        $region129: #{tpu_custom_call.1} parent=119 // pred_check
          %p957 = pneg %p152
        $region130: #{tpu_custom_call.1} parent=119 // pred_check_branch
          %959 = sbr.rel (%p957) target = $region132
        $region131: #{tpu_custom_call.1} parent=119 // pred_region
          %s960 = sand.u32 %s80, 1
          %s961 = scalar_lea.sflag [#allocation6], %s960
          %s962 = sand.u32 %s142, 1
          %s963 = smul.addr %s962, 8
          %s964 = scalar_lea.vmem [#allocation7], %s963
          %s966 = ssub.s32 128, 128
          %967 = vsyncadd %s961, %s966
          %s968 = smul.addr %s80, 128
          %s969 = scalar_lea.hbm %s5, %s968
          %s971 = sshll.u32 %s964, 4
          %s972 = int_to_ptr.vmem [resolvable:$true] %s971
          %974 = dma.hbm_to_vmem [thread:$0]  %s969, 128, %s972, %s961
        $region132: #{tpu_custom_call.1} parent=119 // pred_fallthru
          _
      $region120: #{tpu_custom_call.1} parent=5 // pred_fallthru
        _
      %p975 = scmp.le.s32.totalorder 1, %s80
      %p976 = scmp.lt.s32.totalorder %s80, 3
      %p977 = pnand %p975, %p976
      %p978 = pneg %p977
      // Predicated region
      $region133: #{tpu_custom_call.1} parent=5 // pred_check
        _
      $region134: #{tpu_custom_call.1} parent=5 // pred_check_branch
        %980 = sbr.rel (%p977) target = $region136
      $region135: #{tpu_custom_call.1} parent=5 // pred_region
        %s981 = ssub.s32 %s80, 1
        %s982 = sand.u32 %s93, 1
        %s983 = scalar_lea.sflag [#allocation3], %s982
        %s984 = sand.u32 %s93, 1
        %s985 = smul.addr %s984, 8
        %s986 = scalar_lea.vmem [#allocation2], %s985
        // Predicated region
        $region137: #{tpu_custom_call.1} parent=135 // pred_check
          %p987 = pneg %p106
        $region138: #{tpu_custom_call.1} parent=135 // pred_check_branch
          %989 = sbr.rel (%p987) target = $region140
        $region139: #{tpu_custom_call.1} parent=135 // pred_region
          %990 = dma.done %s983, 128
        $region140: #{tpu_custom_call.1} parent=135 // pred_fallthru
          _
        %s991 = sand.u32 %s85, 1
        %s992 = scalar_lea.sflag [#allocation6], %s991
        %s993 = sand.u32 %s119, 1
        %s994 = smul.addr %s993, 8
        %s995 = scalar_lea.vmem [#allocation5], %s994
        // Predicated region
        $region141: #{tpu_custom_call.1} parent=135 // pred_check
          %p996 = pneg %p132
        $region142: #{tpu_custom_call.1} parent=135 // pred_check_branch
          %998 = sbr.rel (%p996) target = $region144
        $region143: #{tpu_custom_call.1} parent=135 // pred_region
          %999 = dma.done %s992, 128
        $region144: #{tpu_custom_call.1} parent=135 // pred_fallthru
          _
        %s1000 = sand.u32 %s85, 1
        %s1001 = scalar_lea.sflag [#allocation6], %s1000
        %s1002 = sand.u32 %s145, 1
        %s1003 = smul.addr %s1002, 8
        %s1004 = scalar_lea.vmem [#allocation7], %s1003
        // Predicated region
        $region145: #{tpu_custom_call.1} parent=135 // pred_check
          %p1005 = pneg %p158
        $region146: #{tpu_custom_call.1} parent=135 // pred_check_branch
          %1007 = sbr.rel (%p1005) target = $region148
        $region147: #{tpu_custom_call.1} parent=135 // pred_region
          %1008 = dma.done %s1001, 128
        $region148: #{tpu_custom_call.1} parent=135 // pred_fallthru
          _
        // Predicated region
        $region149: #{tpu_custom_call.1} parent=135 // pred_check
          %p1009 = pneg %p200
        $region150: #{tpu_custom_call.1} parent=135 // pred_check_branch
          %1011 = sbr.rel (%p1009) target = $region152
        $region151: #{tpu_custom_call.1} parent=135 // pred_region
          %1012 = dma.done [#allocation9], 16
        $region152: #{tpu_custom_call.1} parent=135 // pred_fallthru
          _
        // Predicated region
        $region153: #{tpu_custom_call.1} parent=135 // pred_check
          %p1013 = pneg %p242
        $region154: #{tpu_custom_call.1} parent=135 // pred_check_branch
          %1015 = sbr.rel (%p1013) target = $region156
        $region155: #{tpu_custom_call.1} parent=135 // pred_region
          %1016 = dma.done [#allocation9], 16
        $region156: #{tpu_custom_call.1} parent=135 // pred_fallthru
          _
        // Predicated region
        $region157: #{tpu_custom_call.1} parent=135 // pred_check
          %p1017 = pneg %p284
        $region158: #{tpu_custom_call.1} parent=135 // pred_check_branch
          %1019 = sbr.rel (%p1017) target = $region160
        $region159: #{tpu_custom_call.1} parent=135 // pred_region
          %1020 = dma.done [#allocation12], 16
        $region160: #{tpu_custom_call.1} parent=135 // pred_fallthru
          _
        // Predicated region
        $region161: #{tpu_custom_call.1} parent=135 // pred_check
          %p1021 = pneg %p326
        $region162: #{tpu_custom_call.1} parent=135 // pred_check_branch
          %1023 = sbr.rel (%p1021) target = $region164
        $region163: #{tpu_custom_call.1} parent=135 // pred_region
          %1024 = dma.done [#allocation12], 16
        $region164: #{tpu_custom_call.1} parent=135 // pred_fallthru
          _
        // Predicated region
        $region165: #{tpu_custom_call.1} parent=135 // pred_check
          %p1025 = pneg %p347
        $region166: #{tpu_custom_call.1} parent=135 // pred_check_branch
          %1027 = sbr.rel (%p1025) target = $region168
        $region167: #{tpu_custom_call.1} parent=135 // pred_region
          %1028 = dma.done [#allocation15], 16
        $region168: #{tpu_custom_call.1} parent=135 // pred_fallthru
          _
        // Predicated region
        $region169: #{tpu_custom_call.1} parent=135 // pred_check
          %p1029 = pneg %p368
        $region170: #{tpu_custom_call.1} parent=135 // pred_check_branch
          %1031 = sbr.rel (%p1029) target = $region172
        $region171: #{tpu_custom_call.1} parent=135 // pred_region
          %1032 = dma.done [#allocation15], 16
        $region172: #{tpu_custom_call.1} parent=135 // pred_fallthru
          _
        // Predicated region
        $region173: #{tpu_custom_call.1} parent=135 // pred_check
          %p1033 = pneg %p410
        $region174: #{tpu_custom_call.1} parent=135 // pred_check_branch
          %1035 = sbr.rel (%p1033) target = $region176
        $region175: #{tpu_custom_call.1} parent=135 // pred_region
          %1036 = dma.done [#allocation18], 16
        $region176: #{tpu_custom_call.1} parent=135 // pred_fallthru
          _
        // Predicated region
        $region177: #{tpu_custom_call.1} parent=135 // pred_check
          %p1037 = pneg %p452
        $region178: #{tpu_custom_call.1} parent=135 // pred_check_branch
          %1039 = sbr.rel (%p1037) target = $region180
        $region179: #{tpu_custom_call.1} parent=135 // pred_region
          %1040 = dma.done [#allocation18], 16
        $region180: #{tpu_custom_call.1} parent=135 // pred_fallthru
          _
        // Predicated region
        $region181: #{tpu_custom_call.1} parent=135 // pred_check
          %p1041 = pneg %p473
        $region182: #{tpu_custom_call.1} parent=135 // pred_check_branch
          %1043 = sbr.rel (%p1041) target = $region184
        $region183: #{tpu_custom_call.1} parent=135 // pred_region
          %1044 = dma.done [#allocation21], 512
        $region184: #{tpu_custom_call.1} parent=135 // pred_fallthru
          _
        // Predicated region
        $region185: #{tpu_custom_call.1} parent=135 // pred_check
          %p1045 = pneg %p515
        $region186: #{tpu_custom_call.1} parent=135 // pred_check_branch
          %1047 = sbr.rel (%p1045) target = $region188
        $region187: #{tpu_custom_call.1} parent=135 // pred_region
          %1048 = dma.done [#allocation21], 512
        $region188: #{tpu_custom_call.1} parent=135 // pred_fallthru
          _
        // Predicated region
        $region189: #{tpu_custom_call.1} parent=135 // pred_check
          %p1049 = pneg %p599
        $region190: #{tpu_custom_call.1} parent=135 // pred_check_branch
          %1051 = sbr.rel (%p1049) target = $region192
        $region191: #{tpu_custom_call.1} parent=135 // pred_region
          %1052 = dma.done [#allocation24], 512
        $region192: #{tpu_custom_call.1} parent=135 // pred_fallthru
          _
        %s1053 = sand.u32 %s93, 1
        %s1054 = scalar_lea.sflag [#allocation3], %s1053
        %s1055 = sand.u32 %s93, 1
        %s1056 = smul.addr %s1055, 8
        %s1057 = scalar_lea.vmem [#allocation2], %s1056
        %p1058 = pneg %p106
        %p1059 = pneg %p103
        %s1060 = sand.u32 %s85, 1
        %s1061 = scalar_lea.sflag [#allocation6], %s1060
        %s1062 = sand.u32 %s119, 1
        %s1063 = smul.addr %s1062, 8
        %s1064 = scalar_lea.vmem [#allocation5], %s1063
        %p1065 = pneg %p132
        %p1066 = pneg %p129
        %s1067 = sand.u32 %s85, 1
        %s1068 = scalar_lea.sflag [#allocation6], %s1067
        %s1069 = sand.u32 %s145, 1
        %s1070 = smul.addr %s1069, 8
        %s1071 = scalar_lea.vmem [#allocation7], %s1070
        %p1072 = pneg %p158
        %p1073 = pneg %p155
        %p1074 = pneg %p179
        %p1075 = pneg %p176
        %p1076 = pneg %p200
        %p1077 = pneg %p197
        %p1078 = pneg %p221
        %p1079 = pneg %p218
        %p1080 = pneg %p242
        %p1081 = pneg %p239
        %p1082 = pneg %p263
        %p1083 = pneg %p260
        %p1084 = pneg %p284
        %p1085 = pneg %p281
        %p1086 = pneg %p305
        %p1087 = pneg %p302
        %p1088 = pneg %p326
        %p1089 = pneg %p323
        %p1090 = pneg %p347
        %p1091 = pneg %p344
        %p1092 = pneg %p368
        %p1093 = pneg %p365
        %p1094 = pneg %p389
        %p1095 = pneg %p386
        %p1096 = pneg %p410
        %p1097 = pneg %p407
        %p1098 = pneg %p431
        %p1099 = pneg %p428
        %p1100 = pneg %p452
        %p1101 = pneg %p449
        %p1102 = pneg %p473
        %p1103 = pneg %p470
        %p1104 = pneg %p494
        %p1105 = pneg %p491
        %p1106 = pneg %p515
        %p1107 = pneg %p512
        %p1108 = pneg %p536
        %p1109 = pneg %p533
        %p1110 = pneg %p557
        %p1111 = pneg %p554
        %p1112 = pneg %p578
        %p1113 = pneg %p575
        %p1114 = pneg %p599
        %p1115 = pneg %p596
        %p1116 = pneg %p620
        %p1117 = pneg %p617
        %p1118 = pneg %p641
        %p1119 = pneg %p638
        %p1120 = pneg %p662
        %p1121 = pneg %p659
        %p1122 = pneg %p683
        %p1123 = pneg %p680
        %p1124 = pneg %p704
        %p1125 = pneg %p701
        %p1126 = pneg %p730
        %p1127 = pneg %p727
        %s1128 = sand.u32 %s717, 1
        %s1129 = scalar_lea.sflag [#allocation4], %s1128
        %s1130 = sand.u32 %s717, 1
        %s1131 = smul.addr %s1130, 8
        %s1132 = scalar_lea.vmem [#allocation25], %s1131
        %v1133 = vld [vmem:[%s986] sm:$0xff]
        %v1134 = vld [vmem:[%s995] sm:$0xff]
        %v1135 = vld [vmem:[%s1004] sm:$0xff]
        %v1136 = vld [vmem:[%s7] sm:$0xff]
        %v1137 = vld [vmem:[%s7 + $0x8] sm:$0xff]
        %v1138 = vld [vmem:[%s7 + $0x10] sm:$0xff]
        %v1139 = vld [vmem:[%s7 + $0x18] sm:$0xff]
        %v1140 = vld [vmem:[#allocation8] sm:$0x1]
        %v1142 = vlaneseq
        %v1143 = vshrl.u32 %v1142, 7
        %v1144 = vsub.s32 0, %v1143
        %v1145 = vrot.slane %v1140, %v1144
        %vm1147 = vcmask 261120
        %v1149 = vsel %vm1147, %v1133, 0
        %1151 = vmatprep.subr.mxu0 0.0
        %1152 = vmatpush1.msra.mxu0 %v1136
        %1153 = vmatprep.subr.mxu0 0.0
        %1154 = vmatpush1.msra.mxu0 %v1137
        %1155 = vmatprep.subr.mxu0 0.0
        %1156 = vmatpush1.msra.mxu0 %v1138
        %1157 = vmatprep.subr.mxu0 0.0
        %1158 = vmatpush1.msra.mxu0 %v1139
        %1159 = vmatprep.subr.mxu0 0.0
        %1160 = vmatpush1.msra.mxu0 0.0
        %1161 = vmatprep.subr.mxu0 0.0
        %1162 = vmatpush1.msra.mxu0 0.0
        %1163 = vmatprep.subr.mxu0 0.0
        %1164 = vmatpush1.msra.mxu0 0.0
        %1165 = vmatprep.subr.mxu0 0.0
        %1166 = vmatpush1.msra.mxu0 0.0
        %1167 = vmatprep.subr.mxu0 0.0
        %1168 = vmatpush1.msra.mxu0 0.0
        %1169 = vmatprep.subr.mxu0 0.0
        %1170 = vmatpush1.msra.mxu0 0.0
        %1171 = vmatprep.subr.mxu0 0.0
        %1172 = vmatpush1.msra.mxu0 0.0
        %1173 = vmatprep.subr.mxu0 0.0
        %1174 = vmatpush1.msra.mxu0 0.0
        %1175 = vmatprep.subr.mxu0 0.0
        %1176 = vmatpush1.msra.mxu0 0.0
        %1177 = vmatprep.subr.mxu0 0.0
        %1178 = vmatpush1.msra.mxu0 0.0
        %1179 = vmatprep.subr.mxu0 0.0
        %1180 = vmatpush1.msra.mxu0 0.0
        %1181 = vmatprep.subr.mxu0 0.0
        %1182 = vmatpush1.msra.mxu0 0.0
        %1183 = vmatprep.subr.mxu0 0.0
        %1184 = vmatpush1.msra.mxu0 0.0
        %1185 = vmatprep.subr.mxu0 0.0
        %1186 = vmatpush1.msra.mxu0 0.0
        %1187 = vmatprep.subr.mxu0 0.0
        %1188 = vmatpush1.msra.mxu0 0.0
        %1189 = vmatprep.subr.mxu0 0.0
        %1190 = vmatpush1.msra.mxu0 0.0
        %1191 = vmatprep.subr.mxu0 0.0
        %1192 = vmatpush1.msra.mxu0 0.0
        %1193 = vmatprep.subr.mxu0 0.0
        %1194 = vmatpush1.msra.mxu0 0.0
        %1195 = vmatprep.subr.mxu0 0.0
        %1196 = vmatpush1.msra.mxu0 0.0
        %1197 = vmatprep.subr.mxu0 0.0
        %1198 = vmatpush1.msra.mxu0 0.0
        %1199 = vmatprep.subr.mxu0 0.0
        %1200 = vmatpush1.msra.mxu0 0.0
        %1201 = vmatprep.subr.mxu0 0.0
        %1202 = vmatpush1.msra.mxu0 0.0
        %1203 = vmatprep.subr.mxu0 0.0
        %1204 = vmatpush1.msra.mxu0 0.0
        %1205 = vmatprep.subr.mxu0 0.0
        %1206 = vmatpush1.msra.mxu0 0.0
        %1207 = vmatprep.subr.mxu0 0.0
        %1208 = vmatpush1.msra.mxu0 0.0
        %1209 = vmatprep.subr.mxu0 0.0
        %1210 = vmatpush1.msra.mxu0 0.0
        %1211 = vmatprep.subr.mxu0 0.0
        %1212 = vmatpush1.msra.mxu0 0.0
        %1213 = vmatprep.subr.mxu0 0.0
        %1214 = vmatpush1.msra.mxu0 0.0
        %1215 = vmatprep.mubr.f32.mxu0 0.0
        %1216 = vmatmul.mubr.f32.gmra.mrb[0].mxu0 %v1149
        %v1217 = vpop.f32.mrb[0].mxu0
        %v1218 = vadd.f32 %v1145, %v1217
        %v1219 = vpop.f32.mrb[0].mxu0
        %1220 = vdwg.mxu0
        %v1221 = vld [vmem:[%s11] sm:$0xff]
        %v1222 = vld [vmem:[%s11 + $0x8] sm:$0xff]
        %v1223 = vld [vmem:[%s11 + $0x10] sm:$0xff]
        %v1224 = vld [vmem:[%s11 + $0x18] sm:$0xff]
        %v1225 = vld [vmem:[#allocation10] sm:$0x1]
        %v1227 = vlaneseq
        %v1228 = vshrl.u32 %v1227, 7
        %v1229 = vsub.s32 0, %v1228
        %v1230 = vrot.slane %v1225, %v1229
        %1232 = vmatprep.subr.mxu0 0.0
        %1233 = vmatpush1.msra.mxu0 %v1221
        %1234 = vmatprep.subr.mxu0 0.0
        %1235 = vmatpush1.msra.mxu0 %v1222
        %1236 = vmatprep.subr.mxu0 0.0
        %1237 = vmatpush1.msra.mxu0 %v1223
        %1238 = vmatprep.subr.mxu0 0.0
        %1239 = vmatpush1.msra.mxu0 %v1224
        %1240 = vmatprep.subr.mxu0 0.0
        %1241 = vmatpush1.msra.mxu0 0.0
        %1242 = vmatprep.subr.mxu0 0.0
        %1243 = vmatpush1.msra.mxu0 0.0
        %1244 = vmatprep.subr.mxu0 0.0
        %1245 = vmatpush1.msra.mxu0 0.0
        %1246 = vmatprep.subr.mxu0 0.0
        %1247 = vmatpush1.msra.mxu0 0.0
        %1248 = vmatprep.subr.mxu0 0.0
        %1249 = vmatpush1.msra.mxu0 0.0
        %1250 = vmatprep.subr.mxu0 0.0
        %1251 = vmatpush1.msra.mxu0 0.0
        %1252 = vmatprep.subr.mxu0 0.0
        %1253 = vmatpush1.msra.mxu0 0.0
        %1254 = vmatprep.subr.mxu0 0.0
        %1255 = vmatpush1.msra.mxu0 0.0
        %1256 = vmatprep.subr.mxu0 0.0
        %1257 = vmatpush1.msra.mxu0 0.0
        %1258 = vmatprep.subr.mxu0 0.0
        %1259 = vmatpush1.msra.mxu0 0.0
        %1260 = vmatprep.subr.mxu0 0.0
        %1261 = vmatpush1.msra.mxu0 0.0
        %1262 = vmatprep.subr.mxu0 0.0
        %1263 = vmatpush1.msra.mxu0 0.0
        %1264 = vmatprep.subr.mxu0 0.0
        %1265 = vmatpush1.msra.mxu0 0.0
        %1266 = vmatprep.subr.mxu0 0.0
        %1267 = vmatpush1.msra.mxu0 0.0
        %1268 = vmatprep.subr.mxu0 0.0
        %1269 = vmatpush1.msra.mxu0 0.0
        %1270 = vmatprep.subr.mxu0 0.0
        %1271 = vmatpush1.msra.mxu0 0.0
        %1272 = vmatprep.subr.mxu0 0.0
        %1273 = vmatpush1.msra.mxu0 0.0
        %1274 = vmatprep.subr.mxu0 0.0
        %1275 = vmatpush1.msra.mxu0 0.0
        %1276 = vmatprep.subr.mxu0 0.0
        %1277 = vmatpush1.msra.mxu0 0.0
        %1278 = vmatprep.subr.mxu0 0.0
        %1279 = vmatpush1.msra.mxu0 0.0
        %1280 = vmatprep.subr.mxu0 0.0
        %1281 = vmatpush1.msra.mxu0 0.0
        %1282 = vmatprep.subr.mxu0 0.0
        %1283 = vmatpush1.msra.mxu0 0.0
        %1284 = vmatprep.subr.mxu0 0.0
        %1285 = vmatpush1.msra.mxu0 0.0
        %1286 = vmatprep.subr.mxu0 0.0
        %1287 = vmatpush1.msra.mxu0 0.0
        %1288 = vmatprep.subr.mxu0 0.0
        %1289 = vmatpush1.msra.mxu0 0.0
        %1290 = vmatprep.subr.mxu0 0.0
        %1291 = vmatpush1.msra.mxu0 0.0
        %1292 = vmatprep.subr.mxu0 0.0
        %1293 = vmatpush1.msra.mxu0 0.0
        %1294 = vmatprep.subr.mxu0 0.0
        %1295 = vmatpush1.msra.mxu0 0.0
        %1296 = vmatprep.mubr.f32.mxu0 0.0
        %1297 = vmatmul.mubr.f32.gmra.mrb[0].mxu0 %v1149
        %v1298 = vpop.f32.mrb[0].mxu0
        %v1299 = vadd.f32 %v1230, %v1298
        %v1300 = vpop.f32.mrb[0].mxu0
        %1301 = vdwg.mxu0
        %v1302 = vld [vmem:[%s15] sm:$0xff]
        %v1303 = vld [vmem:[%s15 + $0x8] sm:$0xff]
        %v1304 = vld [vmem:[%s15 + $0x10] sm:$0xff]
        %v1305 = vld [vmem:[%s15 + $0x18] sm:$0xff]
        %v1306 = vld [vmem:[#allocation11] sm:$0x1]
        %v1308 = vlaneseq
        %v1309 = vshrl.u32 %v1308, 7
        %v1310 = vsub.s32 0, %v1309
        %v1311 = vrot.slane %v1306, %v1310
        %1313 = vmatprep.subr.mxu0 0.0
        %1314 = vmatpush1.msra.mxu0 %v1302
        %1315 = vmatprep.subr.mxu0 0.0
        %1316 = vmatpush1.msra.mxu0 %v1303
        %1317 = vmatprep.subr.mxu0 0.0
        %1318 = vmatpush1.msra.mxu0 %v1304
        %1319 = vmatprep.subr.mxu0 0.0
        %1320 = vmatpush1.msra.mxu0 %v1305
        %1321 = vmatprep.subr.mxu0 0.0
        %1322 = vmatpush1.msra.mxu0 0.0
        %1323 = vmatprep.subr.mxu0 0.0
        %1324 = vmatpush1.msra.mxu0 0.0
        %1325 = vmatprep.subr.mxu0 0.0
        %1326 = vmatpush1.msra.mxu0 0.0
        %1327 = vmatprep.subr.mxu0 0.0
        %1328 = vmatpush1.msra.mxu0 0.0
        %1329 = vmatprep.subr.mxu0 0.0
        %1330 = vmatpush1.msra.mxu0 0.0
        %1331 = vmatprep.subr.mxu0 0.0
        %1332 = vmatpush1.msra.mxu0 0.0
        %1333 = vmatprep.subr.mxu0 0.0
        %1334 = vmatpush1.msra.mxu0 0.0
        %1335 = vmatprep.subr.mxu0 0.0
        %1336 = vmatpush1.msra.mxu0 0.0
        %1337 = vmatprep.subr.mxu0 0.0
        %1338 = vmatpush1.msra.mxu0 0.0
        %1339 = vmatprep.subr.mxu0 0.0
        %1340 = vmatpush1.msra.mxu0 0.0
        %1341 = vmatprep.subr.mxu0 0.0
        %1342 = vmatpush1.msra.mxu0 0.0
        %1343 = vmatprep.subr.mxu0 0.0
        %1344 = vmatpush1.msra.mxu0 0.0
        %1345 = vmatprep.subr.mxu0 0.0
        %1346 = vmatpush1.msra.mxu0 0.0
        %1347 = vmatprep.subr.mxu0 0.0
        %1348 = vmatpush1.msra.mxu0 0.0
        %1349 = vmatprep.subr.mxu0 0.0
        %1350 = vmatpush1.msra.mxu0 0.0
        %1351 = vmatprep.subr.mxu0 0.0
        %1352 = vmatpush1.msra.mxu0 0.0
        %1353 = vmatprep.subr.mxu0 0.0
        %1354 = vmatpush1.msra.mxu0 0.0
        %1355 = vmatprep.subr.mxu0 0.0
        %1356 = vmatpush1.msra.mxu0 0.0
        %1357 = vmatprep.subr.mxu0 0.0
        %1358 = vmatpush1.msra.mxu0 0.0
        %1359 = vmatprep.subr.mxu0 0.0
        %1360 = vmatpush1.msra.mxu0 0.0
        %1361 = vmatprep.subr.mxu0 0.0
        %1362 = vmatpush1.msra.mxu0 0.0
        %1363 = vmatprep.subr.mxu0 0.0
        %1364 = vmatpush1.msra.mxu0 0.0
        %1365 = vmatprep.subr.mxu0 0.0
        %1366 = vmatpush1.msra.mxu0 0.0
        %1367 = vmatprep.subr.mxu0 0.0
        %1368 = vmatpush1.msra.mxu0 0.0
        %1369 = vmatprep.subr.mxu0 0.0
        %1370 = vmatpush1.msra.mxu0 0.0
        %1371 = vmatprep.subr.mxu0 0.0
        %1372 = vmatpush1.msra.mxu0 0.0
        %1373 = vmatprep.subr.mxu0 0.0
        %1374 = vmatpush1.msra.mxu0 0.0
        %1375 = vmatprep.subr.mxu0 0.0
        %1376 = vmatpush1.msra.mxu0 0.0
        %1377 = vmatprep.mubr.f32.mxu0 0.0
        %1378 = vmatmul.mubr.f32.gmra.mrb[0].mxu0 %v1149
        %v1379 = vpop.f32.mrb[0].mxu0
        %v1380 = vadd.f32 %v1311, %v1379
        %v1381 = vpop.f32.mrb[0].mxu0
        %1382 = vdwg.mxu0
        %v1383 = vmul.f32 %v1218, 0.17677669
        %1385 = vrot.lane.b32.xlu0 %v1383, 120
        %v1386 = vpop.permute.xlu0 %1385
        %1387 = vrot.lane.b32.xlu0 %v1383, 112
        %v1388 = vpop.permute.xlu0 %1387
        %1389 = vrot.lane.b32.xlu0 %v1383, 104
        %v1390 = vpop.permute.xlu0 %1389
        %1392 = vrot.lane.b32.xlu0 %v1299, 120
        %v1393 = vpop.permute.xlu0 %1392
        %1394 = vrot.lane.b32.xlu0 %v1299, 112
        %v1395 = vpop.permute.xlu0 %1394
        %1396 = vrot.lane.b32.xlu0 %v1299, 104
        %v1397 = vpop.permute.xlu0 %1396
        %1399 = vrot.lane.b32.xlu0 %v1380, 120
        %v1400 = vpop.permute.xlu0 %1399
        %1402 = vrot.lane.b32.xlu0 %v1380, 112
        %v1403 = vpop.permute.xlu0 %1402
        %1405 = vrot.lane.b32.xlu0 %v1380, 104
        %v1406 = vpop.permute.xlu0 %1405
        %vm1408 = vcmask 64512
        %v1409 = vsel %vm1408, %v1383, 0
        %v1411 = vsel %vm1408, %v1299, 0
        %1413 = vmatprep.subr.mxu0 0.0
        %1414 = vmatpush1.xpose.msra.mxu0 %v1411
        %1415 = vmatprep.subr.mxu0 0.0
        %1416 = vmatpush1.xpose.msra.mxu0 0.0
        %1417 = vmatprep.subr.mxu0 0.0
        %1418 = vmatpush1.xpose.msra.mxu0 0.0
        %1419 = vmatprep.subr.mxu0 0.0
        %1420 = vmatpush1.xpose.msra.mxu0 0.0
        %1421 = vmatprep.subr.mxu0 0.0
        %1422 = vmatpush1.xpose.msra.mxu0 0.0
        %1423 = vmatprep.subr.mxu0 0.0
        %1424 = vmatpush1.xpose.msra.mxu0 0.0
        %1425 = vmatprep.subr.mxu0 0.0
        %1426 = vmatpush1.xpose.msra.mxu0 0.0
        %1427 = vmatprep.subr.mxu0 0.0
        %1428 = vmatpush1.xpose.msra.mxu0 0.0
        %1429 = vmatprep.subr.mxu0 0.0
        %1430 = vmatpush1.xpose.msra.mxu0 0.0
        %1431 = vmatprep.subr.mxu0 0.0
        %1432 = vmatpush1.xpose.msra.mxu0 0.0
        %1433 = vmatprep.subr.mxu0 0.0
        %1434 = vmatpush1.xpose.msra.mxu0 0.0
        %1435 = vmatprep.subr.mxu0 0.0
        %1436 = vmatpush1.xpose.msra.mxu0 0.0
        %1437 = vmatprep.subr.mxu0 0.0
        %1438 = vmatpush1.xpose.msra.mxu0 0.0
        %1439 = vmatprep.subr.mxu0 0.0
        %1440 = vmatpush1.xpose.msra.mxu0 0.0
        %1441 = vmatprep.subr.mxu0 0.0
        %1442 = vmatpush1.xpose.msra.mxu0 0.0
        %1443 = vmatprep.subr.mxu0 0.0
        %1444 = vmatpush1.xpose.msra.mxu0 0.0
        %1445 = vmatprep.subr.mxu0 0.0
        %1446 = vmatpush1.xpose.msra.mxu0 0.0
        %1447 = vmatprep.subr.mxu0 0.0
        %1448 = vmatpush1.xpose.msra.mxu0 0.0
        %1449 = vmatprep.subr.mxu0 0.0
        %1450 = vmatpush1.xpose.msra.mxu0 0.0
        %1451 = vmatprep.subr.mxu0 0.0
        %1452 = vmatpush1.xpose.msra.mxu0 0.0
        %1453 = vmatprep.subr.mxu0 0.0
        %1454 = vmatpush1.xpose.msra.mxu0 0.0
        %1455 = vmatprep.subr.mxu0 0.0
        %1456 = vmatpush1.xpose.msra.mxu0 0.0
        %1457 = vmatprep.subr.mxu0 0.0
        %1458 = vmatpush1.xpose.msra.mxu0 0.0
        %1459 = vmatprep.subr.mxu0 0.0
        %1460 = vmatpush1.xpose.msra.mxu0 0.0
        %1461 = vmatprep.subr.mxu0 0.0
        %1462 = vmatpush1.xpose.msra.mxu0 0.0
        %1463 = vmatprep.subr.mxu0 0.0
        %1464 = vmatpush1.xpose.msra.mxu0 0.0
        %1465 = vmatprep.subr.mxu0 0.0
        %1466 = vmatpush1.xpose.msra.mxu0 0.0
        %1467 = vmatprep.subr.mxu0 0.0
        %1468 = vmatpush1.xpose.msra.mxu0 0.0
        %1469 = vmatprep.subr.mxu0 0.0
        %1470 = vmatpush1.xpose.msra.mxu0 0.0
        %1471 = vmatprep.subr.mxu0 0.0
        %1472 = vmatpush1.xpose.msra.mxu0 0.0
        %1473 = vmatprep.subr.mxu0 0.0
        %1474 = vmatpush1.xpose.msra.mxu0 0.0
        %1475 = vmatprep.subr.mxu0 0.0
        %1476 = vmatpush1.xpose.msra.mxu0 0.0
        %1477 = vmatprep.mubr.f32.mxu0 0.0
        %1478 = vmatmul.mubr.f32.gmra.mrb[0].mxu0 %v1409
        %v1479 = vpop.f32.mrb[0].mxu0
        %v1480 = vadd.f32 0.0, %v1479
        %v1481 = vpop.f32.mrb[0].mxu0
        %1482 = vdwg.mxu0
        %v1483 = vsel %vm1408, %v1386, 0
        %v1485 = vsel %vm1408, %v1393, 0
        %1487 = vmatprep.subr.mxu0 0.0
        %1488 = vmatpush1.xpose.msra.mxu0 %v1485
        %1489 = vmatprep.subr.mxu0 0.0
        %1490 = vmatpush1.xpose.msra.mxu0 0.0
        %1491 = vmatprep.subr.mxu0 0.0
        %1492 = vmatpush1.xpose.msra.mxu0 0.0
        %1493 = vmatprep.subr.mxu0 0.0
        %1494 = vmatpush1.xpose.msra.mxu0 0.0
        %1495 = vmatprep.subr.mxu0 0.0
        %1496 = vmatpush1.xpose.msra.mxu0 0.0
        %1497 = vmatprep.subr.mxu0 0.0
        %1498 = vmatpush1.xpose.msra.mxu0 0.0
        %1499 = vmatprep.subr.mxu0 0.0
        %1500 = vmatpush1.xpose.msra.mxu0 0.0
        %1501 = vmatprep.subr.mxu0 0.0
        %1502 = vmatpush1.xpose.msra.mxu0 0.0
        %1503 = vmatprep.subr.mxu0 0.0
        %1504 = vmatpush1.xpose.msra.mxu0 0.0
        %1505 = vmatprep.subr.mxu0 0.0
        %1506 = vmatpush1.xpose.msra.mxu0 0.0
        %1507 = vmatprep.subr.mxu0 0.0
        %1508 = vmatpush1.xpose.msra.mxu0 0.0
        %1509 = vmatprep.subr.mxu0 0.0
        %1510 = vmatpush1.xpose.msra.mxu0 0.0
        %1511 = vmatprep.subr.mxu0 0.0
        %1512 = vmatpush1.xpose.msra.mxu0 0.0
        %1513 = vmatprep.subr.mxu0 0.0
        %1514 = vmatpush1.xpose.msra.mxu0 0.0
        %1515 = vmatprep.subr.mxu0 0.0
        %1516 = vmatpush1.xpose.msra.mxu0 0.0
        %1517 = vmatprep.subr.mxu0 0.0
        %1518 = vmatpush1.xpose.msra.mxu0 0.0
        %1519 = vmatprep.subr.mxu0 0.0
        %1520 = vmatpush1.xpose.msra.mxu0 0.0
        %1521 = vmatprep.subr.mxu0 0.0
        %1522 = vmatpush1.xpose.msra.mxu0 0.0
        %1523 = vmatprep.subr.mxu0 0.0
        %1524 = vmatpush1.xpose.msra.mxu0 0.0
        %1525 = vmatprep.subr.mxu0 0.0
        %1526 = vmatpush1.xpose.msra.mxu0 0.0
        %1527 = vmatprep.subr.mxu0 0.0
        %1528 = vmatpush1.xpose.msra.mxu0 0.0
        %1529 = vmatprep.subr.mxu0 0.0
        %1530 = vmatpush1.xpose.msra.mxu0 0.0
        %1531 = vmatprep.subr.mxu0 0.0
        %1532 = vmatpush1.xpose.msra.mxu0 0.0
        %1533 = vmatprep.subr.mxu0 0.0
        %1534 = vmatpush1.xpose.msra.mxu0 0.0
        %1535 = vmatprep.subr.mxu0 0.0
        %1536 = vmatpush1.xpose.msra.mxu0 0.0
        %1537 = vmatprep.subr.mxu0 0.0
        %1538 = vmatpush1.xpose.msra.mxu0 0.0
        %1539 = vmatprep.subr.mxu0 0.0
        %1540 = vmatpush1.xpose.msra.mxu0 0.0
        %1541 = vmatprep.subr.mxu0 0.0
        %1542 = vmatpush1.xpose.msra.mxu0 0.0
        %1543 = vmatprep.subr.mxu0 0.0
        %1544 = vmatpush1.xpose.msra.mxu0 0.0
        %1545 = vmatprep.subr.mxu0 0.0
        %1546 = vmatpush1.xpose.msra.mxu0 0.0
        %1547 = vmatprep.subr.mxu0 0.0
        %1548 = vmatpush1.xpose.msra.mxu0 0.0
        %1549 = vmatprep.subr.mxu0 0.0
        %1550 = vmatpush1.xpose.msra.mxu0 0.0
        %1551 = vmatprep.mubr.f32.mxu0 0.0
        %1552 = vmatmul.mubr.f32.gmra.mrb[0].mxu0 %v1483
        %v1553 = vpop.f32.mrb[0].mxu0
        %v1554 = vadd.f32 0.0, %v1553
        %v1555 = vpop.f32.mrb[0].mxu0
        %1556 = vdwg.mxu0
        %v1557 = vsel %vm1408, %v1388, 0
        %v1559 = vsel %vm1408, %v1395, 0
        %1561 = vmatprep.subr.mxu0 0.0
        %1562 = vmatpush1.xpose.msra.mxu0 %v1559
        %1563 = vmatprep.subr.mxu0 0.0
        %1564 = vmatpush1.xpose.msra.mxu0 0.0
        %1565 = vmatprep.subr.mxu0 0.0
        %1566 = vmatpush1.xpose.msra.mxu0 0.0
        %1567 = vmatprep.subr.mxu0 0.0
        %1568 = vmatpush1.xpose.msra.mxu0 0.0
        %1569 = vmatprep.subr.mxu0 0.0
        %1570 = vmatpush1.xpose.msra.mxu0 0.0
        %1571 = vmatprep.subr.mxu0 0.0
        %1572 = vmatpush1.xpose.msra.mxu0 0.0
        %1573 = vmatprep.subr.mxu0 0.0
        %1574 = vmatpush1.xpose.msra.mxu0 0.0
        %1575 = vmatprep.subr.mxu0 0.0
        %1576 = vmatpush1.xpose.msra.mxu0 0.0
        %1577 = vmatprep.subr.mxu0 0.0
        %1578 = vmatpush1.xpose.msra.mxu0 0.0
        %1579 = vmatprep.subr.mxu0 0.0
        %1580 = vmatpush1.xpose.msra.mxu0 0.0
        %1581 = vmatprep.subr.mxu0 0.0
        %1582 = vmatpush1.xpose.msra.mxu0 0.0
        %1583 = vmatprep.subr.mxu0 0.0
        %1584 = vmatpush1.xpose.msra.mxu0 0.0
        %1585 = vmatprep.subr.mxu0 0.0
        %1586 = vmatpush1.xpose.msra.mxu0 0.0
        %1587 = vmatprep.subr.mxu0 0.0
        %1588 = vmatpush1.xpose.msra.mxu0 0.0
        %1589 = vmatprep.subr.mxu0 0.0
        %1590 = vmatpush1.xpose.msra.mxu0 0.0
        %1591 = vmatprep.subr.mxu0 0.0
        %1592 = vmatpush1.xpose.msra.mxu0 0.0
        %1593 = vmatprep.subr.mxu0 0.0
        %1594 = vmatpush1.xpose.msra.mxu0 0.0
        %1595 = vmatprep.subr.mxu0 0.0
        %1596 = vmatpush1.xpose.msra.mxu0 0.0
        %1597 = vmatprep.subr.mxu0 0.0
        %1598 = vmatpush1.xpose.msra.mxu0 0.0
        %1599 = vmatprep.subr.mxu0 0.0
        %1600 = vmatpush1.xpose.msra.mxu0 0.0
        %1601 = vmatprep.subr.mxu0 0.0
        %1602 = vmatpush1.xpose.msra.mxu0 0.0
        %1603 = vmatprep.subr.mxu0 0.0
        %1604 = vmatpush1.xpose.msra.mxu0 0.0
        %1605 = vmatprep.subr.mxu0 0.0
        %1606 = vmatpush1.xpose.msra.mxu0 0.0
        %1607 = vmatprep.subr.mxu0 0.0
        %1608 = vmatpush1.xpose.msra.mxu0 0.0
        %1609 = vmatprep.subr.mxu0 0.0
        %1610 = vmatpush1.xpose.msra.mxu0 0.0
        %1611 = vmatprep.subr.mxu0 0.0
        %1612 = vmatpush1.xpose.msra.mxu0 0.0
        %1613 = vmatprep.subr.mxu0 0.0
        %1614 = vmatpush1.xpose.msra.mxu0 0.0
        %1615 = vmatprep.subr.mxu0 0.0
        %1616 = vmatpush1.xpose.msra.mxu0 0.0
        %1617 = vmatprep.subr.mxu0 0.0
        %1618 = vmatpush1.xpose.msra.mxu0 0.0
        %1619 = vmatprep.subr.mxu0 0.0
        %1620 = vmatpush1.xpose.msra.mxu0 0.0
        %1621 = vmatprep.subr.mxu0 0.0
        %1622 = vmatpush1.xpose.msra.mxu0 0.0
        %1623 = vmatprep.subr.mxu0 0.0
        %1624 = vmatpush1.xpose.msra.mxu0 0.0
        %1625 = vmatprep.mubr.f32.mxu0 0.0
        %1626 = vmatmul.mubr.f32.gmra.mrb[0].mxu0 %v1557
        %v1627 = vpop.f32.mrb[0].mxu0
        %v1628 = vadd.f32 0.0, %v1627
        %v1629 = vpop.f32.mrb[0].mxu0
        %1630 = vdwg.mxu0
        %v1631 = vsel %vm1408, %v1390, 0
        %v1633 = vsel %vm1408, %v1397, 0
        %1635 = vmatprep.subr.mxu0 0.0
        %1636 = vmatpush1.xpose.msra.mxu0 %v1633
        %1637 = vmatprep.subr.mxu0 0.0
        %1638 = vmatpush1.xpose.msra.mxu0 0.0
        %1639 = vmatprep.subr.mxu0 0.0
        %1640 = vmatpush1.xpose.msra.mxu0 0.0
        %1641 = vmatprep.subr.mxu0 0.0
        %1642 = vmatpush1.xpose.msra.mxu0 0.0
        %1643 = vmatprep.subr.mxu0 0.0
        %1644 = vmatpush1.xpose.msra.mxu0 0.0
        %1645 = vmatprep.subr.mxu0 0.0
        %1646 = vmatpush1.xpose.msra.mxu0 0.0
        %1647 = vmatprep.subr.mxu0 0.0
        %1648 = vmatpush1.xpose.msra.mxu0 0.0
        %1649 = vmatprep.subr.mxu0 0.0
        %1650 = vmatpush1.xpose.msra.mxu0 0.0
        %1651 = vmatprep.subr.mxu0 0.0
        %1652 = vmatpush1.xpose.msra.mxu0 0.0
        %1653 = vmatprep.subr.mxu0 0.0
        %1654 = vmatpush1.xpose.msra.mxu0 0.0
        %1655 = vmatprep.subr.mxu0 0.0
        %1656 = vmatpush1.xpose.msra.mxu0 0.0
        %1657 = vmatprep.subr.mxu0 0.0
        %1658 = vmatpush1.xpose.msra.mxu0 0.0
        %1659 = vmatprep.subr.mxu0 0.0
        %1660 = vmatpush1.xpose.msra.mxu0 0.0
        %1661 = vmatprep.subr.mxu0 0.0
        %1662 = vmatpush1.xpose.msra.mxu0 0.0
        %1663 = vmatprep.subr.mxu0 0.0
        %1664 = vmatpush1.xpose.msra.mxu0 0.0
        %1665 = vmatprep.subr.mxu0 0.0
        %1666 = vmatpush1.xpose.msra.mxu0 0.0
        %1667 = vmatprep.subr.mxu0 0.0
        %1668 = vmatpush1.xpose.msra.mxu0 0.0
        %1669 = vmatprep.subr.mxu0 0.0
        %1670 = vmatpush1.xpose.msra.mxu0 0.0
        %1671 = vmatprep.subr.mxu0 0.0
        %1672 = vmatpush1.xpose.msra.mxu0 0.0
        %1673 = vmatprep.subr.mxu0 0.0
        %1674 = vmatpush1.xpose.msra.mxu0 0.0
        %1675 = vmatprep.subr.mxu0 0.0
        %1676 = vmatpush1.xpose.msra.mxu0 0.0
        %1677 = vmatprep.subr.mxu0 0.0
        %1678 = vmatpush1.xpose.msra.mxu0 0.0
        %1679 = vmatprep.subr.mxu0 0.0
        %1680 = vmatpush1.xpose.msra.mxu0 0.0
        %1681 = vmatprep.subr.mxu0 0.0
        %1682 = vmatpush1.xpose.msra.mxu0 0.0
        %1683 = vmatprep.subr.mxu0 0.0
        %1684 = vmatpush1.xpose.msra.mxu0 0.0
        %1685 = vmatprep.subr.mxu0 0.0
        %1686 = vmatpush1.xpose.msra.mxu0 0.0
        %1687 = vmatprep.subr.mxu0 0.0
        %1688 = vmatpush1.xpose.msra.mxu0 0.0
        %1689 = vmatprep.subr.mxu0 0.0
        %1690 = vmatpush1.xpose.msra.mxu0 0.0
        %1691 = vmatprep.subr.mxu0 0.0
        %1692 = vmatpush1.xpose.msra.mxu0 0.0
        %1693 = vmatprep.subr.mxu0 0.0
        %1694 = vmatpush1.xpose.msra.mxu0 0.0
        %1695 = vmatprep.subr.mxu0 0.0
        %1696 = vmatpush1.xpose.msra.mxu0 0.0
        %1697 = vmatprep.subr.mxu0 0.0
        %1698 = vmatpush1.xpose.msra.mxu0 0.0
        %1699 = vmatprep.mubr.f32.mxu0 0.0
        %1700 = vmatmul.mubr.f32.gmra.mrb[0].mxu0 %v1631
        %v1701 = vpop.f32.mrb[0].mxu0
        %v1702 = vadd.f32 0.0, %v1701
        %v1703 = vpop.f32.mrb[0].mxu0
        %1704 = vdwg.mxu0
        %v1705 = vsel %vm1408, %v1480, -inf
        %1706 = vmax.xlane.f32.xlu0 %v1705
        %v1707 = vpop.xlane.xlu0 %1706
        %v1708 = vsel %vm1408, %v1554, -inf
        %1709 = vmax.xlane.f32.xlu0 %v1708
        %v1710 = vpop.xlane.xlu0 %1709
        %v1711 = vsel %vm1408, %v1628, -inf
        %1712 = vmax.xlane.f32.xlu0 %v1711
        %v1713 = vpop.xlane.xlu0 %1712
        %v1714 = vsel %vm1408, %v1702, -inf
        %1715 = vmax.xlane.f32.xlu0 %v1714
        %v1716 = vpop.xlane.xlu0 %1715
        %v1717 = vsub.f32 %v1480, %v1707
        %v1718 = vsub.f32 %v1554, %v1710
        %v1719 = vsub.f32 %v1628, %v1713
        %v1720 = vsub.f32 %v1702, %v1716
        %v1721 = vmul.f32 %v1717, 1.442695
        %v1722 = vpow.pop %v1721
        %v1723 = vmul.f32 %v1718, 1.442695
        %v1724 = vpow.pop %v1723
        %v1725 = vmul.f32 %v1719, 1.442695
        %v1726 = vpow.pop %v1725
        %v1727 = vmul.f32 %v1720, 1.442695
        %v1728 = vpow.pop %v1727
        %v1729 = vsel %vm1408, %v1722, 0.0
        %1730 = vadd.xlane.f32.xlu0 %v1729
        %v1731 = vpop.xlane.xlu0 %1730
        %v1732 = vsel %vm1408, %v1724, 0.0
        %1733 = vadd.xlane.f32.xlu0 %v1732
        %v1734 = vpop.xlane.xlu0 %1733
        %v1735 = vsel %vm1408, %v1726, 0.0
        %1736 = vadd.xlane.f32.xlu0 %v1735
        %v1737 = vpop.xlane.xlu0 %1736
        %v1738 = vsel %vm1408, %v1728, 0.0
        %1739 = vadd.xlane.f32.xlu0 %v1738
        %v1740 = vpop.xlane.xlu0 %1739
        %v1741 = vrcp.pop %v1731
        %v1742 = vrcp.pop %v1734
        %v1743 = vrcp.pop %v1737
        %v1744 = vrcp.pop %v1740
        %v1745 = vmul.f32 %v1722, %v1741
        %v1746 = vmul.f32 %v1724, %v1742
        %v1747 = vmul.f32 %v1726, %v1743
        %v1748 = vmul.f32 %v1728, %v1744
        %v1750 = vsel %vm1408, %v1745, 0
        %1752 = vmatprep.subr.mxu0 0.0
        %1753 = vmatpush1.msra.mxu0 %v1380
        %1754 = vmatprep.subr.mxu0 0.0
        %1755 = vmatpush1.msra.mxu0 0.0
        %1756 = vmatprep.subr.mxu0 0.0
        %1757 = vmatpush1.msra.mxu0 0.0
        %1758 = vmatprep.subr.mxu0 0.0
        %1759 = vmatpush1.msra.mxu0 0.0
        %1760 = vmatprep.subr.mxu0 0.0
        %1761 = vmatpush1.msra.mxu0 0.0
        %1762 = vmatprep.subr.mxu0 0.0
        %1763 = vmatpush1.msra.mxu0 0.0
        %1764 = vmatprep.subr.mxu0 0.0
        %1765 = vmatpush1.msra.mxu0 0.0
        %1766 = vmatprep.subr.mxu0 0.0
        %1767 = vmatpush1.msra.mxu0 0.0
        %1768 = vmatprep.subr.mxu0 0.0
        %1769 = vmatpush1.msra.mxu0 0.0
        %1770 = vmatprep.subr.mxu0 0.0
        %1771 = vmatpush1.msra.mxu0 0.0
        %1772 = vmatprep.subr.mxu0 0.0
        %1773 = vmatpush1.msra.mxu0 0.0
        %1774 = vmatprep.subr.mxu0 0.0
        %1775 = vmatpush1.msra.mxu0 0.0
        %1776 = vmatprep.subr.mxu0 0.0
        %1777 = vmatpush1.msra.mxu0 0.0
        %1778 = vmatprep.subr.mxu0 0.0
        %1779 = vmatpush1.msra.mxu0 0.0
        %1780 = vmatprep.subr.mxu0 0.0
        %1781 = vmatpush1.msra.mxu0 0.0
        %1782 = vmatprep.subr.mxu0 0.0
        %1783 = vmatpush1.msra.mxu0 0.0
        %1784 = vmatprep.subr.mxu0 0.0
        %1785 = vmatpush1.msra.mxu0 0.0
        %1786 = vmatprep.subr.mxu0 0.0
        %1787 = vmatpush1.msra.mxu0 0.0
        %1788 = vmatprep.subr.mxu0 0.0
        %1789 = vmatpush1.msra.mxu0 0.0
        %1790 = vmatprep.subr.mxu0 0.0
        %1791 = vmatpush1.msra.mxu0 0.0
        %1792 = vmatprep.subr.mxu0 0.0
        %1793 = vmatpush1.msra.mxu0 0.0
        %1794 = vmatprep.subr.mxu0 0.0
        %1795 = vmatpush1.msra.mxu0 0.0
        %1796 = vmatprep.subr.mxu0 0.0
        %1797 = vmatpush1.msra.mxu0 0.0
        %1798 = vmatprep.subr.mxu0 0.0
        %1799 = vmatpush1.msra.mxu0 0.0
        %1800 = vmatprep.subr.mxu0 0.0
        %1801 = vmatpush1.msra.mxu0 0.0
        %1802 = vmatprep.subr.mxu0 0.0
        %1803 = vmatpush1.msra.mxu0 0.0
        %1804 = vmatprep.subr.mxu0 0.0
        %1805 = vmatpush1.msra.mxu0 0.0
        %1806 = vmatprep.subr.mxu0 0.0
        %1807 = vmatpush1.msra.mxu0 0.0
        %1808 = vmatprep.subr.mxu0 0.0
        %1809 = vmatpush1.msra.mxu0 0.0
        %1810 = vmatprep.subr.mxu0 0.0
        %1811 = vmatpush1.msra.mxu0 0.0
        %1812 = vmatprep.subr.mxu0 0.0
        %1813 = vmatpush1.msra.mxu0 0.0
        %1814 = vmatprep.subr.mxu0 0.0
        %1815 = vmatpush1.msra.mxu0 0.0
        %1816 = vmatprep.mubr.f32.mxu0 0.0
        %1817 = vmatmul.mubr.f32.gmra.mrb[0].mxu0 %v1750
        %v1818 = vpop.f32.mrb[0].mxu0
        %v1819 = vadd.f32 0.0, %v1818
        %v1820 = vpop.f32.mrb[0].mxu0
        %1821 = vdwg.mxu0
        %v1823 = vsel %vm1408, %v1746, 0
        %1825 = vmatprep.subr.mxu0 0.0
        %1826 = vmatpush1.msra.mxu0 %v1400
        %1827 = vmatprep.subr.mxu0 0.0
        %1828 = vmatpush1.msra.mxu0 0.0
        %1829 = vmatprep.subr.mxu0 0.0
        %1830 = vmatpush1.msra.mxu0 0.0
        %1831 = vmatprep.subr.mxu0 0.0
        %1832 = vmatpush1.msra.mxu0 0.0
        %1833 = vmatprep.subr.mxu0 0.0
        %1834 = vmatpush1.msra.mxu0 0.0
        %1835 = vmatprep.subr.mxu0 0.0
        %1836 = vmatpush1.msra.mxu0 0.0
        %1837 = vmatprep.subr.mxu0 0.0
        %1838 = vmatpush1.msra.mxu0 0.0
        %1839 = vmatprep.subr.mxu0 0.0
        %1840 = vmatpush1.msra.mxu0 0.0
        %1841 = vmatprep.subr.mxu0 0.0
        %1842 = vmatpush1.msra.mxu0 0.0
        %1843 = vmatprep.subr.mxu0 0.0
        %1844 = vmatpush1.msra.mxu0 0.0
        %1845 = vmatprep.subr.mxu0 0.0
        %1846 = vmatpush1.msra.mxu0 0.0
        %1847 = vmatprep.subr.mxu0 0.0
        %1848 = vmatpush1.msra.mxu0 0.0
        %1849 = vmatprep.subr.mxu0 0.0
        %1850 = vmatpush1.msra.mxu0 0.0
        %1851 = vmatprep.subr.mxu0 0.0
        %1852 = vmatpush1.msra.mxu0 0.0
        %1853 = vmatprep.subr.mxu0 0.0
        %1854 = vmatpush1.msra.mxu0 0.0
        %1855 = vmatprep.subr.mxu0 0.0
        %1856 = vmatpush1.msra.mxu0 0.0
        %1857 = vmatprep.subr.mxu0 0.0
        %1858 = vmatpush1.msra.mxu0 0.0
        %1859 = vmatprep.subr.mxu0 0.0
        %1860 = vmatpush1.msra.mxu0 0.0
        %1861 = vmatprep.subr.mxu0 0.0
        %1862 = vmatpush1.msra.mxu0 0.0
        %1863 = vmatprep.subr.mxu0 0.0
        %1864 = vmatpush1.msra.mxu0 0.0
        %1865 = vmatprep.subr.mxu0 0.0
        %1866 = vmatpush1.msra.mxu0 0.0
        %1867 = vmatprep.subr.mxu0 0.0
        %1868 = vmatpush1.msra.mxu0 0.0
        %1869 = vmatprep.subr.mxu0 0.0
        %1870 = vmatpush1.msra.mxu0 0.0
        %1871 = vmatprep.subr.mxu0 0.0
        %1872 = vmatpush1.msra.mxu0 0.0
        %1873 = vmatprep.subr.mxu0 0.0
        %1874 = vmatpush1.msra.mxu0 0.0
        %1875 = vmatprep.subr.mxu0 0.0
        %1876 = vmatpush1.msra.mxu0 0.0
        %1877 = vmatprep.subr.mxu0 0.0
        %1878 = vmatpush1.msra.mxu0 0.0
        %1879 = vmatprep.subr.mxu0 0.0
        %1880 = vmatpush1.msra.mxu0 0.0
        %1881 = vmatprep.subr.mxu0 0.0
        %1882 = vmatpush1.msra.mxu0 0.0
        %1883 = vmatprep.subr.mxu0 0.0
        %1884 = vmatpush1.msra.mxu0 0.0
        %1885 = vmatprep.subr.mxu0 0.0
        %1886 = vmatpush1.msra.mxu0 0.0
        %1887 = vmatprep.subr.mxu0 0.0
        %1888 = vmatpush1.msra.mxu0 0.0
        %1889 = vmatprep.mubr.f32.mxu0 0.0
        %1890 = vmatmul.mubr.f32.gmra.mrb[0].mxu0 %v1823
        %v1891 = vpop.f32.mrb[0].mxu0
        %v1892 = vadd.f32 0.0, %v1891
        %v1893 = vpop.f32.mrb[0].mxu0
        %1894 = vdwg.mxu0
        %v1896 = vsel %vm1408, %v1747, 0
        %1898 = vmatprep.subr.mxu0 0.0
        %1899 = vmatpush1.msra.mxu0 %v1403
        %1900 = vmatprep.subr.mxu0 0.0
        %1901 = vmatpush1.msra.mxu0 0.0
        %1902 = vmatprep.subr.mxu0 0.0
        %1903 = vmatpush1.msra.mxu0 0.0
        %1904 = vmatprep.subr.mxu0 0.0
        %1905 = vmatpush1.msra.mxu0 0.0
        %1906 = vmatprep.subr.mxu0 0.0
        %1907 = vmatpush1.msra.mxu0 0.0
        %1908 = vmatprep.subr.mxu0 0.0
        %1909 = vmatpush1.msra.mxu0 0.0
        %1910 = vmatprep.subr.mxu0 0.0
        %1911 = vmatpush1.msra.mxu0 0.0
        %1912 = vmatprep.subr.mxu0 0.0
        %1913 = vmatpush1.msra.mxu0 0.0
        %1914 = vmatprep.subr.mxu0 0.0
        %1915 = vmatpush1.msra.mxu0 0.0
        %1916 = vmatprep.subr.mxu0 0.0
        %1917 = vmatpush1.msra.mxu0 0.0
        %1918 = vmatprep.subr.mxu0 0.0
        %1919 = vmatpush1.msra.mxu0 0.0
        %1920 = vmatprep.subr.mxu0 0.0
        %1921 = vmatpush1.msra.mxu0 0.0
        %1922 = vmatprep.subr.mxu0 0.0
        %1923 = vmatpush1.msra.mxu0 0.0
        %1924 = vmatprep.subr.mxu0 0.0
        %1925 = vmatpush1.msra.mxu0 0.0
        %1926 = vmatprep.subr.mxu0 0.0
        %1927 = vmatpush1.msra.mxu0 0.0
        %1928 = vmatprep.subr.mxu0 0.0
        %1929 = vmatpush1.msra.mxu0 0.0
        %1930 = vmatprep.subr.mxu0 0.0
        %1931 = vmatpush1.msra.mxu0 0.0
        %1932 = vmatprep.subr.mxu0 0.0
        %1933 = vmatpush1.msra.mxu0 0.0
        %1934 = vmatprep.subr.mxu0 0.0
        %1935 = vmatpush1.msra.mxu0 0.0
        %1936 = vmatprep.subr.mxu0 0.0
        %1937 = vmatpush1.msra.mxu0 0.0
        %1938 = vmatprep.subr.mxu0 0.0
        %1939 = vmatpush1.msra.mxu0 0.0
        %1940 = vmatprep.subr.mxu0 0.0
        %1941 = vmatpush1.msra.mxu0 0.0
        %1942 = vmatprep.subr.mxu0 0.0
        %1943 = vmatpush1.msra.mxu0 0.0
        %1944 = vmatprep.subr.mxu0 0.0
        %1945 = vmatpush1.msra.mxu0 0.0
        %1946 = vmatprep.subr.mxu0 0.0
        %1947 = vmatpush1.msra.mxu0 0.0
        %1948 = vmatprep.subr.mxu0 0.0
        %1949 = vmatpush1.msra.mxu0 0.0
        %1950 = vmatprep.subr.mxu0 0.0
        %1951 = vmatpush1.msra.mxu0 0.0
        %1952 = vmatprep.subr.mxu0 0.0
        %1953 = vmatpush1.msra.mxu0 0.0
        %1954 = vmatprep.subr.mxu0 0.0
        %1955 = vmatpush1.msra.mxu0 0.0
        %1956 = vmatprep.subr.mxu0 0.0
        %1957 = vmatpush1.msra.mxu0 0.0
        %1958 = vmatprep.subr.mxu0 0.0
        %1959 = vmatpush1.msra.mxu0 0.0
        %1960 = vmatprep.subr.mxu0 0.0
        %1961 = vmatpush1.msra.mxu0 0.0
        %1962 = vmatprep.mubr.f32.mxu0 0.0
        %1963 = vmatmul.mubr.f32.gmra.mrb[0].mxu0 %v1896
        %v1964 = vpop.f32.mrb[0].mxu0
        %v1965 = vadd.f32 0.0, %v1964
        %v1966 = vpop.f32.mrb[0].mxu0
        %1967 = vdwg.mxu0
        %v1969 = vsel %vm1408, %v1748, 0
        %1971 = vmatprep.subr.mxu0 0.0
        %1972 = vmatpush1.msra.mxu0 %v1406
        %1973 = vmatprep.subr.mxu0 0.0
        %1974 = vmatpush1.msra.mxu0 0.0
        %1975 = vmatprep.subr.mxu0 0.0
        %1976 = vmatpush1.msra.mxu0 0.0
        %1977 = vmatprep.subr.mxu0 0.0
        %1978 = vmatpush1.msra.mxu0 0.0
        %1979 = vmatprep.subr.mxu0 0.0
        %1980 = vmatpush1.msra.mxu0 0.0
        %1981 = vmatprep.subr.mxu0 0.0
        %1982 = vmatpush1.msra.mxu0 0.0
        %1983 = vmatprep.subr.mxu0 0.0
        %1984 = vmatpush1.msra.mxu0 0.0
        %1985 = vmatprep.subr.mxu0 0.0
        %1986 = vmatpush1.msra.mxu0 0.0
        %1987 = vmatprep.subr.mxu0 0.0
        %1988 = vmatpush1.msra.mxu0 0.0
        %1989 = vmatprep.subr.mxu0 0.0
        %1990 = vmatpush1.msra.mxu0 0.0
        %1991 = vmatprep.subr.mxu0 0.0
        %1992 = vmatpush1.msra.mxu0 0.0
        %1993 = vmatprep.subr.mxu0 0.0
        %1994 = vmatpush1.msra.mxu0 0.0
        %1995 = vmatprep.subr.mxu0 0.0
        %1996 = vmatpush1.msra.mxu0 0.0
        %1997 = vmatprep.subr.mxu0 0.0
        %1998 = vmatpush1.msra.mxu0 0.0
        %1999 = vmatprep.subr.mxu0 0.0
        %2000 = vmatpush1.msra.mxu0 0.0
        %2001 = vmatprep.subr.mxu0 0.0
        %2002 = vmatpush1.msra.mxu0 0.0
        %2003 = vmatprep.subr.mxu0 0.0
        %2004 = vmatpush1.msra.mxu0 0.0
        %2005 = vmatprep.subr.mxu0 0.0
        %2006 = vmatpush1.msra.mxu0 0.0
        %2007 = vmatprep.subr.mxu0 0.0
        %2008 = vmatpush1.msra.mxu0 0.0
        %2009 = vmatprep.subr.mxu0 0.0
        %2010 = vmatpush1.msra.mxu0 0.0
        %2011 = vmatprep.subr.mxu0 0.0
        %2012 = vmatpush1.msra.mxu0 0.0
        %2013 = vmatprep.subr.mxu0 0.0
        %2014 = vmatpush1.msra.mxu0 0.0
        %2015 = vmatprep.subr.mxu0 0.0
        %2016 = vmatpush1.msra.mxu0 0.0
        %2017 = vmatprep.subr.mxu0 0.0
        %2018 = vmatpush1.msra.mxu0 0.0
        %2019 = vmatprep.subr.mxu0 0.0
        %2020 = vmatpush1.msra.mxu0 0.0
        %2021 = vmatprep.subr.mxu0 0.0
        %2022 = vmatpush1.msra.mxu0 0.0
        %2023 = vmatprep.subr.mxu0 0.0
        %2024 = vmatpush1.msra.mxu0 0.0
        %2025 = vmatprep.subr.mxu0 0.0
        %2026 = vmatpush1.msra.mxu0 0.0
        %2027 = vmatprep.subr.mxu0 0.0
        %2028 = vmatpush1.msra.mxu0 0.0
        %2029 = vmatprep.subr.mxu0 0.0
        %2030 = vmatpush1.msra.mxu0 0.0
        %2031 = vmatprep.subr.mxu0 0.0
        %2032 = vmatpush1.msra.mxu0 0.0
        %2033 = vmatprep.subr.mxu0 0.0
        %2034 = vmatpush1.msra.mxu0 0.0
        %2035 = vmatprep.mubr.f32.mxu0 0.0
        %2036 = vmatmul.mubr.f32.gmra.mrb[0].mxu0 %v1969
        %v2037 = vpop.f32.mrb[0].mxu0
        %v2038 = vadd.f32 0.0, %v2037
        %v2039 = vpop.f32.mrb[0].mxu0
        %2040 = vdwg.mxu0
        %v2041 = vld [vmem:[%s19] sm:$0xff]
        %v2042 = vld [vmem:[%s19 + $0x8] sm:$0xff]
        %v2043 = vld [vmem:[%s19 + $0x10] sm:$0xff]
        %v2044 = vld [vmem:[%s19 + $0x18] sm:$0xff]
        %v2046 = vsel %vm1408, %v1819, 0
        %2048 = vmatprep.subr.mxu0 0.0
        %2049 = vmatpush1.msra.mxu0 %v2041
        %2050 = vmatprep.subr.mxu0 0.0
        %2051 = vmatpush1.msra.mxu0 0.0
        %2052 = vmatprep.subr.mxu0 0.0
        %2053 = vmatpush1.msra.mxu0 0.0
        %2054 = vmatprep.subr.mxu0 0.0
        %2055 = vmatpush1.msra.mxu0 0.0
        %2056 = vmatprep.subr.mxu0 0.0
        %2057 = vmatpush1.msra.mxu0 0.0
        %2058 = vmatprep.subr.mxu0 0.0
        %2059 = vmatpush1.msra.mxu0 0.0
        %2060 = vmatprep.subr.mxu0 0.0
        %2061 = vmatpush1.msra.mxu0 0.0
        %2062 = vmatprep.subr.mxu0 0.0
        %2063 = vmatpush1.msra.mxu0 0.0
        %2064 = vmatprep.subr.mxu0 0.0
        %2065 = vmatpush1.msra.mxu0 0.0
        %2066 = vmatprep.subr.mxu0 0.0
        %2067 = vmatpush1.msra.mxu0 0.0
        %2068 = vmatprep.subr.mxu0 0.0
        %2069 = vmatpush1.msra.mxu0 0.0
        %2070 = vmatprep.subr.mxu0 0.0
        %2071 = vmatpush1.msra.mxu0 0.0
        %2072 = vmatprep.subr.mxu0 0.0
        %2073 = vmatpush1.msra.mxu0 0.0
        %2074 = vmatprep.subr.mxu0 0.0
        %2075 = vmatpush1.msra.mxu0 0.0
        %2076 = vmatprep.subr.mxu0 0.0
        %2077 = vmatpush1.msra.mxu0 0.0
        %2078 = vmatprep.subr.mxu0 0.0
        %2079 = vmatpush1.msra.mxu0 0.0
        %2080 = vmatprep.subr.mxu0 0.0
        %2081 = vmatpush1.msra.mxu0 0.0
        %2082 = vmatprep.subr.mxu0 0.0
        %2083 = vmatpush1.msra.mxu0 0.0
        %2084 = vmatprep.subr.mxu0 0.0
        %2085 = vmatpush1.msra.mxu0 0.0
        %2086 = vmatprep.subr.mxu0 0.0
        %2087 = vmatpush1.msra.mxu0 0.0
        %2088 = vmatprep.subr.mxu0 0.0
        %2089 = vmatpush1.msra.mxu0 0.0
        %2090 = vmatprep.subr.mxu0 0.0
        %2091 = vmatpush1.msra.mxu0 0.0
        %2092 = vmatprep.subr.mxu0 0.0
        %2093 = vmatpush1.msra.mxu0 0.0
        %2094 = vmatprep.subr.mxu0 0.0
        %2095 = vmatpush1.msra.mxu0 0.0
        %2096 = vmatprep.subr.mxu0 0.0
        %2097 = vmatpush1.msra.mxu0 0.0
        %2098 = vmatprep.subr.mxu0 0.0
        %2099 = vmatpush1.msra.mxu0 0.0
        %2100 = vmatprep.subr.mxu0 0.0
        %2101 = vmatpush1.msra.mxu0 0.0
        %2102 = vmatprep.subr.mxu0 0.0
        %2103 = vmatpush1.msra.mxu0 0.0
        %2104 = vmatprep.subr.mxu0 0.0
        %2105 = vmatpush1.msra.mxu0 0.0
        %2106 = vmatprep.subr.mxu0 0.0
        %2107 = vmatpush1.msra.mxu0 0.0
        %2108 = vmatprep.subr.mxu0 0.0
        %2109 = vmatpush1.msra.mxu0 0.0
        %2110 = vmatprep.subr.mxu0 0.0
        %2111 = vmatpush1.msra.mxu0 0.0
        %2112 = vmatprep.mubr.f32.mxu0 0.0
        %2113 = vmatmul.mubr.f32.gmra.mrb[0].mxu0 %v2046
        %v2114 = vpop.f32.mrb[0].mxu0
        %v2115 = vadd.f32 0.0, %v2114
        %v2116 = vpop.f32.mrb[0].mxu0
        %2117 = vdwg.mxu0
        %v2119 = vsel %vm1408, %v1892, 0
        %2121 = vmatprep.subr.mxu0 0.0
        %2122 = vmatpush1.msra.mxu0 %v2042
        %2123 = vmatprep.subr.mxu0 0.0
        %2124 = vmatpush1.msra.mxu0 0.0
        %2125 = vmatprep.subr.mxu0 0.0
        %2126 = vmatpush1.msra.mxu0 0.0
        %2127 = vmatprep.subr.mxu0 0.0
        %2128 = vmatpush1.msra.mxu0 0.0
        %2129 = vmatprep.subr.mxu0 0.0
        %2130 = vmatpush1.msra.mxu0 0.0
        %2131 = vmatprep.subr.mxu0 0.0
        %2132 = vmatpush1.msra.mxu0 0.0
        %2133 = vmatprep.subr.mxu0 0.0
        %2134 = vmatpush1.msra.mxu0 0.0
        %2135 = vmatprep.subr.mxu0 0.0
        %2136 = vmatpush1.msra.mxu0 0.0
        %2137 = vmatprep.subr.mxu0 0.0
        %2138 = vmatpush1.msra.mxu0 0.0
        %2139 = vmatprep.subr.mxu0 0.0
        %2140 = vmatpush1.msra.mxu0 0.0
        %2141 = vmatprep.subr.mxu0 0.0
        %2142 = vmatpush1.msra.mxu0 0.0
        %2143 = vmatprep.subr.mxu0 0.0
        %2144 = vmatpush1.msra.mxu0 0.0
        %2145 = vmatprep.subr.mxu0 0.0
        %2146 = vmatpush1.msra.mxu0 0.0
        %2147 = vmatprep.subr.mxu0 0.0
        %2148 = vmatpush1.msra.mxu0 0.0
        %2149 = vmatprep.subr.mxu0 0.0
        %2150 = vmatpush1.msra.mxu0 0.0
        %2151 = vmatprep.subr.mxu0 0.0
        %2152 = vmatpush1.msra.mxu0 0.0
        %2153 = vmatprep.subr.mxu0 0.0
        %2154 = vmatpush1.msra.mxu0 0.0
        %2155 = vmatprep.subr.mxu0 0.0
        %2156 = vmatpush1.msra.mxu0 0.0
        %2157 = vmatprep.subr.mxu0 0.0
        %2158 = vmatpush1.msra.mxu0 0.0
        %2159 = vmatprep.subr.mxu0 0.0
        %2160 = vmatpush1.msra.mxu0 0.0
        %2161 = vmatprep.subr.mxu0 0.0
        %2162 = vmatpush1.msra.mxu0 0.0
        %2163 = vmatprep.subr.mxu0 0.0
        %2164 = vmatpush1.msra.mxu0 0.0
        %2165 = vmatprep.subr.mxu0 0.0
        %2166 = vmatpush1.msra.mxu0 0.0
        %2167 = vmatprep.subr.mxu0 0.0
        %2168 = vmatpush1.msra.mxu0 0.0
        %2169 = vmatprep.subr.mxu0 0.0
        %2170 = vmatpush1.msra.mxu0 0.0
        %2171 = vmatprep.subr.mxu0 0.0
        %2172 = vmatpush1.msra.mxu0 0.0
        %2173 = vmatprep.subr.mxu0 0.0
        %2174 = vmatpush1.msra.mxu0 0.0
        %2175 = vmatprep.subr.mxu0 0.0
        %2176 = vmatpush1.msra.mxu0 0.0
        %2177 = vmatprep.subr.mxu0 0.0
        %2178 = vmatpush1.msra.mxu0 0.0
        %2179 = vmatprep.subr.mxu0 0.0
        %2180 = vmatpush1.msra.mxu0 0.0
        %2181 = vmatprep.subr.mxu0 0.0
        %2182 = vmatpush1.msra.mxu0 0.0
        %2183 = vmatprep.subr.mxu0 0.0
        %2184 = vmatpush1.msra.mxu0 0.0
        %2185 = vmatprep.mubr.f32.mxu0 0.0
        %2186 = vmatmul.mubr.f32.gmra.mrb[0].mxu0 %v2119
        %v2187 = vpop.f32.mrb[0].mxu0
        %v2188 = vadd.f32 0.0, %v2187
        %v2189 = vpop.f32.mrb[0].mxu0
        %2190 = vdwg.mxu0
        %v2192 = vsel %vm1408, %v1965, 0
        %2194 = vmatprep.subr.mxu0 0.0
        %2195 = vmatpush1.msra.mxu0 %v2043
        %2196 = vmatprep.subr.mxu0 0.0
        %2197 = vmatpush1.msra.mxu0 0.0
        %2198 = vmatprep.subr.mxu0 0.0
        %2199 = vmatpush1.msra.mxu0 0.0
        %2200 = vmatprep.subr.mxu0 0.0
        %2201 = vmatpush1.msra.mxu0 0.0
        %2202 = vmatprep.subr.mxu0 0.0
        %2203 = vmatpush1.msra.mxu0 0.0
        %2204 = vmatprep.subr.mxu0 0.0
        %2205 = vmatpush1.msra.mxu0 0.0
        %2206 = vmatprep.subr.mxu0 0.0
        %2207 = vmatpush1.msra.mxu0 0.0
        %2208 = vmatprep.subr.mxu0 0.0
        %2209 = vmatpush1.msra.mxu0 0.0
        %2210 = vmatprep.subr.mxu0 0.0
        %2211 = vmatpush1.msra.mxu0 0.0
        %2212 = vmatprep.subr.mxu0 0.0
        %2213 = vmatpush1.msra.mxu0 0.0
        %2214 = vmatprep.subr.mxu0 0.0
        %2215 = vmatpush1.msra.mxu0 0.0
        %2216 = vmatprep.subr.mxu0 0.0
        %2217 = vmatpush1.msra.mxu0 0.0
        %2218 = vmatprep.subr.mxu0 0.0
        %2219 = vmatpush1.msra.mxu0 0.0
        %2220 = vmatprep.subr.mxu0 0.0
        %2221 = vmatpush1.msra.mxu0 0.0
        %2222 = vmatprep.subr.mxu0 0.0
        %2223 = vmatpush1.msra.mxu0 0.0
        %2224 = vmatprep.subr.mxu0 0.0
        %2225 = vmatpush1.msra.mxu0 0.0
        %2226 = vmatprep.subr.mxu0 0.0
        %2227 = vmatpush1.msra.mxu0 0.0
        %2228 = vmatprep.subr.mxu0 0.0
        %2229 = vmatpush1.msra.mxu0 0.0
        %2230 = vmatprep.subr.mxu0 0.0
        %2231 = vmatpush1.msra.mxu0 0.0
        %2232 = vmatprep.subr.mxu0 0.0
        %2233 = vmatpush1.msra.mxu0 0.0
        %2234 = vmatprep.subr.mxu0 0.0
        %2235 = vmatpush1.msra.mxu0 0.0
        %2236 = vmatprep.subr.mxu0 0.0
        %2237 = vmatpush1.msra.mxu0 0.0
        %2238 = vmatprep.subr.mxu0 0.0
        %2239 = vmatpush1.msra.mxu0 0.0
        %2240 = vmatprep.subr.mxu0 0.0
        %2241 = vmatpush1.msra.mxu0 0.0
        %2242 = vmatprep.subr.mxu0 0.0
        %2243 = vmatpush1.msra.mxu0 0.0
        %2244 = vmatprep.subr.mxu0 0.0
        %2245 = vmatpush1.msra.mxu0 0.0
        %2246 = vmatprep.subr.mxu0 0.0
        %2247 = vmatpush1.msra.mxu0 0.0
        %2248 = vmatprep.subr.mxu0 0.0
        %2249 = vmatpush1.msra.mxu0 0.0
        %2250 = vmatprep.subr.mxu0 0.0
        %2251 = vmatpush1.msra.mxu0 0.0
        %2252 = vmatprep.subr.mxu0 0.0
        %2253 = vmatpush1.msra.mxu0 0.0
        %2254 = vmatprep.subr.mxu0 0.0
        %2255 = vmatpush1.msra.mxu0 0.0
        %2256 = vmatprep.subr.mxu0 0.0
        %2257 = vmatpush1.msra.mxu0 0.0
        %2258 = vmatprep.mubr.f32.mxu0 0.0
        %2259 = vmatmul.mubr.f32.gmra.mrb[0].mxu0 %v2192
        %v2260 = vpop.f32.mrb[0].mxu0
        %v2261 = vadd.f32 0.0, %v2260
        %v2262 = vpop.f32.mrb[0].mxu0
        %2263 = vdwg.mxu0
        %v2265 = vsel %vm1408, %v2038, 0
        %2267 = vmatprep.subr.mxu0 0.0
        %2268 = vmatpush1.msra.mxu0 %v2044
        %2269 = vmatprep.subr.mxu0 0.0
        %2270 = vmatpush1.msra.mxu0 0.0
        %2271 = vmatprep.subr.mxu0 0.0
        %2272 = vmatpush1.msra.mxu0 0.0
        %2273 = vmatprep.subr.mxu0 0.0
        %2274 = vmatpush1.msra.mxu0 0.0
        %2275 = vmatprep.subr.mxu0 0.0
        %2276 = vmatpush1.msra.mxu0 0.0
        %2277 = vmatprep.subr.mxu0 0.0
        %2278 = vmatpush1.msra.mxu0 0.0
        %2279 = vmatprep.subr.mxu0 0.0
        %2280 = vmatpush1.msra.mxu0 0.0
        %2281 = vmatprep.subr.mxu0 0.0
        %2282 = vmatpush1.msra.mxu0 0.0
        %2283 = vmatprep.subr.mxu0 0.0
        %2284 = vmatpush1.msra.mxu0 0.0
        %2285 = vmatprep.subr.mxu0 0.0
        %2286 = vmatpush1.msra.mxu0 0.0
        %2287 = vmatprep.subr.mxu0 0.0
        %2288 = vmatpush1.msra.mxu0 0.0
        %2289 = vmatprep.subr.mxu0 0.0
        %2290 = vmatpush1.msra.mxu0 0.0
        %2291 = vmatprep.subr.mxu0 0.0
        %2292 = vmatpush1.msra.mxu0 0.0
        %2293 = vmatprep.subr.mxu0 0.0
        %2294 = vmatpush1.msra.mxu0 0.0
        %2295 = vmatprep.subr.mxu0 0.0
        %2296 = vmatpush1.msra.mxu0 0.0
        %2297 = vmatprep.subr.mxu0 0.0
        %2298 = vmatpush1.msra.mxu0 0.0
        %2299 = vmatprep.subr.mxu0 0.0
        %2300 = vmatpush1.msra.mxu0 0.0
        %2301 = vmatprep.subr.mxu0 0.0
        %2302 = vmatpush1.msra.mxu0 0.0
        %2303 = vmatprep.subr.mxu0 0.0
        %2304 = vmatpush1.msra.mxu0 0.0
        %2305 = vmatprep.subr.mxu0 0.0
        %2306 = vmatpush1.msra.mxu0 0.0
        %2307 = vmatprep.subr.mxu0 0.0
        %2308 = vmatpush1.msra.mxu0 0.0
        %2309 = vmatprep.subr.mxu0 0.0
        %2310 = vmatpush1.msra.mxu0 0.0
        %2311 = vmatprep.subr.mxu0 0.0
        %2312 = vmatpush1.msra.mxu0 0.0
        %2313 = vmatprep.subr.mxu0 0.0
        %2314 = vmatpush1.msra.mxu0 0.0
        %2315 = vmatprep.subr.mxu0 0.0
        %2316 = vmatpush1.msra.mxu0 0.0
        %2317 = vmatprep.subr.mxu0 0.0
        %2318 = vmatpush1.msra.mxu0 0.0
        %2319 = vmatprep.subr.mxu0 0.0
        %2320 = vmatpush1.msra.mxu0 0.0
        %2321 = vmatprep.subr.mxu0 0.0
        %2322 = vmatpush1.msra.mxu0 0.0
        %2323 = vmatprep.subr.mxu0 0.0
        %2324 = vmatpush1.msra.mxu0 0.0
        %2325 = vmatprep.subr.mxu0 0.0
        %2326 = vmatpush1.msra.mxu0 0.0
        %2327 = vmatprep.subr.mxu0 0.0
        %2328 = vmatpush1.msra.mxu0 0.0
        %2329 = vmatprep.subr.mxu0 0.0
        %2330 = vmatpush1.msra.mxu0 0.0
        %2331 = vmatprep.mubr.f32.mxu0 0.0
        %2332 = vmatmul.mubr.f32.gmra.mrb[0].mxu0 %v2265
        %v2333 = vpop.f32.mrb[0].mxu0
        %v2334 = vadd.f32 0.0, %v2333
        %v2335 = vpop.f32.mrb[0].mxu0
        %2336 = vdwg.mxu0
        %v2337 = vsel %vm1147, %v2115, 0.0
        %v2338 = vsel %vm1147, %v2188, 0.0
        %v2339 = vadd.f32 %v2337, %v2338
        %v2340 = vsel %vm1147, %v2261, 0.0
        %v2341 = vadd.f32 %v2339, %v2340
        %v2342 = vsel %vm1147, %v2334, 0.0
        %v2343 = vadd.f32 %v2341, %v2342
        %v2344 = vld [vmem:[#allocation13] sm:$0x1]
        %v2346 = vlaneseq
        %v2347 = vshrl.u32 %v2346, 7
        %v2348 = vsub.s32 0, %v2347
        %v2349 = vrot.slane %v2344, %v2348
        %v2351 = vadd.f32 %v2343, %v2349
        %v2352 = vadd.f32 %v2351, %v1133
        %v2353 = vld [vmem:[#allocation14] sm:$0x1]
        %v2354 = vld [vmem:[#allocation16] sm:$0x1]
        %v2355 = vsel %vm1147, %v2352, 0.0
        %2356 = vadd.xlane.f32.xlu0 %v2355
        %v2357 = vpop.xlane.xlu0 %2356
        %v2358 = vrcp.pop 32.0
        %v2359 = vmul.f32 %v2357, %v2358
        %v2360 = vsub.f32 %v2352, %v2359
        %v2361 = vmul.f32 %v2360, %v2360
        %v2362 = vsel %vm1147, %v2361, 0.0
        %2363 = vadd.xlane.f32.xlu0 %v2362
        %v2364 = vpop.xlane.xlu0 %2363
        %v2365 = vmul.f32 %v2364, %v2358
        %v2366 = vadd.f32 %v2365, 1e-05
        %v2367 = vrsqrt.pop %v2366
        %v2368 = vmul.f32 %v2360, %v2367
        %v2370 = vlaneseq
        %v2371 = vshrl.u32 %v2370, 7
        %v2372 = vsub.s32 0, %v2371
        %v2373 = vrot.slane %v2353, %v2372
        %v2375 = vmul.f32 %v2368, %v2373
        %v2377 = vlaneseq
        %v2378 = vshrl.u32 %v2377, 7
        %v2379 = vsub.s32 0, %v2378
        %v2380 = vrot.slane %v2354, %v2379
        %v2382 = vadd.f32 %v2375, %v2380
        %v2383 = vld [vmem:[%s27] sm:$0xff]
        %v2384 = vld [vmem:[%s27 + $0x8] sm:$0xff]
        %v2385 = vld [vmem:[%s27 + $0x10] sm:$0xff]
        %v2386 = vld [vmem:[%s27 + $0x18] sm:$0xff]
        %v2387 = vld [vmem:[#allocation17] sm:$0x1]
        %v2389 = vlaneseq
        %v2390 = vshrl.u32 %v2389, 7
        %v2391 = vsub.s32 0, %v2390
        %v2392 = vrot.slane %v2387, %v2391
        %v2395 = vsel %vm1147, %v2382, 0
        %2397 = vmatprep.subr.mxu0 0.0
        %2398 = vmatpush1.msra.mxu0 %v2383
        %2399 = vmatprep.subr.mxu0 0.0
        %2400 = vmatpush1.msra.mxu0 %v2384
        %2401 = vmatprep.subr.mxu0 0.0
        %2402 = vmatpush1.msra.mxu0 %v2385
        %2403 = vmatprep.subr.mxu0 0.0
        %2404 = vmatpush1.msra.mxu0 %v2386
        %2405 = vmatprep.subr.mxu0 0.0
        %2406 = vmatpush1.msra.mxu0 0.0
        %2407 = vmatprep.subr.mxu0 0.0
        %2408 = vmatpush1.msra.mxu0 0.0
        %2409 = vmatprep.subr.mxu0 0.0
        %2410 = vmatpush1.msra.mxu0 0.0
        %2411 = vmatprep.subr.mxu0 0.0
        %2412 = vmatpush1.msra.mxu0 0.0
        %2413 = vmatprep.subr.mxu0 0.0
        %2414 = vmatpush1.msra.mxu0 0.0
        %2415 = vmatprep.subr.mxu0 0.0
        %2416 = vmatpush1.msra.mxu0 0.0
        %2417 = vmatprep.subr.mxu0 0.0
        %2418 = vmatpush1.msra.mxu0 0.0
        %2419 = vmatprep.subr.mxu0 0.0
        %2420 = vmatpush1.msra.mxu0 0.0
        %2421 = vmatprep.subr.mxu0 0.0
        %2422 = vmatpush1.msra.mxu0 0.0
        %2423 = vmatprep.subr.mxu0 0.0
        %2424 = vmatpush1.msra.mxu0 0.0
        %2425 = vmatprep.subr.mxu0 0.0
        %2426 = vmatpush1.msra.mxu0 0.0
        %2427 = vmatprep.subr.mxu0 0.0
        %2428 = vmatpush1.msra.mxu0 0.0
        %2429 = vmatprep.subr.mxu0 0.0
        %2430 = vmatpush1.msra.mxu0 0.0
        %2431 = vmatprep.subr.mxu0 0.0
        %2432 = vmatpush1.msra.mxu0 0.0
        %2433 = vmatprep.subr.mxu0 0.0
        %2434 = vmatpush1.msra.mxu0 0.0
        %2435 = vmatprep.subr.mxu0 0.0
        %2436 = vmatpush1.msra.mxu0 0.0
        %2437 = vmatprep.subr.mxu0 0.0
        %2438 = vmatpush1.msra.mxu0 0.0
        %2439 = vmatprep.subr.mxu0 0.0
        %2440 = vmatpush1.msra.mxu0 0.0
        %2441 = vmatprep.subr.mxu0 0.0
        %2442 = vmatpush1.msra.mxu0 0.0
        %2443 = vmatprep.subr.mxu0 0.0
        %2444 = vmatpush1.msra.mxu0 0.0
        %2445 = vmatprep.subr.mxu0 0.0
        %2446 = vmatpush1.msra.mxu0 0.0
        %2447 = vmatprep.subr.mxu0 0.0
        %2448 = vmatpush1.msra.mxu0 0.0
        %2449 = vmatprep.subr.mxu0 0.0
        %2450 = vmatpush1.msra.mxu0 0.0
        %2451 = vmatprep.subr.mxu0 0.0
        %2452 = vmatpush1.msra.mxu0 0.0
        %2453 = vmatprep.subr.mxu0 0.0
        %2454 = vmatpush1.msra.mxu0 0.0
        %2455 = vmatprep.subr.mxu0 0.0
        %2456 = vmatpush1.msra.mxu0 0.0
        %2457 = vmatprep.subr.mxu0 0.0
        %2458 = vmatpush1.msra.mxu0 0.0
        %2459 = vmatprep.subr.mxu0 0.0
        %2460 = vmatpush1.msra.mxu0 0.0
        %2461 = vmatprep.mubr.f32.mxu0 0.0
        %2462 = vmatmul.mubr.f32.gmra.mrb[0].mxu0 %v2395
        %v2463 = vpop.f32.mrb[0].mxu0
        %v2464 = vadd.f32 %v2392, %v2463
        %v2465 = vpop.f32.mrb[0].mxu0
        %2466 = vdwg.mxu0
        %v2467 = vld [vmem:[%s31] sm:$0xff]
        %v2468 = vld [vmem:[%s31 + $0x8] sm:$0xff]
        %v2469 = vld [vmem:[%s31 + $0x10] sm:$0xff]
        %v2470 = vld [vmem:[%s31 + $0x18] sm:$0xff]
        %v2471 = vld [vmem:[#allocation19] sm:$0x1]
        %v2473 = vlaneseq
        %v2474 = vshrl.u32 %v2473, 7
        %v2475 = vsub.s32 0, %v2474
        %v2476 = vrot.slane %v2471, %v2475
        %v2479 = vsel %vm1147, %v1135, 0
        %2481 = vmatprep.subr.mxu0 0.0
        %2482 = vmatpush1.msra.mxu0 %v2467
        %2483 = vmatprep.subr.mxu0 0.0
        %2484 = vmatpush1.msra.mxu0 %v2468
        %2485 = vmatprep.subr.mxu0 0.0
        %2486 = vmatpush1.msra.mxu0 %v2469
        %2487 = vmatprep.subr.mxu0 0.0
        %2488 = vmatpush1.msra.mxu0 %v2470
        %2489 = vmatprep.subr.mxu0 0.0
        %2490 = vmatpush1.msra.mxu0 0.0
        %2491 = vmatprep.subr.mxu0 0.0
        %2492 = vmatpush1.msra.mxu0 0.0
        %2493 = vmatprep.subr.mxu0 0.0
        %2494 = vmatpush1.msra.mxu0 0.0
        %2495 = vmatprep.subr.mxu0 0.0
        %2496 = vmatpush1.msra.mxu0 0.0
        %2497 = vmatprep.subr.mxu0 0.0
        %2498 = vmatpush1.msra.mxu0 0.0
        %2499 = vmatprep.subr.mxu0 0.0
        %2500 = vmatpush1.msra.mxu0 0.0
        %2501 = vmatprep.subr.mxu0 0.0
        %2502 = vmatpush1.msra.mxu0 0.0
        %2503 = vmatprep.subr.mxu0 0.0
        %2504 = vmatpush1.msra.mxu0 0.0
        %2505 = vmatprep.subr.mxu0 0.0
        %2506 = vmatpush1.msra.mxu0 0.0
        %2507 = vmatprep.subr.mxu0 0.0
        %2508 = vmatpush1.msra.mxu0 0.0
        %2509 = vmatprep.subr.mxu0 0.0
        %2510 = vmatpush1.msra.mxu0 0.0
        %2511 = vmatprep.subr.mxu0 0.0
        %2512 = vmatpush1.msra.mxu0 0.0
        %2513 = vmatprep.subr.mxu0 0.0
        %2514 = vmatpush1.msra.mxu0 0.0
        %2515 = vmatprep.subr.mxu0 0.0
        %2516 = vmatpush1.msra.mxu0 0.0
        %2517 = vmatprep.subr.mxu0 0.0
        %2518 = vmatpush1.msra.mxu0 0.0
        %2519 = vmatprep.subr.mxu0 0.0
        %2520 = vmatpush1.msra.mxu0 0.0
        %2521 = vmatprep.subr.mxu0 0.0
        %2522 = vmatpush1.msra.mxu0 0.0
        %2523 = vmatprep.subr.mxu0 0.0
        %2524 = vmatpush1.msra.mxu0 0.0
        %2525 = vmatprep.subr.mxu0 0.0
        %2526 = vmatpush1.msra.mxu0 0.0
        %2527 = vmatprep.subr.mxu0 0.0
        %2528 = vmatpush1.msra.mxu0 0.0
        %2529 = vmatprep.subr.mxu0 0.0
        %2530 = vmatpush1.msra.mxu0 0.0
        %2531 = vmatprep.subr.mxu0 0.0
        %2532 = vmatpush1.msra.mxu0 0.0
        %2533 = vmatprep.subr.mxu0 0.0
        %2534 = vmatpush1.msra.mxu0 0.0
        %2535 = vmatprep.subr.mxu0 0.0
        %2536 = vmatpush1.msra.mxu0 0.0
        %2537 = vmatprep.subr.mxu0 0.0
        %2538 = vmatpush1.msra.mxu0 0.0
        %2539 = vmatprep.subr.mxu0 0.0
        %2540 = vmatpush1.msra.mxu0 0.0
        %2541 = vmatprep.subr.mxu0 0.0
        %2542 = vmatpush1.msra.mxu0 0.0
        %2543 = vmatprep.subr.mxu0 0.0
        %2544 = vmatpush1.msra.mxu0 0.0
        %2545 = vmatprep.mubr.f32.mxu0 0.0
        %2546 = vmatmul.mubr.f32.gmra.mrb[0].mxu0 %v2479
        %v2547 = vpop.f32.mrb[0].mxu0
        %v2548 = vadd.f32 %v2476, %v2547
        %v2549 = vpop.f32.mrb[0].mxu0
        %2550 = vdwg.mxu0
        %v2551 = vld [vmem:[#allocation20] sm:$0xff]
        %v2552 = vld [vmem:[#allocation20 + $0x8] sm:$0xff]
        %v2553 = vld [vmem:[#allocation20 + $0x10] sm:$0xff]
        %v2554 = vld [vmem:[#allocation20 + $0x18] sm:$0xff]
        %v2555 = vld [vmem:[%s37] sm:$0x1]
        %v2557 = vlaneseq
        %v2558 = vshrl.u32 %v2557, 7
        %v2559 = vsub.s32 0, %v2558
        %v2560 = vrot.slane %v2555, %v2559
        %v2563 = vsel %vm1147, %v1134, 0
        %2565 = vmatprep.subr.mxu0 0.0
        %2566 = vmatpush1.msra.mxu0 %v2551
        %2567 = vmatprep.subr.mxu0 0.0
        %2568 = vmatpush1.msra.mxu0 %v2552
        %2569 = vmatprep.subr.mxu0 0.0
        %2570 = vmatpush1.msra.mxu0 %v2553
        %2571 = vmatprep.subr.mxu0 0.0
        %2572 = vmatpush1.msra.mxu0 %v2554
        %2573 = vmatprep.subr.mxu0 0.0
        %2574 = vmatpush1.msra.mxu0 0.0
        %2575 = vmatprep.subr.mxu0 0.0
        %2576 = vmatpush1.msra.mxu0 0.0
        %2577 = vmatprep.subr.mxu0 0.0
        %2578 = vmatpush1.msra.mxu0 0.0
        %2579 = vmatprep.subr.mxu0 0.0
        %2580 = vmatpush1.msra.mxu0 0.0
        %2581 = vmatprep.subr.mxu0 0.0
        %2582 = vmatpush1.msra.mxu0 0.0
        %2583 = vmatprep.subr.mxu0 0.0
        %2584 = vmatpush1.msra.mxu0 0.0
        %2585 = vmatprep.subr.mxu0 0.0
        %2586 = vmatpush1.msra.mxu0 0.0
        %2587 = vmatprep.subr.mxu0 0.0
        %2588 = vmatpush1.msra.mxu0 0.0
        %2589 = vmatprep.subr.mxu0 0.0
        %2590 = vmatpush1.msra.mxu0 0.0
        %2591 = vmatprep.subr.mxu0 0.0
        %2592 = vmatpush1.msra.mxu0 0.0
        %2593 = vmatprep.subr.mxu0 0.0
        %2594 = vmatpush1.msra.mxu0 0.0
        %2595 = vmatprep.subr.mxu0 0.0
        %2596 = vmatpush1.msra.mxu0 0.0
        %2597 = vmatprep.subr.mxu0 0.0
        %2598 = vmatpush1.msra.mxu0 0.0
        %2599 = vmatprep.subr.mxu0 0.0
        %2600 = vmatpush1.msra.mxu0 0.0
        %2601 = vmatprep.subr.mxu0 0.0
        %2602 = vmatpush1.msra.mxu0 0.0
        %2603 = vmatprep.subr.mxu0 0.0
        %2604 = vmatpush1.msra.mxu0 0.0
        %2605 = vmatprep.subr.mxu0 0.0
        %2606 = vmatpush1.msra.mxu0 0.0
        %2607 = vmatprep.subr.mxu0 0.0
        %2608 = vmatpush1.msra.mxu0 0.0
        %2609 = vmatprep.subr.mxu0 0.0
        %2610 = vmatpush1.msra.mxu0 0.0
        %2611 = vmatprep.subr.mxu0 0.0
        %2612 = vmatpush1.msra.mxu0 0.0
        %2613 = vmatprep.subr.mxu0 0.0
        %2614 = vmatpush1.msra.mxu0 0.0
        %2615 = vmatprep.subr.mxu0 0.0
        %2616 = vmatpush1.msra.mxu0 0.0
        %2617 = vmatprep.subr.mxu0 0.0
        %2618 = vmatpush1.msra.mxu0 0.0
        %2619 = vmatprep.subr.mxu0 0.0
        %2620 = vmatpush1.msra.mxu0 0.0
        %2621 = vmatprep.subr.mxu0 0.0
        %2622 = vmatpush1.msra.mxu0 0.0
        %2623 = vmatprep.subr.mxu0 0.0
        %2624 = vmatpush1.msra.mxu0 0.0
        %2625 = vmatprep.subr.mxu0 0.0
        %2626 = vmatpush1.msra.mxu0 0.0
        %2627 = vmatprep.subr.mxu0 0.0
        %2628 = vmatpush1.msra.mxu0 0.0
        %2629 = vmatprep.mubr.f32.mxu0 0.0
        %2630 = vmatmul.mubr.f32.gmra.mrb[0].mxu0 %v2563
        %v2631 = vpop.f32.mrb[0].mxu0
        %v2632 = vadd.f32 %v2560, %v2631
        %v2633 = vpop.f32.mrb[0].mxu0
        %2634 = vdwg.mxu0
        %v2635 = vmul.f32 %v2464, 0.17677669
        %2637 = vrot.lane.b32.xlu0 %v2635, 120
        %v2638 = vpop.permute.xlu0 %2637
        %2639 = vrot.lane.b32.xlu0 %v2635, 112
        %v2640 = vpop.permute.xlu0 %2639
        %2641 = vrot.lane.b32.xlu0 %v2635, 104
        %v2642 = vpop.permute.xlu0 %2641
        %2644 = vrot.lane.b32.xlu0 %v2548, 120
        %v2645 = vpop.permute.xlu0 %2644
        %2646 = vrot.lane.b32.xlu0 %v2548, 112
        %v2647 = vpop.permute.xlu0 %2646
        %2648 = vrot.lane.b32.xlu0 %v2548, 104
        %v2649 = vpop.permute.xlu0 %2648
        %2651 = vrot.lane.b32.xlu0 %v2632, 120
        %v2652 = vpop.permute.xlu0 %2651
        %2654 = vrot.lane.b32.xlu0 %v2632, 112
        %v2655 = vpop.permute.xlu0 %2654
        %2657 = vrot.lane.b32.xlu0 %v2632, 104
        %v2658 = vpop.permute.xlu0 %2657
        %v2660 = vsel %vm1408, %v2635, 0
        %v2662 = vsel %vm1408, %v2548, 0
        %2664 = vmatprep.subr.mxu0 0.0
        %2665 = vmatpush1.xpose.msra.mxu0 %v2662
        %2666 = vmatprep.subr.mxu0 0.0
        %2667 = vmatpush1.xpose.msra.mxu0 0.0
        %2668 = vmatprep.subr.mxu0 0.0
        %2669 = vmatpush1.xpose.msra.mxu0 0.0
        %2670 = vmatprep.subr.mxu0 0.0
        %2671 = vmatpush1.xpose.msra.mxu0 0.0
        %2672 = vmatprep.subr.mxu0 0.0
        %2673 = vmatpush1.xpose.msra.mxu0 0.0
        %2674 = vmatprep.subr.mxu0 0.0
        %2675 = vmatpush1.xpose.msra.mxu0 0.0
        %2676 = vmatprep.subr.mxu0 0.0
        %2677 = vmatpush1.xpose.msra.mxu0 0.0
        %2678 = vmatprep.subr.mxu0 0.0
        %2679 = vmatpush1.xpose.msra.mxu0 0.0
        %2680 = vmatprep.subr.mxu0 0.0
        %2681 = vmatpush1.xpose.msra.mxu0 0.0
        %2682 = vmatprep.subr.mxu0 0.0
        %2683 = vmatpush1.xpose.msra.mxu0 0.0
        %2684 = vmatprep.subr.mxu0 0.0
        %2685 = vmatpush1.xpose.msra.mxu0 0.0
        %2686 = vmatprep.subr.mxu0 0.0
        %2687 = vmatpush1.xpose.msra.mxu0 0.0
        %2688 = vmatprep.subr.mxu0 0.0
        %2689 = vmatpush1.xpose.msra.mxu0 0.0
        %2690 = vmatprep.subr.mxu0 0.0
        %2691 = vmatpush1.xpose.msra.mxu0 0.0
        %2692 = vmatprep.subr.mxu0 0.0
        %2693 = vmatpush1.xpose.msra.mxu0 0.0
        %2694 = vmatprep.subr.mxu0 0.0
        %2695 = vmatpush1.xpose.msra.mxu0 0.0
        %2696 = vmatprep.subr.mxu0 0.0
        %2697 = vmatpush1.xpose.msra.mxu0 0.0
        %2698 = vmatprep.subr.mxu0 0.0
        %2699 = vmatpush1.xpose.msra.mxu0 0.0
        %2700 = vmatprep.subr.mxu0 0.0
        %2701 = vmatpush1.xpose.msra.mxu0 0.0
        %2702 = vmatprep.subr.mxu0 0.0
        %2703 = vmatpush1.xpose.msra.mxu0 0.0
        %2704 = vmatprep.subr.mxu0 0.0
        %2705 = vmatpush1.xpose.msra.mxu0 0.0
        %2706 = vmatprep.subr.mxu0 0.0
        %2707 = vmatpush1.xpose.msra.mxu0 0.0
        %2708 = vmatprep.subr.mxu0 0.0
        %2709 = vmatpush1.xpose.msra.mxu0 0.0
        %2710 = vmatprep.subr.mxu0 0.0
        %2711 = vmatpush1.xpose.msra.mxu0 0.0
        %2712 = vmatprep.subr.mxu0 0.0
        %2713 = vmatpush1.xpose.msra.mxu0 0.0
        %2714 = vmatprep.subr.mxu0 0.0
        %2715 = vmatpush1.xpose.msra.mxu0 0.0
        %2716 = vmatprep.subr.mxu0 0.0
        %2717 = vmatpush1.xpose.msra.mxu0 0.0
        %2718 = vmatprep.subr.mxu0 0.0
        %2719 = vmatpush1.xpose.msra.mxu0 0.0
        %2720 = vmatprep.subr.mxu0 0.0
        %2721 = vmatpush1.xpose.msra.mxu0 0.0
        %2722 = vmatprep.subr.mxu0 0.0
        %2723 = vmatpush1.xpose.msra.mxu0 0.0
        %2724 = vmatprep.subr.mxu0 0.0
        %2725 = vmatpush1.xpose.msra.mxu0 0.0
        %2726 = vmatprep.subr.mxu0 0.0
        %2727 = vmatpush1.xpose.msra.mxu0 0.0
        %2728 = vmatprep.mubr.f32.mxu0 0.0
        %2729 = vmatmul.mubr.f32.gmra.mrb[0].mxu0 %v2660
        %v2730 = vpop.f32.mrb[0].mxu0
        %v2731 = vadd.f32 0.0, %v2730
        %v2732 = vpop.f32.mrb[0].mxu0
        %2733 = vdwg.mxu0
        %v2734 = vsel %vm1408, %v2638, 0
        %v2736 = vsel %vm1408, %v2645, 0
        %2738 = vmatprep.subr.mxu0 0.0
        %2739 = vmatpush1.xpose.msra.mxu0 %v2736
        %2740 = vmatprep.subr.mxu0 0.0
        %2741 = vmatpush1.xpose.msra.mxu0 0.0
        %2742 = vmatprep.subr.mxu0 0.0
        %2743 = vmatpush1.xpose.msra.mxu0 0.0
        %2744 = vmatprep.subr.mxu0 0.0
        %2745 = vmatpush1.xpose.msra.mxu0 0.0
        %2746 = vmatprep.subr.mxu0 0.0
        %2747 = vmatpush1.xpose.msra.mxu0 0.0
        %2748 = vmatprep.subr.mxu0 0.0
        %2749 = vmatpush1.xpose.msra.mxu0 0.0
        %2750 = vmatprep.subr.mxu0 0.0
        %2751 = vmatpush1.xpose.msra.mxu0 0.0
        %2752 = vmatprep.subr.mxu0 0.0
        %2753 = vmatpush1.xpose.msra.mxu0 0.0
        %2754 = vmatprep.subr.mxu0 0.0
        %2755 = vmatpush1.xpose.msra.mxu0 0.0
        %2756 = vmatprep.subr.mxu0 0.0
        %2757 = vmatpush1.xpose.msra.mxu0 0.0
        %2758 = vmatprep.subr.mxu0 0.0
        %2759 = vmatpush1.xpose.msra.mxu0 0.0
        %2760 = vmatprep.subr.mxu0 0.0
        %2761 = vmatpush1.xpose.msra.mxu0 0.0
        %2762 = vmatprep.subr.mxu0 0.0
        %2763 = vmatpush1.xpose.msra.mxu0 0.0
        %2764 = vmatprep.subr.mxu0 0.0
        %2765 = vmatpush1.xpose.msra.mxu0 0.0
        %2766 = vmatprep.subr.mxu0 0.0
        %2767 = vmatpush1.xpose.msra.mxu0 0.0
        %2768 = vmatprep.subr.mxu0 0.0
        %2769 = vmatpush1.xpose.msra.mxu0 0.0
        %2770 = vmatprep.subr.mxu0 0.0
        %2771 = vmatpush1.xpose.msra.mxu0 0.0
        %2772 = vmatprep.subr.mxu0 0.0
        %2773 = vmatpush1.xpose.msra.mxu0 0.0
        %2774 = vmatprep.subr.mxu0 0.0
        %2775 = vmatpush1.xpose.msra.mxu0 0.0
        %2776 = vmatprep.subr.mxu0 0.0
        %2777 = vmatpush1.xpose.msra.mxu0 0.0
        %2778 = vmatprep.subr.mxu0 0.0
        %2779 = vmatpush1.xpose.msra.mxu0 0.0
        %2780 = vmatprep.subr.mxu0 0.0
        %2781 = vmatpush1.xpose.msra.mxu0 0.0
        %2782 = vmatprep.subr.mxu0 0.0
        %2783 = vmatpush1.xpose.msra.mxu0 0.0
        %2784 = vmatprep.subr.mxu0 0.0
        %2785 = vmatpush1.xpose.msra.mxu0 0.0
        %2786 = vmatprep.subr.mxu0 0.0
        %2787 = vmatpush1.xpose.msra.mxu0 0.0
        %2788 = vmatprep.subr.mxu0 0.0
        %2789 = vmatpush1.xpose.msra.mxu0 0.0
        %2790 = vmatprep.subr.mxu0 0.0
        %2791 = vmatpush1.xpose.msra.mxu0 0.0
        %2792 = vmatprep.subr.mxu0 0.0
        %2793 = vmatpush1.xpose.msra.mxu0 0.0
        %2794 = vmatprep.subr.mxu0 0.0
        %2795 = vmatpush1.xpose.msra.mxu0 0.0
        %2796 = vmatprep.subr.mxu0 0.0
        %2797 = vmatpush1.xpose.msra.mxu0 0.0
        %2798 = vmatprep.subr.mxu0 0.0
        %2799 = vmatpush1.xpose.msra.mxu0 0.0
        %2800 = vmatprep.subr.mxu0 0.0
        %2801 = vmatpush1.xpose.msra.mxu0 0.0
        %2802 = vmatprep.mubr.f32.mxu0 0.0
        %2803 = vmatmul.mubr.f32.gmra.mrb[0].mxu0 %v2734
        %v2804 = vpop.f32.mrb[0].mxu0
        %v2805 = vadd.f32 0.0, %v2804
        %v2806 = vpop.f32.mrb[0].mxu0
        %2807 = vdwg.mxu0
        %v2808 = vsel %vm1408, %v2640, 0
        %v2810 = vsel %vm1408, %v2647, 0
        %2812 = vmatprep.subr.mxu0 0.0
        %2813 = vmatpush1.xpose.msra.mxu0 %v2810
        %2814 = vmatprep.subr.mxu0 0.0
        %2815 = vmatpush1.xpose.msra.mxu0 0.0
        %2816 = vmatprep.subr.mxu0 0.0
        %2817 = vmatpush1.xpose.msra.mxu0 0.0
        %2818 = vmatprep.subr.mxu0 0.0
        %2819 = vmatpush1.xpose.msra.mxu0 0.0
        %2820 = vmatprep.subr.mxu0 0.0
        %2821 = vmatpush1.xpose.msra.mxu0 0.0
        %2822 = vmatprep.subr.mxu0 0.0
        %2823 = vmatpush1.xpose.msra.mxu0 0.0
        %2824 = vmatprep.subr.mxu0 0.0
        %2825 = vmatpush1.xpose.msra.mxu0 0.0
        %2826 = vmatprep.subr.mxu0 0.0
        %2827 = vmatpush1.xpose.msra.mxu0 0.0
        %2828 = vmatprep.subr.mxu0 0.0
        %2829 = vmatpush1.xpose.msra.mxu0 0.0
        %2830 = vmatprep.subr.mxu0 0.0
        %2831 = vmatpush1.xpose.msra.mxu0 0.0
        %2832 = vmatprep.subr.mxu0 0.0
        %2833 = vmatpush1.xpose.msra.mxu0 0.0
        %2834 = vmatprep.subr.mxu0 0.0
        %2835 = vmatpush1.xpose.msra.mxu0 0.0
        %2836 = vmatprep.subr.mxu0 0.0
        %2837 = vmatpush1.xpose.msra.mxu0 0.0
        %2838 = vmatprep.subr.mxu0 0.0
        %2839 = vmatpush1.xpose.msra.mxu0 0.0
        %2840 = vmatprep.subr.mxu0 0.0
        %2841 = vmatpush1.xpose.msra.mxu0 0.0
        %2842 = vmatprep.subr.mxu0 0.0
        %2843 = vmatpush1.xpose.msra.mxu0 0.0
        %2844 = vmatprep.subr.mxu0 0.0
        %2845 = vmatpush1.xpose.msra.mxu0 0.0
        %2846 = vmatprep.subr.mxu0 0.0
        %2847 = vmatpush1.xpose.msra.mxu0 0.0
        %2848 = vmatprep.subr.mxu0 0.0
        %2849 = vmatpush1.xpose.msra.mxu0 0.0
        %2850 = vmatprep.subr.mxu0 0.0
        %2851 = vmatpush1.xpose.msra.mxu0 0.0
        %2852 = vmatprep.subr.mxu0 0.0
        %2853 = vmatpush1.xpose.msra.mxu0 0.0
        %2854 = vmatprep.subr.mxu0 0.0
        %2855 = vmatpush1.xpose.msra.mxu0 0.0
        %2856 = vmatprep.subr.mxu0 0.0
        %2857 = vmatpush1.xpose.msra.mxu0 0.0
        %2858 = vmatprep.subr.mxu0 0.0
        %2859 = vmatpush1.xpose.msra.mxu0 0.0
        %2860 = vmatprep.subr.mxu0 0.0
        %2861 = vmatpush1.xpose.msra.mxu0 0.0
        %2862 = vmatprep.subr.mxu0 0.0
        %2863 = vmatpush1.xpose.msra.mxu0 0.0
        %2864 = vmatprep.subr.mxu0 0.0
        %2865 = vmatpush1.xpose.msra.mxu0 0.0
        %2866 = vmatprep.subr.mxu0 0.0
        %2867 = vmatpush1.xpose.msra.mxu0 0.0
        %2868 = vmatprep.subr.mxu0 0.0
        %2869 = vmatpush1.xpose.msra.mxu0 0.0
        %2870 = vmatprep.subr.mxu0 0.0
        %2871 = vmatpush1.xpose.msra.mxu0 0.0
        %2872 = vmatprep.subr.mxu0 0.0
        %2873 = vmatpush1.xpose.msra.mxu0 0.0
        %2874 = vmatprep.subr.mxu0 0.0
        %2875 = vmatpush1.xpose.msra.mxu0 0.0
        %2876 = vmatprep.mubr.f32.mxu0 0.0
        %2877 = vmatmul.mubr.f32.gmra.mrb[0].mxu0 %v2808
        %v2878 = vpop.f32.mrb[0].mxu0
        %v2879 = vadd.f32 0.0, %v2878
        %v2880 = vpop.f32.mrb[0].mxu0
        %2881 = vdwg.mxu0
        %v2882 = vsel %vm1408, %v2642, 0
        %v2884 = vsel %vm1408, %v2649, 0
        %2886 = vmatprep.subr.mxu0 0.0
        %2887 = vmatpush1.xpose.msra.mxu0 %v2884
        %2888 = vmatprep.subr.mxu0 0.0
        %2889 = vmatpush1.xpose.msra.mxu0 0.0
        %2890 = vmatprep.subr.mxu0 0.0
        %2891 = vmatpush1.xpose.msra.mxu0 0.0
        %2892 = vmatprep.subr.mxu0 0.0
        %2893 = vmatpush1.xpose.msra.mxu0 0.0
        %2894 = vmatprep.subr.mxu0 0.0
        %2895 = vmatpush1.xpose.msra.mxu0 0.0
        %2896 = vmatprep.subr.mxu0 0.0
        %2897 = vmatpush1.xpose.msra.mxu0 0.0
        %2898 = vmatprep.subr.mxu0 0.0
        %2899 = vmatpush1.xpose.msra.mxu0 0.0
        %2900 = vmatprep.subr.mxu0 0.0
        %2901 = vmatpush1.xpose.msra.mxu0 0.0
        %2902 = vmatprep.subr.mxu0 0.0
        %2903 = vmatpush1.xpose.msra.mxu0 0.0
        %2904 = vmatprep.subr.mxu0 0.0
        %2905 = vmatpush1.xpose.msra.mxu0 0.0
        %2906 = vmatprep.subr.mxu0 0.0
        %2907 = vmatpush1.xpose.msra.mxu0 0.0
        %2908 = vmatprep.subr.mxu0 0.0
        %2909 = vmatpush1.xpose.msra.mxu0 0.0
        %2910 = vmatprep.subr.mxu0 0.0
        %2911 = vmatpush1.xpose.msra.mxu0 0.0
        %2912 = vmatprep.subr.mxu0 0.0
        %2913 = vmatpush1.xpose.msra.mxu0 0.0
        %2914 = vmatprep.subr.mxu0 0.0
        %2915 = vmatpush1.xpose.msra.mxu0 0.0
        %2916 = vmatprep.subr.mxu0 0.0
        %2917 = vmatpush1.xpose.msra.mxu0 0.0
        %2918 = vmatprep.subr.mxu0 0.0
        %2919 = vmatpush1.xpose.msra.mxu0 0.0
        %2920 = vmatprep.subr.mxu0 0.0
        %2921 = vmatpush1.xpose.msra.mxu0 0.0
        %2922 = vmatprep.subr.mxu0 0.0
        %2923 = vmatpush1.xpose.msra.mxu0 0.0
        %2924 = vmatprep.subr.mxu0 0.0
        %2925 = vmatpush1.xpose.msra.mxu0 0.0
        %2926 = vmatprep.subr.mxu0 0.0
        %2927 = vmatpush1.xpose.msra.mxu0 0.0
        %2928 = vmatprep.subr.mxu0 0.0
        %2929 = vmatpush1.xpose.msra.mxu0 0.0
        %2930 = vmatprep.subr.mxu0 0.0
        %2931 = vmatpush1.xpose.msra.mxu0 0.0
        %2932 = vmatprep.subr.mxu0 0.0
        %2933 = vmatpush1.xpose.msra.mxu0 0.0
        %2934 = vmatprep.subr.mxu0 0.0
        %2935 = vmatpush1.xpose.msra.mxu0 0.0
        %2936 = vmatprep.subr.mxu0 0.0
        %2937 = vmatpush1.xpose.msra.mxu0 0.0
        %2938 = vmatprep.subr.mxu0 0.0
        %2939 = vmatpush1.xpose.msra.mxu0 0.0
        %2940 = vmatprep.subr.mxu0 0.0
        %2941 = vmatpush1.xpose.msra.mxu0 0.0
        %2942 = vmatprep.subr.mxu0 0.0
        %2943 = vmatpush1.xpose.msra.mxu0 0.0
        %2944 = vmatprep.subr.mxu0 0.0
        %2945 = vmatpush1.xpose.msra.mxu0 0.0
        %2946 = vmatprep.subr.mxu0 0.0
        %2947 = vmatpush1.xpose.msra.mxu0 0.0
        %2948 = vmatprep.subr.mxu0 0.0
        %2949 = vmatpush1.xpose.msra.mxu0 0.0
        %2950 = vmatprep.mubr.f32.mxu0 0.0
        %2951 = vmatmul.mubr.f32.gmra.mrb[0].mxu0 %v2882
        %v2952 = vpop.f32.mrb[0].mxu0
        %v2953 = vadd.f32 0.0, %v2952
        %v2954 = vpop.f32.mrb[0].mxu0
        %2955 = vdwg.mxu0
        %v2956 = vsel %vm1408, %v2731, -inf
        %2957 = vmax.xlane.f32.xlu0 %v2956
        %v2958 = vpop.xlane.xlu0 %2957
        %v2959 = vsel %vm1408, %v2805, -inf
        %2960 = vmax.xlane.f32.xlu0 %v2959
        %v2961 = vpop.xlane.xlu0 %2960
        %v2962 = vsel %vm1408, %v2879, -inf
        %2963 = vmax.xlane.f32.xlu0 %v2962
        %v2964 = vpop.xlane.xlu0 %2963
        %v2965 = vsel %vm1408, %v2953, -inf
        %2966 = vmax.xlane.f32.xlu0 %v2965
        %v2967 = vpop.xlane.xlu0 %2966
        %v2968 = vsub.f32 %v2731, %v2958
        %v2969 = vsub.f32 %v2805, %v2961
        %v2970 = vsub.f32 %v2879, %v2964
        %v2971 = vsub.f32 %v2953, %v2967
        %v2972 = vmul.f32 %v2968, 1.442695
        %v2973 = vpow.pop %v2972
        %v2974 = vmul.f32 %v2969, 1.442695
        %v2975 = vpow.pop %v2974
        %v2976 = vmul.f32 %v2970, 1.442695
        %v2977 = vpow.pop %v2976
        %v2978 = vmul.f32 %v2971, 1.442695
        %v2979 = vpow.pop %v2978
        %v2980 = vsel %vm1408, %v2973, 0.0
        %2981 = vadd.xlane.f32.xlu0 %v2980
        %v2982 = vpop.xlane.xlu0 %2981
        %v2983 = vsel %vm1408, %v2975, 0.0
        %2984 = vadd.xlane.f32.xlu0 %v2983
        %v2985 = vpop.xlane.xlu0 %2984
        %v2986 = vsel %vm1408, %v2977, 0.0
        %2987 = vadd.xlane.f32.xlu0 %v2986
        %v2988 = vpop.xlane.xlu0 %2987
        %v2989 = vsel %vm1408, %v2979, 0.0
        %2990 = vadd.xlane.f32.xlu0 %v2989
        %v2991 = vpop.xlane.xlu0 %2990
        %v2992 = vrcp.pop %v2982
        %v2993 = vrcp.pop %v2985
        %v2994 = vrcp.pop %v2988
        %v2995 = vrcp.pop %v2991
        %v2996 = vmul.f32 %v2973, %v2992
        %v2997 = vmul.f32 %v2975, %v2993
        %v2998 = vmul.f32 %v2977, %v2994
        %v2999 = vmul.f32 %v2979, %v2995
        %v3001 = vsel %vm1408, %v2996, 0
        %3003 = vmatprep.subr.mxu0 0.0
        %3004 = vmatpush1.msra.mxu0 %v2632
        %3005 = vmatprep.subr.mxu0 0.0
        %3006 = vmatpush1.msra.mxu0 0.0
        %3007 = vmatprep.subr.mxu0 0.0
        %3008 = vmatpush1.msra.mxu0 0.0
        %3009 = vmatprep.subr.mxu0 0.0
        %3010 = vmatpush1.msra.mxu0 0.0
        %3011 = vmatprep.subr.mxu0 0.0
        %3012 = vmatpush1.msra.mxu0 0.0
        %3013 = vmatprep.subr.mxu0 0.0
        %3014 = vmatpush1.msra.mxu0 0.0
        %3015 = vmatprep.subr.mxu0 0.0
        %3016 = vmatpush1.msra.mxu0 0.0
        %3017 = vmatprep.subr.mxu0 0.0
        %3018 = vmatpush1.msra.mxu0 0.0
        %3019 = vmatprep.subr.mxu0 0.0
        %3020 = vmatpush1.msra.mxu0 0.0
        %3021 = vmatprep.subr.mxu0 0.0
        %3022 = vmatpush1.msra.mxu0 0.0
        %3023 = vmatprep.subr.mxu0 0.0
        %3024 = vmatpush1.msra.mxu0 0.0
        %3025 = vmatprep.subr.mxu0 0.0
        %3026 = vmatpush1.msra.mxu0 0.0
        %3027 = vmatprep.subr.mxu0 0.0
        %3028 = vmatpush1.msra.mxu0 0.0
        %3029 = vmatprep.subr.mxu0 0.0
        %3030 = vmatpush1.msra.mxu0 0.0
        %3031 = vmatprep.subr.mxu0 0.0
        %3032 = vmatpush1.msra.mxu0 0.0
        %3033 = vmatprep.subr.mxu0 0.0
        %3034 = vmatpush1.msra.mxu0 0.0
        %3035 = vmatprep.subr.mxu0 0.0
        %3036 = vmatpush1.msra.mxu0 0.0
        %3037 = vmatprep.subr.mxu0 0.0
        %3038 = vmatpush1.msra.mxu0 0.0
        %3039 = vmatprep.subr.mxu0 0.0
        %3040 = vmatpush1.msra.mxu0 0.0
        %3041 = vmatprep.subr.mxu0 0.0
        %3042 = vmatpush1.msra.mxu0 0.0
        %3043 = vmatprep.subr.mxu0 0.0
        %3044 = vmatpush1.msra.mxu0 0.0
        %3045 = vmatprep.subr.mxu0 0.0
        %3046 = vmatpush1.msra.mxu0 0.0
        %3047 = vmatprep.subr.mxu0 0.0
        %3048 = vmatpush1.msra.mxu0 0.0
        %3049 = vmatprep.subr.mxu0 0.0
        %3050 = vmatpush1.msra.mxu0 0.0
        %3051 = vmatprep.subr.mxu0 0.0
        %3052 = vmatpush1.msra.mxu0 0.0
        %3053 = vmatprep.subr.mxu0 0.0
        %3054 = vmatpush1.msra.mxu0 0.0
        %3055 = vmatprep.subr.mxu0 0.0
        %3056 = vmatpush1.msra.mxu0 0.0
        %3057 = vmatprep.subr.mxu0 0.0
        %3058 = vmatpush1.msra.mxu0 0.0
        %3059 = vmatprep.subr.mxu0 0.0
        %3060 = vmatpush1.msra.mxu0 0.0
        %3061 = vmatprep.subr.mxu0 0.0
        %3062 = vmatpush1.msra.mxu0 0.0
        %3063 = vmatprep.subr.mxu0 0.0
        %3064 = vmatpush1.msra.mxu0 0.0
        %3065 = vmatprep.subr.mxu0 0.0
        %3066 = vmatpush1.msra.mxu0 0.0
        %3067 = vmatprep.mubr.f32.mxu0 0.0
        %3068 = vmatmul.mubr.f32.gmra.mrb[0].mxu0 %v3001
        %v3069 = vpop.f32.mrb[0].mxu0
        %v3070 = vadd.f32 0.0, %v3069
        %v3071 = vpop.f32.mrb[0].mxu0
        %3072 = vdwg.mxu0
        %v3074 = vsel %vm1408, %v2997, 0
        %3076 = vmatprep.subr.mxu0 0.0
        %3077 = vmatpush1.msra.mxu0 %v2652
        %3078 = vmatprep.subr.mxu0 0.0
        %3079 = vmatpush1.msra.mxu0 0.0
        %3080 = vmatprep.subr.mxu0 0.0
        %3081 = vmatpush1.msra.mxu0 0.0
        %3082 = vmatprep.subr.mxu0 0.0
        %3083 = vmatpush1.msra.mxu0 0.0
        %3084 = vmatprep.subr.mxu0 0.0
        %3085 = vmatpush1.msra.mxu0 0.0
        %3086 = vmatprep.subr.mxu0 0.0
        %3087 = vmatpush1.msra.mxu0 0.0
        %3088 = vmatprep.subr.mxu0 0.0
        %3089 = vmatpush1.msra.mxu0 0.0
        %3090 = vmatprep.subr.mxu0 0.0
        %3091 = vmatpush1.msra.mxu0 0.0
        %3092 = vmatprep.subr.mxu0 0.0
        %3093 = vmatpush1.msra.mxu0 0.0
        %3094 = vmatprep.subr.mxu0 0.0
        %3095 = vmatpush1.msra.mxu0 0.0
        %3096 = vmatprep.subr.mxu0 0.0
        %3097 = vmatpush1.msra.mxu0 0.0
        %3098 = vmatprep.subr.mxu0 0.0
        %3099 = vmatpush1.msra.mxu0 0.0
        %3100 = vmatprep.subr.mxu0 0.0
        %3101 = vmatpush1.msra.mxu0 0.0
        %3102 = vmatprep.subr.mxu0 0.0
        %3103 = vmatpush1.msra.mxu0 0.0
        %3104 = vmatprep.subr.mxu0 0.0
        %3105 = vmatpush1.msra.mxu0 0.0
        %3106 = vmatprep.subr.mxu0 0.0
        %3107 = vmatpush1.msra.mxu0 0.0
        %3108 = vmatprep.subr.mxu0 0.0
        %3109 = vmatpush1.msra.mxu0 0.0
        %3110 = vmatprep.subr.mxu0 0.0
        %3111 = vmatpush1.msra.mxu0 0.0
        %3112 = vmatprep.subr.mxu0 0.0
        %3113 = vmatpush1.msra.mxu0 0.0
        %3114 = vmatprep.subr.mxu0 0.0
        %3115 = vmatpush1.msra.mxu0 0.0
        %3116 = vmatprep.subr.mxu0 0.0
        %3117 = vmatpush1.msra.mxu0 0.0
        %3118 = vmatprep.subr.mxu0 0.0
        %3119 = vmatpush1.msra.mxu0 0.0
        %3120 = vmatprep.subr.mxu0 0.0
        %3121 = vmatpush1.msra.mxu0 0.0
        %3122 = vmatprep.subr.mxu0 0.0
        %3123 = vmatpush1.msra.mxu0 0.0
        %3124 = vmatprep.subr.mxu0 0.0
        %3125 = vmatpush1.msra.mxu0 0.0
        %3126 = vmatprep.subr.mxu0 0.0
        %3127 = vmatpush1.msra.mxu0 0.0
        %3128 = vmatprep.subr.mxu0 0.0
        %3129 = vmatpush1.msra.mxu0 0.0
        %3130 = vmatprep.subr.mxu0 0.0
        %3131 = vmatpush1.msra.mxu0 0.0
        %3132 = vmatprep.subr.mxu0 0.0
        %3133 = vmatpush1.msra.mxu0 0.0
        %3134 = vmatprep.subr.mxu0 0.0
        %3135 = vmatpush1.msra.mxu0 0.0
        %3136 = vmatprep.subr.mxu0 0.0
        %3137 = vmatpush1.msra.mxu0 0.0
        %3138 = vmatprep.subr.mxu0 0.0
        %3139 = vmatpush1.msra.mxu0 0.0
        %3140 = vmatprep.mubr.f32.mxu0 0.0
        %3141 = vmatmul.mubr.f32.gmra.mrb[0].mxu0 %v3074
        %v3142 = vpop.f32.mrb[0].mxu0
        %v3143 = vadd.f32 0.0, %v3142
        %v3144 = vpop.f32.mrb[0].mxu0
        %3145 = vdwg.mxu0
        %v3147 = vsel %vm1408, %v2998, 0
        %3149 = vmatprep.subr.mxu0 0.0
        %3150 = vmatpush1.msra.mxu0 %v2655
        %3151 = vmatprep.subr.mxu0 0.0
        %3152 = vmatpush1.msra.mxu0 0.0
        %3153 = vmatprep.subr.mxu0 0.0
        %3154 = vmatpush1.msra.mxu0 0.0
        %3155 = vmatprep.subr.mxu0 0.0
        %3156 = vmatpush1.msra.mxu0 0.0
        %3157 = vmatprep.subr.mxu0 0.0
        %3158 = vmatpush1.msra.mxu0 0.0
        %3159 = vmatprep.subr.mxu0 0.0
        %3160 = vmatpush1.msra.mxu0 0.0
        %3161 = vmatprep.subr.mxu0 0.0
        %3162 = vmatpush1.msra.mxu0 0.0
        %3163 = vmatprep.subr.mxu0 0.0
        %3164 = vmatpush1.msra.mxu0 0.0
        %3165 = vmatprep.subr.mxu0 0.0
        %3166 = vmatpush1.msra.mxu0 0.0
        %3167 = vmatprep.subr.mxu0 0.0
        %3168 = vmatpush1.msra.mxu0 0.0
        %3169 = vmatprep.subr.mxu0 0.0
        %3170 = vmatpush1.msra.mxu0 0.0
        %3171 = vmatprep.subr.mxu0 0.0
        %3172 = vmatpush1.msra.mxu0 0.0
        %3173 = vmatprep.subr.mxu0 0.0
        %3174 = vmatpush1.msra.mxu0 0.0
        %3175 = vmatprep.subr.mxu0 0.0
        %3176 = vmatpush1.msra.mxu0 0.0
        %3177 = vmatprep.subr.mxu0 0.0
        %3178 = vmatpush1.msra.mxu0 0.0
        %3179 = vmatprep.subr.mxu0 0.0
        %3180 = vmatpush1.msra.mxu0 0.0
        %3181 = vmatprep.subr.mxu0 0.0
        %3182 = vmatpush1.msra.mxu0 0.0
        %3183 = vmatprep.subr.mxu0 0.0
        %3184 = vmatpush1.msra.mxu0 0.0
        %3185 = vmatprep.subr.mxu0 0.0
        %3186 = vmatpush1.msra.mxu0 0.0
        %3187 = vmatprep.subr.mxu0 0.0
        %3188 = vmatpush1.msra.mxu0 0.0
        %3189 = vmatprep.subr.mxu0 0.0
        %3190 = vmatpush1.msra.mxu0 0.0
        %3191 = vmatprep.subr.mxu0 0.0
        %3192 = vmatpush1.msra.mxu0 0.0
        %3193 = vmatprep.subr.mxu0 0.0
        %3194 = vmatpush1.msra.mxu0 0.0
        %3195 = vmatprep.subr.mxu0 0.0
        %3196 = vmatpush1.msra.mxu0 0.0
        %3197 = vmatprep.subr.mxu0 0.0
        %3198 = vmatpush1.msra.mxu0 0.0
        %3199 = vmatprep.subr.mxu0 0.0
        %3200 = vmatpush1.msra.mxu0 0.0
        %3201 = vmatprep.subr.mxu0 0.0
        %3202 = vmatpush1.msra.mxu0 0.0
        %3203 = vmatprep.subr.mxu0 0.0
        %3204 = vmatpush1.msra.mxu0 0.0
        %3205 = vmatprep.subr.mxu0 0.0
        %3206 = vmatpush1.msra.mxu0 0.0
        %3207 = vmatprep.subr.mxu0 0.0
        %3208 = vmatpush1.msra.mxu0 0.0
        %3209 = vmatprep.subr.mxu0 0.0
        %3210 = vmatpush1.msra.mxu0 0.0
        %3211 = vmatprep.subr.mxu0 0.0
        %3212 = vmatpush1.msra.mxu0 0.0
        %3213 = vmatprep.mubr.f32.mxu0 0.0
        %3214 = vmatmul.mubr.f32.gmra.mrb[0].mxu0 %v3147
        %v3215 = vpop.f32.mrb[0].mxu0
        %v3216 = vadd.f32 0.0, %v3215
        %v3217 = vpop.f32.mrb[0].mxu0
        %3218 = vdwg.mxu0
        %v3220 = vsel %vm1408, %v2999, 0
        %3222 = vmatprep.subr.mxu0 0.0
        %3223 = vmatpush1.msra.mxu0 %v2658
        %3224 = vmatprep.subr.mxu0 0.0
        %3225 = vmatpush1.msra.mxu0 0.0
        %3226 = vmatprep.subr.mxu0 0.0
        %3227 = vmatpush1.msra.mxu0 0.0
        %3228 = vmatprep.subr.mxu0 0.0
        %3229 = vmatpush1.msra.mxu0 0.0
        %3230 = vmatprep.subr.mxu0 0.0
        %3231 = vmatpush1.msra.mxu0 0.0
        %3232 = vmatprep.subr.mxu0 0.0
        %3233 = vmatpush1.msra.mxu0 0.0
        %3234 = vmatprep.subr.mxu0 0.0
        %3235 = vmatpush1.msra.mxu0 0.0
        %3236 = vmatprep.subr.mxu0 0.0
        %3237 = vmatpush1.msra.mxu0 0.0
        %3238 = vmatprep.subr.mxu0 0.0
        %3239 = vmatpush1.msra.mxu0 0.0
        %3240 = vmatprep.subr.mxu0 0.0
        %3241 = vmatpush1.msra.mxu0 0.0
        %3242 = vmatprep.subr.mxu0 0.0
        %3243 = vmatpush1.msra.mxu0 0.0
        %3244 = vmatprep.subr.mxu0 0.0
        %3245 = vmatpush1.msra.mxu0 0.0
        %3246 = vmatprep.subr.mxu0 0.0
        %3247 = vmatpush1.msra.mxu0 0.0
        %3248 = vmatprep.subr.mxu0 0.0
        %3249 = vmatpush1.msra.mxu0 0.0
        %3250 = vmatprep.subr.mxu0 0.0
        %3251 = vmatpush1.msra.mxu0 0.0
        %3252 = vmatprep.subr.mxu0 0.0
        %3253 = vmatpush1.msra.mxu0 0.0
        %3254 = vmatprep.subr.mxu0 0.0
        %3255 = vmatpush1.msra.mxu0 0.0
        %3256 = vmatprep.subr.mxu0 0.0
        %3257 = vmatpush1.msra.mxu0 0.0
        %3258 = vmatprep.subr.mxu0 0.0
        %3259 = vmatpush1.msra.mxu0 0.0
        %3260 = vmatprep.subr.mxu0 0.0
        %3261 = vmatpush1.msra.mxu0 0.0
        %3262 = vmatprep.subr.mxu0 0.0
        %3263 = vmatpush1.msra.mxu0 0.0
        %3264 = vmatprep.subr.mxu0 0.0
        %3265 = vmatpush1.msra.mxu0 0.0
        %3266 = vmatprep.subr.mxu0 0.0
        %3267 = vmatpush1.msra.mxu0 0.0
        %3268 = vmatprep.subr.mxu0 0.0
        %3269 = vmatpush1.msra.mxu0 0.0
        %3270 = vmatprep.subr.mxu0 0.0
        %3271 = vmatpush1.msra.mxu0 0.0
        %3272 = vmatprep.subr.mxu0 0.0
        %3273 = vmatpush1.msra.mxu0 0.0
        %3274 = vmatprep.subr.mxu0 0.0
        %3275 = vmatpush1.msra.mxu0 0.0
        %3276 = vmatprep.subr.mxu0 0.0
        %3277 = vmatpush1.msra.mxu0 0.0
        %3278 = vmatprep.subr.mxu0 0.0
        %3279 = vmatpush1.msra.mxu0 0.0
        %3280 = vmatprep.subr.mxu0 0.0
        %3281 = vmatpush1.msra.mxu0 0.0
        %3282 = vmatprep.subr.mxu0 0.0
        %3283 = vmatpush1.msra.mxu0 0.0
        %3284 = vmatprep.subr.mxu0 0.0
        %3285 = vmatpush1.msra.mxu0 0.0
        %3286 = vmatprep.mubr.f32.mxu0 0.0
        %3287 = vmatmul.mubr.f32.gmra.mrb[0].mxu0 %v3220
        %v3288 = vpop.f32.mrb[0].mxu0
        %v3289 = vadd.f32 0.0, %v3288
        %v3290 = vpop.f32.mrb[0].mxu0
        %3291 = vdwg.mxu0
        %v3292 = vld [vmem:[#allocation22] sm:$0xff]
        %v3293 = vld [vmem:[#allocation22 + $0x8] sm:$0xff]
        %v3294 = vld [vmem:[#allocation22 + $0x10] sm:$0xff]
        %v3295 = vld [vmem:[#allocation22 + $0x18] sm:$0xff]
        %v3297 = vsel %vm1408, %v3070, 0
        %3299 = vmatprep.subr.mxu0 0.0
        %3300 = vmatpush1.msra.mxu0 %v3292
        %3301 = vmatprep.subr.mxu0 0.0
        %3302 = vmatpush1.msra.mxu0 0.0
        %3303 = vmatprep.subr.mxu0 0.0
        %3304 = vmatpush1.msra.mxu0 0.0
        %3305 = vmatprep.subr.mxu0 0.0
        %3306 = vmatpush1.msra.mxu0 0.0
        %3307 = vmatprep.subr.mxu0 0.0
        %3308 = vmatpush1.msra.mxu0 0.0
        %3309 = vmatprep.subr.mxu0 0.0
        %3310 = vmatpush1.msra.mxu0 0.0
        %3311 = vmatprep.subr.mxu0 0.0
        %3312 = vmatpush1.msra.mxu0 0.0
        %3313 = vmatprep.subr.mxu0 0.0
        %3314 = vmatpush1.msra.mxu0 0.0
        %3315 = vmatprep.subr.mxu0 0.0
        %3316 = vmatpush1.msra.mxu0 0.0
        %3317 = vmatprep.subr.mxu0 0.0
        %3318 = vmatpush1.msra.mxu0 0.0
        %3319 = vmatprep.subr.mxu0 0.0
        %3320 = vmatpush1.msra.mxu0 0.0
        %3321 = vmatprep.subr.mxu0 0.0
        %3322 = vmatpush1.msra.mxu0 0.0
        %3323 = vmatprep.subr.mxu0 0.0
        %3324 = vmatpush1.msra.mxu0 0.0
        %3325 = vmatprep.subr.mxu0 0.0
        %3326 = vmatpush1.msra.mxu0 0.0
        %3327 = vmatprep.subr.mxu0 0.0
        %3328 = vmatpush1.msra.mxu0 0.0
        %3329 = vmatprep.subr.mxu0 0.0
        %3330 = vmatpush1.msra.mxu0 0.0
        %3331 = vmatprep.subr.mxu0 0.0
        %3332 = vmatpush1.msra.mxu0 0.0
        %3333 = vmatprep.subr.mxu0 0.0
        %3334 = vmatpush1.msra.mxu0 0.0
        %3335 = vmatprep.subr.mxu0 0.0
        %3336 = vmatpush1.msra.mxu0 0.0
        %3337 = vmatprep.subr.mxu0 0.0
        %3338 = vmatpush1.msra.mxu0 0.0
        %3339 = vmatprep.subr.mxu0 0.0
        %3340 = vmatpush1.msra.mxu0 0.0
        %3341 = vmatprep.subr.mxu0 0.0
        %3342 = vmatpush1.msra.mxu0 0.0
        %3343 = vmatprep.subr.mxu0 0.0
        %3344 = vmatpush1.msra.mxu0 0.0
        %3345 = vmatprep.subr.mxu0 0.0
        %3346 = vmatpush1.msra.mxu0 0.0
        %3347 = vmatprep.subr.mxu0 0.0
        %3348 = vmatpush1.msra.mxu0 0.0
        %3349 = vmatprep.subr.mxu0 0.0
        %3350 = vmatpush1.msra.mxu0 0.0
        %3351 = vmatprep.subr.mxu0 0.0
        %3352 = vmatpush1.msra.mxu0 0.0
        %3353 = vmatprep.subr.mxu0 0.0
        %3354 = vmatpush1.msra.mxu0 0.0
        %3355 = vmatprep.subr.mxu0 0.0
        %3356 = vmatpush1.msra.mxu0 0.0
        %3357 = vmatprep.subr.mxu0 0.0
        %3358 = vmatpush1.msra.mxu0 0.0
        %3359 = vmatprep.subr.mxu0 0.0
        %3360 = vmatpush1.msra.mxu0 0.0
        %3361 = vmatprep.subr.mxu0 0.0
        %3362 = vmatpush1.msra.mxu0 0.0
        %3363 = vmatprep.mubr.f32.mxu0 0.0
        %3364 = vmatmul.mubr.f32.gmra.mrb[0].mxu0 %v3297
        %v3365 = vpop.f32.mrb[0].mxu0
        %v3366 = vadd.f32 0.0, %v3365
        %v3367 = vpop.f32.mrb[0].mxu0
        %3368 = vdwg.mxu0
        %v3370 = vsel %vm1408, %v3143, 0
        %3372 = vmatprep.subr.mxu0 0.0
        %3373 = vmatpush1.msra.mxu0 %v3293
        %3374 = vmatprep.subr.mxu0 0.0
        %3375 = vmatpush1.msra.mxu0 0.0
        %3376 = vmatprep.subr.mxu0 0.0
        %3377 = vmatpush1.msra.mxu0 0.0
        %3378 = vmatprep.subr.mxu0 0.0
        %3379 = vmatpush1.msra.mxu0 0.0
        %3380 = vmatprep.subr.mxu0 0.0
        %3381 = vmatpush1.msra.mxu0 0.0
        %3382 = vmatprep.subr.mxu0 0.0
        %3383 = vmatpush1.msra.mxu0 0.0
        %3384 = vmatprep.subr.mxu0 0.0
        %3385 = vmatpush1.msra.mxu0 0.0
        %3386 = vmatprep.subr.mxu0 0.0
        %3387 = vmatpush1.msra.mxu0 0.0
        %3388 = vmatprep.subr.mxu0 0.0
        %3389 = vmatpush1.msra.mxu0 0.0
        %3390 = vmatprep.subr.mxu0 0.0
        %3391 = vmatpush1.msra.mxu0 0.0
        %3392 = vmatprep.subr.mxu0 0.0
        %3393 = vmatpush1.msra.mxu0 0.0
        %3394 = vmatprep.subr.mxu0 0.0
        %3395 = vmatpush1.msra.mxu0 0.0
        %3396 = vmatprep.subr.mxu0 0.0
        %3397 = vmatpush1.msra.mxu0 0.0
        %3398 = vmatprep.subr.mxu0 0.0
        %3399 = vmatpush1.msra.mxu0 0.0
        %3400 = vmatprep.subr.mxu0 0.0
        %3401 = vmatpush1.msra.mxu0 0.0
        %3402 = vmatprep.subr.mxu0 0.0
        %3403 = vmatpush1.msra.mxu0 0.0
        %3404 = vmatprep.subr.mxu0 0.0
        %3405 = vmatpush1.msra.mxu0 0.0
        %3406 = vmatprep.subr.mxu0 0.0
        %3407 = vmatpush1.msra.mxu0 0.0
        %3408 = vmatprep.subr.mxu0 0.0
        %3409 = vmatpush1.msra.mxu0 0.0
        %3410 = vmatprep.subr.mxu0 0.0
        %3411 = vmatpush1.msra.mxu0 0.0
        %3412 = vmatprep.subr.mxu0 0.0
        %3413 = vmatpush1.msra.mxu0 0.0
        %3414 = vmatprep.subr.mxu0 0.0
        %3415 = vmatpush1.msra.mxu0 0.0
        %3416 = vmatprep.subr.mxu0 0.0
        %3417 = vmatpush1.msra.mxu0 0.0
        %3418 = vmatprep.subr.mxu0 0.0
        %3419 = vmatpush1.msra.mxu0 0.0
        %3420 = vmatprep.subr.mxu0 0.0
        %3421 = vmatpush1.msra.mxu0 0.0
        %3422 = vmatprep.subr.mxu0 0.0
        %3423 = vmatpush1.msra.mxu0 0.0
        %3424 = vmatprep.subr.mxu0 0.0
        %3425 = vmatpush1.msra.mxu0 0.0
        %3426 = vmatprep.subr.mxu0 0.0
        %3427 = vmatpush1.msra.mxu0 0.0
        %3428 = vmatprep.subr.mxu0 0.0
        %3429 = vmatpush1.msra.mxu0 0.0
        %3430 = vmatprep.subr.mxu0 0.0
        %3431 = vmatpush1.msra.mxu0 0.0
        %3432 = vmatprep.subr.mxu0 0.0
        %3433 = vmatpush1.msra.mxu0 0.0
        %3434 = vmatprep.subr.mxu0 0.0
        %3435 = vmatpush1.msra.mxu0 0.0
        %3436 = vmatprep.mubr.f32.mxu0 0.0
        %3437 = vmatmul.mubr.f32.gmra.mrb[0].mxu0 %v3370
        %v3438 = vpop.f32.mrb[0].mxu0
        %v3439 = vadd.f32 0.0, %v3438
        %v3440 = vpop.f32.mrb[0].mxu0
        %3441 = vdwg.mxu0
        %v3443 = vsel %vm1408, %v3216, 0
        %3445 = vmatprep.subr.mxu0 0.0
        %3446 = vmatpush1.msra.mxu0 %v3294
        %3447 = vmatprep.subr.mxu0 0.0
        %3448 = vmatpush1.msra.mxu0 0.0
        %3449 = vmatprep.subr.mxu0 0.0
        %3450 = vmatpush1.msra.mxu0 0.0
        %3451 = vmatprep.subr.mxu0 0.0
        %3452 = vmatpush1.msra.mxu0 0.0
        %3453 = vmatprep.subr.mxu0 0.0
        %3454 = vmatpush1.msra.mxu0 0.0
        %3455 = vmatprep.subr.mxu0 0.0
        %3456 = vmatpush1.msra.mxu0 0.0
        %3457 = vmatprep.subr.mxu0 0.0
        %3458 = vmatpush1.msra.mxu0 0.0
        %3459 = vmatprep.subr.mxu0 0.0
        %3460 = vmatpush1.msra.mxu0 0.0
        %3461 = vmatprep.subr.mxu0 0.0
        %3462 = vmatpush1.msra.mxu0 0.0
        %3463 = vmatprep.subr.mxu0 0.0
        %3464 = vmatpush1.msra.mxu0 0.0
        %3465 = vmatprep.subr.mxu0 0.0
        %3466 = vmatpush1.msra.mxu0 0.0
        %3467 = vmatprep.subr.mxu0 0.0
        %3468 = vmatpush1.msra.mxu0 0.0
        %3469 = vmatprep.subr.mxu0 0.0
        %3470 = vmatpush1.msra.mxu0 0.0
        %3471 = vmatprep.subr.mxu0 0.0
        %3472 = vmatpush1.msra.mxu0 0.0
        %3473 = vmatprep.subr.mxu0 0.0
        %3474 = vmatpush1.msra.mxu0 0.0
        %3475 = vmatprep.subr.mxu0 0.0
        %3476 = vmatpush1.msra.mxu0 0.0
        %3477 = vmatprep.subr.mxu0 0.0
        %3478 = vmatpush1.msra.mxu0 0.0
        %3479 = vmatprep.subr.mxu0 0.0
        %3480 = vmatpush1.msra.mxu0 0.0
        %3481 = vmatprep.subr.mxu0 0.0
        %3482 = vmatpush1.msra.mxu0 0.0
        %3483 = vmatprep.subr.mxu0 0.0
        %3484 = vmatpush1.msra.mxu0 0.0
        %3485 = vmatprep.subr.mxu0 0.0
        %3486 = vmatpush1.msra.mxu0 0.0
        %3487 = vmatprep.subr.mxu0 0.0
        %3488 = vmatpush1.msra.mxu0 0.0
        %3489 = vmatprep.subr.mxu0 0.0
        %3490 = vmatpush1.msra.mxu0 0.0
        %3491 = vmatprep.subr.mxu0 0.0
        %3492 = vmatpush1.msra.mxu0 0.0
        %3493 = vmatprep.subr.mxu0 0.0
        %3494 = vmatpush1.msra.mxu0 0.0
        %3495 = vmatprep.subr.mxu0 0.0
        %3496 = vmatpush1.msra.mxu0 0.0
        %3497 = vmatprep.subr.mxu0 0.0
        %3498 = vmatpush1.msra.mxu0 0.0
        %3499 = vmatprep.subr.mxu0 0.0
        %3500 = vmatpush1.msra.mxu0 0.0
        %3501 = vmatprep.subr.mxu0 0.0
        %3502 = vmatpush1.msra.mxu0 0.0
        %3503 = vmatprep.subr.mxu0 0.0
        %3504 = vmatpush1.msra.mxu0 0.0
        %3505 = vmatprep.subr.mxu0 0.0
        %3506 = vmatpush1.msra.mxu0 0.0
        %3507 = vmatprep.subr.mxu0 0.0
        %3508 = vmatpush1.msra.mxu0 0.0
        %3509 = vmatprep.mubr.f32.mxu0 0.0
        %3510 = vmatmul.mubr.f32.gmra.mrb[0].mxu0 %v3443
        %v3511 = vpop.f32.mrb[0].mxu0
        %v3512 = vadd.f32 0.0, %v3511
        %v3513 = vpop.f32.mrb[0].mxu0
        %3514 = vdwg.mxu0
        %v3516 = vsel %vm1408, %v3289, 0
        %3518 = vmatprep.subr.mxu0 0.0
        %3519 = vmatpush1.msra.mxu0 %v3295
        %3520 = vmatprep.subr.mxu0 0.0
        %3521 = vmatpush1.msra.mxu0 0.0
        %3522 = vmatprep.subr.mxu0 0.0
        %3523 = vmatpush1.msra.mxu0 0.0
        %3524 = vmatprep.subr.mxu0 0.0
        %3525 = vmatpush1.msra.mxu0 0.0
        %3526 = vmatprep.subr.mxu0 0.0
        %3527 = vmatpush1.msra.mxu0 0.0
        %3528 = vmatprep.subr.mxu0 0.0
        %3529 = vmatpush1.msra.mxu0 0.0
        %3530 = vmatprep.subr.mxu0 0.0
        %3531 = vmatpush1.msra.mxu0 0.0
        %3532 = vmatprep.subr.mxu0 0.0
        %3533 = vmatpush1.msra.mxu0 0.0
        %3534 = vmatprep.subr.mxu0 0.0
        %3535 = vmatpush1.msra.mxu0 0.0
        %3536 = vmatprep.subr.mxu0 0.0
        %3537 = vmatpush1.msra.mxu0 0.0
        %3538 = vmatprep.subr.mxu0 0.0
        %3539 = vmatpush1.msra.mxu0 0.0
        %3540 = vmatprep.subr.mxu0 0.0
        %3541 = vmatpush1.msra.mxu0 0.0
        %3542 = vmatprep.subr.mxu0 0.0
        %3543 = vmatpush1.msra.mxu0 0.0
        %3544 = vmatprep.subr.mxu0 0.0
        %3545 = vmatpush1.msra.mxu0 0.0
        %3546 = vmatprep.subr.mxu0 0.0
        %3547 = vmatpush1.msra.mxu0 0.0
        %3548 = vmatprep.subr.mxu0 0.0
        %3549 = vmatpush1.msra.mxu0 0.0
        %3550 = vmatprep.subr.mxu0 0.0
        %3551 = vmatpush1.msra.mxu0 0.0
        %3552 = vmatprep.subr.mxu0 0.0
        %3553 = vmatpush1.msra.mxu0 0.0
        %3554 = vmatprep.subr.mxu0 0.0
        %3555 = vmatpush1.msra.mxu0 0.0
        %3556 = vmatprep.subr.mxu0 0.0
        %3557 = vmatpush1.msra.mxu0 0.0
        %3558 = vmatprep.subr.mxu0 0.0
        %3559 = vmatpush1.msra.mxu0 0.0
        %3560 = vmatprep.subr.mxu0 0.0
        %3561 = vmatpush1.msra.mxu0 0.0
        %3562 = vmatprep.subr.mxu0 0.0
        %3563 = vmatpush1.msra.mxu0 0.0
        %3564 = vmatprep.subr.mxu0 0.0
        %3565 = vmatpush1.msra.mxu0 0.0
        %3566 = vmatprep.subr.mxu0 0.0
        %3567 = vmatpush1.msra.mxu0 0.0
        %3568 = vmatprep.subr.mxu0 0.0
        %3569 = vmatpush1.msra.mxu0 0.0
        %3570 = vmatprep.subr.mxu0 0.0
        %3571 = vmatpush1.msra.mxu0 0.0
        %3572 = vmatprep.subr.mxu0 0.0
        %3573 = vmatpush1.msra.mxu0 0.0
        %3574 = vmatprep.subr.mxu0 0.0
        %3575 = vmatpush1.msra.mxu0 0.0
        %3576 = vmatprep.subr.mxu0 0.0
        %3577 = vmatpush1.msra.mxu0 0.0
        %3578 = vmatprep.subr.mxu0 0.0
        %3579 = vmatpush1.msra.mxu0 0.0
        %3580 = vmatprep.subr.mxu0 0.0
        %3581 = vmatpush1.msra.mxu0 0.0
        %3582 = vmatprep.mubr.f32.mxu0 0.0
        %3583 = vmatmul.mubr.f32.gmra.mrb[0].mxu0 %v3516
        %v3584 = vpop.f32.mrb[0].mxu0
        %v3585 = vadd.f32 0.0, %v3584
        %v3586 = vpop.f32.mrb[0].mxu0
        %3587 = vdwg.mxu0
        %v3588 = vsel %vm1147, %v3366, 0.0
        %v3589 = vsel %vm1147, %v3439, 0.0
        %v3590 = vadd.f32 %v3588, %v3589
        %v3591 = vsel %vm1147, %v3512, 0.0
        %v3592 = vadd.f32 %v3590, %v3591
        %v3593 = vsel %vm1147, %v3585, 0.0
        %v3594 = vadd.f32 %v3592, %v3593
        %v3595 = vld [vmem:[%s41] sm:$0x1]
        %v3597 = vlaneseq
        %v3598 = vshrl.u32 %v3597, 7
        %v3599 = vsub.s32 0, %v3598
        %v3600 = vrot.slane %v3595, %v3599
        %v3602 = vadd.f32 %v3594, %v3600
        %v3603 = vadd.f32 %v3602, %v2382
        %v3604 = vld [vmem:[%s43] sm:$0x1]
        %v3605 = vld [vmem:[%s45] sm:$0x1]
        %v3606 = vsel %vm1147, %v3603, 0.0
        %3607 = vadd.xlane.f32.xlu0 %v3606
        %v3608 = vpop.xlane.xlu0 %3607
        %v3609 = vmul.f32 %v3608, %v2358
        %v3610 = vsub.f32 %v3603, %v3609
        %v3611 = vmul.f32 %v3610, %v3610
        %v3612 = vsel %vm1147, %v3611, 0.0
        %3613 = vadd.xlane.f32.xlu0 %v3612
        %v3614 = vpop.xlane.xlu0 %3613
        %v3615 = vmul.f32 %v3614, %v2358
        %v3616 = vadd.f32 %v3615, 1e-05
        %v3617 = vrsqrt.pop %v3616
        %v3618 = vmul.f32 %v3610, %v3617
        %v3620 = vlaneseq
        %v3621 = vshrl.u32 %v3620, 7
        %v3622 = vsub.s32 0, %v3621
        %v3623 = vrot.slane %v3604, %v3622
        %v3625 = vmul.f32 %v3618, %v3623
        %v3627 = vlaneseq
        %v3628 = vshrl.u32 %v3627, 7
        %v3629 = vsub.s32 0, %v3628
        %v3630 = vrot.slane %v3605, %v3629
        %v3632 = vadd.f32 %v3625, %v3630
        %v3633 = vld [vmem:[#allocation23] sm:$0xff]
        %v3634 = vld [vmem:[#allocation23 + $0x8] sm:$0xff]
        %v3635 = vld [vmem:[#allocation23 + $0x10] sm:$0xff]
        %v3636 = vld [vmem:[#allocation23 + $0x18] sm:$0xff]
        %v3637 = vld [vmem:[%s49] sm:$0x1]
        %v3639 = vlaneseq
        %v3640 = vshrl.u32 %v3639, 7
        %v3641 = vsub.s32 0, %v3640
        %v3642 = vrot.slane %v3637, %v3641
        %v3645 = vsel %vm1147, %v3632, 0
        %3647 = vmatprep.subr.mxu0 0.0
        %3648 = vmatpush1.msra.mxu0 %v3633
        %3649 = vmatprep.subr.mxu0 0.0
        %3650 = vmatpush1.msra.mxu0 %v3634
        %3651 = vmatprep.subr.mxu0 0.0
        %3652 = vmatpush1.msra.mxu0 %v3635
        %3653 = vmatprep.subr.mxu0 0.0
        %3654 = vmatpush1.msra.mxu0 %v3636
        %3655 = vmatprep.subr.mxu0 0.0
        %3656 = vmatpush1.msra.mxu0 0.0
        %3657 = vmatprep.subr.mxu0 0.0
        %3658 = vmatpush1.msra.mxu0 0.0
        %3659 = vmatprep.subr.mxu0 0.0
        %3660 = vmatpush1.msra.mxu0 0.0
        %3661 = vmatprep.subr.mxu0 0.0
        %3662 = vmatpush1.msra.mxu0 0.0
        %3663 = vmatprep.subr.mxu0 0.0
        %3664 = vmatpush1.msra.mxu0 0.0
        %3665 = vmatprep.subr.mxu0 0.0
        %3666 = vmatpush1.msra.mxu0 0.0
        %3667 = vmatprep.subr.mxu0 0.0
        %3668 = vmatpush1.msra.mxu0 0.0
        %3669 = vmatprep.subr.mxu0 0.0
        %3670 = vmatpush1.msra.mxu0 0.0
        %3671 = vmatprep.subr.mxu0 0.0
        %3672 = vmatpush1.msra.mxu0 0.0
        %3673 = vmatprep.subr.mxu0 0.0
        %3674 = vmatpush1.msra.mxu0 0.0
        %3675 = vmatprep.subr.mxu0 0.0
        %3676 = vmatpush1.msra.mxu0 0.0
        %3677 = vmatprep.subr.mxu0 0.0
        %3678 = vmatpush1.msra.mxu0 0.0
        %3679 = vmatprep.subr.mxu0 0.0
        %3680 = vmatpush1.msra.mxu0 0.0
        %3681 = vmatprep.subr.mxu0 0.0
        %3682 = vmatpush1.msra.mxu0 0.0
        %3683 = vmatprep.subr.mxu0 0.0
        %3684 = vmatpush1.msra.mxu0 0.0
        %3685 = vmatprep.subr.mxu0 0.0
        %3686 = vmatpush1.msra.mxu0 0.0
        %3687 = vmatprep.subr.mxu0 0.0
        %3688 = vmatpush1.msra.mxu0 0.0
        %3689 = vmatprep.subr.mxu0 0.0
        %3690 = vmatpush1.msra.mxu0 0.0
        %3691 = vmatprep.subr.mxu0 0.0
        %3692 = vmatpush1.msra.mxu0 0.0
        %3693 = vmatprep.subr.mxu0 0.0
        %3694 = vmatpush1.msra.mxu0 0.0
        %3695 = vmatprep.subr.mxu0 0.0
        %3696 = vmatpush1.msra.mxu0 0.0
        %3697 = vmatprep.subr.mxu0 0.0
        %3698 = vmatpush1.msra.mxu0 0.0
        %3699 = vmatprep.subr.mxu0 0.0
        %3700 = vmatpush1.msra.mxu0 0.0
        %3701 = vmatprep.subr.mxu0 0.0
        %3702 = vmatpush1.msra.mxu0 0.0
        %3703 = vmatprep.subr.mxu0 0.0
        %3704 = vmatpush1.msra.mxu0 0.0
        %3705 = vmatprep.subr.mxu0 0.0
        %3706 = vmatpush1.msra.mxu0 0.0
        %3707 = vmatprep.subr.mxu0 0.0
        %3708 = vmatpush1.msra.mxu0 0.0
        %3709 = vmatprep.subr.mxu0 0.0
        %3710 = vmatpush1.msra.mxu0 0.0
        %3711 = vmatprep.mubr.f32.mxu0 0.0
        %3712 = vmatmul.mubr.f32.gmra.mrb[0].mxu0 %v3645
        %v3713 = vpop.f32.mrb[0].mxu0
        %v3714 = vadd.f32 %v3642, %v3713
        %v3715 = vpop.f32.mrb[0].mxu0
        %3716 = vdwg.mxu0
        %v3717 = vmax.f32 %v3714, 0.0
        %v3718 = vld [vmem:[%s51] sm:$0xff]
        %v3719 = vld [vmem:[%s51 + $0x8] sm:$0xff]
        %v3720 = vld [vmem:[%s51 + $0x10] sm:$0xff]
        %v3721 = vld [vmem:[%s51 + $0x18] sm:$0xff]
        %v3722 = vld [vmem:[%s51 + $0x20] sm:$0xff]
        %v3723 = vld [vmem:[%s51 + $0x28] sm:$0xff]
        %v3724 = vld [vmem:[%s51 + $0x30] sm:$0xff]
        %v3725 = vld [vmem:[%s51 + $0x38] sm:$0xff]
        %v3726 = vld [vmem:[%s51 + $0x40] sm:$0xff]
        %v3727 = vld [vmem:[%s51 + $0x48] sm:$0xff]
        %v3728 = vld [vmem:[%s51 + $0x50] sm:$0xff]
        %v3729 = vld [vmem:[%s51 + $0x58] sm:$0xff]
        %v3730 = vld [vmem:[%s51 + $0x60] sm:$0xff]
        %v3731 = vld [vmem:[%s51 + $0x68] sm:$0xff]
        %v3732 = vld [vmem:[%s51 + $0x70] sm:$0xff]
        %v3733 = vld [vmem:[%s51 + $0x78] sm:$0xff]
        %v3734 = vld [vmem:[%s53] sm:$0x1]
        %v3736 = vlaneseq
        %v3737 = vshrl.u32 %v3736, 7
        %v3738 = vsub.s32 0, %v3737
        %v3739 = vrot.slane %v3734, %v3738
        %3741 = vmatprep.subr.mxu0 0.0
        %3742 = vmatpush1.msra.mxu0 %v3718
        %3743 = vmatprep.subr.mxu0 0.0
        %3744 = vmatpush1.msra.mxu0 %v3719
        %3745 = vmatprep.subr.mxu0 0.0
        %3746 = vmatpush1.msra.mxu0 %v3720
        %3747 = vmatprep.subr.mxu0 0.0
        %3748 = vmatpush1.msra.mxu0 %v3721
        %3749 = vmatprep.subr.mxu0 0.0
        %3750 = vmatpush1.msra.mxu0 %v3722
        %3751 = vmatprep.subr.mxu0 0.0
        %3752 = vmatpush1.msra.mxu0 %v3723
        %3753 = vmatprep.subr.mxu0 0.0
        %3754 = vmatpush1.msra.mxu0 %v3724
        %3755 = vmatprep.subr.mxu0 0.0
        %3756 = vmatpush1.msra.mxu0 %v3725
        %3757 = vmatprep.subr.mxu0 0.0
        %3758 = vmatpush1.msra.mxu0 %v3726
        %3759 = vmatprep.subr.mxu0 0.0
        %3760 = vmatpush1.msra.mxu0 %v3727
        %3761 = vmatprep.subr.mxu0 0.0
        %3762 = vmatpush1.msra.mxu0 %v3728
        %3763 = vmatprep.subr.mxu0 0.0
        %3764 = vmatpush1.msra.mxu0 %v3729
        %3765 = vmatprep.subr.mxu0 0.0
        %3766 = vmatpush1.msra.mxu0 %v3730
        %3767 = vmatprep.subr.mxu0 0.0
        %3768 = vmatpush1.msra.mxu0 %v3731
        %3769 = vmatprep.subr.mxu0 0.0
        %3770 = vmatpush1.msra.mxu0 %v3732
        %3771 = vmatprep.subr.mxu0 0.0
        %3772 = vmatpush1.msra.mxu0 %v3733
        %3773 = vmatprep.subr.mxu0 0.0
        %3774 = vmatpush1.msra.mxu0 0.0
        %3775 = vmatprep.subr.mxu0 0.0
        %3776 = vmatpush1.msra.mxu0 0.0
        %3777 = vmatprep.subr.mxu0 0.0
        %3778 = vmatpush1.msra.mxu0 0.0
        %3779 = vmatprep.subr.mxu0 0.0
        %3780 = vmatpush1.msra.mxu0 0.0
        %3781 = vmatprep.subr.mxu0 0.0
        %3782 = vmatpush1.msra.mxu0 0.0
        %3783 = vmatprep.subr.mxu0 0.0
        %3784 = vmatpush1.msra.mxu0 0.0
        %3785 = vmatprep.subr.mxu0 0.0
        %3786 = vmatpush1.msra.mxu0 0.0
        %3787 = vmatprep.subr.mxu0 0.0
        %3788 = vmatpush1.msra.mxu0 0.0
        %3789 = vmatprep.subr.mxu0 0.0
        %3790 = vmatpush1.msra.mxu0 0.0
        %3791 = vmatprep.subr.mxu0 0.0
        %3792 = vmatpush1.msra.mxu0 0.0
        %3793 = vmatprep.subr.mxu0 0.0
        %3794 = vmatpush1.msra.mxu0 0.0
        %3795 = vmatprep.subr.mxu0 0.0
        %3796 = vmatpush1.msra.mxu0 0.0
        %3797 = vmatprep.subr.mxu0 0.0
        %3798 = vmatpush1.msra.mxu0 0.0
        %3799 = vmatprep.subr.mxu0 0.0
        %3800 = vmatpush1.msra.mxu0 0.0
        %3801 = vmatprep.subr.mxu0 0.0
        %3802 = vmatpush1.msra.mxu0 0.0
        %3803 = vmatprep.subr.mxu0 0.0
        %3804 = vmatpush1.msra.mxu0 0.0
        %3805 = vmatprep.mubr.f32.mxu0 0.0
        %3806 = vmatmul.mubr.f32.gmra.mrb[0].mxu0 %v3717
        %v3807 = vpop.f32.mrb[0].mxu0
        %v3808 = vadd.f32 %v3739, %v3807
        %v3809 = vpop.f32.mrb[0].mxu0
        %3810 = vdwg.mxu0
        %v3811 = vadd.f32 %v3808, %v3632
        %v3812 = vld [vmem:[%s55] sm:$0x1]
        %v3813 = vld [vmem:[%s57] sm:$0x1]
        %v3814 = vsel %vm1147, %v3811, 0.0
        %3815 = vadd.xlane.f32.xlu0 %v3814
        %v3816 = vpop.xlane.xlu0 %3815
        %v3817 = vmul.f32 %v3816, %v2358
        %v3818 = vsub.f32 %v3811, %v3817
        %v3819 = vmul.f32 %v3818, %v3818
        %v3820 = vsel %vm1147, %v3819, 0.0
        %3821 = vadd.xlane.f32.xlu0 %v3820
        %v3822 = vpop.xlane.xlu0 %3821
        %v3823 = vmul.f32 %v3822, %v2358
        %v3824 = vadd.f32 %v3823, 1e-05
        %v3825 = vrsqrt.pop %v3824
        %v3826 = vmul.f32 %v3818, %v3825
        %v3828 = vlaneseq
        %v3829 = vshrl.u32 %v3828, 7
        %v3830 = vsub.s32 0, %v3829
        %v3831 = vrot.slane %v3812, %v3830
        %v3833 = vmul.f32 %v3826, %v3831
        %v3835 = vlaneseq
        %v3836 = vshrl.u32 %v3835, 7
        %v3837 = vsub.s32 0, %v3836
        %v3838 = vrot.slane %v3813, %v3837
        %v3840 = vadd.f32 %v3833, %v3838
        %3841 = vst.msk [vmem:[%s1132] sm:$0xff] %vm1147, %v3840
        %s3842 = sand.u32 %s717, 1
        %s3843 = scalar_lea.sflag [#allocation4], %s3842
        %s3844 = sand.u32 %s717, 1
        %s3845 = smul.addr %s3844, 8
        %s3846 = scalar_lea.vmem [#allocation25], %s3845
        // Predicated region
        $region193: #{tpu_custom_call.1} parent=135 // pred_check
          %p3847 = pneg %p727
        $region194: #{tpu_custom_call.1} parent=135 // pred_check_branch
          %3849 = sbr.rel (%p3847) target = $region196
        $region195: #{tpu_custom_call.1} parent=135 // pred_region
          %s3851 = ssub.s32 128, 128
          %3852 = vsyncadd %s3843, %s3851
          %s3853 = smul.addr %s85, 128
          %s3854 = scalar_lea.hbm %s59, %s3853
          %s3856 = sshll.u32 %s3846, 4
          %s3857 = int_to_ptr.vmem [resolvable:$true] %s3856
          %3859 = dma.vmem_to_hbm [thread:$0]  %s3857, 128, %s3854, %s3843
        $region196: #{tpu_custom_call.1} parent=135 // pred_fallthru
          _
      $region136: #{tpu_custom_call.1} parent=5 // pred_fallthru
        _
      %p3860 = scmp.le.s32.totalorder 2, %s80
      // Predicated region
      $region197: #{tpu_custom_call.1} parent=5 // pred_check
        %p3861 = pneg %p3860
      $region198: #{tpu_custom_call.1} parent=5 // pred_check_branch
        %3863 = sbr.rel (%p3861) target = $region200
      $region199: #{tpu_custom_call.1} parent=5 // pred_region
        %s3864 = ssub.s32 %s80, 2
        // Predicated region
        $region201: #{tpu_custom_call.1} parent=199 // pred_check
          %p3865 = pneg %p733
        $region202: #{tpu_custom_call.1} parent=199 // pred_check_branch
          %3867 = sbr.rel (%p3865) target = $region204
        $region203: #{tpu_custom_call.1} parent=199 // pred_region
          %s3868 = sand.u32 %s718, 1
          %s3869 = scalar_lea.sflag [#allocation4], %s3868
          %s3870 = sand.u32 %s718, 1
          %s3871 = smul.addr %s3870, 8
          %s3872 = scalar_lea.vmem [#allocation25], %s3871
          %3873 = dma.done %s3869, 128
        $region204: #{tpu_custom_call.1} parent=199 // pred_fallthru
          _
      $region200: #{tpu_custom_call.1} parent=5 // pred_fallthru
        _
    $region6: #{tpu_custom_call.1} parent=1 // loop_footer
      %s84 = sadd.s32 1, %s80
    $region7: #{tpu_custom_call.1} parent=1 // loop_footer_branch
      %79 = sbr.rel target = $region3
    $region8: #{tpu_custom_call.1} parent=1 // loop_exit
      _
    %3874 = vsyncpa [#allocation3], 1
    %s3875 = scalar_lea.sflag [#allocation3], 1
    %3876 = vsyncpa %s3875, 1
    %3877 = vsyncpa [#allocation6], 1
    %s3878 = scalar_lea.sflag [#allocation6], 1
    %3879 = vsyncpa %s3878, 1
    %3880 = vsyncpa [#allocation9], 1
    %3881 = vsyncpa [#allocation12], 1
    %3882 = vsyncpa [#allocation15], 1
    %3883 = vsyncpa [#allocation18], 1
    %3884 = vsyncpa [#allocation21], 1
    %3885 = vsyncpa [#allocation24], 1
    %3886 = vsyncpa [#allocation4], 1
    %s3887 = scalar_lea.sflag [#allocation4], 1
    %3888 = vsyncpa %s3887, 1

</llo_original>
